<compile_context>
chip_gen: v6e
topology: v6e:2x2x1
jax: 0.10.0
libtpu: 0.0.40
codegen_flags: <defaults>
</compile_context>

<pallas_src>
import functools

import jax
import jax.numpy as jnp
from jax.experimental import pallas as pl
from jax.experimental.pallas import tpu as pltpu

LANE = 128                       # lane width / Cout tile
VMEM_LIMIT = 32 * 1024 * 1024    # safe on v5e/v6e/v7x, far above our tiles
BN_EPS = 1e-5


def _rup(x, m):
    return (x + m - 1) // m * m


def _pad_last(x, c):
    pad = c - x.shape[-1]
    if pad == 0:
        return x
    return jnp.pad(x, [(0, 0)] * (x.ndim - 1) + [(0, pad)])


# ----------------------------- Pallas kernels ------------------------------


def _conv_row_kernel(x_ref, w_ref, o_ref, acc_ref, *, kw, wo):
    """One padded input row x one weight row-tap, accumulated over KH taps.

    x_ref:  (1, 1, Wp, Cin_p)    bf16 padded input row (row index = ho + di)
    w_ref:  (1, KW, Cin_p, 128)  bf16 weight row-tap di
    o_ref:  (1, 1, Wo, 128)      f32 pre-BN conv output row
    acc_ref:(Wo, 128)            f32 accumulator, persists across the KH axis
    """
    di = pl.program_id(3)

    @pl.when(di == 0)
    def _():
        acc_ref[...] = jnp.zeros_like(acc_ref)

    row = x_ref[0, 0]                                   # (Wp, Cin_p) bf16
    acc = acc_ref[...]
    for dj in range(kw):                                # KW column taps
        acc = acc + jnp.dot(row[dj:dj + wo, :], w_ref[0, dj],
                            preferred_element_type=jnp.float32)
    acc_ref[...] = acc

    @pl.when(di == pl.num_programs(3) - 1)
    def _():
        o_ref[0, 0] = acc_ref[...]


def _bn_stats_kernel(y_ref, gamma_ref, beta_ref, scale_ref, shift_ref,
                     sum_ref, sq_ref, *, m_rows, eps):
    """Accumulate per-channel sum / sumsq over all rows; finalize to the folded
    affine (scale, shift).  Grid = (Cout/128 parallel, N arb, Ho arb)."""
    ni = pl.program_id(1)
    hi = pl.program_id(2)

    @pl.when((ni == 0) & (hi == 0))
    def _():
        sum_ref[...] = jnp.zeros_like(sum_ref)
        sq_ref[...] = jnp.zeros_like(sq_ref)

    yb = y_ref[0, 0]                                    # (Wo, 128) f32
    sum_ref[...] += jnp.sum(yb, axis=0, keepdims=True)
    sq_ref[...] += jnp.sum(yb * yb, axis=0, keepdims=True)

    @pl.when((ni == pl.num_programs(1) - 1) & (hi == pl.num_programs(2) - 1))
    def _():
        inv_m = 1.0 / m_rows
        mean = sum_ref[...] * inv_m
        var = jnp.maximum(sq_ref[...] * inv_m - mean * mean, 0.0)  # biased var
        sc = gamma_ref[...] * jax.lax.rsqrt(var + eps)
        scale_ref[...] = sc
        shift_ref[...] = beta_ref[...] - mean * sc


def _affine_relu_kernel(y_ref, scale_ref, shift_ref, o_ref):
    y = y_ref[0, 0]                                     # (Wo, 128) f32
    z = y * scale_ref[...] + shift_ref[...]
    o_ref[0, 0] = jnp.maximum(z, 0.0).astype(o_ref.dtype)


def _maxpool_row_kernel(x_ref, o_ref, acc_ref, *, kw, wo):
    """Running max across KH row-taps; KW column taps via pairwise maximum."""
    di = pl.program_id(2)

    @pl.when(di == 0)
    def _():
        acc_ref[...] = jnp.full_like(acc_ref, -jnp.inf)

    row = x_ref[0, 0]                                   # (Wp, C)
    m = row[0:wo, :]
    for dj in range(1, kw):
        m = jnp.maximum(m, row[dj:dj + wo, :])
    acc_ref[...] = jnp.maximum(acc_ref[...], m)

    @pl.when(di == pl.num_programs(2) - 1)
    def _():
        o_ref[0, 0] = acc_ref[...]


# ------------------------------ layer wrappers ------------------------------


def conv_bn_relu(x, wt, gamma, beta, *, padding):
    """BasicConv2d: conv (bias=False) + BatchNorm (batch stats) + ReLU.

    x:  (N, H, W, Cin_p) bf16 NHWC, channels zero-padded to a LANE multiple.
    wt: (KH, KW, Cin, Cout) f32.  gamma/beta: (Cout,) f32.
    Returns (N, Ho, Wo, Cout_p) bf16 (extra channels are zero).
    """
    n, h, w, cin_p = x.shape
    kh, kw, cin, cout = wt.shape
    ph, pw = padding
    cout_p = _rup(cout, LANE)
    n_cb = cout_p // LANE

    w_p = jnp.pad(wt, ((0, 0), (0, 0), (0, cin_p - cin),
                       (0, cout_p - cout))).astype(jnp.bfloat16)
    gamma_p = jnp.pad(gamma, (0, cout_p - cout)).reshape(1, cout_p)
    beta_p = jnp.pad(beta, (0, cout_p - cout)).reshape(1, cout_p)

    if ph or pw:
        x = jnp.pad(x, ((0, 0), (ph, ph), (pw, pw), (0, 0)))
    hp, wp = h + 2 * ph, w + 2 * pw
    ho, wo = hp - kh + 1, wp - kw + 1

    # ---- pass 1: convolution (row-tap accumulation on the MXU, bf16->f32) --
    y = pl.pallas_call(
        functools.partial(_conv_row_kernel, kw=kw, wo=wo),
        out_shape=jax.ShapeDtypeStruct((n, ho, wo, cout_p), jnp.float32),
        grid=(n, ho, n_cb, kh),
        in_specs=[
            pl.BlockSpec((1, 1, wp, cin_p),
                         lambda ni, hi, ci, di: (ni, hi + di, 0, 0)),
            pl.BlockSpec((1, kw, cin_p, LANE),
                         lambda ni, hi, ci, di: (di, 0, 0, ci)),
        ],
        out_specs=pl.BlockSpec((1, 1, wo, LANE),
                               lambda ni, hi, ci, di: (ni, hi, 0, ci)),
        scratch_shapes=[pltpu.VMEM((wo, LANE), jnp.float32)],
        compiler_params=pltpu.CompilerParams(
            dimension_semantics=("parallel", "parallel", "parallel",
                                 "arbitrary"),
            vmem_limit_bytes=VMEM_LIMIT),
    )(x, w_p)

    # ---- pass 2: batch statistics -> folded per-channel scale / shift ------
    scale, shift = pl.pallas_call(
        functools.partial(_bn_stats_kernel, m_rows=n * ho * wo, eps=BN_EPS),
        out_shape=(jax.ShapeDtypeStruct((1, cout_p), jnp.float32),
                   jax.ShapeDtypeStruct((1, cout_p), jnp.float32)),
        grid=(n_cb, n, ho),
        in_specs=[
            pl.BlockSpec((1, 1, wo, LANE),
                         lambda ci, ni, hi: (ni, hi, 0, ci)),
            pl.BlockSpec((1, LANE), lambda ci, ni, hi: (0, ci)),
            pl.BlockSpec((1, LANE), lambda ci, ni, hi: (0, ci)),
        ],
        out_specs=(pl.BlockSpec((1, LANE), lambda ci, ni, hi: (0, ci)),
                   pl.BlockSpec((1, LANE), lambda ci, ni, hi: (0, ci))),
        scratch_shapes=[pltpu.VMEM((1, LANE), jnp.float32),
                        pltpu.VMEM((1, LANE), jnp.float32)],
        compiler_params=pltpu.CompilerParams(
            dimension_semantics=("parallel", "arbitrary", "arbitrary"),
            vmem_limit_bytes=VMEM_LIMIT),
    )(y, gamma_p, beta_p)

    # ---- pass 3: affine + ReLU (lane-dense elementwise epilogue) -----------
    out = pl.pallas_call(
        _affine_relu_kernel,
        out_shape=jax.ShapeDtypeStruct((n, ho, wo, cout_p), jnp.bfloat16),
        grid=(n, ho, n_cb),
        in_specs=[
            pl.BlockSpec((1, 1, wo, LANE),
                         lambda ni, hi, ci: (ni, hi, 0, ci)),
            pl.BlockSpec((1, LANE), lambda ni, hi, ci: (0, ci)),
            pl.BlockSpec((1, LANE), lambda ni, hi, ci: (0, ci)),
        ],
        out_specs=pl.BlockSpec((1, 1, wo, LANE),
                               lambda ni, hi, ci: (ni, hi, 0, ci)),
        compiler_params=pltpu.CompilerParams(
            dimension_semantics=("parallel", "parallel", "parallel"),
            vmem_limit_bytes=VMEM_LIMIT),
    )(y, scale, shift)
    return out


def maxpool3x3_s1_p1(x):
    """MaxPool2d(kernel=3, stride=1, padding=1) on NHWC (lane-padded channels)."""
    n, h, w, c = x.shape
    xp = jnp.pad(x, ((0, 0), (1, 1), (1, 1), (0, 0)),
                 constant_values=-jnp.inf)
    wp = w + 2
    return pl.pallas_call(
        functools.partial(_maxpool_row_kernel, kw=3, wo=w),
        out_shape=jax.ShapeDtypeStruct((n, h, w, c), x.dtype),
        grid=(n, h, 3),
        in_specs=[pl.BlockSpec((1, 1, wp, c),
                               lambda ni, hi, di: (ni, hi + di, 0, 0))],
        out_specs=pl.BlockSpec((1, 1, w, c),
                               lambda ni, hi, di: (ni, hi, 0, 0)),
        scratch_shapes=[pltpu.VMEM((w, c), x.dtype)],
        compiler_params=pltpu.CompilerParams(
            dimension_semantics=("parallel", "parallel", "arbitrary"),
            vmem_limit_bytes=VMEM_LIMIT),
    )(xp)


def _cat_channels(parts):
    """Channel-concat of (array, true_channels) pairs; re-pad to LANE multiple."""
    sliced = [p[..., :c] for (p, c) in parts]
    total = sum(c for _, c in parts)
    cat = jnp.concatenate(sliced, axis=-1)
    return _pad_last(cat, _rup(total, LANE)), total


# ----------------------------- InceptionStem --------------------------------


def init_inception_stem_params(in_planes, key):
    """Deterministic synthetic weights.  Conv weights laid out (KH, KW, Cin, Cout).
    BatchNorm: gamma=1, beta=0 (fresh module); batch stats computed at run time."""
    specs = [
        ("c1_1", (3, 3, in_planes, 32)),
        ("c1_2", (3, 3, 32, 32)),
        ("c1_3", (3, 3, 32, 64)),
        ("b3x3", (3, 3, 64, 96)),
        ("a7_1", (1, 1, 160, 64)),
        ("a7_2", (3, 3, 64, 96)),
        ("b7_1", (1, 1, 160, 64)),
        ("b7_2", (7, 1, 64, 64)),
        ("b7_3", (1, 7, 64, 64)),
        ("b7_4", (3, 3, 64, 96)),
        ("poolb", (3, 3, 192, 192)),
    ]
    keys = jax.random.split(key, len(specs))
    params = {}
    for kk, (name, shp) in zip(keys, specs):
        cout = shp[-1]
        params[name] = {
            "w": 0.1 * jax.random.normal(kk, shp, jnp.float32),
            "gamma": jnp.ones((cout,), jnp.float32),
            "beta": jnp.zeros((cout,), jnp.float32),
        }
    return params


def inception_stem_forward(x_nchw, params):
    # TODO(synk): BatchNorm running_mean/running_var buffer updates (training
    # side-state) are not modeled; normalization uses batch statistics.
    x = jnp.transpose(x_nchw, (0, 2, 3, 1)).astype(jnp.bfloat16)   # NCHW->NHWC
    x = _pad_last(x, _rup(x.shape[-1], LANE))

    def conv(name, h, pad):
        p = params[name]
        out = conv_bn_relu(h, p["w"], p["gamma"], p["beta"], padding=pad)
        return out, p["w"].shape[-1]

    # conv1: 3x3 valid -> 3x3 same -> 3x3 same
    h, _ = conv("c1_1", x, (0, 0))
    h, _ = conv("c1_2", h, (1, 1))
    h, c = conv("c1_3", h, (1, 1))                        # 64 channels

    # branch_3x3_conv || branch_3x3_pool -> cat (96 + 64 = 160)
    b3, c3 = conv("b3x3", h, (1, 1))
    bp = maxpool3x3_s1_p1(h)
    h, _ = _cat_channels([(b3, c3), (bp, c)])             # 160 (padded to 256)

    # branch_7x7a || branch_7x7b -> cat (96 + 96 = 192)
    a, _ = conv("a7_1", h, (0, 0))
    a, ca = conv("a7_2", a, (1, 1))
    b, _ = conv("b7_1", h, (0, 0))
    b, _ = conv("b7_2", b, (3, 0))                        # (7,1) conv
    b, _ = conv("b7_3", b, (0, 3))                        # (1,7) conv
    b, cb = conv("b7_4", b, (1, 1))
    h, c = _cat_channels([(a, ca), (b, cb)])              # 192 (padded to 256)

    # branchpoola || branchpoolb -> cat (192 + 192 = 384)
    pa = maxpool3x3_s1_p1(h)
    pb, cpb = conv("poolb", h, (1, 1))
    out, ctot = _cat_channels([(pa, c), (pb, cpb)])       # 384

    out = out[..., :ctot].astype(jnp.float32)
    return jnp.transpose(out, (0, 3, 1, 2))               # NHWC -> NCHW


if __name__ == "__main__":
    # Small shapes consistent with the module: only the first conv is VALID
    # (16 -> 14); everything else preserves spatial size.  Channel counts are
    # the real stem ones (32..384).
    N_, IN_PLANES, H_, W_ = 2, 4, 16, 16

    root = jax.random.PRNGKey(0)
    kx, kp = jax.random.split(root)
    x = jax.random.normal(kx, (N_, IN_PLANES, H_, W_), jnp.float32)
    params = init_inception_stem_params(IN_PLANES, kp)

    out = jax.jit(inception_stem_forward)(x, params)
    out = jax.block_until_ready(out)

    expected_hw = H_ - 2
    assert out.shape == (N_, 384, expected_hw, expected_hw), out.shape
    assert out.dtype == jnp.float32
    assert bool(jnp.isfinite(out).all())
    print("KERNEL_OK")
</pallas_src>

<mosaic_0001>
module attributes {stable_mosaic.version = 11 : i64} {
  func.func @_conv_row_kernel(%arg0: i32, %arg1: i32, %arg2: i32, %arg3: i32, %arg4: memref<1x1x16x128xbf16, #tpu.memory_space<vmem>>, %arg5: memref<1x3x128x128xbf16, #tpu.memory_space<vmem>>, %arg6: memref<1x1x14x128xf32, #tpu.memory_space<vmem>>, %arg7: memref<14x128xf32, #tpu.memory_space<vmem>>) attributes {dimension_semantics = [#tpu.dimension_semantics<parallel>, #tpu.dimension_semantics<parallel>, #tpu.dimension_semantics<parallel>, #tpu.dimension_semantics<arbitrary>], iteration_bounds = array<i64: 2, 14, 1, 3>, scalar_prefetch = 0 : i64, scratch_operands = 1 : i64, tpu.core_type = #tpu.core_type<tc>, window_params = [{transform_indices = @transform_0, window_bounds = array<i64: 1, 1, 16, 128>}, {transform_indices = @transform_1, window_bounds = array<i64: 1, 3, 128, 128>}, {transform_indices = @transform_2, window_bounds = array<i64: 1, 1, 14, 128>}]} {
    %c0_i32 = arith.constant 0 : i32
    %0 = arith.cmpi eq, %arg3, %c0_i32 : i32
    %1 = arith.extui %0 : i1 to i32
    %c0_i32_0 = arith.constant 0 : i32
    %2 = arith.cmpi ne, %1, %c0_i32_0 : i32
    scf.if %2 {
      %cst_21 = arith.constant 0.000000e+00 : f32
      %25 = vector.broadcast %cst_21 : f32 to vector<14x128xf32>
      %c0_22 = arith.constant 0 : index
      %c0_23 = arith.constant 0 : index
      %26 = vector.load %arg7[%c0_22, %c0_23] : memref<14x128xf32, #tpu.memory_space<vmem>>, vector<14x128xf32>
      tpu.vector_store %arg7[%c0_22, %c0_23], %25 {strides = array<i32>} : memref<14x128xf32, #tpu.memory_space<vmem>>, vector<14x128xf32>,
    } else {
    }
    %c0 = arith.constant 0 : index
    %c0_1 = arith.constant 0 : index
    %c0_2 = arith.constant 0 : index
    %c0_3 = arith.constant 0 : index
    %3 = vector.load %arg4[%c0, %c0_1, %c0_2, %c0_3] : memref<1x1x16x128xbf16, #tpu.memory_space<vmem>>, vector<1x1x16x128xbf16>
    %4 = vector.shape_cast %3 : vector<1x1x16x128xbf16> to vector<16x128xbf16>
    %c0_4 = arith.constant 0 : index
    %c0_5 = arith.constant 0 : index
    %5 = vector.load %arg7[%c0_4, %c0_5] : memref<14x128xf32, #tpu.memory_space<vmem>>, vector<14x128xf32>
    %6 = vector.extract_strided_slice %4 {offsets = [0, 0], sizes = [14, 128], strides = [1, 1]} : vector<16x128xbf16> to vector<14x128xbf16>
    %c0_6 = arith.constant 0 : index
    %c0_7 = arith.constant 0 : index
    %c0_8 = arith.constant 0 : index
    %c0_9 = arith.constant 0 : index
    %7 = vector.load %arg5[%c0_6, %c0_7, %c0_8, %c0_9] : memref<1x3x128x128xbf16, #tpu.memory_space<vmem>>, vector<1x1x128x128xbf16>
    %8 = vector.shape_cast %7 : vector<1x1x128x128xbf16> to vector<128x128xbf16>
    %cst = arith.constant dense<0.000000e+00> : vector<14x128xf32>
    %9 = tpu.matmul %6, %8, %cst {dimension_numbers = #tpu.dot_dimension_numbers<[1], [0], [0], [1], [0, 0, 1, 1], [], []>} : vector<14x128xbf16>, vector<128x128xbf16>, vector<14x128xf32> -> vector<14x128xf32>
    %10 = arith.addf %5, %9 : vector<14x128xf32>
    %11 = vector.extract_strided_slice %4 {offsets = [1, 0], sizes = [14, 128], strides = [1, 1]} : vector<16x128xbf16> to vector<14x128xbf16>
    %c0_10 = arith.constant 0 : index
    %c1 = arith.constant 1 : index
    %c0_11 = arith.constant 0 : index
    %c0_12 = arith.constant 0 : index
    %12 = vector.load %arg5[%c0_10, %c1, %c0_11, %c0_12] : memref<1x3x128x128xbf16, #tpu.memory_space<vmem>>, vector<1x1x128x128xbf16>
    %13 = vector.shape_cast %12 : vector<1x1x128x128xbf16> to vector<128x128xbf16>
    %cst_13 = arith.constant dense<0.000000e+00> : vector<14x128xf32>
    %14 = tpu.matmul %11, %13, %cst_13 {dimension_numbers = #tpu.dot_dimension_numbers<[1], [0], [0], [1], [0, 0, 1, 1], [], []>} : vector<14x128xbf16>, vector<128x128xbf16>, vector<14x128xf32> -> vector<14x128xf32>
    %15 = arith.addf %10, %14 : vector<14x128xf32>
    %16 = vector.extract_strided_slice %4 {offsets = [2, 0], sizes = [14, 128], strides = [1, 1]} : vector<16x128xbf16> to vector<14x128xbf16>
    %c0_14 = arith.constant 0 : index
    %c2 = arith.constant 2 : index
    %c0_15 = arith.constant 0 : index
    %c0_16 = arith.constant 0 : index
    %17 = vector.load %arg5[%c0_14, %c2, %c0_15, %c0_16] : memref<1x3x128x128xbf16, #tpu.memory_space<vmem>>, vector<1x1x128x128xbf16>
    %18 = vector.shape_cast %17 : vector<1x1x128x128xbf16> to vector<128x128xbf16>
    %cst_17 = arith.constant dense<0.000000e+00> : vector<14x128xf32>
    %19 = tpu.matmul %16, %18, %cst_17 {dimension_numbers = #tpu.dot_dimension_numbers<[1], [0], [0], [1], [0, 0, 1, 1], [], []>} : vector<14x128xbf16>, vector<128x128xbf16>, vector<14x128xf32> -> vector<14x128xf32>
    %20 = arith.addf %15, %19 : vector<14x128xf32>
    %c0_18 = arith.constant 0 : index
    %c0_19 = arith.constant 0 : index
    %21 = vector.load %arg7[%c0_18, %c0_19] : memref<14x128xf32, #tpu.memory_space<vmem>>, vector<14x128xf32>
    tpu.vector_store %arg7[%c0_18, %c0_19], %20 {strides = array<i32>} : memref<14x128xf32, #tpu.memory_space<vmem>>, vector<14x128xf32>,
    %c2_i32 = arith.constant 2 : i32
    %22 = arith.cmpi eq, %arg3, %c2_i32 : i32
    %23 = arith.extui %22 : i1 to i32
    %c0_i32_20 = arith.constant 0 : i32
    %24 = arith.cmpi ne, %23, %c0_i32_20 : i32
    scf.if %24 {
      %c0_21 = arith.constant 0 : index
      %c0_22 = arith.constant 0 : index
      %25 = vector.load %arg7[%c0_21, %c0_22] : memref<14x128xf32, #tpu.memory_space<vmem>>, vector<14x128xf32>
      %c0_23 = arith.constant 0 : index
      %c0_24 = arith.constant 0 : index
      %c0_25 = arith.constant 0 : index
      %c0_26 = arith.constant 0 : index
      %26 = vector.load %arg6[%c0_23, %c0_24, %c0_25, %c0_26] : memref<1x1x14x128xf32, #tpu.memory_space<vmem>>, vector<1x1x14x128xf32>
      %27 = vector.shape_cast %26 : vector<1x1x14x128xf32> to vector<14x128xf32>
      %28 = vector.shape_cast %25 : vector<14x128xf32> to vector<1x1x14x128xf32>
      tpu.vector_store %arg6[%c0_23, %c0_24, %c0_25, %c0_26], %28 {strides = array<i32>} : memref<1x1x14x128xf32, #tpu.memory_space<vmem>>, vector<1x1x14x128xf32>,
    } else {
    }
    return
  }
  func.func @transform_0(%arg0: i32, %arg1: i32, %arg2: i32, %arg3: i32) -> (i32, i32, i32, i32) {
    %0 = arith.addi %arg1, %arg3 : i32
    %c0_i32 = arith.constant 0 : i32
    %c0_i32_0 = arith.constant 0 : i32
    %c0_i32_1 = arith.constant 0 : i32
    return %arg0, %0, %c0_i32, %c0_i32_0 : i32, i32, i32, i32
  }
  func.func @transform_1(%arg0: i32, %arg1: i32, %arg2: i32, %arg3: i32) -> (i32, i32, i32, i32) {
    %c0_i32 = arith.constant 0 : i32
    %c0_i32_0 = arith.constant 0 : i32
    %c0_i32_1 = arith.constant 0 : i32
    return %arg3, %c0_i32, %c0_i32_0, %arg2 : i32, i32, i32, i32
  }
  func.func @transform_2(%arg0: i32, %arg1: i32, %arg2: i32, %arg3: i32) -> (i32, i32, i32, i32) {
    %c0_i32 = arith.constant 0 : i32
    %c0_i32_0 = arith.constant 0 : i32
    return %arg0, %arg1, %c0_i32, %arg2 : i32, i32, i32, i32
  }
}

module attributes {stable_mosaic.version = 11 : i64} {
  func.func @_bn_stats_kernel(%arg0: i32, %arg1: i32, %arg2: i32, %arg3: memref<1x1x14x128xf32, #tpu.memory_space<vmem>>, %arg4: memref<1x128xf32, #tpu.memory_space<vmem>>, %arg5: memref<1x128xf32, #tpu.memory_space<vmem>>, %arg6: memref<1x128xf32, #tpu.memory_space<vmem>>, %arg7: memref<1x128xf32, #tpu.memory_space<vmem>>, %arg8: memref<1x128xf32, #tpu.memory_space<vmem>>, %arg9: memref<1x128xf32, #tpu.memory_space<vmem>>) attributes {dimension_semantics = [#tpu.dimension_semantics<parallel>, #tpu.dimension_semantics<arbitrary>, #tpu.dimension_semantics<arbitrary>], iteration_bounds = array<i64: 1, 2, 14>, scalar_prefetch = 0 : i64, scratch_operands = 2 : i64, tpu.core_type = #tpu.core_type<tc>, window_params = [{transform_indices = @transform_0, window_bounds = array<i64: 1, 1, 14, 128>}, {transform_indices = @transform_1, window_bounds = array<i64: 1, 128>}, {transform_indices = @transform_2, window_bounds = array<i64: 1, 128>}, {transform_indices = @transform_3, window_bounds = array<i64: 1, 128>}, {transform_indices = @transform_4, window_bounds = array<i64: 1, 128>}]} {
    %c0_i32 = arith.constant 0 : i32
    %0 = arith.cmpi eq, %arg1, %c0_i32 : i32
    %c0_i32_0 = arith.constant 0 : i32
    %1 = arith.cmpi eq, %arg2, %c0_i32_0 : i32
    %2 = arith.andi %0, %1 : i1
    %3 = arith.extui %2 : i1 to i32
    %c0_i32_1 = arith.constant 0 : i32
    %4 = arith.cmpi ne, %3, %c0_i32_1 : i32
    scf.if %4 {
      %cst_15 = arith.constant 0.000000e+00 : f32
      %23 = vector.broadcast %cst_15 : f32 to vector<1x128xf32>
      %c0_16 = arith.constant 0 : index
      %c0_17 = arith.constant 0 : index
      %24 = vector.load %arg8[%c0_16, %c0_17] : memref<1x128xf32, #tpu.memory_space<vmem>>, vector<1x128xf32>
      tpu.vector_store %arg8[%c0_16, %c0_17], %23 {strides = array<i32>} : memref<1x128xf32, #tpu.memory_space<vmem>>, vector<1x128xf32>,
      %cst_18 = arith.constant 0.000000e+00 : f32
      %25 = vector.broadcast %cst_18 : f32 to vector<1x128xf32>
      %c0_19 = arith.constant 0 : index
      %c0_20 = arith.constant 0 : index
      %26 = vector.load %arg9[%c0_19, %c0_20] : memref<1x128xf32, #tpu.memory_space<vmem>>, vector<1x128xf32>
      tpu.vector_store %arg9[%c0_19, %c0_20], %25 {strides = array<i32>} : memref<1x128xf32, #tpu.memory_space<vmem>>, vector<1x128xf32>,
    } else {
    }
    %c0 = arith.constant 0 : index
    %c0_2 = arith.constant 0 : index
    %c0_3 = arith.constant 0 : index
    %c0_4 = arith.constant 0 : index
    %5 = vector.load %arg3[%c0, %c0_2, %c0_3, %c0_4] : memref<1x1x14x128xf32, #tpu.memory_space<vmem>>, vector<1x1x14x128xf32>
    %6 = vector.shape_cast %5 : vector<1x1x14x128xf32> to vector<14x128xf32>
    %c0_5 = arith.constant 0 : index
    %c0_6 = arith.constant 0 : index
    %7 = vector.load %arg8[%c0_5, %c0_6] : memref<1x128xf32, #tpu.memory_space<vmem>>, vector<1x128xf32>
    %cst = arith.constant dense<0.000000e+00> : vector<128xf32>
    %8 = vector.multi_reduction <add>, %6, %cst [0] : vector<14x128xf32> to vector<128xf32>
    %9 = vector.shape_cast %8 : vector<128xf32> to vector<1x128xf32>
    %10 = arith.addf %7, %9 : vector<1x128xf32>
    %c0_7 = arith.constant 0 : index
    %c0_8 = arith.constant 0 : index
    %11 = vector.load %arg8[%c0_7, %c0_8] : memref<1x128xf32, #tpu.memory_space<vmem>>, vector<1x128xf32>
    tpu.vector_store %arg8[%c0_7, %c0_8], %10 {strides = array<i32>} : memref<1x128xf32, #tpu.memory_space<vmem>>, vector<1x128xf32>,
    %c0_9 = arith.constant 0 : index
    %c0_10 = arith.constant 0 : index
    %12 = vector.load %arg9[%c0_9, %c0_10] : memref<1x128xf32, #tpu.memory_space<vmem>>, vector<1x128xf32>
    %13 = arith.mulf %6, %6 : vector<14x128xf32>
    %cst_11 = arith.constant dense<0.000000e+00> : vector<128xf32>
    %14 = vector.multi_reduction <add>, %13, %cst_11 [0] : vector<14x128xf32> to vector<128xf32>
    %15 = vector.shape_cast %14 : vector<128xf32> to vector<1x128xf32>
    %16 = arith.addf %12, %15 : vector<1x128xf32>
    %c0_12 = arith.constant 0 : index
    %c0_13 = arith.constant 0 : index
    %17 = vector.load %arg9[%c0_12, %c0_13] : memref<1x128xf32, #tpu.memory_space<vmem>>, vector<1x128xf32>
    tpu.vector_store %arg9[%c0_12, %c0_13], %16 {strides = array<i32>} : memref<1x128xf32, #tpu.memory_space<vmem>>, vector<1x128xf32>,
    %c1_i32 = arith.constant 1 : i32
    %18 = arith.cmpi eq, %arg1, %c1_i32 : i32
    %c13_i32 = arith.constant 13 : i32
    %19 = arith.cmpi eq, %arg2, %c13_i32 : i32
    %20 = arith.andi %18, %19 : i1
    %21 = arith.extui %20 : i1 to i32
    %c0_i32_14 = arith.constant 0 : i32
    %22 = arith.cmpi ne, %21, %c0_i32_14 : i32
    scf.if %22 {
      %c0_15 = arith.constant 0 : index
      %c0_16 = arith.constant 0 : index
      %23 = vector.load %arg8[%c0_15, %c0_16] : memref<1x128xf32, #tpu.memory_space<vmem>>, vector<1x128xf32>
      %cst_17 = arith.constant 0.00255102036 : f32
      %24 = vector.broadcast %cst_17 : f32 to vector<1x128xf32>
      %25 = arith.mulf %23, %24 : vector<1x128xf32>
      %c0_18 = arith.constant 0 : index
      %c0_19 = arith.constant 0 : index
      %26 = vector.load %arg9[%c0_18, %c0_19] : memref<1x128xf32, #tpu.memory_space<vmem>>, vector<1x128xf32>
      %cst_20 = arith.constant 0.00255102036 : f32
      %27 = vector.broadcast %cst_20 : f32 to vector<1x128xf32>
      %28 = arith.mulf %26, %27 : vector<1x128xf32>
      %29 = arith.mulf %25, %25 : vector<1x128xf32>
      %30 = arith.subf %28, %29 : vector<1x128xf32>
      %cst_21 = arith.constant 0.000000e+00 : f32
      %31 = vector.broadcast %cst_21 : f32 to vector<1x128xf32>
      %32 = arith.maximumf %30, %31 : vector<1x128xf32>
      %c0_22 = arith.constant 0 : index
      %c0_23 = arith.constant 0 : index
      %33 = vector.load %arg4[%c0_22, %c0_23] : memref<1x128xf32, #tpu.memory_space<vmem>>, vector<1x128xf32>
      %cst_24 = arith.constant 9.99999974E-6 : f32
      %34 = vector.broadcast %cst_24 : f32 to vector<1x128xf32>
      %35 = arith.addf %32, %34 : vector<1x128xf32>
      %36 = math.rsqrt %35 : vector<1x128xf32>
      %37 = arith.mulf %33, %36 : vector<1x128xf32>
      %c0_25 = arith.constant 0 : index
      %c0_26 = arith.constant 0 : index
      %38 = vector.load %arg6[%c0_25, %c0_26] : memref<1x128xf32, #tpu.memory_space<vmem>>, vector<1x128xf32>
      tpu.vector_store %arg6[%c0_25, %c0_26], %37 {strides = array<i32>} : memref<1x128xf32, #tpu.memory_space<vmem>>, vector<1x128xf32>,
      %c0_27 = arith.constant 0 : index
      %c0_28 = arith.constant 0 : index
      %39 = vector.load %arg5[%c0_27, %c0_28] : memref<1x128xf32, #tpu.memory_space<vmem>>, vector<1x128xf32>
      %40 = arith.mulf %25, %37 : vector<1x128xf32>
      %41 = arith.subf %39, %40 : vector<1x128xf32>
      %c0_29 = arith.constant 0 : index
      %c0_30 = arith.constant 0 : index
      %42 = vector.load %arg7[%c0_29, %c0_30] : memref<1x128xf32, #tpu.memory_space<vmem>>, vector<1x128xf32>
      tpu.vector_store %arg7[%c0_29, %c0_30], %41 {strides = array<i32>} : memref<1x128xf32, #tpu.memory_space<vmem>>, vector<1x128xf32>,
    } else {
    }
    return
  }
  func.func @transform_0(%arg0: i32, %arg1: i32, %arg2: i32) -> (i32, i32, i32, i32) {
    %c0_i32 = arith.constant 0 : i32
    %c0_i32_0 = arith.constant 0 : i32
    return %arg1, %arg2, %c0_i32, %arg0 : i32, i32, i32, i32
  }
  func.func @transform_1(%arg0: i32, %arg1: i32, %arg2: i32) -> (i32, i32) {
    %c0_i32 = arith.constant 0 : i32
    %c0_i32_0 = arith.constant 0 : i32
    return %c0_i32, %arg0 : i32, i32
  }
  func.func @transform_2(%arg0: i32, %arg1: i32, %arg2: i32) -> (i32, i32) {
    %c0_i32 = arith.constant 0 : i32
    %c0_i32_0 = arith.constant 0 : i32
    return %c0_i32, %arg0 : i32, i32
  }
  func.func @transform_3(%arg0: i32, %arg1: i32, %arg2: i32) -> (i32, i32) {
    %c0_i32 = arith.constant 0 : i32
    %c0_i32_0 = arith.constant 0 : i32
    return %c0_i32, %arg0 : i32, i32
  }
  func.func @transform_4(%arg0: i32, %arg1: i32, %arg2: i32) -> (i32, i32) {
    %c0_i32 = arith.constant 0 : i32
    %c0_i32_0 = arith.constant 0 : i32
    return %c0_i32, %arg0 : i32, i32
  }
}

module attributes {stable_mosaic.version = 11 : i64} {
  func.func @_affine_relu_kernel(%arg0: i32, %arg1: i32, %arg2: i32, %arg3: memref<1x1x14x128xf32, #tpu.memory_space<vmem>>, %arg4: memref<1x128xf32, #tpu.memory_space<vmem>>, %arg5: memref<1x128xf32, #tpu.memory_space<vmem>>, %arg6: memref<1x1x14x128xbf16, #tpu.memory_space<vmem>>) attributes {dimension_semantics = [#tpu.dimension_semantics<parallel>, #tpu.dimension_semantics<parallel>, #tpu.dimension_semantics<parallel>], iteration_bounds = array<i64: 2, 14, 1>, scalar_prefetch = 0 : i64, scratch_operands = 0 : i64, tpu.core_type = #tpu.core_type<tc>, window_params = [{transform_indices = @transform_0, window_bounds = array<i64: 1, 1, 14, 128>}, {transform_indices = @transform_1, window_bounds = array<i64: 1, 128>}, {transform_indices = @transform_2, window_bounds = array<i64: 1, 128>}, {transform_indices = @transform_3, window_bounds = array<i64: 1, 1, 14, 128>}]} {
    %c0 = arith.constant 0 : index
    %c0_0 = arith.constant 0 : index
    %c0_1 = arith.constant 0 : index
    %c0_2 = arith.constant 0 : index
    %0 = vector.load %arg3[%c0, %c0_0, %c0_1, %c0_2] : memref<1x1x14x128xf32, #tpu.memory_space<vmem>>, vector<1x1x14x128xf32>
    %1 = vector.shape_cast %0 : vector<1x1x14x128xf32> to vector<14x128xf32>
    %c0_3 = arith.constant 0 : index
    %c0_4 = arith.constant 0 : index
    %2 = vector.load %arg4[%c0_3, %c0_4] : memref<1x128xf32, #tpu.memory_space<vmem>>, vector<1x128xf32>
    %3 = vector.broadcast %2 : vector<1x128xf32> to vector<14x128xf32>
    %4 = arith.mulf %1, %3 : vector<14x128xf32>
    %c0_5 = arith.constant 0 : index
    %c0_6 = arith.constant 0 : index
    %5 = vector.load %arg5[%c0_5, %c0_6] : memref<1x128xf32, #tpu.memory_space<vmem>>, vector<1x128xf32>
    %6 = vector.broadcast %5 : vector<1x128xf32> to vector<14x128xf32>
    %7 = arith.addf %4, %6 : vector<14x128xf32>
    %cst = arith.constant 0.000000e+00 : f32
    %8 = vector.broadcast %cst : f32 to vector<14x128xf32>
    %9 = arith.maximumf %7, %8 : vector<14x128xf32>
    %10 = arith.truncf %9 : vector<14x128xf32> to vector<14x128xbf16>
    %c0_7 = arith.constant 0 : index
    %c0_8 = arith.constant 0 : index
    %c0_9 = arith.constant 0 : index
    %c0_10 = arith.constant 0 : index
    %11 = vector.load %arg6[%c0_7, %c0_8, %c0_9, %c0_10] : memref<1x1x14x128xbf16, #tpu.memory_space<vmem>>, vector<1x1x14x128xbf16>
    %12 = vector.shape_cast %11 : vector<1x1x14x128xbf16> to vector<14x128xbf16>
    %13 = vector.shape_cast %10 : vector<14x128xbf16> to vector<1x1x14x128xbf16>
    tpu.vector_store %arg6[%c0_7, %c0_8, %c0_9, %c0_10], %13 {strides = array<i32>} : memref<1x1x14x128xbf16, #tpu.memory_space<vmem>>, vector<1x1x14x128xbf16>,
    return
  }
  func.func @transform_0(%arg0: i32, %arg1: i32, %arg2: i32) -> (i32, i32, i32, i32) {
    %c0_i32 = arith.constant 0 : i32
    %c0_i32_0 = arith.constant 0 : i32
    return %arg0, %arg1, %c0_i32, %arg2 : i32, i32, i32, i32
  }
  func.func @transform_1(%arg0: i32, %arg1: i32, %arg2: i32) -> (i32, i32) {
    %c0_i32 = arith.constant 0 : i32
    %c0_i32_0 = arith.constant 0 : i32
    return %c0_i32, %arg2 : i32, i32
  }
  func.func @transform_2(%arg0: i32, %arg1: i32, %arg2: i32) -> (i32, i32) {
    %c0_i32 = arith.constant 0 : i32
    %c0_i32_0 = arith.constant 0 : i32
    return %c0_i32, %arg2 : i32, i32
  }
  func.func @transform_3(%arg0: i32, %arg1: i32, %arg2: i32) -> (i32, i32, i32, i32) {
    %c0_i32 = arith.constant 0 : i32
    %c0_i32_0 = arith.constant 0 : i32
    return %arg0, %arg1, %c0_i32, %arg2 : i32, i32, i32, i32
  }
}

module attributes {stable_mosaic.version = 11 : i64} {
  func.func @_maxpool_row_kernel(%arg0: i32, %arg1: i32, %arg2: i32, %arg3: memref<1x1x16x128xbf16, #tpu.memory_space<vmem>>, %arg4: memref<1x1x14x128xbf16, #tpu.memory_space<vmem>>, %arg5: memref<14x128xbf16, #tpu.memory_space<vmem>>) attributes {dimension_semantics = [#tpu.dimension_semantics<parallel>, #tpu.dimension_semantics<parallel>, #tpu.dimension_semantics<arbitrary>], iteration_bounds = array<i64: 2, 14, 3>, scalar_prefetch = 0 : i64, scratch_operands = 1 : i64, tpu.core_type = #tpu.core_type<tc>, window_params = [{transform_indices = @transform_0, window_bounds = array<i64: 1, 1, 16, 128>}, {transform_indices = @transform_1, window_bounds = array<i64: 1, 1, 14, 128>}]} {
    %c0_i32 = arith.constant 0 : i32
    %0 = arith.cmpi eq, %arg2, %c0_i32 : i32
    %1 = arith.extui %0 : i1 to i32
    %c0_i32_0 = arith.constant 0 : i32
    %2 = arith.cmpi ne, %1, %c0_i32_0 : i32
    scf.if %2 {
      %cst = arith.constant 0xFF80 : bf16
      %16 = vector.broadcast %cst : bf16 to vector<14x128xbf16>
      %c0_9 = arith.constant 0 : index
      %c0_10 = arith.constant 0 : index
      %17 = vector.load %arg5[%c0_9, %c0_10] : memref<14x128xbf16, #tpu.memory_space<vmem>>, vector<14x128xbf16>
      tpu.vector_store %arg5[%c0_9, %c0_10], %16 {strides = array<i32>} : memref<14x128xbf16, #tpu.memory_space<vmem>>, vector<14x128xbf16>,
    } else {
    }
    %c0 = arith.constant 0 : index
    %c0_1 = arith.constant 0 : index
    %c0_2 = arith.constant 0 : index
    %c0_3 = arith.constant 0 : index
    %3 = vector.load %arg3[%c0, %c0_1, %c0_2, %c0_3] : memref<1x1x16x128xbf16, #tpu.memory_space<vmem>>, vector<1x1x16x128xbf16>
    %4 = vector.shape_cast %3 : vector<1x1x16x128xbf16> to vector<16x128xbf16>
    %5 = vector.extract_strided_slice %4 {offsets = [0, 0], sizes = [14, 128], strides = [1, 1]} : vector<16x128xbf16> to vector<14x128xbf16>
    %6 = vector.extract_strided_slice %4 {offsets = [1, 0], sizes = [14, 128], strides = [1, 1]} : vector<16x128xbf16> to vector<14x128xbf16>
    %7 = arith.maximumf %5, %6 : vector<14x128xbf16>
    %8 = vector.extract_strided_slice %4 {offsets = [2, 0], sizes = [14, 128], strides = [1, 1]} : vector<16x128xbf16> to vector<14x128xbf16>
    %9 = arith.maximumf %7, %8 : vector<14x128xbf16>
    %c0_4 = arith.constant 0 : index
    %c0_5 = arith.constant 0 : index
    %10 = vector.load %arg5[%c0_4, %c0_5] : memref<14x128xbf16, #tpu.memory_space<vmem>>, vector<14x128xbf16>
    %11 = arith.maximumf %10, %9 : vector<14x128xbf16>
    %c0_6 = arith.constant 0 : index
    %c0_7 = arith.constant 0 : index
    %12 = vector.load %arg5[%c0_6, %c0_7] : memref<14x128xbf16, #tpu.memory_space<vmem>>, vector<14x128xbf16>
    tpu.vector_store %arg5[%c0_6, %c0_7], %11 {strides = array<i32>} : memref<14x128xbf16, #tpu.memory_space<vmem>>, vector<14x128xbf16>,
    %c2_i32 = arith.constant 2 : i32
    %13 = arith.cmpi eq, %arg2, %c2_i32 : i32
    %14 = arith.extui %13 : i1 to i32
    %c0_i32_8 = arith.constant 0 : i32
    %15 = arith.cmpi ne, %14, %c0_i32_8 : i32
    scf.if %15 {
      %c0_9 = arith.constant 0 : index
      %c0_10 = arith.constant 0 : index
      %16 = vector.load %arg5[%c0_9, %c0_10] : memref<14x128xbf16, #tpu.memory_space<vmem>>, vector<14x128xbf16>
      %c0_11 = arith.constant 0 : index
      %c0_12 = arith.constant 0 : index
      %c0_13 = arith.constant 0 : index
      %c0_14 = arith.constant 0 : index
      %17 = vector.load %arg4[%c0_11, %c0_12, %c0_13, %c0_14] : memref<1x1x14x128xbf16, #tpu.memory_space<vmem>>, vector<1x1x14x128xbf16>
      %18 = vector.shape_cast %17 : vector<1x1x14x128xbf16> to vector<14x128xbf16>
      %19 = vector.shape_cast %16 : vector<14x128xbf16> to vector<1x1x14x128xbf16>
      tpu.vector_store %arg4[%c0_11, %c0_12, %c0_13, %c0_14], %19 {strides = array<i32>} : memref<1x1x14x128xbf16, #tpu.memory_space<vmem>>, vector<1x1x14x128xbf16>,
    } else {
    }
    return
  }
  func.func @transform_0(%arg0: i32, %arg1: i32, %arg2: i32) -> (i32, i32, i32, i32) {
    %0 = arith.addi %arg1, %arg2 : i32
    %c0_i32 = arith.constant 0 : i32
    %c0_i32_0 = arith.constant 0 : i32
    %c0_i32_1 = arith.constant 0 : i32
    return %arg0, %0, %c0_i32, %c0_i32_0 : i32, i32, i32, i32
  }
  func.func @transform_1(%arg0: i32, %arg1: i32, %arg2: i32) -> (i32, i32, i32, i32) {
    %c0_i32 = arith.constant 0 : i32
    %c0_i32_0 = arith.constant 0 : i32
    %c0_i32_1 = arith.constant 0 : i32
    return %arg0, %arg1, %c0_i32, %c0_i32_0 : i32, i32, i32, i32
  }
}

module attributes {stable_mosaic.version = 11 : i64} {
  func.func @_conv_row_kernel(%arg0: i32, %arg1: i32, %arg2: i32, %arg3: i32, %arg4: memref<1x1x14x256xbf16, #tpu.memory_space<vmem>>, %arg5: memref<1x1x256x128xbf16, #tpu.memory_space<vmem>>, %arg6: memref<1x1x14x128xf32, #tpu.memory_space<vmem>>, %arg7: memref<14x128xf32, #tpu.memory_space<vmem>>) attributes {dimension_semantics = [#tpu.dimension_semantics<parallel>, #tpu.dimension_semantics<parallel>, #tpu.dimension_semantics<parallel>, #tpu.dimension_semantics<arbitrary>], iteration_bounds = array<i64: 2, 14, 1, 1>, scalar_prefetch = 0 : i64, scratch_operands = 1 : i64, tpu.core_type = #tpu.core_type<tc>, window_params = [{transform_indices = @transform_0, window_bounds = array<i64: 1, 1, 14, 256>}, {transform_indices = @transform_1, window_bounds = array<i64: 1, 1, 256, 128>}, {transform_indices = @transform_2, window_bounds = array<i64: 1, 1, 14, 128>}]} {
    %c0_i32 = arith.constant 0 : i32
    %0 = arith.cmpi eq, %arg3, %c0_i32 : i32
    %1 = arith.extui %0 : i1 to i32
    %c0_i32_0 = arith.constant 0 : i32
    %2 = arith.cmpi ne, %1, %c0_i32_0 : i32
    scf.if %2 {
      %cst_14 = arith.constant 0.000000e+00 : f32
      %14 = vector.broadcast %cst_14 : f32 to vector<14x128xf32>
      %c0_15 = arith.constant 0 : index
      %c0_16 = arith.constant 0 : index
      %15 = vector.load %arg7[%c0_15, %c0_16] : memref<14x128xf32, #tpu.memory_space<vmem>>, vector<14x128xf32>
      tpu.vector_store %arg7[%c0_15, %c0_16], %14 {strides = array<i32>} : memref<14x128xf32, #tpu.memory_space<vmem>>, vector<14x128xf32>,
    } else {
    }
    %c0 = arith.constant 0 : index
    %c0_1 = arith.constant 0 : index
    %c0_2 = arith.constant 0 : index
    %c0_3 = arith.constant 0 : index
    %3 = vector.load %arg4[%c0, %c0_1, %c0_2, %c0_3] : memref<1x1x14x256xbf16, #tpu.memory_space<vmem>>, vector<1x1x14x256xbf16>
    %4 = vector.shape_cast %3 : vector<1x1x14x256xbf16> to vector<14x256xbf16>
    %c0_4 = arith.constant 0 : index
    %c0_5 = arith.constant 0 : index
    %5 = vector.load %arg7[%c0_4, %c0_5] : memref<14x128xf32, #tpu.memory_space<vmem>>, vector<14x128xf32>
    %c0_6 = arith.constant 0 : index
    %c0_7 = arith.constant 0 : index
    %c0_8 = arith.constant 0 : index
    %c0_9 = arith.constant 0 : index
    %6 = vector.load %arg5[%c0_6, %c0_7, %c0_8, %c0_9] : memref<1x1x256x128xbf16, #tpu.memory_space<vmem>>, vector<1x1x256x128xbf16>
    %7 = vector.shape_cast %6 : vector<1x1x256x128xbf16> to vector<256x128xbf16>
    %cst = arith.constant dense<0.000000e+00> : vector<14x128xf32>
    %8 = tpu.matmul %4, %7, %cst {dimension_numbers = #tpu.dot_dimension_numbers<[1], [0], [0], [1], [0, 0, 1, 1], [], []>} : vector<14x256xbf16>, vector<256x128xbf16>, vector<14x128xf32> -> vector<14x128xf32>
    %9 = arith.addf %5, %8 : vector<14x128xf32>
    %c0_10 = arith.constant 0 : index
    %c0_11 = arith.constant 0 : index
    %10 = vector.load %arg7[%c0_10, %c0_11] : memref<14x128xf32, #tpu.memory_space<vmem>>, vector<14x128xf32>
    tpu.vector_store %arg7[%c0_10, %c0_11], %9 {strides = array<i32>} : memref<14x128xf32, #tpu.memory_space<vmem>>, vector<14x128xf32>,
    %c0_i32_12 = arith.constant 0 : i32
    %11 = arith.cmpi eq, %arg3, %c0_i32_12 : i32
    %12 = arith.extui %11 : i1 to i32
    %c0_i32_13 = arith.constant 0 : i32
    %13 = arith.cmpi ne, %12, %c0_i32_13 : i32
    scf.if %13 {
      %c0_14 = arith.constant 0 : index
      %c0_15 = arith.constant 0 : index
      %14 = vector.load %arg7[%c0_14, %c0_15] : memref<14x128xf32, #tpu.memory_space<vmem>>, vector<14x128xf32>
      %c0_16 = arith.constant 0 : index
      %c0_17 = arith.constant 0 : index
      %c0_18 = arith.constant 0 : index
      %c0_19 = arith.constant 0 : index
      %15 = vector.load %arg6[%c0_16, %c0_17, %c0_18, %c0_19] : memref<1x1x14x128xf32, #tpu.memory_space<vmem>>, vector<1x1x14x128xf32>
      %16 = vector.shape_cast %15 : vector<1x1x14x128xf32> to vector<14x128xf32>
      %17 = vector.shape_cast %14 : vector<14x128xf32> to vector<1x1x14x128xf32>
      tpu.vector_store %arg6[%c0_16, %c0_17, %c0_18, %c0_19], %17 {strides = array<i32>} : memref<1x1x14x128xf32, #tpu.memory_space<vmem>>, vector<1x1x14x128xf32>,
    } else {
    }
    return
  }
  func.func @transform_0(%arg0: i32, %arg1: i32, %arg2: i32, %arg3: i32) -> (i32, i32, i32, i32) {
    %0 = arith.addi %arg1, %arg3 : i32
    %c0_i32 = arith.constant 0 : i32
    %c0_i32_0 = arith.constant 0 : i32
    %c0_i32_1 = arith.constant 0 : i32
    return %arg0, %0, %c0_i32, %c0_i32_0 : i32, i32, i32, i32
  }
  func.func @transform_1(%arg0: i32, %arg1: i32, %arg2: i32, %arg3: i32) -> (i32, i32, i32, i32) {
    %c0_i32 = arith.constant 0 : i32
    %c0_i32_0 = arith.constant 0 : i32
    %c0_i32_1 = arith.constant 0 : i32
    return %arg3, %c0_i32, %c0_i32_0, %arg2 : i32, i32, i32, i32
  }
  func.func @transform_2(%arg0: i32, %arg1: i32, %arg2: i32, %arg3: i32) -> (i32, i32, i32, i32) {
    %c0_i32 = arith.constant 0 : i32
    %c0_i32_0 = arith.constant 0 : i32
    return %arg0, %arg1, %c0_i32, %arg2 : i32, i32, i32, i32
  }
}

module attributes {stable_mosaic.version = 11 : i64} {
  func.func @_conv_row_kernel(%arg0: i32, %arg1: i32, %arg2: i32, %arg3: i32, %arg4: memref<1x1x14x128xbf16, #tpu.memory_space<vmem>>, %arg5: memref<1x1x128x128xbf16, #tpu.memory_space<vmem>>, %arg6: memref<1x1x14x128xf32, #tpu.memory_space<vmem>>, %arg7: memref<14x128xf32, #tpu.memory_space<vmem>>) attributes {dimension_semantics = [#tpu.dimension_semantics<parallel>, #tpu.dimension_semantics<parallel>, #tpu.dimension_semantics<parallel>, #tpu.dimension_semantics<arbitrary>], iteration_bounds = array<i64: 2, 14, 1, 7>, scalar_prefetch = 0 : i64, scratch_operands = 1 : i64, tpu.core_type = #tpu.core_type<tc>, window_params = [{transform_indices = @transform_0, window_bounds = array<i64: 1, 1, 14, 128>}, {transform_indices = @transform_1, window_bounds = array<i64: 1, 1, 128, 128>}, {transform_indices = @transform_2, window_bounds = array<i64: 1, 1, 14, 128>}]} {
    %c0_i32 = arith.constant 0 : i32
    %0 = arith.cmpi eq, %arg3, %c0_i32 : i32
    %1 = arith.extui %0 : i1 to i32
    %c0_i32_0 = arith.constant 0 : i32
    %2 = arith.cmpi ne, %1, %c0_i32_0 : i32
    scf.if %2 {
      %cst_13 = arith.constant 0.000000e+00 : f32
      %14 = vector.broadcast %cst_13 : f32 to vector<14x128xf32>
      %c0_14 = arith.constant 0 : index
      %c0_15 = arith.constant 0 : index
      %15 = vector.load %arg7[%c0_14, %c0_15] : memref<14x128xf32, #tpu.memory_space<vmem>>, vector<14x128xf32>
      tpu.vector_store %arg7[%c0_14, %c0_15], %14 {strides = array<i32>} : memref<14x128xf32, #tpu.memory_space<vmem>>, vector<14x128xf32>,
    } else {
    }
    %c0 = arith.constant 0 : index
    %c0_1 = arith.constant 0 : index
    %c0_2 = arith.constant 0 : index
    %c0_3 = arith.constant 0 : index
    %3 = vector.load %arg4[%c0, %c0_1, %c0_2, %c0_3] : memref<1x1x14x128xbf16, #tpu.memory_space<vmem>>, vector<1x1x14x128xbf16>
    %4 = vector.shape_cast %3 : vector<1x1x14x128xbf16> to vector<14x128xbf16>
    %c0_4 = arith.constant 0 : index
    %c0_5 = arith.constant 0 : index
    %5 = vector.load %arg7[%c0_4, %c0_5] : memref<14x128xf32, #tpu.memory_space<vmem>>, vector<14x128xf32>
    %c0_6 = arith.constant 0 : index
    %c0_7 = arith.constant 0 : index
    %c0_8 = arith.constant 0 : index
    %c0_9 = arith.constant 0 : index
    %6 = vector.load %arg5[%c0_6, %c0_7, %c0_8, %c0_9] : memref<1x1x128x128xbf16, #tpu.memory_space<vmem>>, vector<1x1x128x128xbf16>
    %7 = vector.shape_cast %6 : vector<1x1x128x128xbf16> to vector<128x128xbf16>
    %cst = arith.constant dense<0.000000e+00> : vector<14x128xf32>
    %8 = tpu.matmul %4, %7, %cst {dimension_numbers = #tpu.dot_dimension_numbers<[1], [0], [0], [1], [0, 0, 1, 1], [], []>} : vector<14x128xbf16>, vector<128x128xbf16>, vector<14x128xf32> -> vector<14x128xf32>
    %9 = arith.addf %5, %8 : vector<14x128xf32>
    %c0_10 = arith.constant 0 : index
    %c0_11 = arith.constant 0 : index
    %10 = vector.load %arg7[%c0_10, %c0_11] : memref<14x128xf32, #tpu.memory_space<vmem>>, vector<14x128xf32>
    tpu.vector_store %arg7[%c0_10, %c0_11], %9 {strides = array<i32>} : memref<14x128xf32, #tpu.memory_space<vmem>>, vector<14x128xf32>,
    %c6_i32 = arith.constant 6 : i32
    %11 = arith.cmpi eq, %arg3, %c6_i32 : i32
    %12 = arith.extui %11 : i1 to i32
    %c0_i32_12 = arith.constant 0 : i32
    %13 = arith.cmpi ne, %12, %c0_i32_12 : i32
    scf.if %13 {
      %c0_13 = arith.constant 0 : index
      %c0_14 = arith.constant 0 : index
      %14 = vector.load %arg7[%c0_13, %c0_14] : memref<14x128xf32, #tpu.memory_space<vmem>>, vector<14x128xf32>
      %c0_15 = arith.constant 0 : index
      %c0_16 = arith.constant 0 : index
      %c0_17 = arith.constant 0 : index
      %c0_18 = arith.constant 0 : index
      %15 = vector.load %arg6[%c0_15, %c0_16, %c0_17, %c0_18] : memref<1x1x14x128xf32, #tpu.memory_space<vmem>>, vector<1x1x14x128xf32>
      %16 = vector.shape_cast %15 : vector<1x1x14x128xf32> to vector<14x128xf32>
      %17 = vector.shape_cast %14 : vector<14x128xf32> to vector<1x1x14x128xf32>
      tpu.vector_store %arg6[%c0_15, %c0_16, %c0_17, %c0_18], %17 {strides = array<i32>} : memref<1x1x14x128xf32, #tpu.memory_space<vmem>>, vector<1x1x14x128xf32>,
    } else {
    }
    return
  }
  func.func @transform_0(%arg0: i32, %arg1: i32, %arg2: i32, %arg3: i32) -> (i32, i32, i32, i32) {
    %0 = arith.addi %arg1, %arg3 : i32
    %c0_i32 = arith.constant 0 : i32
    %c0_i32_0 = arith.constant 0 : i32
    %c0_i32_1 = arith.constant 0 : i32
    return %arg0, %0, %c0_i32, %c0_i32_0 : i32, i32, i32, i32
  }
  func.func @transform_1(%arg0: i32, %arg1: i32, %arg2: i32, %arg3: i32) -> (i32, i32, i32, i32) {
    %c0_i32 = arith.constant 0 : i32
    %c0_i32_0 = arith.constant 0 : i32
    %c0_i32_1 = arith.constant 0 : i32
    return %arg3, %c0_i32, %c0_i32_0, %arg2 : i32, i32, i32, i32
  }
  func.func @transform_2(%arg0: i32, %arg1: i32, %arg2: i32, %arg3: i32) -> (i32, i32, i32, i32) {
    %c0_i32 = arith.constant 0 : i32
    %c0_i32_0 = arith.constant 0 : i32
    return %arg0, %arg1, %c0_i32, %arg2 : i32, i32, i32, i32
  }
}

module attributes {stable_mosaic.version = 11 : i64} {
  func.func @_conv_row_kernel(%arg0: i32, %arg1: i32, %arg2: i32, %arg3: i32, %arg4: memref<1x1x20x128xbf16, #tpu.memory_space<vmem>>, %arg5: memref<1x7x128x128xbf16, #tpu.memory_space<vmem>>, %arg6: memref<1x1x14x128xf32, #tpu.memory_space<vmem>>, %arg7: memref<14x128xf32, #tpu.memory_space<vmem>>) attributes {dimension_semantics = [#tpu.dimension_semantics<parallel>, #tpu.dimension_semantics<parallel>, #tpu.dimension_semantics<parallel>, #tpu.dimension_semantics<arbitrary>], iteration_bounds = array<i64: 2, 14, 1, 1>, scalar_prefetch = 0 : i64, scratch_operands = 1 : i64, tpu.core_type = #tpu.core_type<tc>, window_params = [{transform_indices = @transform_0, window_bounds = array<i64: 1, 1, 20, 128>}, {transform_indices = @transform_1, window_bounds = array<i64: 1, 7, 128, 128>}, {transform_indices = @transform_2, window_bounds = array<i64: 1, 1, 14, 128>}]} {
    %c0_i32 = arith.constant 0 : i32
    %0 = arith.cmpi eq, %arg3, %c0_i32 : i32
    %1 = arith.extui %0 : i1 to i32
    %c0_i32_0 = arith.constant 0 : i32
    %2 = arith.cmpi ne, %1, %c0_i32_0 : i32
    scf.if %2 {
      %cst_38 = arith.constant 0.000000e+00 : f32
      %45 = vector.broadcast %cst_38 : f32 to vector<14x128xf32>
      %c0_39 = arith.constant 0 : index
      %c0_40 = arith.constant 0 : index
      %46 = vector.load %arg7[%c0_39, %c0_40] : memref<14x128xf32, #tpu.memory_space<vmem>>, vector<14x128xf32>
      tpu.vector_store %arg7[%c0_39, %c0_40], %45 {strides = array<i32>} : memref<14x128xf32, #tpu.memory_space<vmem>>, vector<14x128xf32>,
    } else {
    }
    %c0 = arith.constant 0 : index
    %c0_1 = arith.constant 0 : index
    %c0_2 = arith.constant 0 : index
    %c0_3 = arith.constant 0 : index
    %3 = vector.load %arg4[%c0, %c0_1, %c0_2, %c0_3] : memref<1x1x20x128xbf16, #tpu.memory_space<vmem>>, vector<1x1x20x128xbf16>
    %4 = vector.shape_cast %3 : vector<1x1x20x128xbf16> to vector<20x128xbf16>
    %c0_4 = arith.constant 0 : index
    %c0_5 = arith.constant 0 : index
    %5 = vector.load %arg7[%c0_4, %c0_5] : memref<14x128xf32, #tpu.memory_space<vmem>>, vector<14x128xf32>
    %6 = vector.extract_strided_slice %4 {offsets = [0, 0], sizes = [14, 128], strides = [1, 1]} : vector<20x128xbf16> to vector<14x128xbf16>
    %c0_6 = arith.constant 0 : index
    %c0_7 = arith.constant 0 : index
    %c0_8 = arith.constant 0 : index
    %c0_9 = arith.constant 0 : index
    %7 = vector.load %arg5[%c0_6, %c0_7, %c0_8, %c0_9] : memref<1x7x128x128xbf16, #tpu.memory_space<vmem>>, vector<1x1x128x128xbf16>
    %8 = vector.shape_cast %7 : vector<1x1x128x128xbf16> to vector<128x128xbf16>
    %cst = arith.constant dense<0.000000e+00> : vector<14x128xf32>
    %9 = tpu.matmul %6, %8, %cst {dimension_numbers = #tpu.dot_dimension_numbers<[1], [0], [0], [1], [0, 0, 1, 1], [], []>} : vector<14x128xbf16>, vector<128x128xbf16>, vector<14x128xf32> -> vector<14x128xf32>
    %10 = arith.addf %5, %9 : vector<14x128xf32>
    %11 = vector.extract_strided_slice %4 {offsets = [1, 0], sizes = [14, 128], strides = [1, 1]} : vector<20x128xbf16> to vector<14x128xbf16>
    %c0_10 = arith.constant 0 : index
    %c1 = arith.constant 1 : index
    %c0_11 = arith.constant 0 : index
    %c0_12 = arith.constant 0 : index
    %12 = vector.load %arg5[%c0_10, %c1, %c0_11, %c0_12] : memref<1x7x128x128xbf16, #tpu.memory_space<vmem>>, vector<1x1x128x128xbf16>
    %13 = vector.shape_cast %12 : vector<1x1x128x128xbf16> to vector<128x128xbf16>
    %cst_13 = arith.constant dense<0.000000e+00> : vector<14x128xf32>
    %14 = tpu.matmul %11, %13, %cst_13 {dimension_numbers = #tpu.dot_dimension_numbers<[1], [0], [0], [1], [0, 0, 1, 1], [], []>} : vector<14x128xbf16>, vector<128x128xbf16>, vector<14x128xf32> -> vector<14x128xf32>
    %15 = arith.addf %10, %14 : vector<14x128xf32>
    %16 = vector.extract_strided_slice %4 {offsets = [2, 0], sizes = [14, 128], strides = [1, 1]} : vector<20x128xbf16> to vector<14x128xbf16>
    %c0_14 = arith.constant 0 : index
    %c2 = arith.constant 2 : index
    %c0_15 = arith.constant 0 : index
    %c0_16 = arith.constant 0 : index
    %17 = vector.load %arg5[%c0_14, %c2, %c0_15, %c0_16] : memref<1x7x128x128xbf16, #tpu.memory_space<vmem>>, vector<1x1x128x128xbf16>
    %18 = vector.shape_cast %17 : vector<1x1x128x128xbf16> to vector<128x128xbf16>
    %cst_17 = arith.constant dense<0.000000e+00> : vector<14x128xf32>
    %19 = tpu.matmul %16, %18, %cst_17 {dimension_numbers = #tpu.dot_dimension_numbers<[1], [0], [0], [1], [0, 0, 1, 1], [], []>} : vector<14x128xbf16>, vector<128x128xbf16>, vector<14x128xf32> -> vector<14x128xf32>
    %20 = arith.addf %15, %19 : vector<14x128xf32>
    %21 = vector.extract_strided_slice %4 {offsets = [3, 0], sizes = [14, 128], strides = [1, 1]} : vector<20x128xbf16> to vector<14x128xbf16>
    %c0_18 = arith.constant 0 : index
    %c3 = arith.constant 3 : index
    %c0_19 = arith.constant 0 : index
    %c0_20 = arith.constant 0 : index
    %22 = vector.load %arg5[%c0_18, %c3, %c0_19, %c0_20] : memref<1x7x128x128xbf16, #tpu.memory_space<vmem>>, vector<1x1x128x128xbf16>
    %23 = vector.shape_cast %22 : vector<1x1x128x128xbf16> to vector<128x128xbf16>
    %cst_21 = arith.constant dense<0.000000e+00> : vector<14x128xf32>
    %24 = tpu.matmul %21, %23, %cst_21 {dimension_numbers = #tpu.dot_dimension_numbers<[1], [0], [0], [1], [0, 0, 1, 1], [], []>} : vector<14x128xbf16>, vector<128x128xbf16>, vector<14x128xf32> -> vector<14x128xf32>
    %25 = arith.addf %20, %24 : vector<14x128xf32>
    %26 = vector.extract_strided_slice %4 {offsets = [4, 0], sizes = [14, 128], strides = [1, 1]} : vector<20x128xbf16> to vector<14x128xbf16>
    %c0_22 = arith.constant 0 : index
    %c4 = arith.constant 4 : index
    %c0_23 = arith.constant 0 : index
    %c0_24 = arith.constant 0 : index
    %27 = vector.load %arg5[%c0_22, %c4, %c0_23, %c0_24] : memref<1x7x128x128xbf16, #tpu.memory_space<vmem>>, vector<1x1x128x128xbf16>
    %28 = vector.shape_cast %27 : vector<1x1x128x128xbf16> to vector<128x128xbf16>
    %cst_25 = arith.constant dense<0.000000e+00> : vector<14x128xf32>
    %29 = tpu.matmul %26, %28, %cst_25 {dimension_numbers = #tpu.dot_dimension_numbers<[1], [0], [0], [1], [0, 0, 1, 1], [], []>} : vector<14x128xbf16>, vector<128x128xbf16>, vector<14x128xf32> -> vector<14x128xf32>
    %30 = arith.addf %25, %29 : vector<14x128xf32>
    %31 = vector.extract_strided_slice %4 {offsets = [5, 0], sizes = [14, 128], strides = [1, 1]} : vector<20x128xbf16> to vector<14x128xbf16>
    %c0_26 = arith.constant 0 : index
    %c5 = arith.constant 5 : index
    %c0_27 = arith.constant 0 : index
    %c0_28 = arith.constant 0 : index
    %32 = vector.load %arg5[%c0_26, %c5, %c0_27, %c0_28] : memref<1x7x128x128xbf16, #tpu.memory_space<vmem>>, vector<1x1x128x128xbf16>
    %33 = vector.shape_cast %32 : vector<1x1x128x128xbf16> to vector<128x128xbf16>
    %cst_29 = arith.constant dense<0.000000e+00> : vector<14x128xf32>
    %34 = tpu.matmul %31, %33, %cst_29 {dimension_numbers = #tpu.dot_dimension_numbers<[1], [0], [0], [1], [0, 0, 1, 1], [], []>} : vector<14x128xbf16>, vector<128x128xbf16>, vector<14x128xf32> -> vector<14x128xf32>
    %35 = arith.addf %30, %34 : vector<14x128xf32>
    %36 = vector.extract_strided_slice %4 {offsets = [6, 0], sizes = [14, 128], strides = [1, 1]} : vector<20x128xbf16> to vector<14x128xbf16>
    %c0_30 = arith.constant 0 : index
    %c6 = arith.constant 6 : index
    %c0_31 = arith.constant 0 : index
    %c0_32 = arith.constant 0 : index
    %37 = vector.load %arg5[%c0_30, %c6, %c0_31, %c0_32] : memref<1x7x128x128xbf16, #tpu.memory_space<vmem>>, vector<1x1x128x128xbf16>
    %38 = vector.shape_cast %37 : vector<1x1x128x128xbf16> to vector<128x128xbf16>
    %cst_33 = arith.constant dense<0.000000e+00> : vector<14x128xf32>
    %39 = tpu.matmul %36, %38, %cst_33 {dimension_numbers = #tpu.dot_dimension_numbers<[1], [0], [0], [1], [0, 0, 1, 1], [], []>} : vector<14x128xbf16>, vector<128x128xbf16>, vector<14x128xf32> -> vector<14x128xf32>
    %40 = arith.addf %35, %39 : vector<14x128xf32>
    %c0_34 = arith.constant 0 : index
    %c0_35 = arith.constant 0 : index
    %41 = vector.load %arg7[%c0_34, %c0_35] : memref<14x128xf32, #tpu.memory_space<vmem>>, vector<14x128xf32>
    tpu.vector_store %arg7[%c0_34, %c0_35], %40 {strides = array<i32>} : memref<14x128xf32, #tpu.memory_space<vmem>>, vector<14x128xf32>,
    %c0_i32_36 = arith.constant 0 : i32
    %42 = arith.cmpi eq, %arg3, %c0_i32_36 : i32
    %43 = arith.extui %42 : i1 to i32
    %c0_i32_37 = arith.constant 0 : i32
    %44 = arith.cmpi ne, %43, %c0_i32_37 : i32
    scf.if %44 {
      %c0_38 = arith.constant 0 : index
      %c0_39 = arith.constant 0 : index
      %45 = vector.load %arg7[%c0_38, %c0_39] : memref<14x128xf32, #tpu.memory_space<vmem>>, vector<14x128xf32>
      %c0_40 = arith.constant 0 : index
      %c0_41 = arith.constant 0 : index
      %c0_42 = arith.constant 0 : index
      %c0_43 = arith.constant 0 : index
      %46 = vector.load %arg6[%c0_40, %c0_41, %c0_42, %c0_43] : memref<1x1x14x128xf32, #tpu.memory_space<vmem>>, vector<1x1x14x128xf32>
      %47 = vector.shape_cast %46 : vector<1x1x14x128xf32> to vector<14x128xf32>
      %48 = vector.shape_cast %45 : vector<14x128xf32> to vector<1x1x14x128xf32>
      tpu.vector_store %arg6[%c0_40, %c0_41, %c0_42, %c0_43], %48 {strides = array<i32>} : memref<1x1x14x128xf32, #tpu.memory_space<vmem>>, vector<1x1x14x128xf32>,
    } else {
    }
    return
  }
  func.func @transform_0(%arg0: i32, %arg1: i32, %arg2: i32, %arg3: i32) -> (i32, i32, i32, i32) {
    %0 = arith.addi %arg1, %arg3 : i32
    %c0_i32 = arith.constant 0 : i32
    %c0_i32_0 = arith.constant 0 : i32
    %c0_i32_1 = arith.constant 0 : i32
    return %arg0, %0, %c0_i32, %c0_i32_0 : i32, i32, i32, i32
  }
  func.func @transform_1(%arg0: i32, %arg1: i32, %arg2: i32, %arg3: i32) -> (i32, i32, i32, i32) {
    %c0_i32 = arith.constant 0 : i32
    %c0_i32_0 = arith.constant 0 : i32
    %c0_i32_1 = arith.constant 0 : i32
    return %arg3, %c0_i32, %c0_i32_0, %arg2 : i32, i32, i32, i32
  }
  func.func @transform_2(%arg0: i32, %arg1: i32, %arg2: i32, %arg3: i32) -> (i32, i32, i32, i32) {
    %c0_i32 = arith.constant 0 : i32
    %c0_i32_0 = arith.constant 0 : i32
    return %arg0, %arg1, %c0_i32, %arg2 : i32, i32, i32, i32
  }
}

module attributes {stable_mosaic.version = 11 : i64} {
  func.func @_conv_row_kernel(%arg0: i32, %arg1: i32, %arg2: i32, %arg3: i32, %arg4: memref<1x1x16x256xbf16, #tpu.memory_space<vmem>>, %arg5: memref<1x3x256x128xbf16, #tpu.memory_space<vmem>>, %arg6: memref<1x1x14x128xf32, #tpu.memory_space<vmem>>, %arg7: memref<14x128xf32, #tpu.memory_space<vmem>>) attributes {dimension_semantics = [#tpu.dimension_semantics<parallel>, #tpu.dimension_semantics<parallel>, #tpu.dimension_semantics<parallel>, #tpu.dimension_semantics<arbitrary>], iteration_bounds = array<i64: 2, 14, 2, 3>, scalar_prefetch = 0 : i64, scratch_operands = 1 : i64, tpu.core_type = #tpu.core_type<tc>, window_params = [{transform_indices = @transform_0, window_bounds = array<i64: 1, 1, 16, 256>}, {transform_indices = @transform_1, window_bounds = array<i64: 1, 3, 256, 128>}, {transform_indices = @transform_2, window_bounds = array<i64: 1, 1, 14, 128>}]} {
    %c0_i32 = arith.constant 0 : i32
    %0 = arith.cmpi eq, %arg3, %c0_i32 : i32
    %1 = arith.extui %0 : i1 to i32
    %c0_i32_0 = arith.constant 0 : i32
    %2 = arith.cmpi ne, %1, %c0_i32_0 : i32
    scf.if %2 {
      %cst_21 = arith.constant 0.000000e+00 : f32
      %25 = vector.broadcast %cst_21 : f32 to vector<14x128xf32>
      %c0_22 = arith.constant 0 : index
      %c0_23 = arith.constant 0 : index
      %26 = vector.load %arg7[%c0_22, %c0_23] : memref<14x128xf32, #tpu.memory_space<vmem>>, vector<14x128xf32>
      tpu.vector_store %arg7[%c0_22, %c0_23], %25 {strides = array<i32>} : memref<14x128xf32, #tpu.memory_space<vmem>>, vector<14x128xf32>,
    } else {
    }
    %c0 = arith.constant 0 : index
    %c0_1 = arith.constant 0 : index
    %c0_2 = arith.constant 0 : index
    %c0_3 = arith.constant 0 : index
    %3 = vector.load %arg4[%c0, %c0_1, %c0_2, %c0_3] : memref<1x1x16x256xbf16, #tpu.memory_space<vmem>>, vector<1x1x16x256xbf16>
    %4 = vector.shape_cast %3 : vector<1x1x16x256xbf16> to vector<16x256xbf16>
    %c0_4 = arith.constant 0 : index
    %c0_5 = arith.constant 0 : index
    %5 = vector.load %arg7[%c0_4, %c0_5] : memref<14x128xf32, #tpu.memory_space<vmem>>, vector<14x128xf32>
    %6 = vector.extract_strided_slice %4 {offsets = [0, 0], sizes = [14, 256], strides = [1, 1]} : vector<16x256xbf16> to vector<14x256xbf16>
    %c0_6 = arith.constant 0 : index
    %c0_7 = arith.constant 0 : index
    %c0_8 = arith.constant 0 : index
    %c0_9 = arith.constant 0 : index
    %7 = vector.load %arg5[%c0_6, %c0_7, %c0_8, %c0_9] : memref<1x3x256x128xbf16, #tpu.memory_space<vmem>>, vector<1x1x256x128xbf16>
    %8 = vector.shape_cast %7 : vector<1x1x256x128xbf16> to vector<256x128xbf16>
    %cst = arith.constant dense<0.000000e+00> : vector<14x128xf32>
    %9 = tpu.matmul %6, %8, %cst {dimension_numbers = #tpu.dot_dimension_numbers<[1], [0], [0], [1], [0, 0, 1, 1], [], []>} : vector<14x256xbf16>, vector<256x128xbf16>, vector<14x128xf32> -> vector<14x128xf32>
    %10 = arith.addf %5, %9 : vector<14x128xf32>
    %11 = vector.extract_strided_slice %4 {offsets = [1, 0], sizes = [14, 256], strides = [1, 1]} : vector<16x256xbf16> to vector<14x256xbf16>
    %c0_10 = arith.constant 0 : index
    %c1 = arith.constant 1 : index
    %c0_11 = arith.constant 0 : index
    %c0_12 = arith.constant 0 : index
    %12 = vector.load %arg5[%c0_10, %c1, %c0_11, %c0_12] : memref<1x3x256x128xbf16, #tpu.memory_space<vmem>>, vector<1x1x256x128xbf16>
    %13 = vector.shape_cast %12 : vector<1x1x256x128xbf16> to vector<256x128xbf16>
    %cst_13 = arith.constant dense<0.000000e+00> : vector<14x128xf32>
    %14 = tpu.matmul %11, %13, %cst_13 {dimension_numbers = #tpu.dot_dimension_numbers<[1], [0], [0], [1], [0, 0, 1, 1], [], []>} : vector<14x256xbf16>, vector<256x128xbf16>, vector<14x128xf32> -> vector<14x128xf32>
    %15 = arith.addf %10, %14 : vector<14x128xf32>
    %16 = vector.extract_strided_slice %4 {offsets = [2, 0], sizes = [14, 256], strides = [1, 1]} : vector<16x256xbf16> to vector<14x256xbf16>
    %c0_14 = arith.constant 0 : index
    %c2 = arith.constant 2 : index
    %c0_15 = arith.constant 0 : index
    %c0_16 = arith.constant 0 : index
    %17 = vector.load %arg5[%c0_14, %c2, %c0_15, %c0_16] : memref<1x3x256x128xbf16, #tpu.memory_space<vmem>>, vector<1x1x256x128xbf16>
    %18 = vector.shape_cast %17 : vector<1x1x256x128xbf16> to vector<256x128xbf16>
    %cst_17 = arith.constant dense<0.000000e+00> : vector<14x128xf32>
    %19 = tpu.matmul %16, %18, %cst_17 {dimension_numbers = #tpu.dot_dimension_numbers<[1], [0], [0], [1], [0, 0, 1, 1], [], []>} : vector<14x256xbf16>, vector<256x128xbf16>, vector<14x128xf32> -> vector<14x128xf32>
    %20 = arith.addf %15, %19 : vector<14x128xf32>
    %c0_18 = arith.constant 0 : index
    %c0_19 = arith.constant 0 : index
    %21 = vector.load %arg7[%c0_18, %c0_19] : memref<14x128xf32, #tpu.memory_space<vmem>>, vector<14x128xf32>
    tpu.vector_store %arg7[%c0_18, %c0_19], %20 {strides = array<i32>} : memref<14x128xf32, #tpu.memory_space<vmem>>, vector<14x128xf32>,
    %c2_i32 = arith.constant 2 : i32
    %22 = arith.cmpi eq, %arg3, %c2_i32 : i32
    %23 = arith.extui %22 : i1 to i32
    %c0_i32_20 = arith.constant 0 : i32
    %24 = arith.cmpi ne, %23, %c0_i32_20 : i32
    scf.if %24 {
      %c0_21 = arith.constant 0 : index
      %c0_22 = arith.constant 0 : index
      %25 = vector.load %arg7[%c0_21, %c0_22] : memref<14x128xf32, #tpu.memory_space<vmem>>, vector<14x128xf32>
      %c0_23 = arith.constant 0 : index
      %c0_24 = arith.constant 0 : index
      %c0_25 = arith.constant 0 : index
      %c0_26 = arith.constant 0 : index
      %26 = vector.load %arg6[%c0_23, %c0_24, %c0_25, %c0_26] : memref<1x1x14x128xf32, #tpu.memory_space<vmem>>, vector<1x1x14x128xf32>
      %27 = vector.shape_cast %26 : vector<1x1x14x128xf32> to vector<14x128xf32>
      %28 = vector.shape_cast %25 : vector<14x128xf32> to vector<1x1x14x128xf32>
      tpu.vector_store %arg6[%c0_23, %c0_24, %c0_25, %c0_26], %28 {strides = array<i32>} : memref<1x1x14x128xf32, #tpu.memory_space<vmem>>, vector<1x1x14x128xf32>,
    } else {
    }
    return
  }
  func.func @transform_0(%arg0: i32, %arg1: i32, %arg2: i32, %arg3: i32) -> (i32, i32, i32, i32) {
    %0 = arith.addi %arg1, %arg3 : i32
    %c0_i32 = arith.constant 0 : i32
    %c0_i32_0 = arith.constant 0 : i32
    %c0_i32_1 = arith.constant 0 : i32
    return %arg0, %0, %c0_i32, %c0_i32_0 : i32, i32, i32, i32
  }
  func.func @transform_1(%arg0: i32, %arg1: i32, %arg2: i32, %arg3: i32) -> (i32, i32, i32, i32) {
    %c0_i32 = arith.constant 0 : i32
    %c0_i32_0 = arith.constant 0 : i32
    %c0_i32_1 = arith.constant 0 : i32
    return %arg3, %c0_i32, %c0_i32_0, %arg2 : i32, i32, i32, i32
  }
  func.func @transform_2(%arg0: i32, %arg1: i32, %arg2: i32, %arg3: i32) -> (i32, i32, i32, i32) {
    %c0_i32 = arith.constant 0 : i32
    %c0_i32_0 = arith.constant 0 : i32
    return %arg0, %arg1, %c0_i32, %arg2 : i32, i32, i32, i32
  }
}

module attributes {stable_mosaic.version = 11 : i64} {
  func.func @_affine_relu_kernel(%arg0: i32, %arg1: i32, %arg2: i32, %arg3: memref<1x1x14x128xf32, #tpu.memory_space<vmem>>, %arg4: memref<1x128xf32, #tpu.memory_space<vmem>>, %arg5: memref<1x128xf32, #tpu.memory_space<vmem>>, %arg6: memref<1x1x14x128xbf16, #tpu.memory_space<vmem>>) attributes {dimension_semantics = [#tpu.dimension_semantics<parallel>, #tpu.dimension_semantics<parallel>, #tpu.dimension_semantics<parallel>], iteration_bounds = array<i64: 2, 14, 2>, scalar_prefetch = 0 : i64, scratch_operands = 0 : i64, tpu.core_type = #tpu.core_type<tc>, window_params = [{transform_indices = @transform_0, window_bounds = array<i64: 1, 1, 14, 128>}, {transform_indices = @transform_1, window_bounds = array<i64: 1, 128>}, {transform_indices = @transform_2, window_bounds = array<i64: 1, 128>}, {transform_indices = @transform_3, window_bounds = array<i64: 1, 1, 14, 128>}]} {
    %c0 = arith.constant 0 : index
    %c0_0 = arith.constant 0 : index
    %c0_1 = arith.constant 0 : index
    %c0_2 = arith.constant 0 : index
    %0 = vector.load %arg3[%c0, %c0_0, %c0_1, %c0_2] : memref<1x1x14x128xf32, #tpu.memory_space<vmem>>, vector<1x1x14x128xf32>
    %1 = vector.shape_cast %0 : vector<1x1x14x128xf32> to vector<14x128xf32>
    %c0_3 = arith.constant 0 : index
    %c0_4 = arith.constant 0 : index
    %2 = vector.load %arg4[%c0_3, %c0_4] : memref<1x128xf32, #tpu.memory_space<vmem>>, vector<1x128xf32>
    %3 = vector.broadcast %2 : vector<1x128xf32> to vector<14x128xf32>
    %4 = arith.mulf %1, %3 : vector<14x128xf32>
    %c0_5 = arith.constant 0 : index
    %c0_6 = arith.constant 0 : index
    %5 = vector.load %arg5[%c0_5, %c0_6] : memref<1x128xf32, #tpu.memory_space<vmem>>, vector<1x128xf32>
    %6 = vector.broadcast %5 : vector<1x128xf32> to vector<14x128xf32>
    %7 = arith.addf %4, %6 : vector<14x128xf32>
    %cst = arith.constant 0.000000e+00 : f32
    %8 = vector.broadcast %cst : f32 to vector<14x128xf32>
    %9 = arith.maximumf %7, %8 : vector<14x128xf32>
    %10 = arith.truncf %9 : vector<14x128xf32> to vector<14x128xbf16>
    %c0_7 = arith.constant 0 : index
    %c0_8 = arith.constant 0 : index
    %c0_9 = arith.constant 0 : index
    %c0_10 = arith.constant 0 : index
    %11 = vector.load %arg6[%c0_7, %c0_8, %c0_9, %c0_10] : memref<1x1x14x128xbf16, #tpu.memory_space<vmem>>, vector<1x1x14x128xbf16>
    %12 = vector.shape_cast %11 : vector<1x1x14x128xbf16> to vector<14x128xbf16>
    %13 = vector.shape_cast %10 : vector<14x128xbf16> to vector<1x1x14x128xbf16>
    tpu.vector_store %arg6[%c0_7, %c0_8, %c0_9, %c0_10], %13 {strides = array<i32>} : memref<1x1x14x128xbf16, #tpu.memory_space<vmem>>, vector<1x1x14x128xbf16>,
    return
  }
  func.func @transform_0(%arg0: i32, %arg1: i32, %arg2: i32) -> (i32, i32, i32, i32) {
    %c0_i32 = arith.constant 0 : i32
    %c0_i32_0 = arith.constant 0 : i32
    return %arg0, %arg1, %c0_i32, %arg2 : i32, i32, i32, i32
  }
  func.func @transform_1(%arg0: i32, %arg1: i32, %arg2: i32) -> (i32, i32) {
    %c0_i32 = arith.constant 0 : i32
    %c0_i32_0 = arith.constant 0 : i32
    return %c0_i32, %arg2 : i32, i32
  }
  func.func @transform_2(%arg0: i32, %arg1: i32, %arg2: i32) -> (i32, i32) {
    %c0_i32 = arith.constant 0 : i32
    %c0_i32_0 = arith.constant 0 : i32
    return %c0_i32, %arg2 : i32, i32
  }
  func.func @transform_3(%arg0: i32, %arg1: i32, %arg2: i32) -> (i32, i32, i32, i32) {
    %c0_i32 = arith.constant 0 : i32
    %c0_i32_0 = arith.constant 0 : i32
    return %arg0, %arg1, %c0_i32, %arg2 : i32, i32, i32, i32
  }
}

module attributes {stable_mosaic.version = 11 : i64} {
  func.func @_bn_stats_kernel(%arg0: i32, %arg1: i32, %arg2: i32, %arg3: memref<1x1x14x128xf32, #tpu.memory_space<vmem>>, %arg4: memref<1x128xf32, #tpu.memory_space<vmem>>, %arg5: memref<1x128xf32, #tpu.memory_space<vmem>>, %arg6: memref<1x128xf32, #tpu.memory_space<vmem>>, %arg7: memref<1x128xf32, #tpu.memory_space<vmem>>, %arg8: memref<1x128xf32, #tpu.memory_space<vmem>>, %arg9: memref<1x128xf32, #tpu.memory_space<vmem>>) attributes {dimension_semantics = [#tpu.dimension_semantics<parallel>, #tpu.dimension_semantics<arbitrary>, #tpu.dimension_semantics<arbitrary>], iteration_bounds = array<i64: 2, 2, 14>, scalar_prefetch = 0 : i64, scratch_operands = 2 : i64, tpu.core_type = #tpu.core_type<tc>, window_params = [{transform_indices = @transform_0, window_bounds = array<i64: 1, 1, 14, 128>}, {transform_indices = @transform_1, window_bounds = array<i64: 1, 128>}, {transform_indices = @transform_2, window_bounds = array<i64: 1, 128>}, {transform_indices = @transform_3, window_bounds = array<i64: 1, 128>}, {transform_indices = @transform_4, window_bounds = array<i64: 1, 128>}]} {
    %c0_i32 = arith.constant 0 : i32
    %0 = arith.cmpi eq, %arg1, %c0_i32 : i32
    %c0_i32_0 = arith.constant 0 : i32
    %1 = arith.cmpi eq, %arg2, %c0_i32_0 : i32
    %2 = arith.andi %0, %1 : i1
    %3 = arith.extui %2 : i1 to i32
    %c0_i32_1 = arith.constant 0 : i32
    %4 = arith.cmpi ne, %3, %c0_i32_1 : i32
    scf.if %4 {
      %cst_15 = arith.constant 0.000000e+00 : f32
      %23 = vector.broadcast %cst_15 : f32 to vector<1x128xf32>
      %c0_16 = arith.constant 0 : index
      %c0_17 = arith.constant 0 : index
      %24 = vector.load %arg8[%c0_16, %c0_17] : memref<1x128xf32, #tpu.memory_space<vmem>>, vector<1x128xf32>
      tpu.vector_store %arg8[%c0_16, %c0_17], %23 {strides = array<i32>} : memref<1x128xf32, #tpu.memory_space<vmem>>, vector<1x128xf32>,
      %cst_18 = arith.constant 0.000000e+00 : f32
      %25 = vector.broadcast %cst_18 : f32 to vector<1x128xf32>
      %c0_19 = arith.constant 0 : index
      %c0_20 = arith.constant 0 : index
      %26 = vector.load %arg9[%c0_19, %c0_20] : memref<1x128xf32, #tpu.memory_space<vmem>>, vector<1x128xf32>
      tpu.vector_store %arg9[%c0_19, %c0_20], %25 {strides = array<i32>} : memref<1x128xf32, #tpu.memory_space<vmem>>, vector<1x128xf32>,
    } else {
    }
    %c0 = arith.constant 0 : index
    %c0_2 = arith.constant 0 : index
    %c0_3 = arith.constant 0 : index
    %c0_4 = arith.constant 0 : index
    %5 = vector.load %arg3[%c0, %c0_2, %c0_3, %c0_4] : memref<1x1x14x128xf32, #tpu.memory_space<vmem>>, vector<1x1x14x128xf32>
    %6 = vector.shape_cast %5 : vector<1x1x14x128xf32> to vector<14x128xf32>
    %c0_5 = arith.constant 0 : index
    %c0_6 = arith.constant 0 : index
    %7 = vector.load %arg8[%c0_5, %c0_6] : memref<1x128xf32, #tpu.memory_space<vmem>>, vector<1x128xf32>
    %cst = arith.constant dense<0.000000e+00> : vector<128xf32>
    %8 = vector.multi_reduction <add>, %6, %cst [0] : vector<14x128xf32> to vector<128xf32>
    %9 = vector.shape_cast %8 : vector<128xf32> to vector<1x128xf32>
    %10 = arith.addf %7, %9 : vector<1x128xf32>
    %c0_7 = arith.constant 0 : index
    %c0_8 = arith.constant 0 : index
    %11 = vector.load %arg8[%c0_7, %c0_8] : memref<1x128xf32, #tpu.memory_space<vmem>>, vector<1x128xf32>
    tpu.vector_store %arg8[%c0_7, %c0_8], %10 {strides = array<i32>} : memref<1x128xf32, #tpu.memory_space<vmem>>, vector<1x128xf32>,
    %c0_9 = arith.constant 0 : index
    %c0_10 = arith.constant 0 : index
    %12 = vector.load %arg9[%c0_9, %c0_10] : memref<1x128xf32, #tpu.memory_space<vmem>>, vector<1x128xf32>
    %13 = arith.mulf %6, %6 : vector<14x128xf32>
    %cst_11 = arith.constant dense<0.000000e+00> : vector<128xf32>
    %14 = vector.multi_reduction <add>, %13, %cst_11 [0] : vector<14x128xf32> to vector<128xf32>
    %15 = vector.shape_cast %14 : vector<128xf32> to vector<1x128xf32>
    %16 = arith.addf %12, %15 : vector<1x128xf32>
    %c0_12 = arith.constant 0 : index
    %c0_13 = arith.constant 0 : index
    %17 = vector.load %arg9[%c0_12, %c0_13] : memref<1x128xf32, #tpu.memory_space<vmem>>, vector<1x128xf32>
    tpu.vector_store %arg9[%c0_12, %c0_13], %16 {strides = array<i32>} : memref<1x128xf32, #tpu.memory_space<vmem>>, vector<1x128xf32>,
    %c1_i32 = arith.constant 1 : i32
    %18 = arith.cmpi eq, %arg1, %c1_i32 : i32
    %c13_i32 = arith.constant 13 : i32
    %19 = arith.cmpi eq, %arg2, %c13_i32 : i32
    %20 = arith.andi %18, %19 : i1
    %21 = arith.extui %20 : i1 to i32
    %c0_i32_14 = arith.constant 0 : i32
    %22 = arith.cmpi ne, %21, %c0_i32_14 : i32
    scf.if %22 {
      %c0_15 = arith.constant 0 : index
      %c0_16 = arith.constant 0 : index
      %23 = vector.load %arg8[%c0_15, %c0_16] : memref<1x128xf32, #tpu.memory_space<vmem>>, vector<1x128xf32>
      %cst_17 = arith.constant 0.00255102036 : f32
      %24 = vector.broadcast %cst_17 : f32 to vector<1x128xf32>
      %25 = arith.mulf %23, %24 : vector<1x128xf32>
      %c0_18 = arith.constant 0 : index
      %c0_19 = arith.constant 0 : index
      %26 = vector.load %arg9[%c0_18, %c0_19] : memref<1x128xf32, #tpu.memory_space<vmem>>, vector<1x128xf32>
      %cst_20 = arith.constant 0.00255102036 : f32
      %27 = vector.broadcast %cst_20 : f32 to vector<1x128xf32>
      %28 = arith.mulf %26, %27 : vector<1x128xf32>
      %29 = arith.mulf %25, %25 : vector<1x128xf32>
      %30 = arith.subf %28, %29 : vector<1x128xf32>
      %cst_21 = arith.constant 0.000000e+00 : f32
      %31 = vector.broadcast %cst_21 : f32 to vector<1x128xf32>
      %32 = arith.maximumf %30, %31 : vector<1x128xf32>
      %c0_22 = arith.constant 0 : index
      %c0_23 = arith.constant 0 : index
      %33 = vector.load %arg4[%c0_22, %c0_23] : memref<1x128xf32, #tpu.memory_space<vmem>>, vector<1x128xf32>
      %cst_24 = arith.constant 9.99999974E-6 : f32
      %34 = vector.broadcast %cst_24 : f32 to vector<1x128xf32>
      %35 = arith.addf %32, %34 : vector<1x128xf32>
      %36 = math.rsqrt %35 : vector<1x128xf32>
      %37 = arith.mulf %33, %36 : vector<1x128xf32>
      %c0_25 = arith.constant 0 : index
      %c0_26 = arith.constant 0 : index
      %38 = vector.load %arg6[%c0_25, %c0_26] : memref<1x128xf32, #tpu.memory_space<vmem>>, vector<1x128xf32>
      tpu.vector_store %arg6[%c0_25, %c0_26], %37 {strides = array<i32>} : memref<1x128xf32, #tpu.memory_space<vmem>>, vector<1x128xf32>,
      %c0_27 = arith.constant 0 : index
      %c0_28 = arith.constant 0 : index
      %39 = vector.load %arg5[%c0_27, %c0_28] : memref<1x128xf32, #tpu.memory_space<vmem>>, vector<1x128xf32>
      %40 = arith.mulf %25, %37 : vector<1x128xf32>
      %41 = arith.subf %39, %40 : vector<1x128xf32>
      %c0_29 = arith.constant 0 : index
      %c0_30 = arith.constant 0 : index
      %42 = vector.load %arg7[%c0_29, %c0_30] : memref<1x128xf32, #tpu.memory_space<vmem>>, vector<1x128xf32>
      tpu.vector_store %arg7[%c0_29, %c0_30], %41 {strides = array<i32>} : memref<1x128xf32, #tpu.memory_space<vmem>>, vector<1x128xf32>,
    } else {
    }
    return
  }
  func.func @transform_0(%arg0: i32, %arg1: i32, %arg2: i32) -> (i32, i32, i32, i32) {
    %c0_i32 = arith.constant 0 : i32
    %c0_i32_0 = arith.constant 0 : i32
    return %arg1, %arg2, %c0_i32, %arg0 : i32, i32, i32, i32
  }
  func.func @transform_1(%arg0: i32, %arg1: i32, %arg2: i32) -> (i32, i32) {
    %c0_i32 = arith.constant 0 : i32
    %c0_i32_0 = arith.constant 0 : i32
    return %c0_i32, %arg0 : i32, i32
  }
  func.func @transform_2(%arg0: i32, %arg1: i32, %arg2: i32) -> (i32, i32) {
    %c0_i32 = arith.constant 0 : i32
    %c0_i32_0 = arith.constant 0 : i32
    return %c0_i32, %arg0 : i32, i32
  }
  func.func @transform_3(%arg0: i32, %arg1: i32, %arg2: i32) -> (i32, i32) {
    %c0_i32 = arith.constant 0 : i32
    %c0_i32_0 = arith.constant 0 : i32
    return %c0_i32, %arg0 : i32, i32
  }
  func.func @transform_4(%arg0: i32, %arg1: i32, %arg2: i32) -> (i32, i32) {
    %c0_i32 = arith.constant 0 : i32
    %c0_i32_0 = arith.constant 0 : i32
    return %c0_i32, %arg0 : i32, i32
  }
}

module attributes {stable_mosaic.version = 11 : i64} {
  func.func @_maxpool_row_kernel(%arg0: i32, %arg1: i32, %arg2: i32, %arg3: memref<1x1x16x256xbf16, #tpu.memory_space<vmem>>, %arg4: memref<1x1x14x256xbf16, #tpu.memory_space<vmem>>, %arg5: memref<14x256xbf16, #tpu.memory_space<vmem>>) attributes {dimension_semantics = [#tpu.dimension_semantics<parallel>, #tpu.dimension_semantics<parallel>, #tpu.dimension_semantics<arbitrary>], iteration_bounds = array<i64: 2, 14, 3>, scalar_prefetch = 0 : i64, scratch_operands = 1 : i64, tpu.core_type = #tpu.core_type<tc>, window_params = [{transform_indices = @transform_0, window_bounds = array<i64: 1, 1, 16, 256>}, {transform_indices = @transform_1, window_bounds = array<i64: 1, 1, 14, 256>}]} {
    %c0_i32 = arith.constant 0 : i32
    %0 = arith.cmpi eq, %arg2, %c0_i32 : i32
    %1 = arith.extui %0 : i1 to i32
    %c0_i32_0 = arith.constant 0 : i32
    %2 = arith.cmpi ne, %1, %c0_i32_0 : i32
    scf.if %2 {
      %cst = arith.constant 0xFF80 : bf16
      %16 = vector.broadcast %cst : bf16 to vector<14x256xbf16>
      %c0_9 = arith.constant 0 : index
      %c0_10 = arith.constant 0 : index
      %17 = vector.load %arg5[%c0_9, %c0_10] : memref<14x256xbf16, #tpu.memory_space<vmem>>, vector<14x256xbf16>
      tpu.vector_store %arg5[%c0_9, %c0_10], %16 {strides = array<i32>} : memref<14x256xbf16, #tpu.memory_space<vmem>>, vector<14x256xbf16>,
    } else {
    }
    %c0 = arith.constant 0 : index
    %c0_1 = arith.constant 0 : index
    %c0_2 = arith.constant 0 : index
    %c0_3 = arith.constant 0 : index
    %3 = vector.load %arg3[%c0, %c0_1, %c0_2, %c0_3] : memref<1x1x16x256xbf16, #tpu.memory_space<vmem>>, vector<1x1x16x256xbf16>
    %4 = vector.shape_cast %3 : vector<1x1x16x256xbf16> to vector<16x256xbf16>
    %5 = vector.extract_strided_slice %4 {offsets = [0, 0], sizes = [14, 256], strides = [1, 1]} : vector<16x256xbf16> to vector<14x256xbf16>
    %6 = vector.extract_strided_slice %4 {offsets = [1, 0], sizes = [14, 256], strides = [1, 1]} : vector<16x256xbf16> to vector<14x256xbf16>
    %7 = arith.maximumf %5, %6 : vector<14x256xbf16>
    %8 = vector.extract_strided_slice %4 {offsets = [2, 0], sizes = [14, 256], strides = [1, 1]} : vector<16x256xbf16> to vector<14x256xbf16>
    %9 = arith.maximumf %7, %8 : vector<14x256xbf16>
    %c0_4 = arith.constant 0 : index
    %c0_5 = arith.constant 0 : index
    %10 = vector.load %arg5[%c0_4, %c0_5] : memref<14x256xbf16, #tpu.memory_space<vmem>>, vector<14x256xbf16>
    %11 = arith.maximumf %10, %9 : vector<14x256xbf16>
    %c0_6 = arith.constant 0 : index
    %c0_7 = arith.constant 0 : index
    %12 = vector.load %arg5[%c0_6, %c0_7] : memref<14x256xbf16, #tpu.memory_space<vmem>>, vector<14x256xbf16>
    tpu.vector_store %arg5[%c0_6, %c0_7], %11 {strides = array<i32>} : memref<14x256xbf16, #tpu.memory_space<vmem>>, vector<14x256xbf16>,
    %c2_i32 = arith.constant 2 : i32
    %13 = arith.cmpi eq, %arg2, %c2_i32 : i32
    %14 = arith.extui %13 : i1 to i32
    %c0_i32_8 = arith.constant 0 : i32
    %15 = arith.cmpi ne, %14, %c0_i32_8 : i32
    scf.if %15 {
      %c0_9 = arith.constant 0 : index
      %c0_10 = arith.constant 0 : index
      %16 = vector.load %arg5[%c0_9, %c0_10] : memref<14x256xbf16, #tpu.memory_space<vmem>>, vector<14x256xbf16>
      %c0_11 = arith.constant 0 : index
      %c0_12 = arith.constant 0 : index
      %c0_13 = arith.constant 0 : index
      %c0_14 = arith.constant 0 : index
      %17 = vector.load %arg4[%c0_11, %c0_12, %c0_13, %c0_14] : memref<1x1x14x256xbf16, #tpu.memory_space<vmem>>, vector<1x1x14x256xbf16>
      %18 = vector.shape_cast %17 : vector<1x1x14x256xbf16> to vector<14x256xbf16>
      %19 = vector.shape_cast %16 : vector<14x256xbf16> to vector<1x1x14x256xbf16>
      tpu.vector_store %arg4[%c0_11, %c0_12, %c0_13, %c0_14], %19 {strides = array<i32>} : memref<1x1x14x256xbf16, #tpu.memory_space<vmem>>, vector<1x1x14x256xbf16>,
    } else {
    }
    return
  }
  func.func @transform_0(%arg0: i32, %arg1: i32, %arg2: i32) -> (i32, i32, i32, i32) {
    %0 = arith.addi %arg1, %arg2 : i32
    %c0_i32 = arith.constant 0 : i32
    %c0_i32_0 = arith.constant 0 : i32
    %c0_i32_1 = arith.constant 0 : i32
    return %arg0, %0, %c0_i32, %c0_i32_0 : i32, i32, i32, i32
  }
  func.func @transform_1(%arg0: i32, %arg1: i32, %arg2: i32) -> (i32, i32, i32, i32) {
    %c0_i32 = arith.constant 0 : i32
    %c0_i32_0 = arith.constant 0 : i32
    %c0_i32_1 = arith.constant 0 : i32
    return %arg0, %arg1, %c0_i32, %c0_i32_0 : i32, i32, i32, i32
  }
}

</mosaic_0001>

<llo_original>
// kernel: inception_stem_forward.35
$region0: #{inception_stem_forward.35}
  #allocation0 [shape = 'u32[]', space=smem, size = 0x4, offset = 0x4, fixed_abs, tag = 'smem constant byte address 0x4 - core index']
  #allocation1 [shape = 'u32[144,128]{1,0:T(1,128)}', space=vmem, size = 0x12000, scoped, tag = 'internal scratch']
  #allocation2 [shape = 'f32[14,128]{1,0:T(8,128)}', space=vmem, size = 0x2000, scoped, tag = 'scratch operand']
  %s0 = inlined_call_operand.vmem [shape: bf16[2,16,16,128], index: 0, kind: input, shape index: {}]
  %s1 = inlined_call_operand.vmem [shape: bf16[3,3,128,128], index: 1, kind: input, shape index: {}]
  %s2 = inlined_call_operand.vmem [shape: f32[2,14,14,128], index: 2, kind: output, shape index: {}]
  %s3 = sld [smem:[#allocation0]]
  $region49: #{inception_stem_forward.35} parent=0
    _
  %s5 = ssub.s32 1, %s3
  %s6 = scalar_select 0, %s5, %s3
  loop: start=0, step=1, limit=86
  $region2: #{inception_stem_forward.35} parent=0 // loop_pre_header
    _
  $region3: #{inception_stem_forward.35} parent=0 // loop_header
    %s8 = sphi 0, %s12
    %p9 = scmp.ge.s32.totalorder %s8, 86
    %s15 = sphi 0, %s41
    %s16 = sphi 0, %s37
    %s17 = sphi 0, %s33
    %s18 = sphi 0, %s29
    %s19 = sphi 0, %s15
    %s20 = sphi 0, %s16
    %s21 = sphi 0, %s17
    %s22 = sphi 0, %s18
    %s23 = sphi 0, %s19
    %s24 = sphi 0, %s20
    %s25 = sphi 0, %s21
    %s26 = sphi 0, %s22
    %s48 = sphi 0, %s50
    %s51 = sphi 0, %s48
    %s52 = sphi 0, %s51
    %s68 = sphi 0, %s52
    %s76 = sphi 0, %s78
    %s79 = sphi 0, %s76
    %s80 = sphi 0, %s79
    %s96 = sphi 0, %s80
    %s106 = sphi 0, %s108
    %s109 = sphi 0, %s106
    %s110 = sphi 0, %s109
    %s126 = sphi 0, %s110
  $region4: #{inception_stem_forward.35} parent=0 // loop_header_branch
    %11 = sbr.rel (%p9) target = $region8
  $region5: #{inception_stem_forward.35} parent=0 // loop_body
    %s13 = ssub.s32 %s8, 1
    %s14 = ssub.s32 %s8, 2
    %s27 = sadd.s32 1, %s18
    %p28 = scmp.ge.s32.totalorder %s27, 3
    %s29 = scalar_select %p28, 0, %s27
    %s30 = sadd.s32 1, %s17
    %s31 = scalar_select %p28, %s30, %s17
    %p32 = scmp.ge.s32.totalorder %s31, 1
    %s33 = scalar_select %p32, 0, %s31
    %s34 = sadd.s32 1, %s16
    %s35 = scalar_select %p32, %s34, %s16
    %p36 = scmp.ge.s32.totalorder %s35, 14
    %s37 = scalar_select %p36, 0, %s35
    %s38 = sadd.s32 1, %s15
    %s39 = scalar_select %p36, %s38, %s15
    %p40 = scmp.ge.s32.totalorder %s39, 2
    %s41 = scalar_select %p40, 0, %s39
    %s42 = sadd.s32 %s16, %s18
    %s43 = sadd.s32 %s37, %s29
    %s44 = ssub.s32 %s15, %s41
    %s45 = ssub.s32 %s42, %s43
    %s46 = sor.u32 %s44, %s45
    %p47 = scmp.eq.s32.totalorder %s46, 0
    %s49 = sadd.s32 %s48, 1
    %s50 = scalar_select %p47, %s48, %s49
    %p53 = pneg %p47
    %p54 = scmp.eq.s32.totalorder %s8, 83
    %p55 = por %p53, %p54
    %p56 = scmp.ne.s32.totalorder %s48, %s51
    %p57 = scmp.eq.s32.totalorder %s8, 0
    %p58 = por %p56, %p57
    %p59 = scmp.ne.s32.totalorder %s48, %s51
    %p60 = scmp.eq.s32.totalorder %s13, 83
    %p61 = por %p59, %p60
    %p62 = scmp.ne.s32.totalorder %s51, %s52
    %p63 = scmp.eq.s32.totalorder %s13, 0
    %p64 = por %p62, %p63
    %p65 = scmp.ne.s32.totalorder %s51, %s52
    %p66 = scmp.eq.s32.totalorder %s14, 83
    %p67 = por %p65, %p66
    %p69 = scmp.ne.s32.totalorder %s52, %s68
    %p70 = scmp.eq.s32.totalorder %s14, 0
    %p71 = por %p69, %p70
    %s72 = ssub.s32 %s18, %s29
    %s73 = ssub.s32 %s17, %s33
    %s74 = sor.u32 %s72, %s73
    %p75 = scmp.eq.s32.totalorder %s74, 0
    %s77 = sadd.s32 %s76, 1
    %s78 = scalar_select %p75, %s76, %s77
    %p81 = pneg %p75
    %p82 = scmp.eq.s32.totalorder %s8, 83
    %p83 = por %p81, %p82
    %p84 = scmp.ne.s32.totalorder %s76, %s79
    %p85 = scmp.eq.s32.totalorder %s8, 0
    %p86 = por %p84, %p85
    %p87 = scmp.ne.s32.totalorder %s76, %s79
    %p88 = scmp.eq.s32.totalorder %s13, 83
    %p89 = por %p87, %p88
    %p90 = scmp.ne.s32.totalorder %s79, %s80
    %p91 = scmp.eq.s32.totalorder %s13, 0
    %p92 = por %p90, %p91
    %p93 = scmp.ne.s32.totalorder %s79, %s80
    %p94 = scmp.eq.s32.totalorder %s14, 83
    %p95 = por %p93, %p94
    %p97 = scmp.ne.s32.totalorder %s80, %s96
    %p98 = scmp.eq.s32.totalorder %s14, 0
    %p99 = por %p97, %p98
    %s100 = ssub.s32 %s15, %s41
    %s101 = ssub.s32 %s16, %s37
    %s102 = sor.u32 %s100, %s101
    %s103 = ssub.s32 %s17, %s33
    %s104 = sor.u32 %s102, %s103
    %p105 = scmp.eq.s32.totalorder %s104, 0
    %s107 = sadd.s32 %s106, 1
    %s108 = scalar_select %p105, %s106, %s107
    %p111 = pneg %p105
    %p112 = scmp.eq.s32.totalorder %s8, 83
    %p113 = por %p111, %p112
    %p114 = scmp.ne.s32.totalorder %s106, %s109
    %p115 = scmp.eq.s32.totalorder %s8, 0
    %p116 = por %p114, %p115
    %p117 = scmp.ne.s32.totalorder %s106, %s109
    %p118 = scmp.eq.s32.totalorder %s13, 83
    %p119 = por %p117, %p118
    %p120 = scmp.ne.s32.totalorder %s109, %s110
    %p121 = scmp.eq.s32.totalorder %s13, 0
    %p122 = por %p120, %p121
    %p123 = scmp.ne.s32.totalorder %s109, %s110
    %p124 = scmp.eq.s32.totalorder %s14, 83
    %p125 = por %p123, %p124
    %p127 = scmp.ne.s32.totalorder %s110, %s126
    %p128 = scmp.eq.s32.totalorder %s14, 0
    %p129 = por %p127, %p128
    %p130 = scmp.le.s32.totalorder 1, %s8
    %p131 = scmp.lt.s32.totalorder %s8, 85
    %p132 = pnand %p130, %p131
    %p133 = pneg %p132
    // Predicated region
    $region9: #{inception_stem_forward.35} parent=5 // pred_check
      _
    $region10: #{inception_stem_forward.35} parent=5 // pred_check_branch
      %135 = sbr.rel (%p132) target = $region12
    $region11: #{inception_stem_forward.35} parent=5 // pred_region
      %s136 = ssub.s32 %s8, 1
    $region12: #{inception_stem_forward.35} parent=5 // pred_fallthru
      _
    %p137 = scmp.lt.s32.totalorder %s8, 84
    // Predicated region
    $region13: #{inception_stem_forward.35} parent=5 // pred_check
      %p138 = pneg %p137
    $region14: #{inception_stem_forward.35} parent=5 // pred_check_branch
      %140 = sbr.rel (%p138) target = $region16
    $region15: #{inception_stem_forward.35} parent=5 // pred_region
      // Predicated region
      $region17: #{inception_stem_forward.35} parent=15 // pred_check
        %p141 = pneg %p58
      $region18: #{inception_stem_forward.35} parent=15 // pred_check_branch
        %143 = sbr.rel (%p141) target = $region20
      $region19: #{inception_stem_forward.35} parent=15 // pred_region
        %s144 = sadd.s32 %s16, %s18
        %p145 = scmp.lt.s32.totalorder %s15, 1
        %s146 = scalar_select %p145, %s15, 1
        %p147 = scmp.lt.s32.totalorder %s144, 15
        %s148 = scalar_select %p147, %s144, 15
        %s149 = smul.addr %s148, 2
        %s150 = smul.addr %s146, 32
        %s151 = sadd.s32 %s149, %s150
        %s152 = smul.addr %s151, 4
        %s153 = scalar_lea.vmem %s0, %s152
        %s154 = sadd.s32 %s16, %s18
      $region20: #{inception_stem_forward.35} parent=15 // pred_fallthru
        _
      // Predicated region
      $region21: #{inception_stem_forward.35} parent=15 // pred_check
        %p155 = pneg %p86
      $region22: #{inception_stem_forward.35} parent=15 // pred_check_branch
        %157 = sbr.rel (%p155) target = $region24
      $region23: #{inception_stem_forward.35} parent=15 // pred_region
        %p158 = scmp.lt.s32.totalorder %s18, 2
        %s159 = scalar_select %p158, %s18, 2
        %p160 = scmp.lt.s32.totalorder %s17, 0
        %s161 = scalar_select %p160, %s17, 0
        %s162 = smul.addr %s159, 48
        %s163 = sadd.s32 %s161, %s162
        %s164 = smul.addr %s163, 4
        %s165 = scalar_lea.vmem %s1, %s164
      $region24: #{inception_stem_forward.35} parent=15 // pred_fallthru
        _
    $region16: #{inception_stem_forward.35} parent=5 // pred_fallthru
      _
    %p166 = scmp.le.s32.totalorder 1, %s8
    %p167 = scmp.lt.s32.totalorder %s8, 85
    %p168 = pnand %p166, %p167
    %p169 = pneg %p168
    // Predicated region
    $region25: #{inception_stem_forward.35} parent=5 // pred_check
      _
    $region26: #{inception_stem_forward.35} parent=5 // pred_check_branch
      %171 = sbr.rel (%p168) target = $region28
    $region27: #{inception_stem_forward.35} parent=5 // pred_region
      %s172 = ssub.s32 %s8, 1
      %s173 = sadd.s32 %s20, %s22
      %p174 = scmp.lt.s32.totalorder %s19, 1
      %s175 = scalar_select %p174, %s19, 1
      %p176 = scmp.lt.s32.totalorder %s173, 15
      %s177 = scalar_select %p176, %s173, 15
      %s178 = smul.addr %s177, 2
      %s179 = smul.addr %s175, 32
      %s180 = sadd.s32 %s178, %s179
      %s181 = smul.addr %s180, 4
      %s182 = scalar_lea.vmem %s0, %s181
      %p183 = pneg %p64
      %p184 = pneg %p61
      %p185 = scmp.lt.s32.totalorder %s22, 2
      %s186 = scalar_select %p185, %s22, 2
      %p187 = scmp.lt.s32.totalorder %s21, 0
      %s188 = scalar_select %p187, %s21, 0
      %s189 = smul.addr %s186, 48
      %s190 = sadd.s32 %s188, %s189
      %s191 = smul.addr %s190, 4
      %s192 = scalar_lea.vmem %s1, %s191
      %p193 = pneg %p92
      %p194 = pneg %p89
      %p195 = pneg %p122
      %p196 = pneg %p119
      %p197 = scmp.lt.s32.totalorder %s19, 1
      %s198 = scalar_select %p197, %s19, 1
      %p199 = scmp.lt.s32.totalorder %s20, 13
      %s200 = scalar_select %p199, %s20, 13
      %p201 = scmp.lt.s32.totalorder %s21, 0
      %s202 = scalar_select %p201, %s21, 0
      %s203 = smul.addr %s200, 2
      %s204 = sadd.s32 %s202, %s203
      %s205 = smul.addr %s198, 28
      %s206 = sadd.s32 %s204, %s205
      %s207 = smul.addr %s206, 8
      %s208 = scalar_lea.vmem %s2, %s207
      %s209 = sadd.s32 %s20, %s22
      %p210 = scmp.lt.s32.totalorder %s19, 1
      %s211 = scalar_select %p210, %s19, 1
      %p212 = scmp.lt.s32.totalorder %s209, 15
      %s213 = scalar_select %p212, %s209, 15
      %s214 = smul.addr %s213, 2
      %s215 = smul.addr %s211, 32
      %s216 = sadd.s32 %s214, %s215
      %s217 = smul.addr %s216, 4
      %s218 = scalar_lea.vmem %s0, %s217
      %s219 = sadd.s32 %s20, %s22
      %p220 = scmp.lt.s32.totalorder %s22, 2
      %s221 = scalar_select %p220, %s22, 2
      %p222 = scmp.lt.s32.totalorder %s21, 0
      %s223 = scalar_select %p222, %s21, 0
      %s224 = smul.addr %s221, 48
      %s225 = sadd.s32 %s223, %s224
      %s226 = smul.addr %s225, 4
      %s227 = scalar_lea.vmem %s1, %s226
      %p228 = scmp.lt.s32.totalorder %s19, 1
      %s229 = scalar_select %p228, %s19, 1
      %p230 = scmp.lt.s32.totalorder %s20, 13
      %s231 = scalar_select %p230, %s20, 13
      %p232 = scmp.lt.s32.totalorder %s21, 0
      %s233 = scalar_select %p232, %s21, 0
      %s234 = smul.addr %s231, 2
      %s235 = sadd.s32 %s233, %s234
      %s236 = smul.addr %s229, 28
      %s237 = sadd.s32 %s235, %s236
      %s238 = smul.addr %s237, 8
      %s239 = scalar_lea.vmem %s2, %s238
      %p241 = scmp.eq.s32.totalorder %s22, 0
      // Predicated region
      $region29: #{inception_stem_forward.35} parent=27 // pred_check
        %p242 = pneg %p241
      $region30: #{inception_stem_forward.35} parent=27 // pred_check_branch
        %244 = sbr.rel (%p242) target = $region32
      $region31: #{inception_stem_forward.35} parent=27 // pred_region
        %245 = vst [vmem:[#allocation2] sm:$0xff] 0.0
        %246 = vst [vmem:[#allocation2 + $0x8] sm:$0x3f] 0.0
      $region32: #{inception_stem_forward.35} parent=27 // pred_fallthru
        _
      %v247 = vld [vmem:[%s218] sm:$0xf]
      %v248 = vld [vmem:[%s218 + $0x4] sm:$0xf]
      %v249 = vld [vmem:[#allocation2] sm:$0xff]
      %v250 = vld [vmem:[#allocation2 + $0x8] sm:$0x3f]
      %v251 = vld [vmem:[%s227] sm:$0xf]
      %v252 = vld [vmem:[%s227 + $0x4] sm:$0xf]
      %v253 = vld [vmem:[%s227 + $0x8] sm:$0xf]
      %v254 = vld [vmem:[%s227 + $0xc] sm:$0xf]
      %v255 = vld [vmem:[%s227 + $0x10] sm:$0xf]
      %v256 = vld [vmem:[%s227 + $0x14] sm:$0xf]
      %v257 = vld [vmem:[%s227 + $0x18] sm:$0xf]
      %v258 = vld [vmem:[%s227 + $0x1c] sm:$0xf]
      %v259 = vld [vmem:[%s227 + $0x20] sm:$0xf]
      %v260 = vld [vmem:[%s227 + $0x24] sm:$0xf]
      %v261 = vld [vmem:[%s227 + $0x28] sm:$0xf]
      %v262 = vld [vmem:[%s227 + $0x2c] sm:$0xf]
      %v263 = vld [vmem:[%s227 + $0x30] sm:$0xf]
      %v264 = vld [vmem:[%s227 + $0x34] sm:$0xf]
      %v265 = vld [vmem:[%s227 + $0x38] sm:$0xf]
      %v266 = vld [vmem:[%s227 + $0x3c] sm:$0xf]
      %v269 = vunpack.c.l.b16 %v247
      %v270 = vunpack.c.l.b16 %v248
      %v271 = vpack.c.b16 %v270, %v269
      %v289 = vunpack.c.l.b16 %v251
      %v290 = vunpack.c.l.b16 %v252
      %v291 = vunpack.c.l.b16 %v253
      %v292 = vunpack.c.l.b16 %v254
      %v293 = vunpack.c.l.b16 %v255
      %v294 = vunpack.c.l.b16 %v256
      %v295 = vunpack.c.l.b16 %v257
      %v296 = vunpack.c.l.b16 %v258
      %v297 = vunpack.c.l.b16 %v259
      %v298 = vunpack.c.l.b16 %v260
      %v299 = vunpack.c.l.b16 %v261
      %v300 = vunpack.c.l.b16 %v262
      %v301 = vunpack.c.l.b16 %v263
      %v302 = vunpack.c.l.b16 %v264
      %v303 = vunpack.c.l.b16 %v265
      %v304 = vunpack.c.l.b16 %v266
      %v305 = vpack.c.b16 %v290, %v289
      %v306 = vpack.c.b16 %v292, %v291
      %v307 = vpack.c.b16 %v294, %v293
      %v308 = vpack.c.b16 %v296, %v295
      %v309 = vpack.c.b16 %v298, %v297
      %v310 = vpack.c.b16 %v300, %v299
      %v311 = vpack.c.b16 %v302, %v301
      %v312 = vpack.c.b16 %v304, %v303
      %321 = vmatprep.subr.bf16.mxu0 0
      %322 = vmatpush1.bf16.msra.mxu0 %v312
      %323 = vmatprep.subr.bf16.mxu0 0
      %324 = vmatpush1.bf16.msra.mxu0 %v311
      %325 = vmatprep.subr.bf16.mxu0 0
      %326 = vmatpush1.bf16.msra.mxu0 %v310
      %327 = vmatprep.subr.bf16.mxu0 0
      %328 = vmatpush1.bf16.msra.mxu0 %v309
      %329 = vmatprep.subr.bf16.mxu0 0
      %330 = vmatpush1.bf16.msra.mxu0 %v308
      %331 = vmatprep.subr.bf16.mxu0 0
      %332 = vmatpush1.bf16.msra.mxu0 %v307
      %333 = vmatprep.subr.bf16.mxu0 0
      %334 = vmatpush1.bf16.msra.mxu0 %v306
      %335 = vmatprep.subr.bf16.mxu0 0
      %336 = vmatpush1.bf16.msra.mxu0 %v305
      %337 = vmatprep.subr.bf16.mxu0 0
      %338 = vmatpush2.bf16.msra.mxu0 0
      %339 = vmatprep.subr.bf16.mxu0 0
      %340 = vmatpush2.bf16.msra.mxu0 0
      %341 = vmatprep.subr.bf16.mxu0 0
      %342 = vmatpush2.bf16.msra.mxu0 0
      %343 = vmatprep.subr.bf16.mxu0 0
      %344 = vmatpush2.bf16.msra.mxu0 0
      %345 = vmatprep.subr.bf16.mxu0 0
      %346 = vmatpush2.bf16.msra.mxu0 0
      %347 = vmatprep.subr.bf16.mxu0 0
      %348 = vmatpush2.bf16.msra.mxu0 0
      %349 = vmatprep.subr.bf16.mxu0 0
      %350 = vmatpush2.bf16.msra.mxu0 0
      %351 = vmatprep.subr.bf16.mxu0 0
      %352 = vmatpush2.bf16.msra.mxu0 0
      %353 = vmatprep.mubr.bf16.mxu0 0
      %354 = vmatmul.mubr.bf16.gmra.mxu0 %v271
      %v355 = vpop.f32.mrf.mxu0
      %v356 = vadd.f32 0.0, %v355
      %v357 = vpop.f32.mrf.mxu0
      %v358 = vpop.f32.mrf.mxu0
      %v359 = vadd.f32 0.0, %v358
      %v360 = vpop.f32.mrf.mxu0
      %361 = vdwg.mxu0
      %v362 = vadd.f32 %v249, %v356
      %v363 = vadd.f32 %v250, %v359
      %s364 = scalar_lea.vmem %s227, 64
      %v365 = vld [vmem:[%s364] sm:$0xf]
      %v366 = vld [vmem:[%s364 + $0x4] sm:$0xf]
      %v367 = vld [vmem:[%s364 + $0x8] sm:$0xf]
      %v368 = vld [vmem:[%s364 + $0xc] sm:$0xf]
      %v369 = vld [vmem:[%s364 + $0x10] sm:$0xf]
      %v370 = vld [vmem:[%s364 + $0x14] sm:$0xf]
      %v371 = vld [vmem:[%s364 + $0x18] sm:$0xf]
      %v372 = vld [vmem:[%s364 + $0x1c] sm:$0xf]
      %v373 = vld [vmem:[%s364 + $0x20] sm:$0xf]
      %v374 = vld [vmem:[%s364 + $0x24] sm:$0xf]
      %v375 = vld [vmem:[%s364 + $0x28] sm:$0xf]
      %v376 = vld [vmem:[%s364 + $0x2c] sm:$0xf]
      %v377 = vld [vmem:[%s364 + $0x30] sm:$0xf]
      %v378 = vld [vmem:[%s364 + $0x34] sm:$0xf]
      %v379 = vld [vmem:[%s364 + $0x38] sm:$0xf]
      %v380 = vld [vmem:[%s364 + $0x3c] sm:$0xf]
      %v382 = vshrl.u32 %v271, 16
      %v384 = vshll.u32 %v271, 16
      %v386 = vrot.slane %v384, 1
      %v387 = vor.u32 %v382, %v386
      %v405 = vunpack.c.l.b16 %v365
      %v406 = vunpack.c.l.b16 %v366
      %v407 = vunpack.c.l.b16 %v367
      %v408 = vunpack.c.l.b16 %v368
      %v409 = vunpack.c.l.b16 %v369
      %v410 = vunpack.c.l.b16 %v370
      %v411 = vunpack.c.l.b16 %v371
      %v412 = vunpack.c.l.b16 %v372
      %v413 = vunpack.c.l.b16 %v373
      %v414 = vunpack.c.l.b16 %v374
      %v415 = vunpack.c.l.b16 %v375
      %v416 = vunpack.c.l.b16 %v376
      %v417 = vunpack.c.l.b16 %v377
      %v418 = vunpack.c.l.b16 %v378
      %v419 = vunpack.c.l.b16 %v379
      %v420 = vunpack.c.l.b16 %v380
      %v421 = vpack.c.b16 %v406, %v405
      %v422 = vpack.c.b16 %v408, %v407
      %v423 = vpack.c.b16 %v410, %v409
      %v424 = vpack.c.b16 %v412, %v411
      %v425 = vpack.c.b16 %v414, %v413
      %v426 = vpack.c.b16 %v416, %v415
      %v427 = vpack.c.b16 %v418, %v417
      %v428 = vpack.c.b16 %v420, %v419
      %437 = vmatprep.subr.bf16.mxu0 0
      %438 = vmatpush1.bf16.msra.mxu0 %v428
      %439 = vmatprep.subr.bf16.mxu0 0
      %440 = vmatpush1.bf16.msra.mxu0 %v427
      %441 = vmatprep.subr.bf16.mxu0 0
      %442 = vmatpush1.bf16.msra.mxu0 %v426
      %443 = vmatprep.subr.bf16.mxu0 0
      %444 = vmatpush1.bf16.msra.mxu0 %v425
      %445 = vmatprep.subr.bf16.mxu0 0
      %446 = vmatpush1.bf16.msra.mxu0 %v424
      %447 = vmatprep.subr.bf16.mxu0 0
      %448 = vmatpush1.bf16.msra.mxu0 %v423
      %449 = vmatprep.subr.bf16.mxu0 0
      %450 = vmatpush1.bf16.msra.mxu0 %v422
      %451 = vmatprep.subr.bf16.mxu0 0
      %452 = vmatpush1.bf16.msra.mxu0 %v421
      %453 = vmatprep.subr.bf16.mxu0 0
      %454 = vmatpush2.bf16.msra.mxu0 0
      %455 = vmatprep.subr.bf16.mxu0 0
      %456 = vmatpush2.bf16.msra.mxu0 0
      %457 = vmatprep.subr.bf16.mxu0 0
      %458 = vmatpush2.bf16.msra.mxu0 0
      %459 = vmatprep.subr.bf16.mxu0 0
      %460 = vmatpush2.bf16.msra.mxu0 0
      %461 = vmatprep.subr.bf16.mxu0 0
      %462 = vmatpush2.bf16.msra.mxu0 0
      %463 = vmatprep.subr.bf16.mxu0 0
      %464 = vmatpush2.bf16.msra.mxu0 0
      %465 = vmatprep.subr.bf16.mxu0 0
      %466 = vmatpush2.bf16.msra.mxu0 0
      %467 = vmatprep.subr.bf16.mxu0 0
      %468 = vmatpush2.bf16.msra.mxu0 0
      %469 = vmatprep.mubr.bf16.mxu0 0
      %470 = vmatmul.mubr.bf16.gmra.mxu0 %v387
      %v471 = vpop.f32.mrf.mxu0
      %v472 = vadd.f32 0.0, %v471
      %v473 = vpop.f32.mrf.mxu0
      %v474 = vpop.f32.mrf.mxu0
      %v475 = vadd.f32 0.0, %v474
      %v476 = vpop.f32.mrf.mxu0
      %477 = vdwg.mxu0
      %v478 = vadd.f32 %v362, %v472
      %v479 = vadd.f32 %v363, %v475
      %s480 = scalar_lea.vmem %s227, 128
      %v481 = vld [vmem:[%s480] sm:$0xf]
      %v482 = vld [vmem:[%s480 + $0x4] sm:$0xf]
      %v483 = vld [vmem:[%s480 + $0x8] sm:$0xf]
      %v484 = vld [vmem:[%s480 + $0xc] sm:$0xf]
      %v485 = vld [vmem:[%s480 + $0x10] sm:$0xf]
      %v486 = vld [vmem:[%s480 + $0x14] sm:$0xf]
      %v487 = vld [vmem:[%s480 + $0x18] sm:$0xf]
      %v488 = vld [vmem:[%s480 + $0x1c] sm:$0xf]
      %v489 = vld [vmem:[%s480 + $0x20] sm:$0xf]
      %v490 = vld [vmem:[%s480 + $0x24] sm:$0xf]
      %v491 = vld [vmem:[%s480 + $0x28] sm:$0xf]
      %v492 = vld [vmem:[%s480 + $0x2c] sm:$0xf]
      %v493 = vld [vmem:[%s480 + $0x30] sm:$0xf]
      %v494 = vld [vmem:[%s480 + $0x34] sm:$0xf]
      %v495 = vld [vmem:[%s480 + $0x38] sm:$0xf]
      %v496 = vld [vmem:[%s480 + $0x3c] sm:$0xf]
      %v497 = vrot.slane %v271, 1
      %v515 = vunpack.c.l.b16 %v481
      %v516 = vunpack.c.l.b16 %v482
      %v517 = vunpack.c.l.b16 %v483
      %v518 = vunpack.c.l.b16 %v484
      %v519 = vunpack.c.l.b16 %v485
      %v520 = vunpack.c.l.b16 %v486
      %v521 = vunpack.c.l.b16 %v487
      %v522 = vunpack.c.l.b16 %v488
      %v523 = vunpack.c.l.b16 %v489
      %v524 = vunpack.c.l.b16 %v490
      %v525 = vunpack.c.l.b16 %v491
      %v526 = vunpack.c.l.b16 %v492
      %v527 = vunpack.c.l.b16 %v493
      %v528 = vunpack.c.l.b16 %v494
      %v529 = vunpack.c.l.b16 %v495
      %v530 = vunpack.c.l.b16 %v496
      %v531 = vpack.c.b16 %v516, %v515
      %v532 = vpack.c.b16 %v518, %v517
      %v533 = vpack.c.b16 %v520, %v519
      %v534 = vpack.c.b16 %v522, %v521
      %v535 = vpack.c.b16 %v524, %v523
      %v536 = vpack.c.b16 %v526, %v525
      %v537 = vpack.c.b16 %v528, %v527
      %v538 = vpack.c.b16 %v530, %v529
      %547 = vmatprep.subr.bf16.mxu0 0
      %548 = vmatpush1.bf16.msra.mxu0 %v538
      %549 = vmatprep.subr.bf16.mxu0 0
      %550 = vmatpush1.bf16.msra.mxu0 %v537
      %551 = vmatprep.subr.bf16.mxu0 0
      %552 = vmatpush1.bf16.msra.mxu0 %v536
      %553 = vmatprep.subr.bf16.mxu0 0
      %554 = vmatpush1.bf16.msra.mxu0 %v535
      %555 = vmatprep.subr.bf16.mxu0 0
      %556 = vmatpush1.bf16.msra.mxu0 %v534
      %557 = vmatprep.subr.bf16.mxu0 0
      %558 = vmatpush1.bf16.msra.mxu0 %v533
      %559 = vmatprep.subr.bf16.mxu0 0
      %560 = vmatpush1.bf16.msra.mxu0 %v532
      %561 = vmatprep.subr.bf16.mxu0 0
      %562 = vmatpush1.bf16.msra.mxu0 %v531
      %563 = vmatprep.subr.bf16.mxu0 0
      %564 = vmatpush2.bf16.msra.mxu0 0
      %565 = vmatprep.subr.bf16.mxu0 0
      %566 = vmatpush2.bf16.msra.mxu0 0
      %567 = vmatprep.subr.bf16.mxu0 0
      %568 = vmatpush2.bf16.msra.mxu0 0
      %569 = vmatprep.subr.bf16.mxu0 0
      %570 = vmatpush2.bf16.msra.mxu0 0
      %571 = vmatprep.subr.bf16.mxu0 0
      %572 = vmatpush2.bf16.msra.mxu0 0
      %573 = vmatprep.subr.bf16.mxu0 0
      %574 = vmatpush2.bf16.msra.mxu0 0
      %575 = vmatprep.subr.bf16.mxu0 0
      %576 = vmatpush2.bf16.msra.mxu0 0
      %577 = vmatprep.subr.bf16.mxu0 0
      %578 = vmatpush2.bf16.msra.mxu0 0
      %579 = vmatprep.mubr.bf16.mxu0 0
      %580 = vmatmul.mubr.bf16.gmra.mxu0 %v497
      %v581 = vpop.f32.mrf.mxu0
      %v582 = vadd.f32 0.0, %v581
      %v583 = vpop.f32.mrf.mxu0
      %v584 = vpop.f32.mrf.mxu0
      %v585 = vadd.f32 0.0, %v584
      %v586 = vpop.f32.mrf.mxu0
      %587 = vdwg.mxu0
      %v588 = vadd.f32 %v478, %v582
      %v589 = vadd.f32 %v479, %v585
      %590 = vst [vmem:[#allocation2] sm:$0xff] %v588
      %591 = vst [vmem:[#allocation2 + $0x8] sm:$0x3f] %v589
      %p592 = scmp.eq.s32.totalorder %s22, 2
      // Predicated region
      $region33: #{inception_stem_forward.35} parent=27 // pred_check
        %p593 = pneg %p592
      $region34: #{inception_stem_forward.35} parent=27 // pred_check_branch
        %595 = sbr.rel (%p593) target = $region36
      $region35: #{inception_stem_forward.35} parent=27 // pred_region
        %v596 = vld [vmem:[#allocation2] sm:$0xff]
        %v597 = vld [vmem:[#allocation2 + $0x8] sm:$0x3f]
        %598 = vst [vmem:[%s239] sm:$0xff] %v596
        %599 = vst [vmem:[%s239 + $0x8] sm:$0x3f] %v597
      $region36: #{inception_stem_forward.35} parent=27 // pred_fallthru
        _
      %p600 = scmp.lt.s32.totalorder %s19, 1
      %s601 = scalar_select %p600, %s19, 1
      %p602 = scmp.lt.s32.totalorder %s20, 13
      %s603 = scalar_select %p602, %s20, 13
      %p604 = scmp.lt.s32.totalorder %s21, 0
      %s605 = scalar_select %p604, %s21, 0
      %s606 = smul.addr %s603, 2
      %s607 = sadd.s32 %s605, %s606
      %s608 = smul.addr %s601, 28
      %s609 = sadd.s32 %s607, %s608
      %s610 = smul.addr %s609, 8
      %s611 = scalar_lea.vmem %s2, %s610
      // Predicated region
      $region37: #{inception_stem_forward.35} parent=27 // pred_check
        %p612 = pneg %p119
      $region38: #{inception_stem_forward.35} parent=27 // pred_check_branch
        %614 = sbr.rel (%p612) target = $region40
      $region39: #{inception_stem_forward.35} parent=27 // pred_region
        _
      $region40: #{inception_stem_forward.35} parent=27 // pred_fallthru
        _
    $region28: #{inception_stem_forward.35} parent=5 // pred_fallthru
      _
    %p615 = scmp.le.s32.totalorder 2, %s8
    // Predicated region
    $region41: #{inception_stem_forward.35} parent=5 // pred_check
      %p616 = pneg %p615
    $region42: #{inception_stem_forward.35} parent=5 // pred_check_branch
      %618 = sbr.rel (%p616) target = $region44
    $region43: #{inception_stem_forward.35} parent=5 // pred_region
      %s619 = ssub.s32 %s8, 2
      // Predicated region
      $region45: #{inception_stem_forward.35} parent=43 // pred_check
        %p620 = pneg %p125
      $region46: #{inception_stem_forward.35} parent=43 // pred_check_branch
        %622 = sbr.rel (%p620) target = $region48
      $region47: #{inception_stem_forward.35} parent=43 // pred_region
        %p623 = scmp.lt.s32.totalorder %s23, 1
        %s624 = scalar_select %p623, %s23, 1
        %p625 = scmp.lt.s32.totalorder %s24, 13
        %s626 = scalar_select %p625, %s24, 13
        %p627 = scmp.lt.s32.totalorder %s25, 0
        %s628 = scalar_select %p627, %s25, 0
        %s629 = smul.addr %s626, 2
        %s630 = sadd.s32 %s628, %s629
        %s631 = smul.addr %s624, 28
        %s632 = sadd.s32 %s630, %s631
        %s633 = smul.addr %s632, 8
        %s634 = scalar_lea.vmem %s2, %s633
      $region48: #{inception_stem_forward.35} parent=43 // pred_fallthru
        _
    $region44: #{inception_stem_forward.35} parent=5 // pred_fallthru
      _
  $region6: #{inception_stem_forward.35} parent=0 // loop_footer
    %s12 = sadd.s32 1, %s8
  $region7: #{inception_stem_forward.35} parent=0 // loop_footer_branch
    %7 = sbr.rel target = $region3
  $region8: #{inception_stem_forward.35} parent=0 // loop_exit
    _

// kernel: inception_stem_forward.36
$region0: #{inception_stem_forward.36}
  #allocation0 [shape = 'u32[]', space=smem, size = 0x4, offset = 0x4, fixed_abs, tag = 'smem constant byte address 0x4 - core index']
  #allocation1 [shape = 'u32[144,128]{1,0:T(1,128)}', space=vmem, size = 0x12000, scoped, tag = 'internal scratch']
  #allocation2 [shape = 'f32[1,128]{1,0:T(1,128)}', space=vmem, size = 0x200, scoped, tag = 'scratch operand']
  #allocation3 [shape = 'f32[1,128]{1,0:T(1,128)}', space=vmem, size = 0x200, scoped, tag = 'scratch operand']
  %s0 = inlined_call_operand.vmem [shape: f32[2,14,14,128], index: 0, kind: input, shape index: {}]
  %s1 = inlined_call_operand.vmem [shape: f32[1,128], index: 1, kind: input, shape index: {}]
  %s2 = inlined_call_operand.vmem [shape: f32[1,128], index: 2, kind: input, shape index: {}]
  %s3 = inlined_call_operand.vmem [shape: f32[1,128], index: 3, kind: output, shape index: {0}]
  %s4 = inlined_call_operand.vmem [shape: f32[1,128], index: 4, kind: output, shape index: {1}]
  %5 = xla_tuple %s3, %s4
  %s6 = sld [smem:[#allocation0]]
  $region61: #{inception_stem_forward.36} parent=0
    _
  %s8 = ssub.s32 1, %s6
  %s9 = scalar_select 0, %s8, %s6
  loop: start=0, step=1, limit=30
  $region2: #{inception_stem_forward.36} parent=0 // loop_pre_header
    _
  $region3: #{inception_stem_forward.36} parent=0 // loop_header
    %s11 = sphi 0, %s15
    %p12 = scmp.ge.s32.totalorder %s11, 30
    %s18 = sphi 0, %s37
    %s19 = sphi 0, %s33
    %s20 = sphi 0, %s29
    %s21 = sphi 0, %s18
    %s22 = sphi 0, %s19
    %s23 = sphi 0, %s20
    %s24 = sphi 0, %s21
    %s25 = sphi 0, %s22
    %s26 = sphi 0, %s23
    %s44 = sphi 0, %s46
    %s47 = sphi 0, %s44
    %s48 = sphi 0, %s47
    %s64 = sphi 0, %s48
    %s70 = sphi 0, %s72
    %s73 = sphi 0, %s70
    %s74 = sphi 0, %s73
    %s90 = sphi 0, %s74
    %s96 = sphi 0, %s98
    %s99 = sphi 0, %s96
    %s100 = sphi 0, %s99
    %s116 = sphi 0, %s100
    %s122 = sphi 0, %s124
    %s125 = sphi 0, %s122
    %s126 = sphi 0, %s125
    %s142 = sphi 0, %s126
    %s148 = sphi 0, %s150
    %s151 = sphi 0, %s148
    %s152 = sphi 0, %s151
    %s168 = sphi 0, %s152
  $region4: #{inception_stem_forward.36} parent=0 // loop_header_branch
    %14 = sbr.rel (%p12) target = $region8
  $region5: #{inception_stem_forward.36} parent=0 // loop_body
    %s16 = ssub.s32 %s11, 1
    %s17 = ssub.s32 %s11, 2
    %s27 = sadd.s32 1, %s20
    %p28 = scmp.ge.s32.totalorder %s27, 14
    %s29 = scalar_select %p28, 0, %s27
    %s30 = sadd.s32 1, %s19
    %s31 = scalar_select %p28, %s30, %s19
    %p32 = scmp.ge.s32.totalorder %s31, 2
    %s33 = scalar_select %p32, 0, %s31
    %s34 = sadd.s32 1, %s18
    %s35 = scalar_select %p32, %s34, %s18
    %p36 = scmp.ge.s32.totalorder %s35, 1
    %s37 = scalar_select %p36, 0, %s35
    %s38 = ssub.s32 %s19, %s33
    %s39 = ssub.s32 %s20, %s29
    %s40 = sor.u32 %s38, %s39
    %s41 = ssub.s32 %s18, %s37
    %s42 = sor.u32 %s40, %s41
    %p43 = scmp.eq.s32.totalorder %s42, 0
    %s45 = sadd.s32 %s44, 1
    %s46 = scalar_select %p43, %s44, %s45
    %p49 = pneg %p43
    %p50 = scmp.eq.s32.totalorder %s11, 27
    %p51 = por %p49, %p50
    %p52 = scmp.ne.s32.totalorder %s44, %s47
    %p53 = scmp.eq.s32.totalorder %s11, 0
    %p54 = por %p52, %p53
    %p55 = scmp.ne.s32.totalorder %s44, %s47
    %p56 = scmp.eq.s32.totalorder %s16, 27
    %p57 = por %p55, %p56
    %p58 = scmp.ne.s32.totalorder %s47, %s48
    %p59 = scmp.eq.s32.totalorder %s16, 0
    %p60 = por %p58, %p59
    %p61 = scmp.ne.s32.totalorder %s47, %s48
    %p62 = scmp.eq.s32.totalorder %s17, 27
    %p63 = por %p61, %p62
    %p65 = scmp.ne.s32.totalorder %s48, %s64
    %p66 = scmp.eq.s32.totalorder %s17, 0
    %p67 = por %p65, %p66
    %s68 = ssub.s32 %s18, %s37
    %p69 = scmp.eq.s32.totalorder %s68, 0
    %s71 = sadd.s32 %s70, 1
    %s72 = scalar_select %p69, %s70, %s71
    %p75 = pneg %p69
    %p76 = scmp.eq.s32.totalorder %s11, 27
    %p77 = por %p75, %p76
    %p78 = scmp.ne.s32.totalorder %s70, %s73
    %p79 = scmp.eq.s32.totalorder %s11, 0
    %p80 = por %p78, %p79
    %p81 = scmp.ne.s32.totalorder %s70, %s73
    %p82 = scmp.eq.s32.totalorder %s16, 27
    %p83 = por %p81, %p82
    %p84 = scmp.ne.s32.totalorder %s73, %s74
    %p85 = scmp.eq.s32.totalorder %s16, 0
    %p86 = por %p84, %p85
    %p87 = scmp.ne.s32.totalorder %s73, %s74
    %p88 = scmp.eq.s32.totalorder %s17, 27
    %p89 = por %p87, %p88
    %p91 = scmp.ne.s32.totalorder %s74, %s90
    %p92 = scmp.eq.s32.totalorder %s17, 0
    %p93 = por %p91, %p92
    %s94 = ssub.s32 %s18, %s37
    %p95 = scmp.eq.s32.totalorder %s94, 0
    %s97 = sadd.s32 %s96, 1
    %s98 = scalar_select %p95, %s96, %s97
    %p101 = pneg %p95
    %p102 = scmp.eq.s32.totalorder %s11, 27
    %p103 = por %p101, %p102
    %p104 = scmp.ne.s32.totalorder %s96, %s99
    %p105 = scmp.eq.s32.totalorder %s11, 0
    %p106 = por %p104, %p105
    %p107 = scmp.ne.s32.totalorder %s96, %s99
    %p108 = scmp.eq.s32.totalorder %s16, 27
    %p109 = por %p107, %p108
    %p110 = scmp.ne.s32.totalorder %s99, %s100
    %p111 = scmp.eq.s32.totalorder %s16, 0
    %p112 = por %p110, %p111
    %p113 = scmp.ne.s32.totalorder %s99, %s100
    %p114 = scmp.eq.s32.totalorder %s17, 27
    %p115 = por %p113, %p114
    %p117 = scmp.ne.s32.totalorder %s100, %s116
    %p118 = scmp.eq.s32.totalorder %s17, 0
    %p119 = por %p117, %p118
    %s120 = ssub.s32 %s18, %s37
    %p121 = scmp.eq.s32.totalorder %s120, 0
    %s123 = sadd.s32 %s122, 1
    %s124 = scalar_select %p121, %s122, %s123
    %p127 = pneg %p121
    %p128 = scmp.eq.s32.totalorder %s11, 27
    %p129 = por %p127, %p128
    %p130 = scmp.ne.s32.totalorder %s122, %s125
    %p131 = scmp.eq.s32.totalorder %s11, 0
    %p132 = por %p130, %p131
    %p133 = scmp.ne.s32.totalorder %s122, %s125
    %p134 = scmp.eq.s32.totalorder %s16, 27
    %p135 = por %p133, %p134
    %p136 = scmp.ne.s32.totalorder %s125, %s126
    %p137 = scmp.eq.s32.totalorder %s16, 0
    %p138 = por %p136, %p137
    %p139 = scmp.ne.s32.totalorder %s125, %s126
    %p140 = scmp.eq.s32.totalorder %s17, 27
    %p141 = por %p139, %p140
    %p143 = scmp.ne.s32.totalorder %s126, %s142
    %p144 = scmp.eq.s32.totalorder %s17, 0
    %p145 = por %p143, %p144
    %s146 = ssub.s32 %s18, %s37
    %p147 = scmp.eq.s32.totalorder %s146, 0
    %s149 = sadd.s32 %s148, 1
    %s150 = scalar_select %p147, %s148, %s149
    %p153 = pneg %p147
    %p154 = scmp.eq.s32.totalorder %s11, 27
    %p155 = por %p153, %p154
    %p156 = scmp.ne.s32.totalorder %s148, %s151
    %p157 = scmp.eq.s32.totalorder %s11, 0
    %p158 = por %p156, %p157
    %p159 = scmp.ne.s32.totalorder %s148, %s151
    %p160 = scmp.eq.s32.totalorder %s16, 27
    %p161 = por %p159, %p160
    %p162 = scmp.ne.s32.totalorder %s151, %s152
    %p163 = scmp.eq.s32.totalorder %s16, 0
    %p164 = por %p162, %p163
    %p165 = scmp.ne.s32.totalorder %s151, %s152
    %p166 = scmp.eq.s32.totalorder %s17, 27
    %p167 = por %p165, %p166
    %p169 = scmp.ne.s32.totalorder %s152, %s168
    %p170 = scmp.eq.s32.totalorder %s17, 0
    %p171 = por %p169, %p170
    %p172 = scmp.le.s32.totalorder 1, %s11
    %p173 = scmp.lt.s32.totalorder %s11, 29
    %p174 = pnand %p172, %p173
    %p175 = pneg %p174
    // Predicated region
    $region9: #{inception_stem_forward.36} parent=5 // pred_check
      _
    $region10: #{inception_stem_forward.36} parent=5 // pred_check_branch
      %177 = sbr.rel (%p174) target = $region12
    $region11: #{inception_stem_forward.36} parent=5 // pred_region
      %s178 = ssub.s32 %s11, 1
      // Predicated region
      $region13: #{inception_stem_forward.36} parent=11 // pred_check
        %p179 = pneg %p86
      $region14: #{inception_stem_forward.36} parent=11 // pred_check_branch
        %181 = sbr.rel (%p179) target = $region16
      $region15: #{inception_stem_forward.36} parent=11 // pred_region
        %p182 = scmp.lt.s32.totalorder %s21, 0
        %s183 = scalar_select %p182, %s21, 0
        %s184 = scalar_lea.vmem %s1, %s183
      $region16: #{inception_stem_forward.36} parent=11 // pred_fallthru
        _
      // Predicated region
      $region17: #{inception_stem_forward.36} parent=11 // pred_check
        %p185 = pneg %p112
      $region18: #{inception_stem_forward.36} parent=11 // pred_check_branch
        %187 = sbr.rel (%p185) target = $region20
      $region19: #{inception_stem_forward.36} parent=11 // pred_region
        %p188 = scmp.lt.s32.totalorder %s21, 0
        %s189 = scalar_select %p188, %s21, 0
        %s190 = scalar_lea.vmem %s2, %s189
      $region20: #{inception_stem_forward.36} parent=11 // pred_fallthru
        _
    $region12: #{inception_stem_forward.36} parent=5 // pred_fallthru
      _
    %p191 = scmp.lt.s32.totalorder %s11, 28
    // Predicated region
    $region21: #{inception_stem_forward.36} parent=5 // pred_check
      %p192 = pneg %p191
    $region22: #{inception_stem_forward.36} parent=5 // pred_check_branch
      %194 = sbr.rel (%p192) target = $region24
    $region23: #{inception_stem_forward.36} parent=5 // pred_region
      // Predicated region
      $region25: #{inception_stem_forward.36} parent=23 // pred_check
        %p195 = pneg %p54
      $region26: #{inception_stem_forward.36} parent=23 // pred_check_branch
        %197 = sbr.rel (%p195) target = $region28
      $region27: #{inception_stem_forward.36} parent=23 // pred_region
        %p198 = scmp.lt.s32.totalorder %s19, 1
        %s199 = scalar_select %p198, %s19, 1
        %p200 = scmp.lt.s32.totalorder %s20, 13
        %s201 = scalar_select %p200, %s20, 13
        %p202 = scmp.lt.s32.totalorder %s18, 0
        %s203 = scalar_select %p202, %s18, 0
        %s204 = smul.addr %s201, 2
        %s205 = sadd.s32 %s203, %s204
        %s206 = smul.addr %s199, 28
        %s207 = sadd.s32 %s205, %s206
        %s208 = smul.addr %s207, 8
        %s209 = scalar_lea.vmem %s0, %s208
      $region28: #{inception_stem_forward.36} parent=23 // pred_fallthru
        _
    $region24: #{inception_stem_forward.36} parent=5 // pred_fallthru
      _
    %p210 = scmp.le.s32.totalorder 1, %s11
    %p211 = scmp.lt.s32.totalorder %s11, 29
    %p212 = pnand %p210, %p211
    %p213 = pneg %p212
    // Predicated region
    $region29: #{inception_stem_forward.36} parent=5 // pred_check
      _
    $region30: #{inception_stem_forward.36} parent=5 // pred_check_branch
      %215 = sbr.rel (%p212) target = $region32
    $region31: #{inception_stem_forward.36} parent=5 // pred_region
      %s216 = ssub.s32 %s11, 1
      %p217 = scmp.lt.s32.totalorder %s22, 1
      %s218 = scalar_select %p217, %s22, 1
      %p219 = scmp.lt.s32.totalorder %s23, 13
      %s220 = scalar_select %p219, %s23, 13
      %p221 = scmp.lt.s32.totalorder %s21, 0
      %s222 = scalar_select %p221, %s21, 0
      %s223 = smul.addr %s220, 2
      %s224 = sadd.s32 %s222, %s223
      %s225 = smul.addr %s218, 28
      %s226 = sadd.s32 %s224, %s225
      %s227 = smul.addr %s226, 8
      %s228 = scalar_lea.vmem %s0, %s227
      %p229 = pneg %p60
      %p230 = pneg %p57
      %p231 = scmp.lt.s32.totalorder %s21, 0
      %s232 = scalar_select %p231, %s21, 0
      %s233 = scalar_lea.vmem %s1, %s232
      %p234 = pneg %p86
      %p235 = pneg %p83
      %p236 = scmp.lt.s32.totalorder %s21, 0
      %s237 = scalar_select %p236, %s21, 0
      %s238 = scalar_lea.vmem %s2, %s237
      %p239 = pneg %p112
      %p240 = pneg %p109
      %p241 = pneg %p138
      %p242 = pneg %p135
      %p243 = scmp.lt.s32.totalorder %s21, 0
      %s244 = scalar_select %p243, %s21, 0
      %s245 = scalar_lea.vmem %s3, %s244
      %p246 = pneg %p164
      %p247 = pneg %p161
      %p248 = scmp.lt.s32.totalorder %s21, 0
      %s249 = scalar_select %p248, %s21, 0
      %s250 = scalar_lea.vmem %s4, %s249
      %p251 = scmp.lt.s32.totalorder %s22, 1
      %s252 = scalar_select %p251, %s22, 1
      %p253 = scmp.lt.s32.totalorder %s23, 13
      %s254 = scalar_select %p253, %s23, 13
      %p255 = scmp.lt.s32.totalorder %s21, 0
      %s256 = scalar_select %p255, %s21, 0
      %s257 = smul.addr %s254, 2
      %s258 = sadd.s32 %s256, %s257
      %s259 = smul.addr %s252, 28
      %s260 = sadd.s32 %s258, %s259
      %s261 = smul.addr %s260, 8
      %s262 = scalar_lea.vmem %s0, %s261
      %p263 = scmp.lt.s32.totalorder %s21, 0
      %s264 = scalar_select %p263, %s21, 0
      %s265 = scalar_lea.vmem %s1, %s264
      %p266 = scmp.lt.s32.totalorder %s21, 0
      %s267 = scalar_select %p266, %s21, 0
      %s268 = scalar_lea.vmem %s2, %s267
      %p269 = scmp.lt.s32.totalorder %s21, 0
      %s270 = scalar_select %p269, %s21, 0
      %s271 = scalar_lea.vmem %s3, %s270
      %p272 = scmp.lt.s32.totalorder %s21, 0
      %s273 = scalar_select %p272, %s21, 0
      %s274 = scalar_lea.vmem %s4, %s273
      %p275 = scmp.eq.s32.totalorder %s22, 0
      %p276 = scmp.eq.s32.totalorder %s23, 0
      %p277 = pnand %p275, %p276
      %p278 = pneg %p277
      // Predicated region
      $region33: #{inception_stem_forward.36} parent=31 // pred_check
        _
      $region34: #{inception_stem_forward.36} parent=31 // pred_check_branch
        %280 = sbr.rel (%p277) target = $region36
      $region35: #{inception_stem_forward.36} parent=31 // pred_region
        %281 = vst [vmem:[#allocation2] sm:$0x1] 0.0
        %282 = vst [vmem:[#allocation3] sm:$0x1] 0.0
      $region36: #{inception_stem_forward.36} parent=31 // pred_fallthru
        _
      %v283 = vld [vmem:[%s262] sm:$0xff]
      %v284 = vld [vmem:[%s262 + $0x8] sm:$0x3f]
      %v285 = vld [vmem:[#allocation2] sm:$0x1]
      %vm286 = vcmask 1045504
      %v287 = vsel %vm286, %v284, 0.0
      %v288 = vadd.f32 %v283, %v287
      %v289 = vrot.slane %v288, 4
      %v290 = vadd.f32 %v288, %v289
      %v291 = vrot.slane %v290, 2
      %v292 = vadd.f32 %v290, %v291
      %v293 = vrot.slane %v292, 1
      %v294 = vadd.f32 %v292, %v293
      %v295 = vadd.f32 %v285, %v294
      %296 = vst [vmem:[#allocation2] sm:$0x1] %v295
      %v297 = vld [vmem:[#allocation3] sm:$0x1]
      %v298 = vmul.f32 %v283, %v283
      %v299 = vmul.f32 %v284, %v284
      %v300 = vsel %vm286, %v299, 0.0
      %v301 = vadd.f32 %v298, %v300
      %v302 = vrot.slane %v301, 4
      %v303 = vadd.f32 %v301, %v302
      %v304 = vrot.slane %v303, 2
      %v305 = vadd.f32 %v303, %v304
      %v306 = vrot.slane %v305, 1
      %v307 = vadd.f32 %v305, %v306
      %v308 = vadd.f32 %v297, %v307
      %309 = vst [vmem:[#allocation3] sm:$0x1] %v308
      %p310 = scmp.eq.s32.totalorder %s22, 1
      %p311 = scmp.eq.s32.totalorder %s23, 13
      %p312 = pnand %p310, %p311
      %p313 = pneg %p312
      // Predicated region
      $region37: #{inception_stem_forward.36} parent=31 // pred_check
        _
      $region38: #{inception_stem_forward.36} parent=31 // pred_check_branch
        %315 = sbr.rel (%p312) target = $region40
      $region39: #{inception_stem_forward.36} parent=31 // pred_region
        %v316 = vld [vmem:[#allocation2] sm:$0x1]
        %v317 = vmul.f32 %v316, 0.0025510204
        %v318 = vld [vmem:[#allocation3] sm:$0x1]
        %v319 = vmul.f32 %v318, 0.0025510204
        %v320 = vmul.f32 %v317, %v317
        %v321 = vsub.f32 %v319, %v320
        %v322 = vmax.f32 %v321, 0.0
        %v323 = vld [vmem:[%s265] sm:$0x1]
        %v324 = vadd.f32 %v322, 1e-05
        %v325 = vrsqrt.pop %v324
        %v326 = vmul.f32 %v323, %v325
        %327 = vst [vmem:[%s271] sm:$0x1] %v326
        %v328 = vld [vmem:[%s268] sm:$0x1]
        %v329 = vmul.f32 %v317, %v326
        %v330 = vsub.f32 %v328, %v329
        %331 = vst [vmem:[%s274] sm:$0x1] %v330
      $region40: #{inception_stem_forward.36} parent=31 // pred_fallthru
        _
      %p332 = scmp.lt.s32.totalorder %s21, 0
      %s333 = scalar_select %p332, %s21, 0
      %s334 = scalar_lea.vmem %s3, %s333
      %p335 = scmp.lt.s32.totalorder %s21, 0
      %s336 = scalar_select %p335, %s21, 0
      %s337 = scalar_lea.vmem %s4, %s336
      // Predicated region
      $region41: #{inception_stem_forward.36} parent=31 // pred_check
        %p338 = pneg %p135
      $region42: #{inception_stem_forward.36} parent=31 // pred_check_branch
        %340 = sbr.rel (%p338) target = $region44
      $region43: #{inception_stem_forward.36} parent=31 // pred_region
        _
      $region44: #{inception_stem_forward.36} parent=31 // pred_fallthru
        _
      // Predicated region
      $region45: #{inception_stem_forward.36} parent=31 // pred_check
        %p341 = pneg %p161
      $region46: #{inception_stem_forward.36} parent=31 // pred_check_branch
        %343 = sbr.rel (%p341) target = $region48
      $region47: #{inception_stem_forward.36} parent=31 // pred_region
        _
      $region48: #{inception_stem_forward.36} parent=31 // pred_fallthru
        _
      // Predicated region
      $region49: #{inception_stem_forward.36} parent=31 // pred_check
        %p344 = pneg %p135
      $region50: #{inception_stem_forward.36} parent=31 // pred_check_branch
        %346 = sbr.rel (%p344) target = $region52
      $region51: #{inception_stem_forward.36} parent=31 // pred_region
        %p347 = scmp.lt.s32.totalorder %s21, 0
        %s348 = scalar_select %p347, %s21, 0
        %s349 = scalar_lea.vmem %s3, %s348
      $region52: #{inception_stem_forward.36} parent=31 // pred_fallthru
        _
      // Predicated region
      $region53: #{inception_stem_forward.36} parent=31 // pred_check
        %p350 = pneg %p161
      $region54: #{inception_stem_forward.36} parent=31 // pred_check_branch
        %352 = sbr.rel (%p350) target = $region56
      $region55: #{inception_stem_forward.36} parent=31 // pred_region
        %p353 = scmp.lt.s32.totalorder %s21, 0
        %s354 = scalar_select %p353, %s21, 0
        %s355 = scalar_lea.vmem %s4, %s354
      $region56: #{inception_stem_forward.36} parent=31 // pred_fallthru
        _
    $region32: #{inception_stem_forward.36} parent=5 // pred_fallthru
      _
    %p356 = scmp.le.s32.totalorder 2, %s11
    // Predicated region
    $region57: #{inception_stem_forward.36} parent=5 // pred_check
      %p357 = pneg %p356
    $region58: #{inception_stem_forward.36} parent=5 // pred_check_branch
      %359 = sbr.rel (%p357) target = $region60
    $region59: #{inception_stem_forward.36} parent=5 // pred_region
      %s360 = ssub.s32 %s11, 2
    $region60: #{inception_stem_forward.36} parent=5 // pred_fallthru
      _
  $region6: #{inception_stem_forward.36} parent=0 // loop_footer
    %s15 = sadd.s32 1, %s11
  $region7: #{inception_stem_forward.36} parent=0 // loop_footer_branch
    %10 = sbr.rel target = $region3
  $region8: #{inception_stem_forward.36} parent=0 // loop_exit
    _

// kernel: inception_stem_forward.37
$region0: #{inception_stem_forward.37}
  #allocation0 [shape = 'u32[]', space=smem, size = 0x4, offset = 0x4, fixed_abs, tag = 'smem constant byte address 0x4 - core index']
  #allocation1 [shape = 'u32[144,128]{1,0:T(1,128)}', space=vmem, size = 0x12000, scoped, tag = 'internal scratch']
  %s0 = inlined_call_operand.vmem [shape: f32[2,14,14,128], index: 0, kind: input, shape index: {}]
  %s1 = inlined_call_operand.vmem [shape: f32[1,128], index: 1, kind: input, shape index: {}]
  %s2 = inlined_call_operand.vmem [shape: f32[1,128], index: 2, kind: input, shape index: {}]
  %s3 = inlined_call_operand.vmem [shape: bf16[2,14,14,128], index: 3, kind: output, shape index: {}]
  %s4 = sld [smem:[#allocation0]]
  $region45: #{inception_stem_forward.37} parent=0
    _
  %s6 = ssub.s32 1, %s4
  %s7 = scalar_select 0, %s6, %s4
  loop: start=0, step=1, limit=30
  $region2: #{inception_stem_forward.37} parent=0 // loop_pre_header
    _
  $region3: #{inception_stem_forward.37} parent=0 // loop_header
    %s9 = sphi 0, %s13
    %p10 = scmp.ge.s32.totalorder %s9, 30
    %s16 = sphi 0, %s35
    %s17 = sphi 0, %s31
    %s18 = sphi 0, %s27
    %s19 = sphi 0, %s16
    %s20 = sphi 0, %s17
    %s21 = sphi 0, %s18
    %s22 = sphi 0, %s19
    %s23 = sphi 0, %s20
    %s24 = sphi 0, %s21
    %s42 = sphi 0, %s44
    %s45 = sphi 0, %s42
    %s46 = sphi 0, %s45
    %s62 = sphi 0, %s46
    %s68 = sphi 0, %s70
    %s71 = sphi 0, %s68
    %s72 = sphi 0, %s71
    %s88 = sphi 0, %s72
    %s94 = sphi 0, %s96
    %s97 = sphi 0, %s94
    %s98 = sphi 0, %s97
    %s114 = sphi 0, %s98
    %s124 = sphi 0, %s126
    %s127 = sphi 0, %s124
    %s128 = sphi 0, %s127
    %s144 = sphi 0, %s128
  $region4: #{inception_stem_forward.37} parent=0 // loop_header_branch
    %12 = sbr.rel (%p10) target = $region8
  $region5: #{inception_stem_forward.37} parent=0 // loop_body
    %s14 = ssub.s32 %s9, 1
    %s15 = ssub.s32 %s9, 2
    %s25 = sadd.s32 1, %s18
    %p26 = scmp.ge.s32.totalorder %s25, 1
    %s27 = scalar_select %p26, 0, %s25
    %s28 = sadd.s32 1, %s17
    %s29 = scalar_select %p26, %s28, %s17
    %p30 = scmp.ge.s32.totalorder %s29, 14
    %s31 = scalar_select %p30, 0, %s29
    %s32 = sadd.s32 1, %s16
    %s33 = scalar_select %p30, %s32, %s16
    %p34 = scmp.ge.s32.totalorder %s33, 2
    %s35 = scalar_select %p34, 0, %s33
    %s36 = ssub.s32 %s16, %s35
    %s37 = ssub.s32 %s17, %s31
    %s38 = sor.u32 %s36, %s37
    %s39 = ssub.s32 %s18, %s27
    %s40 = sor.u32 %s38, %s39
    %p41 = scmp.eq.s32.totalorder %s40, 0
    %s43 = sadd.s32 %s42, 1
    %s44 = scalar_select %p41, %s42, %s43
    %p47 = pneg %p41
    %p48 = scmp.eq.s32.totalorder %s9, 27
    %p49 = por %p47, %p48
    %p50 = scmp.ne.s32.totalorder %s42, %s45
    %p51 = scmp.eq.s32.totalorder %s9, 0
    %p52 = por %p50, %p51
    %p53 = scmp.ne.s32.totalorder %s42, %s45
    %p54 = scmp.eq.s32.totalorder %s14, 27
    %p55 = por %p53, %p54
    %p56 = scmp.ne.s32.totalorder %s45, %s46
    %p57 = scmp.eq.s32.totalorder %s14, 0
    %p58 = por %p56, %p57
    %p59 = scmp.ne.s32.totalorder %s45, %s46
    %p60 = scmp.eq.s32.totalorder %s15, 27
    %p61 = por %p59, %p60
    %p63 = scmp.ne.s32.totalorder %s46, %s62
    %p64 = scmp.eq.s32.totalorder %s15, 0
    %p65 = por %p63, %p64
    %s66 = ssub.s32 %s18, %s27
    %p67 = scmp.eq.s32.totalorder %s66, 0
    %s69 = sadd.s32 %s68, 1
    %s70 = scalar_select %p67, %s68, %s69
    %p73 = pneg %p67
    %p74 = scmp.eq.s32.totalorder %s9, 27
    %p75 = por %p73, %p74
    %p76 = scmp.ne.s32.totalorder %s68, %s71
    %p77 = scmp.eq.s32.totalorder %s9, 0
    %p78 = por %p76, %p77
    %p79 = scmp.ne.s32.totalorder %s68, %s71
    %p80 = scmp.eq.s32.totalorder %s14, 27
    %p81 = por %p79, %p80
    %p82 = scmp.ne.s32.totalorder %s71, %s72
    %p83 = scmp.eq.s32.totalorder %s14, 0
    %p84 = por %p82, %p83
    %p85 = scmp.ne.s32.totalorder %s71, %s72
    %p86 = scmp.eq.s32.totalorder %s15, 27
    %p87 = por %p85, %p86
    %p89 = scmp.ne.s32.totalorder %s72, %s88
    %p90 = scmp.eq.s32.totalorder %s15, 0
    %p91 = por %p89, %p90
    %s92 = ssub.s32 %s18, %s27
    %p93 = scmp.eq.s32.totalorder %s92, 0
    %s95 = sadd.s32 %s94, 1
    %s96 = scalar_select %p93, %s94, %s95
    %p99 = pneg %p93
    %p100 = scmp.eq.s32.totalorder %s9, 27
    %p101 = por %p99, %p100
    %p102 = scmp.ne.s32.totalorder %s94, %s97
    %p103 = scmp.eq.s32.totalorder %s9, 0
    %p104 = por %p102, %p103
    %p105 = scmp.ne.s32.totalorder %s94, %s97
    %p106 = scmp.eq.s32.totalorder %s14, 27
    %p107 = por %p105, %p106
    %p108 = scmp.ne.s32.totalorder %s97, %s98
    %p109 = scmp.eq.s32.totalorder %s14, 0
    %p110 = por %p108, %p109
    %p111 = scmp.ne.s32.totalorder %s97, %s98
    %p112 = scmp.eq.s32.totalorder %s15, 27
    %p113 = por %p111, %p112
    %p115 = scmp.ne.s32.totalorder %s98, %s114
    %p116 = scmp.eq.s32.totalorder %s15, 0
    %p117 = por %p115, %p116
    %s118 = ssub.s32 %s16, %s35
    %s119 = ssub.s32 %s17, %s31
    %s120 = sor.u32 %s118, %s119
    %s121 = ssub.s32 %s18, %s27
    %s122 = sor.u32 %s120, %s121
    %p123 = scmp.eq.s32.totalorder %s122, 0
    %s125 = sadd.s32 %s124, 1
    %s126 = scalar_select %p123, %s124, %s125
    %p129 = pneg %p123
    %p130 = scmp.eq.s32.totalorder %s9, 27
    %p131 = por %p129, %p130
    %p132 = scmp.ne.s32.totalorder %s124, %s127
    %p133 = scmp.eq.s32.totalorder %s9, 0
    %p134 = por %p132, %p133
    %p135 = scmp.ne.s32.totalorder %s124, %s127
    %p136 = scmp.eq.s32.totalorder %s14, 27
    %p137 = por %p135, %p136
    %p138 = scmp.ne.s32.totalorder %s127, %s128
    %p139 = scmp.eq.s32.totalorder %s14, 0
    %p140 = por %p138, %p139
    %p141 = scmp.ne.s32.totalorder %s127, %s128
    %p142 = scmp.eq.s32.totalorder %s15, 27
    %p143 = por %p141, %p142
    %p145 = scmp.ne.s32.totalorder %s128, %s144
    %p146 = scmp.eq.s32.totalorder %s15, 0
    %p147 = por %p145, %p146
    %p148 = scmp.le.s32.totalorder 1, %s9
    %p149 = scmp.lt.s32.totalorder %s9, 29
    %p150 = pnand %p148, %p149
    %p151 = pneg %p150
    // Predicated region
    $region9: #{inception_stem_forward.37} parent=5 // pred_check
      _
    $region10: #{inception_stem_forward.37} parent=5 // pred_check_branch
      %153 = sbr.rel (%p150) target = $region12
    $region11: #{inception_stem_forward.37} parent=5 // pred_region
      %s154 = ssub.s32 %s9, 1
      // Predicated region
      $region13: #{inception_stem_forward.37} parent=11 // pred_check
        %p155 = pneg %p84
      $region14: #{inception_stem_forward.37} parent=11 // pred_check_branch
        %157 = sbr.rel (%p155) target = $region16
      $region15: #{inception_stem_forward.37} parent=11 // pred_region
        %p158 = scmp.lt.s32.totalorder %s21, 0
        %s159 = scalar_select %p158, %s21, 0
        %s160 = scalar_lea.vmem %s1, %s159
      $region16: #{inception_stem_forward.37} parent=11 // pred_fallthru
        _
      // Predicated region
      $region17: #{inception_stem_forward.37} parent=11 // pred_check
        %p161 = pneg %p110
      $region18: #{inception_stem_forward.37} parent=11 // pred_check_branch
        %163 = sbr.rel (%p161) target = $region20
      $region19: #{inception_stem_forward.37} parent=11 // pred_region
        %p164 = scmp.lt.s32.totalorder %s21, 0
        %s165 = scalar_select %p164, %s21, 0
        %s166 = scalar_lea.vmem %s2, %s165
      $region20: #{inception_stem_forward.37} parent=11 // pred_fallthru
        _
    $region12: #{inception_stem_forward.37} parent=5 // pred_fallthru
      _
    %p167 = scmp.lt.s32.totalorder %s9, 28
    // Predicated region
    $region21: #{inception_stem_forward.37} parent=5 // pred_check
      %p168 = pneg %p167
    $region22: #{inception_stem_forward.37} parent=5 // pred_check_branch
      %170 = sbr.rel (%p168) target = $region24
    $region23: #{inception_stem_forward.37} parent=5 // pred_region
      // Predicated region
      $region25: #{inception_stem_forward.37} parent=23 // pred_check
        %p171 = pneg %p52
      $region26: #{inception_stem_forward.37} parent=23 // pred_check_branch
        %173 = sbr.rel (%p171) target = $region28
      $region27: #{inception_stem_forward.37} parent=23 // pred_region
        %p174 = scmp.lt.s32.totalorder %s16, 1
        %s175 = scalar_select %p174, %s16, 1
        %p176 = scmp.lt.s32.totalorder %s17, 13
        %s177 = scalar_select %p176, %s17, 13
        %p178 = scmp.lt.s32.totalorder %s18, 0
        %s179 = scalar_select %p178, %s18, 0
        %s180 = smul.addr %s177, 2
        %s181 = sadd.s32 %s179, %s180
        %s182 = smul.addr %s175, 28
        %s183 = sadd.s32 %s181, %s182
        %s184 = smul.addr %s183, 8
        %s185 = scalar_lea.vmem %s0, %s184
      $region28: #{inception_stem_forward.37} parent=23 // pred_fallthru
        _
    $region24: #{inception_stem_forward.37} parent=5 // pred_fallthru
      _
    %p186 = scmp.le.s32.totalorder 1, %s9
    %p187 = scmp.lt.s32.totalorder %s9, 29
    %p188 = pnand %p186, %p187
    %p189 = pneg %p188
    // Predicated region
    $region29: #{inception_stem_forward.37} parent=5 // pred_check
      _
    $region30: #{inception_stem_forward.37} parent=5 // pred_check_branch
      %191 = sbr.rel (%p188) target = $region32
    $region31: #{inception_stem_forward.37} parent=5 // pred_region
      %s192 = ssub.s32 %s9, 1
      %p193 = scmp.lt.s32.totalorder %s19, 1
      %s194 = scalar_select %p193, %s19, 1
      %p195 = scmp.lt.s32.totalorder %s20, 13
      %s196 = scalar_select %p195, %s20, 13
      %p197 = scmp.lt.s32.totalorder %s21, 0
      %s198 = scalar_select %p197, %s21, 0
      %s199 = smul.addr %s196, 2
      %s200 = sadd.s32 %s198, %s199
      %s201 = smul.addr %s194, 28
      %s202 = sadd.s32 %s200, %s201
      %s203 = smul.addr %s202, 8
      %s204 = scalar_lea.vmem %s0, %s203
      %p205 = pneg %p58
      %p206 = pneg %p55
      %p207 = scmp.lt.s32.totalorder %s21, 0
      %s208 = scalar_select %p207, %s21, 0
      %s209 = scalar_lea.vmem %s1, %s208
      %p210 = pneg %p84
      %p211 = pneg %p81
      %p212 = scmp.lt.s32.totalorder %s21, 0
      %s213 = scalar_select %p212, %s21, 0
      %s214 = scalar_lea.vmem %s2, %s213
      %p215 = pneg %p110
      %p216 = pneg %p107
      %p217 = pneg %p140
      %p218 = pneg %p137
      %p219 = scmp.lt.s32.totalorder %s19, 1
      %s220 = scalar_select %p219, %s19, 1
      %p221 = scmp.lt.s32.totalorder %s20, 13
      %s222 = scalar_select %p221, %s20, 13
      %p223 = scmp.lt.s32.totalorder %s21, 0
      %s224 = scalar_select %p223, %s21, 0
      %s225 = smul.addr %s222, 2
      %s226 = sadd.s32 %s224, %s225
      %s227 = smul.addr %s220, 28
      %s228 = sadd.s32 %s226, %s227
      %s229 = smul.addr %s228, 4
      %s230 = scalar_lea.vmem %s3, %s229
      %p231 = scmp.lt.s32.totalorder %s19, 1
      %s232 = scalar_select %p231, %s19, 1
      %p233 = scmp.lt.s32.totalorder %s20, 13
      %s234 = scalar_select %p233, %s20, 13
      %p235 = scmp.lt.s32.totalorder %s21, 0
      %s236 = scalar_select %p235, %s21, 0
      %s237 = smul.addr %s234, 2
      %s238 = sadd.s32 %s236, %s237
      %s239 = smul.addr %s232, 28
      %s240 = sadd.s32 %s238, %s239
      %s241 = smul.addr %s240, 8
      %s242 = scalar_lea.vmem %s0, %s241
      %p243 = scmp.lt.s32.totalorder %s21, 0
      %s244 = scalar_select %p243, %s21, 0
      %s245 = scalar_lea.vmem %s1, %s244
      %p246 = scmp.lt.s32.totalorder %s21, 0
      %s247 = scalar_select %p246, %s21, 0
      %s248 = scalar_lea.vmem %s2, %s247
      %p249 = scmp.lt.s32.totalorder %s19, 1
      %s250 = scalar_select %p249, %s19, 1
      %p251 = scmp.lt.s32.totalorder %s20, 13
      %s252 = scalar_select %p251, %s20, 13
      %p253 = scmp.lt.s32.totalorder %s21, 0
      %s254 = scalar_select %p253, %s21, 0
      %s255 = smul.addr %s252, 2
      %s256 = sadd.s32 %s254, %s255
      %s257 = smul.addr %s250, 28
      %s258 = sadd.s32 %s256, %s257
      %s259 = smul.addr %s258, 4
      %s260 = scalar_lea.vmem %s3, %s259
      %v261 = vld [vmem:[%s242] sm:$0xff]
      %v262 = vld [vmem:[%s242 + $0x8] sm:$0x3f]
      %v263 = vld [vmem:[%s245] sm:$0x1]
      %v265 = vlaneseq
      %v266 = vshrl.u32 %v265, 7
      %v267 = vsub.s32 0, %v266
      %v268 = vrot.slane %v263, %v267
      %v270 = vmul.f32 %v261, %v268
      %v271 = vmul.f32 %v262, %v268
      %v272 = vld [vmem:[%s248] sm:$0x1]
      %v274 = vlaneseq
      %v275 = vshrl.u32 %v274, 7
      %v276 = vsub.s32 0, %v275
      %v277 = vrot.slane %v272, %v276
      %v279 = vadd.f32 %v270, %v277
      %v280 = vadd.f32 %v271, %v277
      %v281 = vmax.f32 %v279, 0.0
      %v282 = vmax.f32 %v280, 0.0
      %v283 = vpack.c.bf16 %v282, %v281
      %v285 = vunpack.c.l.b16 %v283
      %v286 = vunpack.c.h.b16 %v283
      %v287 = vpack.c.b16 %v285, %v285
      %v288 = vpack.c.b16 %v286, %v286
      %291 = vst [vmem:[%s260] sm:$0xf] %v287
      %292 = vst [vmem:[%s260 + $0x4] sm:$0x7] %v288
      %p293 = scmp.lt.s32.totalorder %s19, 1
      %s294 = scalar_select %p293, %s19, 1
      %p295 = scmp.lt.s32.totalorder %s20, 13
      %s296 = scalar_select %p295, %s20, 13
      %p297 = scmp.lt.s32.totalorder %s21, 0
      %s298 = scalar_select %p297, %s21, 0
      %s299 = smul.addr %s296, 2
      %s300 = sadd.s32 %s298, %s299
      %s301 = smul.addr %s294, 28
      %s302 = sadd.s32 %s300, %s301
      %s303 = smul.addr %s302, 4
      %s304 = scalar_lea.vmem %s3, %s303
      // Predicated region
      $region33: #{inception_stem_forward.37} parent=31 // pred_check
        %p305 = pneg %p137
      $region34: #{inception_stem_forward.37} parent=31 // pred_check_branch
        %307 = sbr.rel (%p305) target = $region36
      $region35: #{inception_stem_forward.37} parent=31 // pred_region
        _
      $region36: #{inception_stem_forward.37} parent=31 // pred_fallthru
        _
    $region32: #{inception_stem_forward.37} parent=5 // pred_fallthru
      _
    %p308 = scmp.le.s32.totalorder 2, %s9
    // Predicated region
    $region37: #{inception_stem_forward.37} parent=5 // pred_check
      %p309 = pneg %p308
    $region38: #{inception_stem_forward.37} parent=5 // pred_check_branch
      %311 = sbr.rel (%p309) target = $region40
    $region39: #{inception_stem_forward.37} parent=5 // pred_region
      %s312 = ssub.s32 %s9, 2
      // Predicated region
      $region41: #{inception_stem_forward.37} parent=39 // pred_check
        %p313 = pneg %p143
      $region42: #{inception_stem_forward.37} parent=39 // pred_check_branch
        %315 = sbr.rel (%p313) target = $region44
      $region43: #{inception_stem_forward.37} parent=39 // pred_region
        %p316 = scmp.lt.s32.totalorder %s22, 1
        %s317 = scalar_select %p316, %s22, 1
        %p318 = scmp.lt.s32.totalorder %s23, 13
        %s319 = scalar_select %p318, %s23, 13
        %p320 = scmp.lt.s32.totalorder %s24, 0
        %s321 = scalar_select %p320, %s24, 0
        %s322 = smul.addr %s319, 2
        %s323 = sadd.s32 %s321, %s322
        %s324 = smul.addr %s317, 28
        %s325 = sadd.s32 %s323, %s324
        %s326 = smul.addr %s325, 4
        %s327 = scalar_lea.vmem %s3, %s326
      $region44: #{inception_stem_forward.37} parent=39 // pred_fallthru
        _
    $region40: #{inception_stem_forward.37} parent=5 // pred_fallthru
      _
  $region6: #{inception_stem_forward.37} parent=0 // loop_footer
    %s13 = sadd.s32 1, %s9
  $region7: #{inception_stem_forward.37} parent=0 // loop_footer_branch
    %8 = sbr.rel target = $region3
  $region8: #{inception_stem_forward.37} parent=0 // loop_exit
    _

// kernel: inception_stem_forward.47
$region0: #{inception_stem_forward.47}
  #allocation0 [shape = 'u32[]', space=smem, size = 0x4, offset = 0x4, fixed_abs, tag = 'smem constant byte address 0x4 - core index']
  #allocation1 [shape = 'u32[144,128]{1,0:T(1,128)}', space=vmem, size = 0x12000, scoped, tag = 'internal scratch']
  #allocation2 [shape = 'bf16[14,128]{1,0:T(8,128)(2,1)}', space=vmem, size = 0x1000, scoped, tag = 'scratch operand']
  %s0 = inlined_call_operand.vmem [shape: bf16[2,16,16,128], index: 0, kind: input, shape index: {}]
  %s1 = inlined_call_operand.vmem [shape: bf16[2,14,14,128], index: 1, kind: output, shape index: {}]
  %s2 = sld [smem:[#allocation0]]
  $region45: #{inception_stem_forward.47} parent=0
    _
  %s4 = ssub.s32 1, %s2
  %s5 = scalar_select 0, %s4, %s2
  loop: start=0, step=1, limit=86
  $region2: #{inception_stem_forward.47} parent=0 // loop_pre_header
    _
  $region3: #{inception_stem_forward.47} parent=0 // loop_header
    %s7 = sphi 0, %s11
    %p8 = scmp.ge.s32.totalorder %s7, 86
    %s14 = sphi 0, %s33
    %s15 = sphi 0, %s29
    %s16 = sphi 0, %s25
    %s17 = sphi 0, %s14
    %s18 = sphi 0, %s15
    %s19 = sphi 0, %s16
    %s20 = sphi 0, %s17
    %s21 = sphi 0, %s18
    %s22 = sphi 0, %s19
    %s40 = sphi 0, %s42
    %s43 = sphi 0, %s40
    %s44 = sphi 0, %s43
    %s60 = sphi 0, %s44
    %s68 = sphi 0, %s70
    %s71 = sphi 0, %s68
    %s72 = sphi 0, %s71
    %s88 = sphi 0, %s72
  $region4: #{inception_stem_forward.47} parent=0 // loop_header_branch
    %10 = sbr.rel (%p8) target = $region8
  $region5: #{inception_stem_forward.47} parent=0 // loop_body
    %s12 = ssub.s32 %s7, 1
    %s13 = ssub.s32 %s7, 2
    %s23 = sadd.s32 1, %s16
    %p24 = scmp.ge.s32.totalorder %s23, 3
    %s25 = scalar_select %p24, 0, %s23
    %s26 = sadd.s32 1, %s15
    %s27 = scalar_select %p24, %s26, %s15
    %p28 = scmp.ge.s32.totalorder %s27, 14
    %s29 = scalar_select %p28, 0, %s27
    %s30 = sadd.s32 1, %s14
    %s31 = scalar_select %p28, %s30, %s14
    %p32 = scmp.ge.s32.totalorder %s31, 2
    %s33 = scalar_select %p32, 0, %s31
    %s34 = sadd.s32 %s15, %s16
    %s35 = sadd.s32 %s29, %s25
    %s36 = ssub.s32 %s14, %s33
    %s37 = ssub.s32 %s34, %s35
    %s38 = sor.u32 %s36, %s37
    %p39 = scmp.eq.s32.totalorder %s38, 0
    %s41 = sadd.s32 %s40, 1
    %s42 = scalar_select %p39, %s40, %s41
    %p45 = pneg %p39
    %p46 = scmp.eq.s32.totalorder %s7, 83
    %p47 = por %p45, %p46
    %p48 = scmp.ne.s32.totalorder %s40, %s43
    %p49 = scmp.eq.s32.totalorder %s7, 0
    %p50 = por %p48, %p49
    %p51 = scmp.ne.s32.totalorder %s40, %s43
    %p52 = scmp.eq.s32.totalorder %s12, 83
    %p53 = por %p51, %p52
    %p54 = scmp.ne.s32.totalorder %s43, %s44
    %p55 = scmp.eq.s32.totalorder %s12, 0
    %p56 = por %p54, %p55
    %p57 = scmp.ne.s32.totalorder %s43, %s44
    %p58 = scmp.eq.s32.totalorder %s13, 83
    %p59 = por %p57, %p58
    %p61 = scmp.ne.s32.totalorder %s44, %s60
    %p62 = scmp.eq.s32.totalorder %s13, 0
    %p63 = por %p61, %p62
    %s64 = ssub.s32 %s14, %s33
    %s65 = ssub.s32 %s15, %s29
    %s66 = sor.u32 %s64, %s65
    %p67 = scmp.eq.s32.totalorder %s66, 0
    %s69 = sadd.s32 %s68, 1
    %s70 = scalar_select %p67, %s68, %s69
    %p73 = pneg %p67
    %p74 = scmp.eq.s32.totalorder %s7, 83
    %p75 = por %p73, %p74
    %p76 = scmp.ne.s32.totalorder %s68, %s71
    %p77 = scmp.eq.s32.totalorder %s7, 0
    %p78 = por %p76, %p77
    %p79 = scmp.ne.s32.totalorder %s68, %s71
    %p80 = scmp.eq.s32.totalorder %s12, 83
    %p81 = por %p79, %p80
    %p82 = scmp.ne.s32.totalorder %s71, %s72
    %p83 = scmp.eq.s32.totalorder %s12, 0
    %p84 = por %p82, %p83
    %p85 = scmp.ne.s32.totalorder %s71, %s72
    %p86 = scmp.eq.s32.totalorder %s13, 83
    %p87 = por %p85, %p86
    %p89 = scmp.ne.s32.totalorder %s72, %s88
    %p90 = scmp.eq.s32.totalorder %s13, 0
    %p91 = por %p89, %p90
    %p92 = scmp.le.s32.totalorder 1, %s7
    %p93 = scmp.lt.s32.totalorder %s7, 85
    %p94 = pnand %p92, %p93
    %p95 = pneg %p94
    // Predicated region
    $region9: #{inception_stem_forward.47} parent=5 // pred_check
      _
    $region10: #{inception_stem_forward.47} parent=5 // pred_check_branch
      %97 = sbr.rel (%p94) target = $region12
    $region11: #{inception_stem_forward.47} parent=5 // pred_region
      %s98 = ssub.s32 %s7, 1
    $region12: #{inception_stem_forward.47} parent=5 // pred_fallthru
      _
    %p99 = scmp.lt.s32.totalorder %s7, 84
    // Predicated region
    $region13: #{inception_stem_forward.47} parent=5 // pred_check
      %p100 = pneg %p99
    $region14: #{inception_stem_forward.47} parent=5 // pred_check_branch
      %102 = sbr.rel (%p100) target = $region16
    $region15: #{inception_stem_forward.47} parent=5 // pred_region
      // Predicated region
      $region17: #{inception_stem_forward.47} parent=15 // pred_check
        %p103 = pneg %p50
      $region18: #{inception_stem_forward.47} parent=15 // pred_check_branch
        %105 = sbr.rel (%p103) target = $region20
      $region19: #{inception_stem_forward.47} parent=15 // pred_region
        %s106 = sadd.s32 %s15, %s16
        %p107 = scmp.lt.s32.totalorder %s14, 1
        %s108 = scalar_select %p107, %s14, 1
        %p109 = scmp.lt.s32.totalorder %s106, 15
        %s110 = scalar_select %p109, %s106, 15
        %s111 = smul.addr %s110, 2
        %s112 = smul.addr %s108, 32
        %s113 = sadd.s32 %s111, %s112
        %s114 = smul.addr %s113, 4
        %s115 = scalar_lea.vmem %s0, %s114
        %s116 = sadd.s32 %s15, %s16
      $region20: #{inception_stem_forward.47} parent=15 // pred_fallthru
        _
    $region16: #{inception_stem_forward.47} parent=5 // pred_fallthru
      _
    %p117 = scmp.le.s32.totalorder 1, %s7
    %p118 = scmp.lt.s32.totalorder %s7, 85
    %p119 = pnand %p117, %p118
    %p120 = pneg %p119
    // Predicated region
    $region21: #{inception_stem_forward.47} parent=5 // pred_check
      _
    $region22: #{inception_stem_forward.47} parent=5 // pred_check_branch
      %122 = sbr.rel (%p119) target = $region24
    $region23: #{inception_stem_forward.47} parent=5 // pred_region
      %s123 = ssub.s32 %s7, 1
      %s124 = sadd.s32 %s18, %s19
      %p125 = scmp.lt.s32.totalorder %s17, 1
      %s126 = scalar_select %p125, %s17, 1
      %p127 = scmp.lt.s32.totalorder %s124, 15
      %s128 = scalar_select %p127, %s124, 15
      %s129 = smul.addr %s128, 2
      %s130 = smul.addr %s126, 32
      %s131 = sadd.s32 %s129, %s130
      %s132 = smul.addr %s131, 4
      %s133 = scalar_lea.vmem %s0, %s132
      %p134 = pneg %p56
      %p135 = pneg %p53
      %p136 = pneg %p84
      %p137 = pneg %p81
      %p138 = scmp.lt.s32.totalorder %s17, 1
      %s139 = scalar_select %p138, %s17, 1
      %p140 = scmp.lt.s32.totalorder %s18, 13
      %s141 = scalar_select %p140, %s18, 13
      %s142 = smul.addr %s141, 2
      %s143 = smul.addr %s139, 28
      %s144 = sadd.s32 %s142, %s143
      %s145 = smul.addr %s144, 4
      %s146 = scalar_lea.vmem %s1, %s145
      %s147 = sadd.s32 %s18, %s19
      %p148 = scmp.lt.s32.totalorder %s17, 1
      %s149 = scalar_select %p148, %s17, 1
      %p150 = scmp.lt.s32.totalorder %s147, 15
      %s151 = scalar_select %p150, %s147, 15
      %s152 = smul.addr %s151, 2
      %s153 = smul.addr %s149, 32
      %s154 = sadd.s32 %s152, %s153
      %s155 = smul.addr %s154, 4
      %s156 = scalar_lea.vmem %s0, %s155
      %s157 = sadd.s32 %s18, %s19
      %p158 = scmp.lt.s32.totalorder %s17, 1
      %s159 = scalar_select %p158, %s17, 1
      %p160 = scmp.lt.s32.totalorder %s18, 13
      %s161 = scalar_select %p160, %s18, 13
      %s162 = smul.addr %s161, 2
      %s163 = smul.addr %s159, 28
      %s164 = sadd.s32 %s162, %s163
      %s165 = smul.addr %s164, 4
      %s166 = scalar_lea.vmem %s1, %s165
      %p168 = scmp.eq.s32.totalorder %s19, 0
      // Predicated region
      $region25: #{inception_stem_forward.47} parent=23 // pred_check
        %p169 = pneg %p168
      $region26: #{inception_stem_forward.47} parent=23 // pred_check_branch
        %171 = sbr.rel (%p169) target = $region28
      $region27: #{inception_stem_forward.47} parent=23 // pred_region
        %172 = vst [vmem:[#allocation2] sm:$0xf] 4286644096
        %173 = vst [vmem:[#allocation2 + $0x4] sm:$0x7] 4286644096
      $region28: #{inception_stem_forward.47} parent=23 // pred_fallthru
        _
      %v174 = vld [vmem:[%s156] sm:$0xf]
      %v175 = vld [vmem:[%s156 + $0x4] sm:$0xf]
      %vm176 = vsmask.f32 3328
      %vm177 = vsmask.f32 7440
      %vm178 = vmor %vm176, %vm177
      %v180 = vshrl.u32 %v174, 16
      %v182 = vrot.slane %v180, 4
      %v183 = vshll.u32 %v174, 16
      %v185 = vrot.slane %v183, 5
      %v186 = vor.u32 %v182, %v185
      %v187 = vrot.slane %v186, 4
      %v189 = vshll.u32 %v175, 16
      %v191 = vrot.slane %v189, 5
      %v192 = vsel %vm178, %v187, %v191
      %v193 = vshrl.u32 %v175, 16
      %v195 = vrot.slane %v193, 4
      %v196 = vor.u32 %v195, %v191
      %v197 = vrot.slane %v196, 4
      %v200 = vmax.bf16 %v174, %v192
      %v201 = vmax.bf16 %v175, %v197
      %vm204 = vcmask 1042432
      %vm205 = vcmask 1046532
      %vm206 = vmor %vm204, %vm205
      %v207 = vrot.slane %v174, 5
      %v208 = vrot.slane %v207, 4
      %v209 = vrot.slane %v175, 5
      %v210 = vsel %vm206, %v208, %v209
      %v211 = vrot.slane %v209, 4
      %v214 = vmax.bf16 %v200, %v210
      %v215 = vmax.bf16 %v201, %v211
      %v216 = vld [vmem:[#allocation2] sm:$0xf]
      %v217 = vld [vmem:[#allocation2 + $0x4] sm:$0x7]
      %v218 = vmax.bf16 %v216, %v214
      %v219 = vmax.bf16 %v217, %v215
      %220 = vst [vmem:[#allocation2] sm:$0xf] %v218
      %221 = vst [vmem:[#allocation2 + $0x4] sm:$0x7] %v219
      %p222 = scmp.eq.s32.totalorder %s19, 2
      // Predicated region
      $region29: #{inception_stem_forward.47} parent=23 // pred_check
        %p223 = pneg %p222
      $region30: #{inception_stem_forward.47} parent=23 // pred_check_branch
        %225 = sbr.rel (%p223) target = $region32
      $region31: #{inception_stem_forward.47} parent=23 // pred_region
        %v226 = vld [vmem:[#allocation2] sm:$0xf]
        %v227 = vld [vmem:[#allocation2 + $0x4] sm:$0x7]
        %228 = vst [vmem:[%s166] sm:$0xf] %v226
        %229 = vst [vmem:[%s166 + $0x4] sm:$0x7] %v227
      $region32: #{inception_stem_forward.47} parent=23 // pred_fallthru
        _
      %p230 = scmp.lt.s32.totalorder %s17, 1
      %s231 = scalar_select %p230, %s17, 1
      %p232 = scmp.lt.s32.totalorder %s18, 13
      %s233 = scalar_select %p232, %s18, 13
      %s234 = smul.addr %s233, 2
      %s235 = smul.addr %s231, 28
      %s236 = sadd.s32 %s234, %s235
      %s237 = smul.addr %s236, 4
      %s238 = scalar_lea.vmem %s1, %s237
      // Predicated region
      $region33: #{inception_stem_forward.47} parent=23 // pred_check
        %p239 = pneg %p81
      $region34: #{inception_stem_forward.47} parent=23 // pred_check_branch
        %241 = sbr.rel (%p239) target = $region36
      $region35: #{inception_stem_forward.47} parent=23 // pred_region
        _
      $region36: #{inception_stem_forward.47} parent=23 // pred_fallthru
        _
    $region24: #{inception_stem_forward.47} parent=5 // pred_fallthru
      _
    %p242 = scmp.le.s32.totalorder 2, %s7
    // Predicated region
    $region37: #{inception_stem_forward.47} parent=5 // pred_check
      %p243 = pneg %p242
    $region38: #{inception_stem_forward.47} parent=5 // pred_check_branch
      %245 = sbr.rel (%p243) target = $region40
    $region39: #{inception_stem_forward.47} parent=5 // pred_region
      %s246 = ssub.s32 %s7, 2
      // Predicated region
      $region41: #{inception_stem_forward.47} parent=39 // pred_check
        %p247 = pneg %p87
      $region42: #{inception_stem_forward.47} parent=39 // pred_check_branch
        %249 = sbr.rel (%p247) target = $region44
      $region43: #{inception_stem_forward.47} parent=39 // pred_region
        %p250 = scmp.lt.s32.totalorder %s20, 1
        %s251 = scalar_select %p250, %s20, 1
        %p252 = scmp.lt.s32.totalorder %s21, 13
        %s253 = scalar_select %p252, %s21, 13
        %s254 = smul.addr %s253, 2
        %s255 = smul.addr %s251, 28
        %s256 = sadd.s32 %s254, %s255
        %s257 = smul.addr %s256, 4
        %s258 = scalar_lea.vmem %s1, %s257
      $region44: #{inception_stem_forward.47} parent=39 // pred_fallthru
        _
    $region40: #{inception_stem_forward.47} parent=5 // pred_fallthru
      _
  $region6: #{inception_stem_forward.47} parent=0 // loop_footer
    %s11 = sadd.s32 1, %s7
  $region7: #{inception_stem_forward.47} parent=0 // loop_footer_branch
    %6 = sbr.rel target = $region3
  $region8: #{inception_stem_forward.47} parent=0 // loop_exit
    _

// kernel: inception_stem_forward.48
$region0: #{inception_stem_forward.48}
  #allocation0 [shape = 'u32[]', space=smem, size = 0x4, offset = 0x4, fixed_abs, tag = 'smem constant byte address 0x4 - core index']
  #allocation1 [shape = 'u32[144,128]{1,0:T(1,128)}', space=vmem, size = 0x12000, scoped, tag = 'internal scratch']
  #allocation2 [shape = 'f32[14,128]{1,0:T(8,128)}', space=vmem, size = 0x2000, scoped, tag = 'scratch operand']
  %s0 = inlined_call_operand.vmem [shape: bf16[2,14,14,256], index: 0, kind: input, shape index: {}]
  %s1 = inlined_call_operand.vmem [shape: bf16[1,1,256,128], index: 1, kind: input, shape index: {}]
  %s2 = inlined_call_operand.vmem [shape: f32[2,14,14,128], index: 2, kind: output, shape index: {}]
  %s3 = sld [smem:[#allocation0]]
  $region49: #{inception_stem_forward.48} parent=0
    _
  %s5 = ssub.s32 1, %s3
  %s6 = scalar_select 0, %s5, %s3
  loop: start=0, step=1, limit=30
  $region2: #{inception_stem_forward.48} parent=0 // loop_pre_header
    _
  $region3: #{inception_stem_forward.48} parent=0 // loop_header
    %s8 = sphi 0, %s12
    %p9 = scmp.ge.s32.totalorder %s8, 30
    %s15 = sphi 0, %s41
    %s16 = sphi 0, %s37
    %s17 = sphi 0, %s33
    %s18 = sphi 0, %s29
    %s19 = sphi 0, %s15
    %s20 = sphi 0, %s16
    %s21 = sphi 0, %s17
    %s22 = sphi 0, %s18
    %s23 = sphi 0, %s19
    %s24 = sphi 0, %s20
    %s25 = sphi 0, %s21
    %s26 = sphi 0, %s22
    %s48 = sphi 0, %s50
    %s51 = sphi 0, %s48
    %s52 = sphi 0, %s51
    %s68 = sphi 0, %s52
    %s76 = sphi 0, %s78
    %s79 = sphi 0, %s76
    %s80 = sphi 0, %s79
    %s96 = sphi 0, %s80
    %s106 = sphi 0, %s108
    %s109 = sphi 0, %s106
    %s110 = sphi 0, %s109
    %s126 = sphi 0, %s110
  $region4: #{inception_stem_forward.48} parent=0 // loop_header_branch
    %11 = sbr.rel (%p9) target = $region8
  $region5: #{inception_stem_forward.48} parent=0 // loop_body
    %s13 = ssub.s32 %s8, 1
    %s14 = ssub.s32 %s8, 2
    %s27 = sadd.s32 1, %s18
    %p28 = scmp.ge.s32.totalorder %s27, 1
    %s29 = scalar_select %p28, 0, %s27
    %s30 = sadd.s32 1, %s17
    %s31 = scalar_select %p28, %s30, %s17
    %p32 = scmp.ge.s32.totalorder %s31, 1
    %s33 = scalar_select %p32, 0, %s31
    %s34 = sadd.s32 1, %s16
    %s35 = scalar_select %p32, %s34, %s16
    %p36 = scmp.ge.s32.totalorder %s35, 14
    %s37 = scalar_select %p36, 0, %s35
    %s38 = sadd.s32 1, %s15
    %s39 = scalar_select %p36, %s38, %s15
    %p40 = scmp.ge.s32.totalorder %s39, 2
    %s41 = scalar_select %p40, 0, %s39
    %s42 = sadd.s32 %s16, %s18
    %s43 = sadd.s32 %s37, %s29
    %s44 = ssub.s32 %s15, %s41
    %s45 = ssub.s32 %s42, %s43
    %s46 = sor.u32 %s44, %s45
    %p47 = scmp.eq.s32.totalorder %s46, 0
    %s49 = sadd.s32 %s48, 1
    %s50 = scalar_select %p47, %s48, %s49
    %p53 = pneg %p47
    %p54 = scmp.eq.s32.totalorder %s8, 27
    %p55 = por %p53, %p54
    %p56 = scmp.ne.s32.totalorder %s48, %s51
    %p57 = scmp.eq.s32.totalorder %s8, 0
    %p58 = por %p56, %p57
    %p59 = scmp.ne.s32.totalorder %s48, %s51
    %p60 = scmp.eq.s32.totalorder %s13, 27
    %p61 = por %p59, %p60
    %p62 = scmp.ne.s32.totalorder %s51, %s52
    %p63 = scmp.eq.s32.totalorder %s13, 0
    %p64 = por %p62, %p63
    %p65 = scmp.ne.s32.totalorder %s51, %s52
    %p66 = scmp.eq.s32.totalorder %s14, 27
    %p67 = por %p65, %p66
    %p69 = scmp.ne.s32.totalorder %s52, %s68
    %p70 = scmp.eq.s32.totalorder %s14, 0
    %p71 = por %p69, %p70
    %s72 = ssub.s32 %s18, %s29
    %s73 = ssub.s32 %s17, %s33
    %s74 = sor.u32 %s72, %s73
    %p75 = scmp.eq.s32.totalorder %s74, 0
    %s77 = sadd.s32 %s76, 1
    %s78 = scalar_select %p75, %s76, %s77
    %p81 = pneg %p75
    %p82 = scmp.eq.s32.totalorder %s8, 27
    %p83 = por %p81, %p82
    %p84 = scmp.ne.s32.totalorder %s76, %s79
    %p85 = scmp.eq.s32.totalorder %s8, 0
    %p86 = por %p84, %p85
    %p87 = scmp.ne.s32.totalorder %s76, %s79
    %p88 = scmp.eq.s32.totalorder %s13, 27
    %p89 = por %p87, %p88
    %p90 = scmp.ne.s32.totalorder %s79, %s80
    %p91 = scmp.eq.s32.totalorder %s13, 0
    %p92 = por %p90, %p91
    %p93 = scmp.ne.s32.totalorder %s79, %s80
    %p94 = scmp.eq.s32.totalorder %s14, 27
    %p95 = por %p93, %p94
    %p97 = scmp.ne.s32.totalorder %s80, %s96
    %p98 = scmp.eq.s32.totalorder %s14, 0
    %p99 = por %p97, %p98
    %s100 = ssub.s32 %s15, %s41
    %s101 = ssub.s32 %s16, %s37
    %s102 = sor.u32 %s100, %s101
    %s103 = ssub.s32 %s17, %s33
    %s104 = sor.u32 %s102, %s103
    %p105 = scmp.eq.s32.totalorder %s104, 0
    %s107 = sadd.s32 %s106, 1
    %s108 = scalar_select %p105, %s106, %s107
    %p111 = pneg %p105
    %p112 = scmp.eq.s32.totalorder %s8, 27
    %p113 = por %p111, %p112
    %p114 = scmp.ne.s32.totalorder %s106, %s109
    %p115 = scmp.eq.s32.totalorder %s8, 0
    %p116 = por %p114, %p115
    %p117 = scmp.ne.s32.totalorder %s106, %s109
    %p118 = scmp.eq.s32.totalorder %s13, 27
    %p119 = por %p117, %p118
    %p120 = scmp.ne.s32.totalorder %s109, %s110
    %p121 = scmp.eq.s32.totalorder %s13, 0
    %p122 = por %p120, %p121
    %p123 = scmp.ne.s32.totalorder %s109, %s110
    %p124 = scmp.eq.s32.totalorder %s14, 27
    %p125 = por %p123, %p124
    %p127 = scmp.ne.s32.totalorder %s110, %s126
    %p128 = scmp.eq.s32.totalorder %s14, 0
    %p129 = por %p127, %p128
    %p130 = scmp.le.s32.totalorder 1, %s8
    %p131 = scmp.lt.s32.totalorder %s8, 29
    %p132 = pnand %p130, %p131
    %p133 = pneg %p132
    // Predicated region
    $region9: #{inception_stem_forward.48} parent=5 // pred_check
      _
    $region10: #{inception_stem_forward.48} parent=5 // pred_check_branch
      %135 = sbr.rel (%p132) target = $region12
    $region11: #{inception_stem_forward.48} parent=5 // pred_region
      %s136 = ssub.s32 %s8, 1
      // Predicated region
      $region13: #{inception_stem_forward.48} parent=11 // pred_check
        %p137 = pneg %p92
      $region14: #{inception_stem_forward.48} parent=11 // pred_check_branch
        %139 = sbr.rel (%p137) target = $region16
      $region15: #{inception_stem_forward.48} parent=11 // pred_region
        %p140 = scmp.lt.s32.totalorder %s22, 0
        %s141 = scalar_select %p140, %s22, 0
        %p142 = scmp.lt.s32.totalorder %s21, 0
        %s143 = scalar_select %p142, %s21, 0
        %s144 = smul.addr %s141, 32
        %s145 = sadd.s32 %s143, %s144
        %s146 = smul.addr %s145, 4
        %s147 = scalar_lea.vmem %s1, %s146
      $region16: #{inception_stem_forward.48} parent=11 // pred_fallthru
        _
    $region12: #{inception_stem_forward.48} parent=5 // pred_fallthru
      _
    %p148 = scmp.lt.s32.totalorder %s8, 28
    // Predicated region
    $region17: #{inception_stem_forward.48} parent=5 // pred_check
      %p149 = pneg %p148
    $region18: #{inception_stem_forward.48} parent=5 // pred_check_branch
      %151 = sbr.rel (%p149) target = $region20
    $region19: #{inception_stem_forward.48} parent=5 // pred_region
      // Predicated region
      $region21: #{inception_stem_forward.48} parent=19 // pred_check
        %p152 = pneg %p58
      $region22: #{inception_stem_forward.48} parent=19 // pred_check_branch
        %154 = sbr.rel (%p152) target = $region24
      $region23: #{inception_stem_forward.48} parent=19 // pred_region
        %s155 = sadd.s32 %s16, %s18
        %p156 = scmp.lt.s32.totalorder %s15, 1
        %s157 = scalar_select %p156, %s15, 1
        %p158 = scmp.lt.s32.totalorder %s155, 13
        %s159 = scalar_select %p158, %s155, 13
        %s160 = smul.addr %s159, 4
        %s161 = smul.addr %s157, 56
        %s162 = sadd.s32 %s160, %s161
        %s163 = smul.addr %s162, 4
        %s164 = scalar_lea.vmem %s0, %s163
        %s165 = sadd.s32 %s16, %s18
      $region24: #{inception_stem_forward.48} parent=19 // pred_fallthru
        _
    $region20: #{inception_stem_forward.48} parent=5 // pred_fallthru
      _
    %p166 = scmp.le.s32.totalorder 1, %s8
    %p167 = scmp.lt.s32.totalorder %s8, 29
    %p168 = pnand %p166, %p167
    %p169 = pneg %p168
    // Predicated region
    $region25: #{inception_stem_forward.48} parent=5 // pred_check
      _
    $region26: #{inception_stem_forward.48} parent=5 // pred_check_branch
      %171 = sbr.rel (%p168) target = $region28
    $region27: #{inception_stem_forward.48} parent=5 // pred_region
      %s172 = ssub.s32 %s8, 1
      %s173 = sadd.s32 %s20, %s22
      %p174 = scmp.lt.s32.totalorder %s19, 1
      %s175 = scalar_select %p174, %s19, 1
      %p176 = scmp.lt.s32.totalorder %s173, 13
      %s177 = scalar_select %p176, %s173, 13
      %s178 = smul.addr %s177, 4
      %s179 = smul.addr %s175, 56
      %s180 = sadd.s32 %s178, %s179
      %s181 = smul.addr %s180, 4
      %s182 = scalar_lea.vmem %s0, %s181
      %p183 = pneg %p64
      %p184 = pneg %p61
      %p185 = scmp.lt.s32.totalorder %s22, 0
      %s186 = scalar_select %p185, %s22, 0
      %p187 = scmp.lt.s32.totalorder %s21, 0
      %s188 = scalar_select %p187, %s21, 0
      %s189 = smul.addr %s186, 32
      %s190 = sadd.s32 %s188, %s189
      %s191 = smul.addr %s190, 4
      %s192 = scalar_lea.vmem %s1, %s191
      %p193 = pneg %p92
      %p194 = pneg %p89
      %p195 = pneg %p122
      %p196 = pneg %p119
      %p197 = scmp.lt.s32.totalorder %s19, 1
      %s198 = scalar_select %p197, %s19, 1
      %p199 = scmp.lt.s32.totalorder %s20, 13
      %s200 = scalar_select %p199, %s20, 13
      %p201 = scmp.lt.s32.totalorder %s21, 0
      %s202 = scalar_select %p201, %s21, 0
      %s203 = smul.addr %s200, 2
      %s204 = sadd.s32 %s202, %s203
      %s205 = smul.addr %s198, 28
      %s206 = sadd.s32 %s204, %s205
      %s207 = smul.addr %s206, 8
      %s208 = scalar_lea.vmem %s2, %s207
      %s209 = sadd.s32 %s20, %s22
      %p210 = scmp.lt.s32.totalorder %s19, 1
      %s211 = scalar_select %p210, %s19, 1
      %p212 = scmp.lt.s32.totalorder %s209, 13
      %s213 = scalar_select %p212, %s209, 13
      %s214 = smul.addr %s213, 4
      %s215 = smul.addr %s211, 56
      %s216 = sadd.s32 %s214, %s215
      %s217 = smul.addr %s216, 4
      %s218 = scalar_lea.vmem %s0, %s217
      %s219 = sadd.s32 %s20, %s22
      %p220 = scmp.lt.s32.totalorder %s22, 0
      %s221 = scalar_select %p220, %s22, 0
      %p222 = scmp.lt.s32.totalorder %s21, 0
      %s223 = scalar_select %p222, %s21, 0
      %s224 = smul.addr %s221, 32
      %s225 = sadd.s32 %s223, %s224
      %s226 = smul.addr %s225, 4
      %s227 = scalar_lea.vmem %s1, %s226
      %p228 = scmp.lt.s32.totalorder %s19, 1
      %s229 = scalar_select %p228, %s19, 1
      %p230 = scmp.lt.s32.totalorder %s20, 13
      %s231 = scalar_select %p230, %s20, 13
      %p232 = scmp.lt.s32.totalorder %s21, 0
      %s233 = scalar_select %p232, %s21, 0
      %s234 = smul.addr %s231, 2
      %s235 = sadd.s32 %s233, %s234
      %s236 = smul.addr %s229, 28
      %s237 = sadd.s32 %s235, %s236
      %s238 = smul.addr %s237, 8
      %s239 = scalar_lea.vmem %s2, %s238
      %p241 = scmp.eq.s32.totalorder %s22, 0
      // Predicated region
      $region29: #{inception_stem_forward.48} parent=27 // pred_check
        %p242 = pneg %p241
      $region30: #{inception_stem_forward.48} parent=27 // pred_check_branch
        %244 = sbr.rel (%p242) target = $region32
      $region31: #{inception_stem_forward.48} parent=27 // pred_region
        %245 = vst [vmem:[#allocation2] sm:$0xff] 0.0
        %246 = vst [vmem:[#allocation2 + $0x8] sm:$0x3f] 0.0
      $region32: #{inception_stem_forward.48} parent=27 // pred_fallthru
        _
      %v247 = vld [vmem:[%s218] sm:$0xff]
      %v248 = vld [vmem:[%s218 + $0x8] sm:$0x77]
      %v249 = vld [vmem:[#allocation2] sm:$0xff]
      %v250 = vld [vmem:[#allocation2 + $0x8] sm:$0x3f]
      %v251 = vld [vmem:[%s227] sm:$0xf]
      %v252 = vld [vmem:[%s227 + $0x4] sm:$0xf]
      %v253 = vld [vmem:[%s227 + $0x8] sm:$0xf]
      %v254 = vld [vmem:[%s227 + $0xc] sm:$0xf]
      %v255 = vld [vmem:[%s227 + $0x10] sm:$0xf]
      %v256 = vld [vmem:[%s227 + $0x14] sm:$0xf]
      %v257 = vld [vmem:[%s227 + $0x18] sm:$0xf]
      %v258 = vld [vmem:[%s227 + $0x1c] sm:$0xf]
      %v259 = vld [vmem:[%s227 + $0x20] sm:$0xf]
      %v260 = vld [vmem:[%s227 + $0x24] sm:$0xf]
      %v261 = vld [vmem:[%s227 + $0x28] sm:$0xf]
      %v262 = vld [vmem:[%s227 + $0x2c] sm:$0xf]
      %v263 = vld [vmem:[%s227 + $0x30] sm:$0xf]
      %v264 = vld [vmem:[%s227 + $0x34] sm:$0xf]
      %v265 = vld [vmem:[%s227 + $0x38] sm:$0xf]
      %v266 = vld [vmem:[%s227 + $0x3c] sm:$0xf]
      %v267 = vld [vmem:[%s227 + $0x40] sm:$0xf]
      %v268 = vld [vmem:[%s227 + $0x44] sm:$0xf]
      %v269 = vld [vmem:[%s227 + $0x48] sm:$0xf]
      %v270 = vld [vmem:[%s227 + $0x4c] sm:$0xf]
      %v271 = vld [vmem:[%s227 + $0x50] sm:$0xf]
      %v272 = vld [vmem:[%s227 + $0x54] sm:$0xf]
      %v273 = vld [vmem:[%s227 + $0x58] sm:$0xf]
      %v274 = vld [vmem:[%s227 + $0x5c] sm:$0xf]
      %v275 = vld [vmem:[%s227 + $0x60] sm:$0xf]
      %v276 = vld [vmem:[%s227 + $0x64] sm:$0xf]
      %v277 = vld [vmem:[%s227 + $0x68] sm:$0xf]
      %v278 = vld [vmem:[%s227 + $0x6c] sm:$0xf]
      %v279 = vld [vmem:[%s227 + $0x70] sm:$0xf]
      %v280 = vld [vmem:[%s227 + $0x74] sm:$0xf]
      %v281 = vld [vmem:[%s227 + $0x78] sm:$0xf]
      %v282 = vld [vmem:[%s227 + $0x7c] sm:$0xf]
      %v285 = vunpack.c.l.b16 %v247
      %v286 = vunpack.c.h.b16 %v247
      %v287 = vunpack.c.l.b16 %v248
      %v288 = vunpack.c.h.b16 %v248
      %v289 = vpack.c.b16 %v287, %v285
      %v290 = vpack.c.b16 %v288, %v286
      %v325 = vunpack.c.l.b16 %v251
      %v326 = vunpack.c.l.b16 %v252
      %v327 = vunpack.c.l.b16 %v253
      %v328 = vunpack.c.l.b16 %v254
      %v329 = vunpack.c.l.b16 %v255
      %v330 = vunpack.c.l.b16 %v256
      %v331 = vunpack.c.l.b16 %v257
      %v332 = vunpack.c.l.b16 %v258
      %v333 = vunpack.c.l.b16 %v259
      %v334 = vunpack.c.l.b16 %v260
      %v335 = vunpack.c.l.b16 %v261
      %v336 = vunpack.c.l.b16 %v262
      %v337 = vunpack.c.l.b16 %v263
      %v338 = vunpack.c.l.b16 %v264
      %v339 = vunpack.c.l.b16 %v265
      %v340 = vunpack.c.l.b16 %v266
      %v341 = vunpack.c.l.b16 %v267
      %v342 = vunpack.c.l.b16 %v268
      %v343 = vunpack.c.l.b16 %v269
      %v344 = vunpack.c.l.b16 %v270
      %v345 = vunpack.c.l.b16 %v271
      %v346 = vunpack.c.l.b16 %v272
      %v347 = vunpack.c.l.b16 %v273
      %v348 = vunpack.c.l.b16 %v274
      %v349 = vunpack.c.l.b16 %v275
      %v350 = vunpack.c.l.b16 %v276
      %v351 = vunpack.c.l.b16 %v277
      %v352 = vunpack.c.l.b16 %v278
      %v353 = vunpack.c.l.b16 %v279
      %v354 = vunpack.c.l.b16 %v280
      %v355 = vunpack.c.l.b16 %v281
      %v356 = vunpack.c.l.b16 %v282
      %v357 = vpack.c.b16 %v326, %v325
      %v358 = vpack.c.b16 %v328, %v327
      %v359 = vpack.c.b16 %v330, %v329
      %v360 = vpack.c.b16 %v332, %v331
      %v361 = vpack.c.b16 %v334, %v333
      %v362 = vpack.c.b16 %v336, %v335
      %v363 = vpack.c.b16 %v338, %v337
      %v364 = vpack.c.b16 %v340, %v339
      %v365 = vpack.c.b16 %v342, %v341
      %v366 = vpack.c.b16 %v344, %v343
      %v367 = vpack.c.b16 %v346, %v345
      %v368 = vpack.c.b16 %v348, %v347
      %v369 = vpack.c.b16 %v350, %v349
      %v370 = vpack.c.b16 %v352, %v351
      %v371 = vpack.c.b16 %v354, %v353
      %v372 = vpack.c.b16 %v356, %v355
      %389 = vmatprep.subr.bf16.mxu0 0
      %390 = vmatpush1.bf16.msra.mxu0 %v364
      %391 = vmatprep.subr.bf16.mxu0 0
      %392 = vmatpush1.bf16.msra.mxu0 %v363
      %393 = vmatprep.subr.bf16.mxu0 0
      %394 = vmatpush1.bf16.msra.mxu0 %v362
      %395 = vmatprep.subr.bf16.mxu0 0
      %396 = vmatpush1.bf16.msra.mxu0 %v361
      %397 = vmatprep.subr.bf16.mxu0 0
      %398 = vmatpush1.bf16.msra.mxu0 %v360
      %399 = vmatprep.subr.bf16.mxu0 0
      %400 = vmatpush1.bf16.msra.mxu0 %v359
      %401 = vmatprep.subr.bf16.mxu0 0
      %402 = vmatpush1.bf16.msra.mxu0 %v358
      %403 = vmatprep.subr.bf16.mxu0 0
      %404 = vmatpush1.bf16.msra.mxu0 %v357
      %405 = vmatprep.subr.bf16.mxu0 0
      %406 = vmatpush2.bf16.msra.mxu0 %v372
      %407 = vmatprep.subr.bf16.mxu0 0
      %408 = vmatpush2.bf16.msra.mxu0 %v371
      %409 = vmatprep.subr.bf16.mxu0 0
      %410 = vmatpush2.bf16.msra.mxu0 %v370
      %411 = vmatprep.subr.bf16.mxu0 0
      %412 = vmatpush2.bf16.msra.mxu0 %v369
      %413 = vmatprep.subr.bf16.mxu0 0
      %414 = vmatpush2.bf16.msra.mxu0 %v368
      %415 = vmatprep.subr.bf16.mxu0 0
      %416 = vmatpush2.bf16.msra.mxu0 %v367
      %417 = vmatprep.subr.bf16.mxu0 0
      %418 = vmatpush2.bf16.msra.mxu0 %v366
      %419 = vmatprep.subr.bf16.mxu0 0
      %420 = vmatpush2.bf16.msra.mxu0 %v365
      %421 = vmatprep.mubr.bf16.mxu0 %v290
      %422 = vmatmul.mubr.bf16.gmra.mxu0 %v289
      %v423 = vpop.f32.mrf.mxu0
      %v424 = vadd.f32 0.0, %v423
      %v425 = vpop.f32.mrf.mxu0
      %v426 = vpop.f32.mrf.mxu0
      %v427 = vadd.f32 0.0, %v426
      %v428 = vpop.f32.mrf.mxu0
      %429 = vdwg.mxu0
      %v430 = vadd.f32 %v249, %v424
      %v431 = vadd.f32 %v250, %v427
      %432 = vst [vmem:[#allocation2] sm:$0xff] %v430
      %433 = vst [vmem:[#allocation2 + $0x8] sm:$0x3f] %v431
      // Predicated region
      $region33: #{inception_stem_forward.48} parent=27 // pred_check
        %p434 = pneg %p241
      $region34: #{inception_stem_forward.48} parent=27 // pred_check_branch
        %436 = sbr.rel (%p434) target = $region36
      $region35: #{inception_stem_forward.48} parent=27 // pred_region
        %v437 = vld [vmem:[#allocation2] sm:$0xff]
        %v438 = vld [vmem:[#allocation2 + $0x8] sm:$0x3f]
        %439 = vst [vmem:[%s239] sm:$0xff] %v437
        %440 = vst [vmem:[%s239 + $0x8] sm:$0x3f] %v438
      $region36: #{inception_stem_forward.48} parent=27 // pred_fallthru
        _
      %p441 = scmp.lt.s32.totalorder %s19, 1
      %s442 = scalar_select %p441, %s19, 1
      %p443 = scmp.lt.s32.totalorder %s20, 13
      %s444 = scalar_select %p443, %s20, 13
      %p445 = scmp.lt.s32.totalorder %s21, 0
      %s446 = scalar_select %p445, %s21, 0
      %s447 = smul.addr %s444, 2
      %s448 = sadd.s32 %s446, %s447
      %s449 = smul.addr %s442, 28
      %s450 = sadd.s32 %s448, %s449
      %s451 = smul.addr %s450, 8
      %s452 = scalar_lea.vmem %s2, %s451
      // Predicated region
      $region37: #{inception_stem_forward.48} parent=27 // pred_check
        %p453 = pneg %p119
      $region38: #{inception_stem_forward.48} parent=27 // pred_check_branch
        %455 = sbr.rel (%p453) target = $region40
      $region39: #{inception_stem_forward.48} parent=27 // pred_region
        _
      $region40: #{inception_stem_forward.48} parent=27 // pred_fallthru
        _
    $region28: #{inception_stem_forward.48} parent=5 // pred_fallthru
      _
    %p456 = scmp.le.s32.totalorder 2, %s8
    // Predicated region
    $region41: #{inception_stem_forward.48} parent=5 // pred_check
      %p457 = pneg %p456
    $region42: #{inception_stem_forward.48} parent=5 // pred_check_branch
      %459 = sbr.rel (%p457) target = $region44
    $region43: #{inception_stem_forward.48} parent=5 // pred_region
      %s460 = ssub.s32 %s8, 2
      // Predicated region
      $region45: #{inception_stem_forward.48} parent=43 // pred_check
        %p461 = pneg %p125
      $region46: #{inception_stem_forward.48} parent=43 // pred_check_branch
        %463 = sbr.rel (%p461) target = $region48
      $region47: #{inception_stem_forward.48} parent=43 // pred_region
        %p464 = scmp.lt.s32.totalorder %s23, 1
        %s465 = scalar_select %p464, %s23, 1
        %p466 = scmp.lt.s32.totalorder %s24, 13
        %s467 = scalar_select %p466, %s24, 13
        %p468 = scmp.lt.s32.totalorder %s25, 0
        %s469 = scalar_select %p468, %s25, 0
        %s470 = smul.addr %s467, 2
        %s471 = sadd.s32 %s469, %s470
        %s472 = smul.addr %s465, 28
        %s473 = sadd.s32 %s471, %s472
        %s474 = smul.addr %s473, 8
        %s475 = scalar_lea.vmem %s2, %s474
      $region48: #{inception_stem_forward.48} parent=43 // pred_fallthru
        _
    $region44: #{inception_stem_forward.48} parent=5 // pred_fallthru
      _
  $region6: #{inception_stem_forward.48} parent=0 // loop_footer
    %s12 = sadd.s32 1, %s8
  $region7: #{inception_stem_forward.48} parent=0 // loop_footer_branch
    %7 = sbr.rel target = $region3
  $region8: #{inception_stem_forward.48} parent=0 // loop_exit
    _

// kernel: inception_stem_forward.57
$region0: #{inception_stem_forward.57}
  #allocation0 [shape = 'u32[]', space=smem, size = 0x4, offset = 0x4, fixed_abs, tag = 'smem constant byte address 0x4 - core index']
  #allocation1 [shape = 'u32[144,128]{1,0:T(1,128)}', space=vmem, size = 0x12000, scoped, tag = 'internal scratch']
  #allocation2 [shape = 'f32[14,128]{1,0:T(8,128)}', space=vmem, size = 0x2000, scoped, tag = 'scratch operand']
  %s0 = inlined_call_operand.vmem [shape: bf16[2,20,14,128], index: 0, kind: input, shape index: {}]
  %s1 = inlined_call_operand.vmem [shape: bf16[7,1,128,128], index: 1, kind: input, shape index: {}]
  %s2 = inlined_call_operand.vmem [shape: f32[2,14,14,128], index: 2, kind: output, shape index: {}]
  %s3 = sld [smem:[#allocation0]]
  $region49: #{inception_stem_forward.57} parent=0
    _
  %s5 = ssub.s32 1, %s3
  %s6 = scalar_select 0, %s5, %s3
  loop: start=0, step=1, limit=198
  $region2: #{inception_stem_forward.57} parent=0 // loop_pre_header
    _
  $region3: #{inception_stem_forward.57} parent=0 // loop_header
    %s8 = sphi 0, %s12
    %p9 = scmp.ge.s32.totalorder %s8, 198
    %s15 = sphi 0, %s41
    %s16 = sphi 0, %s37
    %s17 = sphi 0, %s33
    %s18 = sphi 0, %s29
    %s19 = sphi 0, %s15
    %s20 = sphi 0, %s16
    %s21 = sphi 0, %s17
    %s22 = sphi 0, %s18
    %s23 = sphi 0, %s19
    %s24 = sphi 0, %s20
    %s25 = sphi 0, %s21
    %s26 = sphi 0, %s22
    %s48 = sphi 0, %s50
    %s51 = sphi 0, %s48
    %s52 = sphi 0, %s51
    %s68 = sphi 0, %s52
    %s76 = sphi 0, %s78
    %s79 = sphi 0, %s76
    %s80 = sphi 0, %s79
    %s96 = sphi 0, %s80
    %s106 = sphi 0, %s108
    %s109 = sphi 0, %s106
    %s110 = sphi 0, %s109
    %s126 = sphi 0, %s110
  $region4: #{inception_stem_forward.57} parent=0 // loop_header_branch
    %11 = sbr.rel (%p9) target = $region8
  $region5: #{inception_stem_forward.57} parent=0 // loop_body
    %s13 = ssub.s32 %s8, 1
    %s14 = ssub.s32 %s8, 2
    %s27 = sadd.s32 1, %s18
    %p28 = scmp.ge.s32.totalorder %s27, 7
    %s29 = scalar_select %p28, 0, %s27
    %s30 = sadd.s32 1, %s17
    %s31 = scalar_select %p28, %s30, %s17
    %p32 = scmp.ge.s32.totalorder %s31, 1
    %s33 = scalar_select %p32, 0, %s31
    %s34 = sadd.s32 1, %s16
    %s35 = scalar_select %p32, %s34, %s16
    %p36 = scmp.ge.s32.totalorder %s35, 14
    %s37 = scalar_select %p36, 0, %s35
    %s38 = sadd.s32 1, %s15
    %s39 = scalar_select %p36, %s38, %s15
    %p40 = scmp.ge.s32.totalorder %s39, 2
    %s41 = scalar_select %p40, 0, %s39
    %s42 = sadd.s32 %s16, %s18
    %s43 = sadd.s32 %s37, %s29
    %s44 = ssub.s32 %s15, %s41
    %s45 = ssub.s32 %s42, %s43
    %s46 = sor.u32 %s44, %s45
    %p47 = scmp.eq.s32.totalorder %s46, 0
    %s49 = sadd.s32 %s48, 1
    %s50 = scalar_select %p47, %s48, %s49
    %p53 = pneg %p47
    %p54 = scmp.eq.s32.totalorder %s8, 195
    %p55 = por %p53, %p54
    %p56 = scmp.ne.s32.totalorder %s48, %s51
    %p57 = scmp.eq.s32.totalorder %s8, 0
    %p58 = por %p56, %p57
    %p59 = scmp.ne.s32.totalorder %s48, %s51
    %p60 = scmp.eq.s32.totalorder %s13, 195
    %p61 = por %p59, %p60
    %p62 = scmp.ne.s32.totalorder %s51, %s52
    %p63 = scmp.eq.s32.totalorder %s13, 0
    %p64 = por %p62, %p63
    %p65 = scmp.ne.s32.totalorder %s51, %s52
    %p66 = scmp.eq.s32.totalorder %s14, 195
    %p67 = por %p65, %p66
    %p69 = scmp.ne.s32.totalorder %s52, %s68
    %p70 = scmp.eq.s32.totalorder %s14, 0
    %p71 = por %p69, %p70
    %s72 = ssub.s32 %s18, %s29
    %s73 = ssub.s32 %s17, %s33
    %s74 = sor.u32 %s72, %s73
    %p75 = scmp.eq.s32.totalorder %s74, 0
    %s77 = sadd.s32 %s76, 1
    %s78 = scalar_select %p75, %s76, %s77
    %p81 = pneg %p75
    %p82 = scmp.eq.s32.totalorder %s8, 195
    %p83 = por %p81, %p82
    %p84 = scmp.ne.s32.totalorder %s76, %s79
    %p85 = scmp.eq.s32.totalorder %s8, 0
    %p86 = por %p84, %p85
    %p87 = scmp.ne.s32.totalorder %s76, %s79
    %p88 = scmp.eq.s32.totalorder %s13, 195
    %p89 = por %p87, %p88
    %p90 = scmp.ne.s32.totalorder %s79, %s80
    %p91 = scmp.eq.s32.totalorder %s13, 0
    %p92 = por %p90, %p91
    %p93 = scmp.ne.s32.totalorder %s79, %s80
    %p94 = scmp.eq.s32.totalorder %s14, 195
    %p95 = por %p93, %p94
    %p97 = scmp.ne.s32.totalorder %s80, %s96
    %p98 = scmp.eq.s32.totalorder %s14, 0
    %p99 = por %p97, %p98
    %s100 = ssub.s32 %s15, %s41
    %s101 = ssub.s32 %s16, %s37
    %s102 = sor.u32 %s100, %s101
    %s103 = ssub.s32 %s17, %s33
    %s104 = sor.u32 %s102, %s103
    %p105 = scmp.eq.s32.totalorder %s104, 0
    %s107 = sadd.s32 %s106, 1
    %s108 = scalar_select %p105, %s106, %s107
    %p111 = pneg %p105
    %p112 = scmp.eq.s32.totalorder %s8, 195
    %p113 = por %p111, %p112
    %p114 = scmp.ne.s32.totalorder %s106, %s109
    %p115 = scmp.eq.s32.totalorder %s8, 0
    %p116 = por %p114, %p115
    %p117 = scmp.ne.s32.totalorder %s106, %s109
    %p118 = scmp.eq.s32.totalorder %s13, 195
    %p119 = por %p117, %p118
    %p120 = scmp.ne.s32.totalorder %s109, %s110
    %p121 = scmp.eq.s32.totalorder %s13, 0
    %p122 = por %p120, %p121
    %p123 = scmp.ne.s32.totalorder %s109, %s110
    %p124 = scmp.eq.s32.totalorder %s14, 195
    %p125 = por %p123, %p124
    %p127 = scmp.ne.s32.totalorder %s110, %s126
    %p128 = scmp.eq.s32.totalorder %s14, 0
    %p129 = por %p127, %p128
    %p130 = scmp.le.s32.totalorder 1, %s8
    %p131 = scmp.lt.s32.totalorder %s8, 197
    %p132 = pnand %p130, %p131
    %p133 = pneg %p132
    // Predicated region
    $region9: #{inception_stem_forward.57} parent=5 // pred_check
      _
    $region10: #{inception_stem_forward.57} parent=5 // pred_check_branch
      %135 = sbr.rel (%p132) target = $region12
    $region11: #{inception_stem_forward.57} parent=5 // pred_region
      %s136 = ssub.s32 %s8, 1
    $region12: #{inception_stem_forward.57} parent=5 // pred_fallthru
      _
    %p137 = scmp.lt.s32.totalorder %s8, 196
    // Predicated region
    $region13: #{inception_stem_forward.57} parent=5 // pred_check
      %p138 = pneg %p137
    $region14: #{inception_stem_forward.57} parent=5 // pred_check_branch
      %140 = sbr.rel (%p138) target = $region16
    $region15: #{inception_stem_forward.57} parent=5 // pred_region
      // Predicated region
      $region17: #{inception_stem_forward.57} parent=15 // pred_check
        %p141 = pneg %p58
      $region18: #{inception_stem_forward.57} parent=15 // pred_check_branch
        %143 = sbr.rel (%p141) target = $region20
      $region19: #{inception_stem_forward.57} parent=15 // pred_region
        %s144 = sadd.s32 %s16, %s18
        %p145 = scmp.lt.s32.totalorder %s15, 1
        %s146 = scalar_select %p145, %s15, 1
        %p147 = scmp.lt.s32.totalorder %s144, 19
        %s148 = scalar_select %p147, %s144, 19
        %s149 = smul.addr %s148, 2
        %s150 = smul.addr %s146, 40
        %s151 = sadd.s32 %s149, %s150
        %s152 = smul.addr %s151, 4
        %s153 = scalar_lea.vmem %s0, %s152
        %s154 = sadd.s32 %s16, %s18
      $region20: #{inception_stem_forward.57} parent=15 // pred_fallthru
        _
      // Predicated region
      $region21: #{inception_stem_forward.57} parent=15 // pred_check
        %p155 = pneg %p86
      $region22: #{inception_stem_forward.57} parent=15 // pred_check_branch
        %157 = sbr.rel (%p155) target = $region24
      $region23: #{inception_stem_forward.57} parent=15 // pred_region
        %p158 = scmp.lt.s32.totalorder %s18, 6
        %s159 = scalar_select %p158, %s18, 6
        %p160 = scmp.lt.s32.totalorder %s17, 0
        %s161 = scalar_select %p160, %s17, 0
        %s162 = smul.addr %s159, 16
        %s163 = sadd.s32 %s161, %s162
        %s164 = smul.addr %s163, 4
        %s165 = scalar_lea.vmem %s1, %s164
      $region24: #{inception_stem_forward.57} parent=15 // pred_fallthru
        _
    $region16: #{inception_stem_forward.57} parent=5 // pred_fallthru
      _
    %p166 = scmp.le.s32.totalorder 1, %s8
    %p167 = scmp.lt.s32.totalorder %s8, 197
    %p168 = pnand %p166, %p167
    %p169 = pneg %p168
    // Predicated region
    $region25: #{inception_stem_forward.57} parent=5 // pred_check
      _
    $region26: #{inception_stem_forward.57} parent=5 // pred_check_branch
      %171 = sbr.rel (%p168) target = $region28
    $region27: #{inception_stem_forward.57} parent=5 // pred_region
      %s172 = ssub.s32 %s8, 1
      %s173 = sadd.s32 %s20, %s22
      %p174 = scmp.lt.s32.totalorder %s19, 1
      %s175 = scalar_select %p174, %s19, 1
      %p176 = scmp.lt.s32.totalorder %s173, 19
      %s177 = scalar_select %p176, %s173, 19
      %s178 = smul.addr %s177, 2
      %s179 = smul.addr %s175, 40
      %s180 = sadd.s32 %s178, %s179
      %s181 = smul.addr %s180, 4
      %s182 = scalar_lea.vmem %s0, %s181
      %p183 = pneg %p64
      %p184 = pneg %p61
      %p185 = scmp.lt.s32.totalorder %s22, 6
      %s186 = scalar_select %p185, %s22, 6
      %p187 = scmp.lt.s32.totalorder %s21, 0
      %s188 = scalar_select %p187, %s21, 0
      %s189 = smul.addr %s186, 16
      %s190 = sadd.s32 %s188, %s189
      %s191 = smul.addr %s190, 4
      %s192 = scalar_lea.vmem %s1, %s191
      %p193 = pneg %p92
      %p194 = pneg %p89
      %p195 = pneg %p122
      %p196 = pneg %p119
      %p197 = scmp.lt.s32.totalorder %s19, 1
      %s198 = scalar_select %p197, %s19, 1
      %p199 = scmp.lt.s32.totalorder %s20, 13
      %s200 = scalar_select %p199, %s20, 13
      %p201 = scmp.lt.s32.totalorder %s21, 0
      %s202 = scalar_select %p201, %s21, 0
      %s203 = smul.addr %s200, 2
      %s204 = sadd.s32 %s202, %s203
      %s205 = smul.addr %s198, 28
      %s206 = sadd.s32 %s204, %s205
      %s207 = smul.addr %s206, 8
      %s208 = scalar_lea.vmem %s2, %s207
      %s209 = sadd.s32 %s20, %s22
      %p210 = scmp.lt.s32.totalorder %s19, 1
      %s211 = scalar_select %p210, %s19, 1
      %p212 = scmp.lt.s32.totalorder %s209, 19
      %s213 = scalar_select %p212, %s209, 19
      %s214 = smul.addr %s213, 2
      %s215 = smul.addr %s211, 40
      %s216 = sadd.s32 %s214, %s215
      %s217 = smul.addr %s216, 4
      %s218 = scalar_lea.vmem %s0, %s217
      %s219 = sadd.s32 %s20, %s22
      %p220 = scmp.lt.s32.totalorder %s22, 6
      %s221 = scalar_select %p220, %s22, 6
      %p222 = scmp.lt.s32.totalorder %s21, 0
      %s223 = scalar_select %p222, %s21, 0
      %s224 = smul.addr %s221, 16
      %s225 = sadd.s32 %s223, %s224
      %s226 = smul.addr %s225, 4
      %s227 = scalar_lea.vmem %s1, %s226
      %p228 = scmp.lt.s32.totalorder %s19, 1
      %s229 = scalar_select %p228, %s19, 1
      %p230 = scmp.lt.s32.totalorder %s20, 13
      %s231 = scalar_select %p230, %s20, 13
      %p232 = scmp.lt.s32.totalorder %s21, 0
      %s233 = scalar_select %p232, %s21, 0
      %s234 = smul.addr %s231, 2
      %s235 = sadd.s32 %s233, %s234
      %s236 = smul.addr %s229, 28
      %s237 = sadd.s32 %s235, %s236
      %s238 = smul.addr %s237, 8
      %s239 = scalar_lea.vmem %s2, %s238
      %p241 = scmp.eq.s32.totalorder %s22, 0
      // Predicated region
      $region29: #{inception_stem_forward.57} parent=27 // pred_check
        %p242 = pneg %p241
      $region30: #{inception_stem_forward.57} parent=27 // pred_check_branch
        %244 = sbr.rel (%p242) target = $region32
      $region31: #{inception_stem_forward.57} parent=27 // pred_region
        %245 = vst [vmem:[#allocation2] sm:$0xff] 0.0
        %246 = vst [vmem:[#allocation2 + $0x8] sm:$0x3f] 0.0
      $region32: #{inception_stem_forward.57} parent=27 // pred_fallthru
        _
      %v247 = vld [vmem:[%s218] sm:$0xf]
      %v248 = vld [vmem:[%s218 + $0x4] sm:$0x7]
      %v249 = vld [vmem:[#allocation2] sm:$0xff]
      %v250 = vld [vmem:[#allocation2 + $0x8] sm:$0x3f]
      %v251 = vld [vmem:[%s227] sm:$0xf]
      %v252 = vld [vmem:[%s227 + $0x4] sm:$0xf]
      %v253 = vld [vmem:[%s227 + $0x8] sm:$0xf]
      %v254 = vld [vmem:[%s227 + $0xc] sm:$0xf]
      %v255 = vld [vmem:[%s227 + $0x10] sm:$0xf]
      %v256 = vld [vmem:[%s227 + $0x14] sm:$0xf]
      %v257 = vld [vmem:[%s227 + $0x18] sm:$0xf]
      %v258 = vld [vmem:[%s227 + $0x1c] sm:$0xf]
      %v259 = vld [vmem:[%s227 + $0x20] sm:$0xf]
      %v260 = vld [vmem:[%s227 + $0x24] sm:$0xf]
      %v261 = vld [vmem:[%s227 + $0x28] sm:$0xf]
      %v262 = vld [vmem:[%s227 + $0x2c] sm:$0xf]
      %v263 = vld [vmem:[%s227 + $0x30] sm:$0xf]
      %v264 = vld [vmem:[%s227 + $0x34] sm:$0xf]
      %v265 = vld [vmem:[%s227 + $0x38] sm:$0xf]
      %v266 = vld [vmem:[%s227 + $0x3c] sm:$0xf]
      %v269 = vunpack.c.l.b16 %v247
      %v270 = vunpack.c.l.b16 %v248
      %v271 = vpack.c.b16 %v270, %v269
      %v289 = vunpack.c.l.b16 %v251
      %v290 = vunpack.c.l.b16 %v252
      %v291 = vunpack.c.l.b16 %v253
      %v292 = vunpack.c.l.b16 %v254
      %v293 = vunpack.c.l.b16 %v255
      %v294 = vunpack.c.l.b16 %v256
      %v295 = vunpack.c.l.b16 %v257
      %v296 = vunpack.c.l.b16 %v258
      %v297 = vunpack.c.l.b16 %v259
      %v298 = vunpack.c.l.b16 %v260
      %v299 = vunpack.c.l.b16 %v261
      %v300 = vunpack.c.l.b16 %v262
      %v301 = vunpack.c.l.b16 %v263
      %v302 = vunpack.c.l.b16 %v264
      %v303 = vunpack.c.l.b16 %v265
      %v304 = vunpack.c.l.b16 %v266
      %v305 = vpack.c.b16 %v290, %v289
      %v306 = vpack.c.b16 %v292, %v291
      %v307 = vpack.c.b16 %v294, %v293
      %v308 = vpack.c.b16 %v296, %v295
      %v309 = vpack.c.b16 %v298, %v297
      %v310 = vpack.c.b16 %v300, %v299
      %v311 = vpack.c.b16 %v302, %v301
      %v312 = vpack.c.b16 %v304, %v303
      %321 = vmatprep.subr.bf16.mxu0 0
      %322 = vmatpush1.bf16.msra.mxu0 %v312
      %323 = vmatprep.subr.bf16.mxu0 0
      %324 = vmatpush1.bf16.msra.mxu0 %v311
      %325 = vmatprep.subr.bf16.mxu0 0
      %326 = vmatpush1.bf16.msra.mxu0 %v310
      %327 = vmatprep.subr.bf16.mxu0 0
      %328 = vmatpush1.bf16.msra.mxu0 %v309
      %329 = vmatprep.subr.bf16.mxu0 0
      %330 = vmatpush1.bf16.msra.mxu0 %v308
      %331 = vmatprep.subr.bf16.mxu0 0
      %332 = vmatpush1.bf16.msra.mxu0 %v307
      %333 = vmatprep.subr.bf16.mxu0 0
      %334 = vmatpush1.bf16.msra.mxu0 %v306
      %335 = vmatprep.subr.bf16.mxu0 0
      %336 = vmatpush1.bf16.msra.mxu0 %v305
      %337 = vmatprep.subr.bf16.mxu0 0
      %338 = vmatpush2.bf16.msra.mxu0 0
      %339 = vmatprep.subr.bf16.mxu0 0
      %340 = vmatpush2.bf16.msra.mxu0 0
      %341 = vmatprep.subr.bf16.mxu0 0
      %342 = vmatpush2.bf16.msra.mxu0 0
      %343 = vmatprep.subr.bf16.mxu0 0
      %344 = vmatpush2.bf16.msra.mxu0 0
      %345 = vmatprep.subr.bf16.mxu0 0
      %346 = vmatpush2.bf16.msra.mxu0 0
      %347 = vmatprep.subr.bf16.mxu0 0
      %348 = vmatpush2.bf16.msra.mxu0 0
      %349 = vmatprep.subr.bf16.mxu0 0
      %350 = vmatpush2.bf16.msra.mxu0 0
      %351 = vmatprep.subr.bf16.mxu0 0
      %352 = vmatpush2.bf16.msra.mxu0 0
      %353 = vmatprep.mubr.bf16.mxu0 0
      %354 = vmatmul.mubr.bf16.gmra.mxu0 %v271
      %v355 = vpop.f32.mrf.mxu0
      %v356 = vadd.f32 0.0, %v355
      %v357 = vpop.f32.mrf.mxu0
      %v358 = vpop.f32.mrf.mxu0
      %v359 = vadd.f32 0.0, %v358
      %v360 = vpop.f32.mrf.mxu0
      %361 = vdwg.mxu0
      %v362 = vadd.f32 %v249, %v356
      %v363 = vadd.f32 %v250, %v359
      %364 = vst [vmem:[#allocation2] sm:$0xff] %v362
      %365 = vst [vmem:[#allocation2 + $0x8] sm:$0x3f] %v363
      %p366 = scmp.eq.s32.totalorder %s22, 6
      // Predicated region
      $region33: #{inception_stem_forward.57} parent=27 // pred_check
        %p367 = pneg %p366
      $region34: #{inception_stem_forward.57} parent=27 // pred_check_branch
        %369 = sbr.rel (%p367) target = $region36
      $region35: #{inception_stem_forward.57} parent=27 // pred_region
        %v370 = vld [vmem:[#allocation2] sm:$0xff]
        %v371 = vld [vmem:[#allocation2 + $0x8] sm:$0x3f]
        %372 = vst [vmem:[%s239] sm:$0xff] %v370
        %373 = vst [vmem:[%s239 + $0x8] sm:$0x3f] %v371
      $region36: #{inception_stem_forward.57} parent=27 // pred_fallthru
        _
      %p374 = scmp.lt.s32.totalorder %s19, 1
      %s375 = scalar_select %p374, %s19, 1
      %p376 = scmp.lt.s32.totalorder %s20, 13
      %s377 = scalar_select %p376, %s20, 13
      %p378 = scmp.lt.s32.totalorder %s21, 0
      %s379 = scalar_select %p378, %s21, 0
      %s380 = smul.addr %s377, 2
      %s381 = sadd.s32 %s379, %s380
      %s382 = smul.addr %s375, 28
      %s383 = sadd.s32 %s381, %s382
      %s384 = smul.addr %s383, 8
      %s385 = scalar_lea.vmem %s2, %s384
      // Predicated region
      $region37: #{inception_stem_forward.57} parent=27 // pred_check
        %p386 = pneg %p119
      $region38: #{inception_stem_forward.57} parent=27 // pred_check_branch
        %388 = sbr.rel (%p386) target = $region40
      $region39: #{inception_stem_forward.57} parent=27 // pred_region
        _
      $region40: #{inception_stem_forward.57} parent=27 // pred_fallthru
        _
    $region28: #{inception_stem_forward.57} parent=5 // pred_fallthru
      _
    %p389 = scmp.le.s32.totalorder 2, %s8
    // Predicated region
    $region41: #{inception_stem_forward.57} parent=5 // pred_check
      %p390 = pneg %p389
    $region42: #{inception_stem_forward.57} parent=5 // pred_check_branch
      %392 = sbr.rel (%p390) target = $region44
    $region43: #{inception_stem_forward.57} parent=5 // pred_region
      %s393 = ssub.s32 %s8, 2
      // Predicated region
      $region45: #{inception_stem_forward.57} parent=43 // pred_check
        %p394 = pneg %p125
      $region46: #{inception_stem_forward.57} parent=43 // pred_check_branch
        %396 = sbr.rel (%p394) target = $region48
      $region47: #{inception_stem_forward.57} parent=43 // pred_region
        %p397 = scmp.lt.s32.totalorder %s23, 1
        %s398 = scalar_select %p397, %s23, 1
        %p399 = scmp.lt.s32.totalorder %s24, 13
        %s400 = scalar_select %p399, %s24, 13
        %p401 = scmp.lt.s32.totalorder %s25, 0
        %s402 = scalar_select %p401, %s25, 0
        %s403 = smul.addr %s400, 2
        %s404 = sadd.s32 %s402, %s403
        %s405 = smul.addr %s398, 28
        %s406 = sadd.s32 %s404, %s405
        %s407 = smul.addr %s406, 8
        %s408 = scalar_lea.vmem %s2, %s407
      $region48: #{inception_stem_forward.57} parent=43 // pred_fallthru
        _
    $region44: #{inception_stem_forward.57} parent=5 // pred_fallthru
      _
  $region6: #{inception_stem_forward.57} parent=0 // loop_footer
    %s12 = sadd.s32 1, %s8
  $region7: #{inception_stem_forward.57} parent=0 // loop_footer_branch
    %7 = sbr.rel target = $region3
  $region8: #{inception_stem_forward.57} parent=0 // loop_exit
    _

// kernel: inception_stem_forward.60
$region0: #{inception_stem_forward.60}
  #allocation0 [shape = 'u32[]', space=smem, size = 0x4, offset = 0x4, fixed_abs, tag = 'smem constant byte address 0x4 - core index']
  #allocation1 [shape = 'u32[144,128]{1,0:T(1,128)}', space=vmem, size = 0x12000, scoped, tag = 'internal scratch']
  #allocation2 [shape = 'f32[14,128]{1,0:T(8,128)}', space=vmem, size = 0x2000, scoped, tag = 'scratch operand']
  %s0 = inlined_call_operand.vmem [shape: bf16[2,14,20,128], index: 0, kind: input, shape index: {}]
  %s1 = inlined_call_operand.vmem [shape: bf16[1,7,128,128], index: 1, kind: input, shape index: {}]
  %s2 = inlined_call_operand.vmem [shape: f32[2,14,14,128], index: 2, kind: output, shape index: {}]
  %s3 = sld [smem:[#allocation0]]
  $region49: #{inception_stem_forward.60} parent=0
    _
  %s5 = ssub.s32 1, %s3
  %s6 = scalar_select 0, %s5, %s3
  loop: start=0, step=1, limit=30
  $region2: #{inception_stem_forward.60} parent=0 // loop_pre_header
    _
  $region3: #{inception_stem_forward.60} parent=0 // loop_header
    %s8 = sphi 0, %s12
    %p9 = scmp.ge.s32.totalorder %s8, 30
    %s15 = sphi 0, %s41
    %s16 = sphi 0, %s37
    %s17 = sphi 0, %s33
    %s18 = sphi 0, %s29
    %s19 = sphi 0, %s15
    %s20 = sphi 0, %s16
    %s21 = sphi 0, %s17
    %s22 = sphi 0, %s18
    %s23 = sphi 0, %s19
    %s24 = sphi 0, %s20
    %s25 = sphi 0, %s21
    %s26 = sphi 0, %s22
    %s48 = sphi 0, %s50
    %s51 = sphi 0, %s48
    %s52 = sphi 0, %s51
    %s68 = sphi 0, %s52
    %s76 = sphi 0, %s78
    %s79 = sphi 0, %s76
    %s80 = sphi 0, %s79
    %s96 = sphi 0, %s80
    %s106 = sphi 0, %s108
    %s109 = sphi 0, %s106
    %s110 = sphi 0, %s109
    %s126 = sphi 0, %s110
  $region4: #{inception_stem_forward.60} parent=0 // loop_header_branch
    %11 = sbr.rel (%p9) target = $region8
  $region5: #{inception_stem_forward.60} parent=0 // loop_body
    %s13 = ssub.s32 %s8, 1
    %s14 = ssub.s32 %s8, 2
    %s27 = sadd.s32 1, %s18
    %p28 = scmp.ge.s32.totalorder %s27, 1
    %s29 = scalar_select %p28, 0, %s27
    %s30 = sadd.s32 1, %s17
    %s31 = scalar_select %p28, %s30, %s17
    %p32 = scmp.ge.s32.totalorder %s31, 1
    %s33 = scalar_select %p32, 0, %s31
    %s34 = sadd.s32 1, %s16
    %s35 = scalar_select %p32, %s34, %s16
    %p36 = scmp.ge.s32.totalorder %s35, 14
    %s37 = scalar_select %p36, 0, %s35
    %s38 = sadd.s32 1, %s15
    %s39 = scalar_select %p36, %s38, %s15
    %p40 = scmp.ge.s32.totalorder %s39, 2
    %s41 = scalar_select %p40, 0, %s39
    %s42 = sadd.s32 %s16, %s18
    %s43 = sadd.s32 %s37, %s29
    %s44 = ssub.s32 %s15, %s41
    %s45 = ssub.s32 %s42, %s43
    %s46 = sor.u32 %s44, %s45
    %p47 = scmp.eq.s32.totalorder %s46, 0
    %s49 = sadd.s32 %s48, 1
    %s50 = scalar_select %p47, %s48, %s49
    %p53 = pneg %p47
    %p54 = scmp.eq.s32.totalorder %s8, 27
    %p55 = por %p53, %p54
    %p56 = scmp.ne.s32.totalorder %s48, %s51
    %p57 = scmp.eq.s32.totalorder %s8, 0
    %p58 = por %p56, %p57
    %p59 = scmp.ne.s32.totalorder %s48, %s51
    %p60 = scmp.eq.s32.totalorder %s13, 27
    %p61 = por %p59, %p60
    %p62 = scmp.ne.s32.totalorder %s51, %s52
    %p63 = scmp.eq.s32.totalorder %s13, 0
    %p64 = por %p62, %p63
    %p65 = scmp.ne.s32.totalorder %s51, %s52
    %p66 = scmp.eq.s32.totalorder %s14, 27
    %p67 = por %p65, %p66
    %p69 = scmp.ne.s32.totalorder %s52, %s68
    %p70 = scmp.eq.s32.totalorder %s14, 0
    %p71 = por %p69, %p70
    %s72 = ssub.s32 %s18, %s29
    %s73 = ssub.s32 %s17, %s33
    %s74 = sor.u32 %s72, %s73
    %p75 = scmp.eq.s32.totalorder %s74, 0
    %s77 = sadd.s32 %s76, 1
    %s78 = scalar_select %p75, %s76, %s77
    %p81 = pneg %p75
    %p82 = scmp.eq.s32.totalorder %s8, 27
    %p83 = por %p81, %p82
    %p84 = scmp.ne.s32.totalorder %s76, %s79
    %p85 = scmp.eq.s32.totalorder %s8, 0
    %p86 = por %p84, %p85
    %p87 = scmp.ne.s32.totalorder %s76, %s79
    %p88 = scmp.eq.s32.totalorder %s13, 27
    %p89 = por %p87, %p88
    %p90 = scmp.ne.s32.totalorder %s79, %s80
    %p91 = scmp.eq.s32.totalorder %s13, 0
    %p92 = por %p90, %p91
    %p93 = scmp.ne.s32.totalorder %s79, %s80
    %p94 = scmp.eq.s32.totalorder %s14, 27
    %p95 = por %p93, %p94
    %p97 = scmp.ne.s32.totalorder %s80, %s96
    %p98 = scmp.eq.s32.totalorder %s14, 0
    %p99 = por %p97, %p98
    %s100 = ssub.s32 %s15, %s41
    %s101 = ssub.s32 %s16, %s37
    %s102 = sor.u32 %s100, %s101
    %s103 = ssub.s32 %s17, %s33
    %s104 = sor.u32 %s102, %s103
    %p105 = scmp.eq.s32.totalorder %s104, 0
    %s107 = sadd.s32 %s106, 1
    %s108 = scalar_select %p105, %s106, %s107
    %p111 = pneg %p105
    %p112 = scmp.eq.s32.totalorder %s8, 27
    %p113 = por %p111, %p112
    %p114 = scmp.ne.s32.totalorder %s106, %s109
    %p115 = scmp.eq.s32.totalorder %s8, 0
    %p116 = por %p114, %p115
    %p117 = scmp.ne.s32.totalorder %s106, %s109
    %p118 = scmp.eq.s32.totalorder %s13, 27
    %p119 = por %p117, %p118
    %p120 = scmp.ne.s32.totalorder %s109, %s110
    %p121 = scmp.eq.s32.totalorder %s13, 0
    %p122 = por %p120, %p121
    %p123 = scmp.ne.s32.totalorder %s109, %s110
    %p124 = scmp.eq.s32.totalorder %s14, 27
    %p125 = por %p123, %p124
    %p127 = scmp.ne.s32.totalorder %s110, %s126
    %p128 = scmp.eq.s32.totalorder %s14, 0
    %p129 = por %p127, %p128
    %p130 = scmp.le.s32.totalorder 1, %s8
    %p131 = scmp.lt.s32.totalorder %s8, 29
    %p132 = pnand %p130, %p131
    %p133 = pneg %p132
    // Predicated region
    $region9: #{inception_stem_forward.60} parent=5 // pred_check
      _
    $region10: #{inception_stem_forward.60} parent=5 // pred_check_branch
      %135 = sbr.rel (%p132) target = $region12
    $region11: #{inception_stem_forward.60} parent=5 // pred_region
      %s136 = ssub.s32 %s8, 1
      // Predicated region
      $region13: #{inception_stem_forward.60} parent=11 // pred_check
        %p137 = pneg %p92
      $region14: #{inception_stem_forward.60} parent=11 // pred_check_branch
        %139 = sbr.rel (%p137) target = $region16
      $region15: #{inception_stem_forward.60} parent=11 // pred_region
        %p140 = scmp.lt.s32.totalorder %s22, 0
        %s141 = scalar_select %p140, %s22, 0
        %p142 = scmp.lt.s32.totalorder %s21, 0
        %s143 = scalar_select %p142, %s21, 0
        %s144 = smul.addr %s141, 112
        %s145 = sadd.s32 %s143, %s144
        %s146 = smul.addr %s145, 4
        %s147 = scalar_lea.vmem %s1, %s146
      $region16: #{inception_stem_forward.60} parent=11 // pred_fallthru
        _
    $region12: #{inception_stem_forward.60} parent=5 // pred_fallthru
      _
    %p148 = scmp.lt.s32.totalorder %s8, 28
    // Predicated region
    $region17: #{inception_stem_forward.60} parent=5 // pred_check
      %p149 = pneg %p148
    $region18: #{inception_stem_forward.60} parent=5 // pred_check_branch
      %151 = sbr.rel (%p149) target = $region20
    $region19: #{inception_stem_forward.60} parent=5 // pred_region
      // Predicated region
      $region21: #{inception_stem_forward.60} parent=19 // pred_check
        %p152 = pneg %p58
      $region22: #{inception_stem_forward.60} parent=19 // pred_check_branch
        %154 = sbr.rel (%p152) target = $region24
      $region23: #{inception_stem_forward.60} parent=19 // pred_region
        %s155 = sadd.s32 %s16, %s18
        %p156 = scmp.lt.s32.totalorder %s15, 1
        %s157 = scalar_select %p156, %s15, 1
        %p158 = scmp.lt.s32.totalorder %s155, 13
        %s159 = scalar_select %p158, %s155, 13
        %s160 = smul.addr %s159, 3
        %s161 = smul.addr %s157, 42
        %s162 = sadd.s32 %s160, %s161
        %s163 = smul.addr %s162, 4
        %s164 = scalar_lea.vmem %s0, %s163
        %s165 = sadd.s32 %s16, %s18
      $region24: #{inception_stem_forward.60} parent=19 // pred_fallthru
        _
    $region20: #{inception_stem_forward.60} parent=5 // pred_fallthru
      _
    %p166 = scmp.le.s32.totalorder 1, %s8
    %p167 = scmp.lt.s32.totalorder %s8, 29
    %p168 = pnand %p166, %p167
    %p169 = pneg %p168
    // Predicated region
    $region25: #{inception_stem_forward.60} parent=5 // pred_check
      _
    $region26: #{inception_stem_forward.60} parent=5 // pred_check_branch
      %171 = sbr.rel (%p168) target = $region28
    $region27: #{inception_stem_forward.60} parent=5 // pred_region
      %s172 = ssub.s32 %s8, 1
      %s173 = sadd.s32 %s20, %s22
      %p174 = scmp.lt.s32.totalorder %s19, 1
      %s175 = scalar_select %p174, %s19, 1
      %p176 = scmp.lt.s32.totalorder %s173, 13
      %s177 = scalar_select %p176, %s173, 13
      %s178 = smul.addr %s177, 3
      %s179 = smul.addr %s175, 42
      %s180 = sadd.s32 %s178, %s179
      %s181 = smul.addr %s180, 4
      %s182 = scalar_lea.vmem %s0, %s181
      %p183 = pneg %p64
      %p184 = pneg %p61
      %p185 = scmp.lt.s32.totalorder %s22, 0
      %s186 = scalar_select %p185, %s22, 0
      %p187 = scmp.lt.s32.totalorder %s21, 0
      %s188 = scalar_select %p187, %s21, 0
      %s189 = smul.addr %s186, 112
      %s190 = sadd.s32 %s188, %s189
      %s191 = smul.addr %s190, 4
      %s192 = scalar_lea.vmem %s1, %s191
      %p193 = pneg %p92
      %p194 = pneg %p89
      %p195 = pneg %p122
      %p196 = pneg %p119
      %p197 = scmp.lt.s32.totalorder %s19, 1
      %s198 = scalar_select %p197, %s19, 1
      %p199 = scmp.lt.s32.totalorder %s20, 13
      %s200 = scalar_select %p199, %s20, 13
      %p201 = scmp.lt.s32.totalorder %s21, 0
      %s202 = scalar_select %p201, %s21, 0
      %s203 = smul.addr %s200, 2
      %s204 = sadd.s32 %s202, %s203
      %s205 = smul.addr %s198, 28
      %s206 = sadd.s32 %s204, %s205
      %s207 = smul.addr %s206, 8
      %s208 = scalar_lea.vmem %s2, %s207
      %s209 = sadd.s32 %s20, %s22
      %p210 = scmp.lt.s32.totalorder %s19, 1
      %s211 = scalar_select %p210, %s19, 1
      %p212 = scmp.lt.s32.totalorder %s209, 13
      %s213 = scalar_select %p212, %s209, 13
      %s214 = smul.addr %s213, 3
      %s215 = smul.addr %s211, 42
      %s216 = sadd.s32 %s214, %s215
      %s217 = smul.addr %s216, 4
      %s218 = scalar_lea.vmem %s0, %s217
      %s219 = sadd.s32 %s20, %s22
      %p220 = scmp.lt.s32.totalorder %s22, 0
      %s221 = scalar_select %p220, %s22, 0
      %p222 = scmp.lt.s32.totalorder %s21, 0
      %s223 = scalar_select %p222, %s21, 0
      %s224 = smul.addr %s221, 112
      %s225 = sadd.s32 %s223, %s224
      %s226 = smul.addr %s225, 4
      %s227 = scalar_lea.vmem %s1, %s226
      %p228 = scmp.lt.s32.totalorder %s19, 1
      %s229 = scalar_select %p228, %s19, 1
      %p230 = scmp.lt.s32.totalorder %s20, 13
      %s231 = scalar_select %p230, %s20, 13
      %p232 = scmp.lt.s32.totalorder %s21, 0
      %s233 = scalar_select %p232, %s21, 0
      %s234 = smul.addr %s231, 2
      %s235 = sadd.s32 %s233, %s234
      %s236 = smul.addr %s229, 28
      %s237 = sadd.s32 %s235, %s236
      %s238 = smul.addr %s237, 8
      %s239 = scalar_lea.vmem %s2, %s238
      %p241 = scmp.eq.s32.totalorder %s22, 0
      // Predicated region
      $region29: #{inception_stem_forward.60} parent=27 // pred_check
        %p242 = pneg %p241
      $region30: #{inception_stem_forward.60} parent=27 // pred_check_branch
        %244 = sbr.rel (%p242) target = $region32
      $region31: #{inception_stem_forward.60} parent=27 // pred_region
        %245 = vst [vmem:[#allocation2] sm:$0xff] 0.0
        %246 = vst [vmem:[#allocation2 + $0x8] sm:$0x3f] 0.0
      $region32: #{inception_stem_forward.60} parent=27 // pred_fallthru
        _
      %v247 = vld [vmem:[%s218] sm:$0xf]
      %v248 = vld [vmem:[%s218 + $0x4] sm:$0xf]
      %v249 = vld [vmem:[%s218 + $0x8] sm:$0x3]
      %v250 = vld [vmem:[#allocation2] sm:$0xff]
      %v251 = vld [vmem:[#allocation2 + $0x8] sm:$0x3f]
      %v252 = vld [vmem:[%s227] sm:$0xf]
      %v253 = vld [vmem:[%s227 + $0x4] sm:$0xf]
      %v254 = vld [vmem:[%s227 + $0x8] sm:$0xf]
      %v255 = vld [vmem:[%s227 + $0xc] sm:$0xf]
      %v256 = vld [vmem:[%s227 + $0x10] sm:$0xf]
      %v257 = vld [vmem:[%s227 + $0x14] sm:$0xf]
      %v258 = vld [vmem:[%s227 + $0x18] sm:$0xf]
      %v259 = vld [vmem:[%s227 + $0x1c] sm:$0xf]
      %v260 = vld [vmem:[%s227 + $0x20] sm:$0xf]
      %v261 = vld [vmem:[%s227 + $0x24] sm:$0xf]
      %v262 = vld [vmem:[%s227 + $0x28] sm:$0xf]
      %v263 = vld [vmem:[%s227 + $0x2c] sm:$0xf]
      %v264 = vld [vmem:[%s227 + $0x30] sm:$0xf]
      %v265 = vld [vmem:[%s227 + $0x34] sm:$0xf]
      %v266 = vld [vmem:[%s227 + $0x38] sm:$0xf]
      %v267 = vld [vmem:[%s227 + $0x3c] sm:$0xf]
      %v270 = vunpack.c.l.b16 %v247
      %v271 = vunpack.c.l.b16 %v248
      %v272 = vpack.c.b16 %v271, %v270
      %v290 = vunpack.c.l.b16 %v252
      %v291 = vunpack.c.l.b16 %v253
      %v292 = vunpack.c.l.b16 %v254
      %v293 = vunpack.c.l.b16 %v255
      %v294 = vunpack.c.l.b16 %v256
      %v295 = vunpack.c.l.b16 %v257
      %v296 = vunpack.c.l.b16 %v258
      %v297 = vunpack.c.l.b16 %v259
      %v298 = vunpack.c.l.b16 %v260
      %v299 = vunpack.c.l.b16 %v261
      %v300 = vunpack.c.l.b16 %v262
      %v301 = vunpack.c.l.b16 %v263
      %v302 = vunpack.c.l.b16 %v264
      %v303 = vunpack.c.l.b16 %v265
      %v304 = vunpack.c.l.b16 %v266
      %v305 = vunpack.c.l.b16 %v267
      %v306 = vpack.c.b16 %v291, %v290
      %v307 = vpack.c.b16 %v293, %v292
      %v308 = vpack.c.b16 %v295, %v294
      %v309 = vpack.c.b16 %v297, %v296
      %v310 = vpack.c.b16 %v299, %v298
      %v311 = vpack.c.b16 %v301, %v300
      %v312 = vpack.c.b16 %v303, %v302
      %v313 = vpack.c.b16 %v305, %v304
      %322 = vmatprep.subr.bf16.mxu0 0
      %323 = vmatpush1.bf16.msra.mxu0 %v313
      %324 = vmatprep.subr.bf16.mxu0 0
      %325 = vmatpush1.bf16.msra.mxu0 %v312
      %326 = vmatprep.subr.bf16.mxu0 0
      %327 = vmatpush1.bf16.msra.mxu0 %v311
      %328 = vmatprep.subr.bf16.mxu0 0
      %329 = vmatpush1.bf16.msra.mxu0 %v310
      %330 = vmatprep.subr.bf16.mxu0 0
      %331 = vmatpush1.bf16.msra.mxu0 %v309
      %332 = vmatprep.subr.bf16.mxu0 0
      %333 = vmatpush1.bf16.msra.mxu0 %v308
      %334 = vmatprep.subr.bf16.mxu0 0
      %335 = vmatpush1.bf16.msra.mxu0 %v307
      %336 = vmatprep.subr.bf16.mxu0 0
      %337 = vmatpush1.bf16.msra.mxu0 %v306
      %338 = vmatprep.subr.bf16.mxu0 0
      %339 = vmatpush2.bf16.msra.mxu0 0
      %340 = vmatprep.subr.bf16.mxu0 0
      %341 = vmatpush2.bf16.msra.mxu0 0
      %342 = vmatprep.subr.bf16.mxu0 0
      %343 = vmatpush2.bf16.msra.mxu0 0
      %344 = vmatprep.subr.bf16.mxu0 0
      %345 = vmatpush2.bf16.msra.mxu0 0
      %346 = vmatprep.subr.bf16.mxu0 0
      %347 = vmatpush2.bf16.msra.mxu0 0
      %348 = vmatprep.subr.bf16.mxu0 0
      %349 = vmatpush2.bf16.msra.mxu0 0
      %350 = vmatprep.subr.bf16.mxu0 0
      %351 = vmatpush2.bf16.msra.mxu0 0
      %352 = vmatprep.subr.bf16.mxu0 0
      %353 = vmatpush2.bf16.msra.mxu0 0
      %354 = vmatprep.mubr.bf16.mxu0 0
      %355 = vmatmul.mubr.bf16.gmra.mxu0 %v272
      %v356 = vpop.f32.mrf.mxu0
      %v357 = vadd.f32 0.0, %v356
      %v358 = vpop.f32.mrf.mxu0
      %v359 = vpop.f32.mrf.mxu0
      %v360 = vadd.f32 0.0, %v359
      %v361 = vpop.f32.mrf.mxu0
      %362 = vdwg.mxu0
      %v363 = vadd.f32 %v250, %v357
      %v364 = vadd.f32 %v251, %v360
      %s365 = scalar_lea.vmem %s227, 64
      %v366 = vld [vmem:[%s365] sm:$0xf]
      %v367 = vld [vmem:[%s365 + $0x4] sm:$0xf]
      %v368 = vld [vmem:[%s365 + $0x8] sm:$0xf]
      %v369 = vld [vmem:[%s365 + $0xc] sm:$0xf]
      %v370 = vld [vmem:[%s365 + $0x10] sm:$0xf]
      %v371 = vld [vmem:[%s365 + $0x14] sm:$0xf]
      %v372 = vld [vmem:[%s365 + $0x18] sm:$0xf]
      %v373 = vld [vmem:[%s365 + $0x1c] sm:$0xf]
      %v374 = vld [vmem:[%s365 + $0x20] sm:$0xf]
      %v375 = vld [vmem:[%s365 + $0x24] sm:$0xf]
      %v376 = vld [vmem:[%s365 + $0x28] sm:$0xf]
      %v377 = vld [vmem:[%s365 + $0x2c] sm:$0xf]
      %v378 = vld [vmem:[%s365 + $0x30] sm:$0xf]
      %v379 = vld [vmem:[%s365 + $0x34] sm:$0xf]
      %v380 = vld [vmem:[%s365 + $0x38] sm:$0xf]
      %v381 = vld [vmem:[%s365 + $0x3c] sm:$0xf]
      %v383 = vshrl.u32 %v272, 16
      %v385 = vshll.u32 %v272, 16
      %v387 = vrot.slane %v385, 1
      %v388 = vor.u32 %v383, %v387
      %v406 = vunpack.c.l.b16 %v366
      %v407 = vunpack.c.l.b16 %v367
      %v408 = vunpack.c.l.b16 %v368
      %v409 = vunpack.c.l.b16 %v369
      %v410 = vunpack.c.l.b16 %v370
      %v411 = vunpack.c.l.b16 %v371
      %v412 = vunpack.c.l.b16 %v372
      %v413 = vunpack.c.l.b16 %v373
      %v414 = vunpack.c.l.b16 %v374
      %v415 = vunpack.c.l.b16 %v375
      %v416 = vunpack.c.l.b16 %v376
      %v417 = vunpack.c.l.b16 %v377
      %v418 = vunpack.c.l.b16 %v378
      %v419 = vunpack.c.l.b16 %v379
      %v420 = vunpack.c.l.b16 %v380
      %v421 = vunpack.c.l.b16 %v381
      %v422 = vpack.c.b16 %v407, %v406
      %v423 = vpack.c.b16 %v409, %v408
      %v424 = vpack.c.b16 %v411, %v410
      %v425 = vpack.c.b16 %v413, %v412
      %v426 = vpack.c.b16 %v415, %v414
      %v427 = vpack.c.b16 %v417, %v416
      %v428 = vpack.c.b16 %v419, %v418
      %v429 = vpack.c.b16 %v421, %v420
      %438 = vmatprep.subr.bf16.mxu0 0
      %439 = vmatpush1.bf16.msra.mxu0 %v429
      %440 = vmatprep.subr.bf16.mxu0 0
      %441 = vmatpush1.bf16.msra.mxu0 %v428
      %442 = vmatprep.subr.bf16.mxu0 0
      %443 = vmatpush1.bf16.msra.mxu0 %v427
      %444 = vmatprep.subr.bf16.mxu0 0
      %445 = vmatpush1.bf16.msra.mxu0 %v426
      %446 = vmatprep.subr.bf16.mxu0 0
      %447 = vmatpush1.bf16.msra.mxu0 %v425
      %448 = vmatprep.subr.bf16.mxu0 0
      %449 = vmatpush1.bf16.msra.mxu0 %v424
      %450 = vmatprep.subr.bf16.mxu0 0
      %451 = vmatpush1.bf16.msra.mxu0 %v423
      %452 = vmatprep.subr.bf16.mxu0 0
      %453 = vmatpush1.bf16.msra.mxu0 %v422
      %454 = vmatprep.subr.bf16.mxu0 0
      %455 = vmatpush2.bf16.msra.mxu0 0
      %456 = vmatprep.subr.bf16.mxu0 0
      %457 = vmatpush2.bf16.msra.mxu0 0
      %458 = vmatprep.subr.bf16.mxu0 0
      %459 = vmatpush2.bf16.msra.mxu0 0
      %460 = vmatprep.subr.bf16.mxu0 0
      %461 = vmatpush2.bf16.msra.mxu0 0
      %462 = vmatprep.subr.bf16.mxu0 0
      %463 = vmatpush2.bf16.msra.mxu0 0
      %464 = vmatprep.subr.bf16.mxu0 0
      %465 = vmatpush2.bf16.msra.mxu0 0
      %466 = vmatprep.subr.bf16.mxu0 0
      %467 = vmatpush2.bf16.msra.mxu0 0
      %468 = vmatprep.subr.bf16.mxu0 0
      %469 = vmatpush2.bf16.msra.mxu0 0
      %470 = vmatprep.mubr.bf16.mxu0 0
      %471 = vmatmul.mubr.bf16.gmra.mxu0 %v388
      %v472 = vpop.f32.mrf.mxu0
      %v473 = vadd.f32 0.0, %v472
      %v474 = vpop.f32.mrf.mxu0
      %v475 = vpop.f32.mrf.mxu0
      %v476 = vadd.f32 0.0, %v475
      %v477 = vpop.f32.mrf.mxu0
      %478 = vdwg.mxu0
      %v479 = vadd.f32 %v363, %v473
      %v480 = vadd.f32 %v364, %v476
      %s481 = scalar_lea.vmem %s227, 128
      %v482 = vld [vmem:[%s481] sm:$0xf]
      %v483 = vld [vmem:[%s481 + $0x4] sm:$0xf]
      %v484 = vld [vmem:[%s481 + $0x8] sm:$0xf]
      %v485 = vld [vmem:[%s481 + $0xc] sm:$0xf]
      %v486 = vld [vmem:[%s481 + $0x10] sm:$0xf]
      %v487 = vld [vmem:[%s481 + $0x14] sm:$0xf]
      %v488 = vld [vmem:[%s481 + $0x18] sm:$0xf]
      %v489 = vld [vmem:[%s481 + $0x1c] sm:$0xf]
      %v490 = vld [vmem:[%s481 + $0x20] sm:$0xf]
      %v491 = vld [vmem:[%s481 + $0x24] sm:$0xf]
      %v492 = vld [vmem:[%s481 + $0x28] sm:$0xf]
      %v493 = vld [vmem:[%s481 + $0x2c] sm:$0xf]
      %v494 = vld [vmem:[%s481 + $0x30] sm:$0xf]
      %v495 = vld [vmem:[%s481 + $0x34] sm:$0xf]
      %v496 = vld [vmem:[%s481 + $0x38] sm:$0xf]
      %v497 = vld [vmem:[%s481 + $0x3c] sm:$0xf]
      %v498 = vrot.slane %v272, 1
      %v516 = vunpack.c.l.b16 %v482
      %v517 = vunpack.c.l.b16 %v483
      %v518 = vunpack.c.l.b16 %v484
      %v519 = vunpack.c.l.b16 %v485
      %v520 = vunpack.c.l.b16 %v486
      %v521 = vunpack.c.l.b16 %v487
      %v522 = vunpack.c.l.b16 %v488
      %v523 = vunpack.c.l.b16 %v489
      %v524 = vunpack.c.l.b16 %v490
      %v525 = vunpack.c.l.b16 %v491
      %v526 = vunpack.c.l.b16 %v492
      %v527 = vunpack.c.l.b16 %v493
      %v528 = vunpack.c.l.b16 %v494
      %v529 = vunpack.c.l.b16 %v495
      %v530 = vunpack.c.l.b16 %v496
      %v531 = vunpack.c.l.b16 %v497
      %v532 = vpack.c.b16 %v517, %v516
      %v533 = vpack.c.b16 %v519, %v518
      %v534 = vpack.c.b16 %v521, %v520
      %v535 = vpack.c.b16 %v523, %v522
      %v536 = vpack.c.b16 %v525, %v524
      %v537 = vpack.c.b16 %v527, %v526
      %v538 = vpack.c.b16 %v529, %v528
      %v539 = vpack.c.b16 %v531, %v530
      %548 = vmatprep.subr.bf16.mxu0 0
      %549 = vmatpush1.bf16.msra.mxu0 %v539
      %550 = vmatprep.subr.bf16.mxu0 0
      %551 = vmatpush1.bf16.msra.mxu0 %v538
      %552 = vmatprep.subr.bf16.mxu0 0
      %553 = vmatpush1.bf16.msra.mxu0 %v537
      %554 = vmatprep.subr.bf16.mxu0 0
      %555 = vmatpush1.bf16.msra.mxu0 %v536
      %556 = vmatprep.subr.bf16.mxu0 0
      %557 = vmatpush1.bf16.msra.mxu0 %v535
      %558 = vmatprep.subr.bf16.mxu0 0
      %559 = vmatpush1.bf16.msra.mxu0 %v534
      %560 = vmatprep.subr.bf16.mxu0 0
      %561 = vmatpush1.bf16.msra.mxu0 %v533
      %562 = vmatprep.subr.bf16.mxu0 0
      %563 = vmatpush1.bf16.msra.mxu0 %v532
      %564 = vmatprep.subr.bf16.mxu0 0
      %565 = vmatpush2.bf16.msra.mxu0 0
      %566 = vmatprep.subr.bf16.mxu0 0
      %567 = vmatpush2.bf16.msra.mxu0 0
      %568 = vmatprep.subr.bf16.mxu0 0
      %569 = vmatpush2.bf16.msra.mxu0 0
      %570 = vmatprep.subr.bf16.mxu0 0
      %571 = vmatpush2.bf16.msra.mxu0 0
      %572 = vmatprep.subr.bf16.mxu0 0
      %573 = vmatpush2.bf16.msra.mxu0 0
      %574 = vmatprep.subr.bf16.mxu0 0
      %575 = vmatpush2.bf16.msra.mxu0 0
      %576 = vmatprep.subr.bf16.mxu0 0
      %577 = vmatpush2.bf16.msra.mxu0 0
      %578 = vmatprep.subr.bf16.mxu0 0
      %579 = vmatpush2.bf16.msra.mxu0 0
      %580 = vmatprep.mubr.bf16.mxu0 0
      %581 = vmatmul.mubr.bf16.gmra.mxu0 %v498
      %v582 = vpop.f32.mrf.mxu0
      %v583 = vadd.f32 0.0, %v582
      %v584 = vpop.f32.mrf.mxu0
      %v585 = vpop.f32.mrf.mxu0
      %v586 = vadd.f32 0.0, %v585
      %v587 = vpop.f32.mrf.mxu0
      %588 = vdwg.mxu0
      %v589 = vadd.f32 %v479, %v583
      %v590 = vadd.f32 %v480, %v586
      %s591 = scalar_lea.vmem %s227, 192
      %v592 = vld [vmem:[%s591] sm:$0xf]
      %v593 = vld [vmem:[%s591 + $0x4] sm:$0xf]
      %v594 = vld [vmem:[%s591 + $0x8] sm:$0xf]
      %v595 = vld [vmem:[%s591 + $0xc] sm:$0xf]
      %v596 = vld [vmem:[%s591 + $0x10] sm:$0xf]
      %v597 = vld [vmem:[%s591 + $0x14] sm:$0xf]
      %v598 = vld [vmem:[%s591 + $0x18] sm:$0xf]
      %v599 = vld [vmem:[%s591 + $0x1c] sm:$0xf]
      %v600 = vld [vmem:[%s591 + $0x20] sm:$0xf]
      %v601 = vld [vmem:[%s591 + $0x24] sm:$0xf]
      %v602 = vld [vmem:[%s591 + $0x28] sm:$0xf]
      %v603 = vld [vmem:[%s591 + $0x2c] sm:$0xf]
      %v604 = vld [vmem:[%s591 + $0x30] sm:$0xf]
      %v605 = vld [vmem:[%s591 + $0x34] sm:$0xf]
      %v606 = vld [vmem:[%s591 + $0x38] sm:$0xf]
      %v607 = vld [vmem:[%s591 + $0x3c] sm:$0xf]
      %v609 = vunpack.c.l.b16 %v249
      %v610 = vpack.c.b16 %v609, %v609
      %vm611 = vsmask.f32 6400
      %v612 = vrot.slane %v383, 1
      %v613 = vrot.slane %v385, 2
      %v614 = vor.u32 %v612, %v613
      %v616 = vshll.u32 %v610, 16
      %v618 = vrot.slane %v616, 2
      %v619 = vsel %vm611, %v614, %v618
      %v637 = vunpack.c.l.b16 %v592
      %v638 = vunpack.c.l.b16 %v593
      %v639 = vunpack.c.l.b16 %v594
      %v640 = vunpack.c.l.b16 %v595
      %v641 = vunpack.c.l.b16 %v596
      %v642 = vunpack.c.l.b16 %v597
      %v643 = vunpack.c.l.b16 %v598
      %v644 = vunpack.c.l.b16 %v599
      %v645 = vunpack.c.l.b16 %v600
      %v646 = vunpack.c.l.b16 %v601
      %v647 = vunpack.c.l.b16 %v602
      %v648 = vunpack.c.l.b16 %v603
      %v649 = vunpack.c.l.b16 %v604
      %v650 = vunpack.c.l.b16 %v605
      %v651 = vunpack.c.l.b16 %v606
      %v652 = vunpack.c.l.b16 %v607
      %v653 = vpack.c.b16 %v638, %v637
      %v654 = vpack.c.b16 %v640, %v639
      %v655 = vpack.c.b16 %v642, %v641
      %v656 = vpack.c.b16 %v644, %v643
      %v657 = vpack.c.b16 %v646, %v645
      %v658 = vpack.c.b16 %v648, %v647
      %v659 = vpack.c.b16 %v650, %v649
      %v660 = vpack.c.b16 %v652, %v651
      %669 = vmatprep.subr.bf16.mxu0 0
      %670 = vmatpush1.bf16.msra.mxu0 %v660
      %671 = vmatprep.subr.bf16.mxu0 0
      %672 = vmatpush1.bf16.msra.mxu0 %v659
      %673 = vmatprep.subr.bf16.mxu0 0
      %674 = vmatpush1.bf16.msra.mxu0 %v658
      %675 = vmatprep.subr.bf16.mxu0 0
      %676 = vmatpush1.bf16.msra.mxu0 %v657
      %677 = vmatprep.subr.bf16.mxu0 0
      %678 = vmatpush1.bf16.msra.mxu0 %v656
      %679 = vmatprep.subr.bf16.mxu0 0
      %680 = vmatpush1.bf16.msra.mxu0 %v655
      %681 = vmatprep.subr.bf16.mxu0 0
      %682 = vmatpush1.bf16.msra.mxu0 %v654
      %683 = vmatprep.subr.bf16.mxu0 0
      %684 = vmatpush1.bf16.msra.mxu0 %v653
      %685 = vmatprep.subr.bf16.mxu0 0
      %686 = vmatpush2.bf16.msra.mxu0 0
      %687 = vmatprep.subr.bf16.mxu0 0
      %688 = vmatpush2.bf16.msra.mxu0 0
      %689 = vmatprep.subr.bf16.mxu0 0
      %690 = vmatpush2.bf16.msra.mxu0 0
      %691 = vmatprep.subr.bf16.mxu0 0
      %692 = vmatpush2.bf16.msra.mxu0 0
      %693 = vmatprep.subr.bf16.mxu0 0
      %694 = vmatpush2.bf16.msra.mxu0 0
      %695 = vmatprep.subr.bf16.mxu0 0
      %696 = vmatpush2.bf16.msra.mxu0 0
      %697 = vmatprep.subr.bf16.mxu0 0
      %698 = vmatpush2.bf16.msra.mxu0 0
      %699 = vmatprep.subr.bf16.mxu0 0
      %700 = vmatpush2.bf16.msra.mxu0 0
      %701 = vmatprep.mubr.bf16.mxu0 0
      %702 = vmatmul.mubr.bf16.gmra.mxu0 %v619
      %v703 = vpop.f32.mrf.mxu0
      %v704 = vadd.f32 0.0, %v703
      %v705 = vpop.f32.mrf.mxu0
      %v706 = vpop.f32.mrf.mxu0
      %v707 = vadd.f32 0.0, %v706
      %v708 = vpop.f32.mrf.mxu0
      %709 = vdwg.mxu0
      %v710 = vadd.f32 %v589, %v704
      %v711 = vadd.f32 %v590, %v707
      %s712 = scalar_lea.vmem %s227, 256
      %v713 = vld [vmem:[%s712] sm:$0xf]
      %v714 = vld [vmem:[%s712 + $0x4] sm:$0xf]
      %v715 = vld [vmem:[%s712 + $0x8] sm:$0xf]
      %v716 = vld [vmem:[%s712 + $0xc] sm:$0xf]
      %v717 = vld [vmem:[%s712 + $0x10] sm:$0xf]
      %v718 = vld [vmem:[%s712 + $0x14] sm:$0xf]
      %v719 = vld [vmem:[%s712 + $0x18] sm:$0xf]
      %v720 = vld [vmem:[%s712 + $0x1c] sm:$0xf]
      %v721 = vld [vmem:[%s712 + $0x20] sm:$0xf]
      %v722 = vld [vmem:[%s712 + $0x24] sm:$0xf]
      %v723 = vld [vmem:[%s712 + $0x28] sm:$0xf]
      %v724 = vld [vmem:[%s712 + $0x2c] sm:$0xf]
      %v725 = vld [vmem:[%s712 + $0x30] sm:$0xf]
      %v726 = vld [vmem:[%s712 + $0x34] sm:$0xf]
      %v727 = vld [vmem:[%s712 + $0x38] sm:$0xf]
      %v728 = vld [vmem:[%s712 + $0x3c] sm:$0xf]
      %vm729 = vcmask 1045504
      %v730 = vrot.slane %v272, 2
      %v731 = vrot.slane %v610, 2
      %v732 = vsel %vm729, %v730, %v731
      %v750 = vunpack.c.l.b16 %v713
      %v751 = vunpack.c.l.b16 %v714
      %v752 = vunpack.c.l.b16 %v715
      %v753 = vunpack.c.l.b16 %v716
      %v754 = vunpack.c.l.b16 %v717
      %v755 = vunpack.c.l.b16 %v718
      %v756 = vunpack.c.l.b16 %v719
      %v757 = vunpack.c.l.b16 %v720
      %v758 = vunpack.c.l.b16 %v721
      %v759 = vunpack.c.l.b16 %v722
      %v760 = vunpack.c.l.b16 %v723
      %v761 = vunpack.c.l.b16 %v724
      %v762 = vunpack.c.l.b16 %v725
      %v763 = vunpack.c.l.b16 %v726
      %v764 = vunpack.c.l.b16 %v727
      %v765 = vunpack.c.l.b16 %v728
      %v766 = vpack.c.b16 %v751, %v750
      %v767 = vpack.c.b16 %v753, %v752
      %v768 = vpack.c.b16 %v755, %v754
      %v769 = vpack.c.b16 %v757, %v756
      %v770 = vpack.c.b16 %v759, %v758
      %v771 = vpack.c.b16 %v761, %v760
      %v772 = vpack.c.b16 %v763, %v762
      %v773 = vpack.c.b16 %v765, %v764
      %782 = vmatprep.subr.bf16.mxu0 0
      %783 = vmatpush1.bf16.msra.mxu0 %v773
      %784 = vmatprep.subr.bf16.mxu0 0
      %785 = vmatpush1.bf16.msra.mxu0 %v772
      %786 = vmatprep.subr.bf16.mxu0 0
      %787 = vmatpush1.bf16.msra.mxu0 %v771
      %788 = vmatprep.subr.bf16.mxu0 0
      %789 = vmatpush1.bf16.msra.mxu0 %v770
      %790 = vmatprep.subr.bf16.mxu0 0
      %791 = vmatpush1.bf16.msra.mxu0 %v769
      %792 = vmatprep.subr.bf16.mxu0 0
      %793 = vmatpush1.bf16.msra.mxu0 %v768
      %794 = vmatprep.subr.bf16.mxu0 0
      %795 = vmatpush1.bf16.msra.mxu0 %v767
      %796 = vmatprep.subr.bf16.mxu0 0
      %797 = vmatpush1.bf16.msra.mxu0 %v766
      %798 = vmatprep.subr.bf16.mxu0 0
      %799 = vmatpush2.bf16.msra.mxu0 0
      %800 = vmatprep.subr.bf16.mxu0 0
      %801 = vmatpush2.bf16.msra.mxu0 0
      %802 = vmatprep.subr.bf16.mxu0 0
      %803 = vmatpush2.bf16.msra.mxu0 0
      %804 = vmatprep.subr.bf16.mxu0 0
      %805 = vmatpush2.bf16.msra.mxu0 0
      %806 = vmatprep.subr.bf16.mxu0 0
      %807 = vmatpush2.bf16.msra.mxu0 0
      %808 = vmatprep.subr.bf16.mxu0 0
      %809 = vmatpush2.bf16.msra.mxu0 0
      %810 = vmatprep.subr.bf16.mxu0 0
      %811 = vmatpush2.bf16.msra.mxu0 0
      %812 = vmatprep.subr.bf16.mxu0 0
      %813 = vmatpush2.bf16.msra.mxu0 0
      %814 = vmatprep.mubr.bf16.mxu0 0
      %815 = vmatmul.mubr.bf16.gmra.mxu0 %v732
      %v816 = vpop.f32.mrf.mxu0
      %v817 = vadd.f32 0.0, %v816
      %v818 = vpop.f32.mrf.mxu0
      %v819 = vpop.f32.mrf.mxu0
      %v820 = vadd.f32 0.0, %v819
      %v821 = vpop.f32.mrf.mxu0
      %822 = vdwg.mxu0
      %v823 = vadd.f32 %v710, %v817
      %v824 = vadd.f32 %v711, %v820
      %s825 = scalar_lea.vmem %s227, 320
      %v826 = vld [vmem:[%s825] sm:$0xf]
      %v827 = vld [vmem:[%s825 + $0x4] sm:$0xf]
      %v828 = vld [vmem:[%s825 + $0x8] sm:$0xf]
      %v829 = vld [vmem:[%s825 + $0xc] sm:$0xf]
      %v830 = vld [vmem:[%s825 + $0x10] sm:$0xf]
      %v831 = vld [vmem:[%s825 + $0x14] sm:$0xf]
      %v832 = vld [vmem:[%s825 + $0x18] sm:$0xf]
      %v833 = vld [vmem:[%s825 + $0x1c] sm:$0xf]
      %v834 = vld [vmem:[%s825 + $0x20] sm:$0xf]
      %v835 = vld [vmem:[%s825 + $0x24] sm:$0xf]
      %v836 = vld [vmem:[%s825 + $0x28] sm:$0xf]
      %v837 = vld [vmem:[%s825 + $0x2c] sm:$0xf]
      %v838 = vld [vmem:[%s825 + $0x30] sm:$0xf]
      %v839 = vld [vmem:[%s825 + $0x34] sm:$0xf]
      %v840 = vld [vmem:[%s825 + $0x38] sm:$0xf]
      %v841 = vld [vmem:[%s825 + $0x3c] sm:$0xf]
      %vm842 = vsmask.f32 5376
      %v843 = vrot.slane %v383, 2
      %v844 = vrot.slane %v385, 3
      %v845 = vor.u32 %v843, %v844
      %v846 = vshrl.u32 %v610, 16
      %v848 = vrot.slane %v846, 2
      %v849 = vrot.slane %v616, 3
      %v850 = vor.u32 %v848, %v849
      %v851 = vsel %vm842, %v845, %v850
      %v869 = vunpack.c.l.b16 %v826
      %v870 = vunpack.c.l.b16 %v827
      %v871 = vunpack.c.l.b16 %v828
      %v872 = vunpack.c.l.b16 %v829
      %v873 = vunpack.c.l.b16 %v830
      %v874 = vunpack.c.l.b16 %v831
      %v875 = vunpack.c.l.b16 %v832
      %v876 = vunpack.c.l.b16 %v833
      %v877 = vunpack.c.l.b16 %v834
      %v878 = vunpack.c.l.b16 %v835
      %v879 = vunpack.c.l.b16 %v836
      %v880 = vunpack.c.l.b16 %v837
      %v881 = vunpack.c.l.b16 %v838
      %v882 = vunpack.c.l.b16 %v839
      %v883 = vunpack.c.l.b16 %v840
      %v884 = vunpack.c.l.b16 %v841
      %v885 = vpack.c.b16 %v870, %v869
      %v886 = vpack.c.b16 %v872, %v871
      %v887 = vpack.c.b16 %v874, %v873
      %v888 = vpack.c.b16 %v876, %v875
      %v889 = vpack.c.b16 %v878, %v877
      %v890 = vpack.c.b16 %v880, %v879
      %v891 = vpack.c.b16 %v882, %v881
      %v892 = vpack.c.b16 %v884, %v883
      %901 = vmatprep.subr.bf16.mxu0 0
      %902 = vmatpush1.bf16.msra.mxu0 %v892
      %903 = vmatprep.subr.bf16.mxu0 0
      %904 = vmatpush1.bf16.msra.mxu0 %v891
      %905 = vmatprep.subr.bf16.mxu0 0
      %906 = vmatpush1.bf16.msra.mxu0 %v890
      %907 = vmatprep.subr.bf16.mxu0 0
      %908 = vmatpush1.bf16.msra.mxu0 %v889
      %909 = vmatprep.subr.bf16.mxu0 0
      %910 = vmatpush1.bf16.msra.mxu0 %v888
      %911 = vmatprep.subr.bf16.mxu0 0
      %912 = vmatpush1.bf16.msra.mxu0 %v887
      %913 = vmatprep.subr.bf16.mxu0 0
      %914 = vmatpush1.bf16.msra.mxu0 %v886
      %915 = vmatprep.subr.bf16.mxu0 0
      %916 = vmatpush1.bf16.msra.mxu0 %v885
      %917 = vmatprep.subr.bf16.mxu0 0
      %918 = vmatpush2.bf16.msra.mxu0 0
      %919 = vmatprep.subr.bf16.mxu0 0
      %920 = vmatpush2.bf16.msra.mxu0 0
      %921 = vmatprep.subr.bf16.mxu0 0
      %922 = vmatpush2.bf16.msra.mxu0 0
      %923 = vmatprep.subr.bf16.mxu0 0
      %924 = vmatpush2.bf16.msra.mxu0 0
      %925 = vmatprep.subr.bf16.mxu0 0
      %926 = vmatpush2.bf16.msra.mxu0 0
      %927 = vmatprep.subr.bf16.mxu0 0
      %928 = vmatpush2.bf16.msra.mxu0 0
      %929 = vmatprep.subr.bf16.mxu0 0
      %930 = vmatpush2.bf16.msra.mxu0 0
      %931 = vmatprep.subr.bf16.mxu0 0
      %932 = vmatpush2.bf16.msra.mxu0 0
      %933 = vmatprep.mubr.bf16.mxu0 0
      %934 = vmatmul.mubr.bf16.gmra.mxu0 %v851
      %v935 = vpop.f32.mrf.mxu0
      %v936 = vadd.f32 0.0, %v935
      %v937 = vpop.f32.mrf.mxu0
      %v938 = vpop.f32.mrf.mxu0
      %v939 = vadd.f32 0.0, %v938
      %v940 = vpop.f32.mrf.mxu0
      %941 = vdwg.mxu0
      %v942 = vadd.f32 %v823, %v936
      %v943 = vadd.f32 %v824, %v939
      %s944 = scalar_lea.vmem %s227, 384
      %v945 = vld [vmem:[%s944] sm:$0xf]
      %v946 = vld [vmem:[%s944 + $0x4] sm:$0xf]
      %v947 = vld [vmem:[%s944 + $0x8] sm:$0xf]
      %v948 = vld [vmem:[%s944 + $0xc] sm:$0xf]
      %v949 = vld [vmem:[%s944 + $0x10] sm:$0xf]
      %v950 = vld [vmem:[%s944 + $0x14] sm:$0xf]
      %v951 = vld [vmem:[%s944 + $0x18] sm:$0xf]
      %v952 = vld [vmem:[%s944 + $0x1c] sm:$0xf]
      %v953 = vld [vmem:[%s944 + $0x20] sm:$0xf]
      %v954 = vld [vmem:[%s944 + $0x24] sm:$0xf]
      %v955 = vld [vmem:[%s944 + $0x28] sm:$0xf]
      %v956 = vld [vmem:[%s944 + $0x2c] sm:$0xf]
      %v957 = vld [vmem:[%s944 + $0x30] sm:$0xf]
      %v958 = vld [vmem:[%s944 + $0x34] sm:$0xf]
      %v959 = vld [vmem:[%s944 + $0x38] sm:$0xf]
      %v960 = vld [vmem:[%s944 + $0x3c] sm:$0xf]
      %vm961 = vcmask 1044480
      %v962 = vrot.slane %v272, 3
      %v963 = vrot.slane %v610, 3
      %v964 = vsel %vm961, %v962, %v963
      %v982 = vunpack.c.l.b16 %v945
      %v983 = vunpack.c.l.b16 %v946
      %v984 = vunpack.c.l.b16 %v947
      %v985 = vunpack.c.l.b16 %v948
      %v986 = vunpack.c.l.b16 %v949
      %v987 = vunpack.c.l.b16 %v950
      %v988 = vunpack.c.l.b16 %v951
      %v989 = vunpack.c.l.b16 %v952
      %v990 = vunpack.c.l.b16 %v953
      %v991 = vunpack.c.l.b16 %v954
      %v992 = vunpack.c.l.b16 %v955
      %v993 = vunpack.c.l.b16 %v956
      %v994 = vunpack.c.l.b16 %v957
      %v995 = vunpack.c.l.b16 %v958
      %v996 = vunpack.c.l.b16 %v959
      %v997 = vunpack.c.l.b16 %v960
      %v998 = vpack.c.b16 %v983, %v982
      %v999 = vpack.c.b16 %v985, %v984
      %v1000 = vpack.c.b16 %v987, %v986
      %v1001 = vpack.c.b16 %v989, %v988
      %v1002 = vpack.c.b16 %v991, %v990
      %v1003 = vpack.c.b16 %v993, %v992
      %v1004 = vpack.c.b16 %v995, %v994
      %v1005 = vpack.c.b16 %v997, %v996
      %1014 = vmatprep.subr.bf16.mxu0 0
      %1015 = vmatpush1.bf16.msra.mxu0 %v1005
      %1016 = vmatprep.subr.bf16.mxu0 0
      %1017 = vmatpush1.bf16.msra.mxu0 %v1004
      %1018 = vmatprep.subr.bf16.mxu0 0
      %1019 = vmatpush1.bf16.msra.mxu0 %v1003
      %1020 = vmatprep.subr.bf16.mxu0 0
      %1021 = vmatpush1.bf16.msra.mxu0 %v1002
      %1022 = vmatprep.subr.bf16.mxu0 0
      %1023 = vmatpush1.bf16.msra.mxu0 %v1001
      %1024 = vmatprep.subr.bf16.mxu0 0
      %1025 = vmatpush1.bf16.msra.mxu0 %v1000
      %1026 = vmatprep.subr.bf16.mxu0 0
      %1027 = vmatpush1.bf16.msra.mxu0 %v999
      %1028 = vmatprep.subr.bf16.mxu0 0
      %1029 = vmatpush1.bf16.msra.mxu0 %v998
      %1030 = vmatprep.subr.bf16.mxu0 0
      %1031 = vmatpush2.bf16.msra.mxu0 0
      %1032 = vmatprep.subr.bf16.mxu0 0
      %1033 = vmatpush2.bf16.msra.mxu0 0
      %1034 = vmatprep.subr.bf16.mxu0 0
      %1035 = vmatpush2.bf16.msra.mxu0 0
      %1036 = vmatprep.subr.bf16.mxu0 0
      %1037 = vmatpush2.bf16.msra.mxu0 0
      %1038 = vmatprep.subr.bf16.mxu0 0
      %1039 = vmatpush2.bf16.msra.mxu0 0
      %1040 = vmatprep.subr.bf16.mxu0 0
      %1041 = vmatpush2.bf16.msra.mxu0 0
      %1042 = vmatprep.subr.bf16.mxu0 0
      %1043 = vmatpush2.bf16.msra.mxu0 0
      %1044 = vmatprep.subr.bf16.mxu0 0
      %1045 = vmatpush2.bf16.msra.mxu0 0
      %1046 = vmatprep.mubr.bf16.mxu0 0
      %1047 = vmatmul.mubr.bf16.gmra.mxu0 %v964
      %v1048 = vpop.f32.mrf.mxu0
      %v1049 = vadd.f32 0.0, %v1048
      %v1050 = vpop.f32.mrf.mxu0
      %v1051 = vpop.f32.mrf.mxu0
      %v1052 = vadd.f32 0.0, %v1051
      %v1053 = vpop.f32.mrf.mxu0
      %1054 = vdwg.mxu0
      %v1055 = vadd.f32 %v942, %v1049
      %v1056 = vadd.f32 %v943, %v1052
      %1057 = vst [vmem:[#allocation2] sm:$0xff] %v1055
      %1058 = vst [vmem:[#allocation2 + $0x8] sm:$0x3f] %v1056
      // Predicated region
      $region33: #{inception_stem_forward.60} parent=27 // pred_check
        %p1059 = pneg %p241
      $region34: #{inception_stem_forward.60} parent=27 // pred_check_branch
        %1061 = sbr.rel (%p1059) target = $region36
      $region35: #{inception_stem_forward.60} parent=27 // pred_region
        %v1062 = vld [vmem:[#allocation2] sm:$0xff]
        %v1063 = vld [vmem:[#allocation2 + $0x8] sm:$0x3f]
        %1064 = vst [vmem:[%s239] sm:$0xff] %v1062
        %1065 = vst [vmem:[%s239 + $0x8] sm:$0x3f] %v1063
      $region36: #{inception_stem_forward.60} parent=27 // pred_fallthru
        _
      %p1066 = scmp.lt.s32.totalorder %s19, 1
      %s1067 = scalar_select %p1066, %s19, 1
      %p1068 = scmp.lt.s32.totalorder %s20, 13
      %s1069 = scalar_select %p1068, %s20, 13
      %p1070 = scmp.lt.s32.totalorder %s21, 0
      %s1071 = scalar_select %p1070, %s21, 0
      %s1072 = smul.addr %s1069, 2
      %s1073 = sadd.s32 %s1071, %s1072
      %s1074 = smul.addr %s1067, 28
      %s1075 = sadd.s32 %s1073, %s1074
      %s1076 = smul.addr %s1075, 8
      %s1077 = scalar_lea.vmem %s2, %s1076
      // Predicated region
      $region37: #{inception_stem_forward.60} parent=27 // pred_check
        %p1078 = pneg %p119
      $region38: #{inception_stem_forward.60} parent=27 // pred_check_branch
        %1080 = sbr.rel (%p1078) target = $region40
      $region39: #{inception_stem_forward.60} parent=27 // pred_region
        _
      $region40: #{inception_stem_forward.60} parent=27 // pred_fallthru
        _
    $region28: #{inception_stem_forward.60} parent=5 // pred_fallthru
      _
    %p1081 = scmp.le.s32.totalorder 2, %s8
    // Predicated region
    $region41: #{inception_stem_forward.60} parent=5 // pred_check
      %p1082 = pneg %p1081
    $region42: #{inception_stem_forward.60} parent=5 // pred_check_branch
      %1084 = sbr.rel (%p1082) target = $region44
    $region43: #{inception_stem_forward.60} parent=5 // pred_region
      %s1085 = ssub.s32 %s8, 2
      // Predicated region
      $region45: #{inception_stem_forward.60} parent=43 // pred_check
        %p1086 = pneg %p125
      $region46: #{inception_stem_forward.60} parent=43 // pred_check_branch
        %1088 = sbr.rel (%p1086) target = $region48
      $region47: #{inception_stem_forward.60} parent=43 // pred_region
        %p1089 = scmp.lt.s32.totalorder %s23, 1
        %s1090 = scalar_select %p1089, %s23, 1
        %p1091 = scmp.lt.s32.totalorder %s24, 13
        %s1092 = scalar_select %p1091, %s24, 13
        %p1093 = scmp.lt.s32.totalorder %s25, 0
        %s1094 = scalar_select %p1093, %s25, 0
        %s1095 = smul.addr %s1092, 2
        %s1096 = sadd.s32 %s1094, %s1095
        %s1097 = smul.addr %s1090, 28
        %s1098 = sadd.s32 %s1096, %s1097
        %s1099 = smul.addr %s1098, 8
        %s1100 = scalar_lea.vmem %s2, %s1099
      $region48: #{inception_stem_forward.60} parent=43 // pred_fallthru
        _
    $region44: #{inception_stem_forward.60} parent=5 // pred_fallthru
      _
  $region6: #{inception_stem_forward.60} parent=0 // loop_footer
    %s12 = sadd.s32 1, %s8
  $region7: #{inception_stem_forward.60} parent=0 // loop_footer_branch
    %7 = sbr.rel target = $region3
  $region8: #{inception_stem_forward.60} parent=0 // loop_exit
    _

// kernel: inception_stem_forward.69
$region0: #{inception_stem_forward.69}
  #allocation0 [shape = 'u32[]', space=smem, size = 0x4, offset = 0x4, fixed_abs, tag = 'smem constant byte address 0x4 - core index']
  #allocation1 [shape = 'u32[144,128]{1,0:T(1,128)}', space=vmem, size = 0x12000, scoped, tag = 'internal scratch']
  %s0 = inlined_call_operand.vmem [shape: f32[2,14,14,256], index: 0, kind: input, shape index: {}]
  %s1 = inlined_call_operand.vmem [shape: f32[1,256], index: 1, kind: input, shape index: {}]
  %s2 = inlined_call_operand.vmem [shape: f32[1,256], index: 2, kind: input, shape index: {}]
  %s3 = inlined_call_operand.vmem [shape: bf16[2,14,14,256], index: 3, kind: output, shape index: {}]
  %s4 = sld [smem:[#allocation0]]
  $region120: #{inception_stem_forward.69} parent=0
    _
  %s6 = ssub.s32 1, %s4
  %s7 = scalar_select 0, %s6, %s4
  $region1: #{inception_stem_forward.69} parent=0
    #allocation2 [shape = 'u8[16384]{0}', space=vmem, size = 0x4000, scoped, tag = 'input window, operand 0']
    #allocation3 [shape = 'u8[8192]{0}', space=vmem, size = 0x2000, scoped, tag = 'output window, operand 0']
    loop: start=0, step=1, limit=58
    $region2: #{inception_stem_forward.69} parent=1 // loop_pre_header
      _
    $region3: #{inception_stem_forward.69} parent=1 // loop_header
      %s9 = sphi 0, %s13
      %p10 = scmp.ge.s32.totalorder %s9, 58
      %s16 = sphi 0, %s35
      %s17 = sphi 0, %s31
      %s18 = sphi 0, %s27
      %s19 = sphi 0, %s16
      %s20 = sphi 0, %s17
      %s21 = sphi 0, %s18
      %s22 = sphi 0, %s19
      %s23 = sphi 0, %s20
      %s24 = sphi 0, %s21
      %s42 = sphi 0, %s44
      %s45 = sphi 0, %s42
      %s46 = sphi 0, %s45
      %s62 = sphi 0, %s46
      %s68 = sphi 0, %s70
      %s71 = sphi 0, %s68
      %s72 = sphi 0, %s71
      %s88 = sphi 0, %s72
      %s94 = sphi 0, %s96
      %s97 = sphi 0, %s94
      %s98 = sphi 0, %s97
      %s114 = sphi 0, %s98
      %s124 = sphi 0, %s126
      %s127 = sphi 0, %s124
      %s128 = sphi 0, %s127
      %s144 = sphi 0, %s128
    $region4: #{inception_stem_forward.69} parent=1 // loop_header_branch
      %12 = sbr.rel (%p10) target = $region8
    $region5: #{inception_stem_forward.69} parent=1 // loop_body
      %s14 = ssub.s32 %s9, 1
      %s15 = ssub.s32 %s9, 2
      %s25 = sadd.s32 1, %s18
      %p26 = scmp.ge.s32.totalorder %s25, 2
      %s27 = scalar_select %p26, 0, %s25
      %s28 = sadd.s32 1, %s17
      %s29 = scalar_select %p26, %s28, %s17
      %p30 = scmp.ge.s32.totalorder %s29, 14
      %s31 = scalar_select %p30, 0, %s29
      %s32 = sadd.s32 1, %s16
      %s33 = scalar_select %p30, %s32, %s16
      %p34 = scmp.ge.s32.totalorder %s33, 2
      %s35 = scalar_select %p34, 0, %s33
      %s36 = ssub.s32 %s16, %s35
      %s37 = ssub.s32 %s17, %s31
      %s38 = sor.u32 %s36, %s37
      %s39 = ssub.s32 %s18, %s27
      %s40 = sor.u32 %s38, %s39
      %p41 = scmp.eq.s32.totalorder %s40, 0
      %s43 = sadd.s32 %s42, 1
      %s44 = scalar_select %p41, %s42, %s43
      %p47 = pneg %p41
      %p48 = scmp.eq.s32.totalorder %s9, 55
      %p49 = por %p47, %p48
      %p50 = scmp.ne.s32.totalorder %s42, %s45
      %p51 = scmp.eq.s32.totalorder %s9, 0
      %p52 = por %p50, %p51
      %p53 = scmp.ne.s32.totalorder %s42, %s45
      %p54 = scmp.eq.s32.totalorder %s14, 55
      %p55 = por %p53, %p54
      %p56 = scmp.ne.s32.totalorder %s45, %s46
      %p57 = scmp.eq.s32.totalorder %s14, 0
      %p58 = por %p56, %p57
      %p59 = scmp.ne.s32.totalorder %s45, %s46
      %p60 = scmp.eq.s32.totalorder %s15, 55
      %p61 = por %p59, %p60
      %p63 = scmp.ne.s32.totalorder %s46, %s62
      %p64 = scmp.eq.s32.totalorder %s15, 0
      %p65 = por %p63, %p64
      %s66 = ssub.s32 %s18, %s27
      %p67 = scmp.eq.s32.totalorder %s66, 0
      %s69 = sadd.s32 %s68, 1
      %s70 = scalar_select %p67, %s68, %s69
      %p73 = pneg %p67
      %p74 = scmp.eq.s32.totalorder %s9, 55
      %p75 = por %p73, %p74
      %p76 = scmp.ne.s32.totalorder %s68, %s71
      %p77 = scmp.eq.s32.totalorder %s9, 0
      %p78 = por %p76, %p77
      %p79 = scmp.ne.s32.totalorder %s68, %s71
      %p80 = scmp.eq.s32.totalorder %s14, 55
      %p81 = por %p79, %p80
      %p82 = scmp.ne.s32.totalorder %s71, %s72
      %p83 = scmp.eq.s32.totalorder %s14, 0
      %p84 = por %p82, %p83
      %p85 = scmp.ne.s32.totalorder %s71, %s72
      %p86 = scmp.eq.s32.totalorder %s15, 55
      %p87 = por %p85, %p86
      %p89 = scmp.ne.s32.totalorder %s72, %s88
      %p90 = scmp.eq.s32.totalorder %s15, 0
      %p91 = por %p89, %p90
      %s92 = ssub.s32 %s18, %s27
      %p93 = scmp.eq.s32.totalorder %s92, 0
      %s95 = sadd.s32 %s94, 1
      %s96 = scalar_select %p93, %s94, %s95
      %p99 = pneg %p93
      %p100 = scmp.eq.s32.totalorder %s9, 55
      %p101 = por %p99, %p100
      %p102 = scmp.ne.s32.totalorder %s94, %s97
      %p103 = scmp.eq.s32.totalorder %s9, 0
      %p104 = por %p102, %p103
      %p105 = scmp.ne.s32.totalorder %s94, %s97
      %p106 = scmp.eq.s32.totalorder %s14, 55
      %p107 = por %p105, %p106
      %p108 = scmp.ne.s32.totalorder %s97, %s98
      %p109 = scmp.eq.s32.totalorder %s14, 0
      %p110 = por %p108, %p109
      %p111 = scmp.ne.s32.totalorder %s97, %s98
      %p112 = scmp.eq.s32.totalorder %s15, 55
      %p113 = por %p111, %p112
      %p115 = scmp.ne.s32.totalorder %s98, %s114
      %p116 = scmp.eq.s32.totalorder %s15, 0
      %p117 = por %p115, %p116
      %s118 = ssub.s32 %s16, %s35
      %s119 = ssub.s32 %s17, %s31
      %s120 = sor.u32 %s118, %s119
      %s121 = ssub.s32 %s18, %s27
      %s122 = sor.u32 %s120, %s121
      %p123 = scmp.eq.s32.totalorder %s122, 0
      %s125 = sadd.s32 %s124, 1
      %s126 = scalar_select %p123, %s124, %s125
      %p129 = pneg %p123
      %p130 = scmp.eq.s32.totalorder %s9, 55
      %p131 = por %p129, %p130
      %p132 = scmp.ne.s32.totalorder %s124, %s127
      %p133 = scmp.eq.s32.totalorder %s9, 0
      %p134 = por %p132, %p133
      %p135 = scmp.ne.s32.totalorder %s124, %s127
      %p136 = scmp.eq.s32.totalorder %s14, 55
      %p137 = por %p135, %p136
      %p138 = scmp.ne.s32.totalorder %s127, %s128
      %p139 = scmp.eq.s32.totalorder %s14, 0
      %p140 = por %p138, %p139
      %p141 = scmp.ne.s32.totalorder %s127, %s128
      %p142 = scmp.eq.s32.totalorder %s15, 55
      %p143 = por %p141, %p142
      %p145 = scmp.ne.s32.totalorder %s128, %s144
      %p146 = scmp.eq.s32.totalorder %s15, 0
      %p147 = por %p145, %p146
      %p148 = scmp.le.s32.totalorder 1, %s9
      %p149 = scmp.lt.s32.totalorder %s9, 57
      %p150 = pnand %p148, %p149
      %p151 = pneg %p150
      // Predicated region
      $region9: #{inception_stem_forward.69} parent=5 // pred_check
        _
      $region10: #{inception_stem_forward.69} parent=5 // pred_check_branch
        %153 = sbr.rel (%p150) target = $region12
      $region11: #{inception_stem_forward.69} parent=5 // pred_region
        %s154 = ssub.s32 %s9, 1
      $region12: #{inception_stem_forward.69} parent=5 // pred_fallthru
        _
      %p155 = scmp.lt.s32.totalorder %s9, 56
      // Predicated region
      $region13: #{inception_stem_forward.69} parent=5 // pred_check
        %p156 = pneg %p155
      $region14: #{inception_stem_forward.69} parent=5 // pred_check_branch
        %158 = sbr.rel (%p156) target = $region16
      $region15: #{inception_stem_forward.69} parent=5 // pred_region
        // Predicated region
        $region17: #{inception_stem_forward.69} parent=15 // pred_check
          %p159 = pneg %p52
        $region18: #{inception_stem_forward.69} parent=15 // pred_check_branch
          %161 = sbr.rel (%p159) target = $region20
        $region19: #{inception_stem_forward.69} parent=15 // pred_region
          %s162 = sand.u32 %s42, 1
          %s163 = sand.u32 %s42, 1
          %s164 = smul.addr %s163, 16
          %s165 = scalar_lea.vmem [#allocation2], %s164
          %s166 = smul.addr %s17, 4
          %s167 = sadd.s32 %s18, %s166
          %s168 = smul.addr %s16, 56
          %s169 = sadd.s32 %s167, %s168
          %s170 = smul.addr %s169, 8
          %s171 = scalar_lea.vmem %s0, %s170
          // Predicated region
          $region21: #{inception_stem_forward.69} parent=19 // pred_check
            _
          $region22: #{inception_stem_forward.69} parent=19 // pred_check_branch
            %173 = sbr.rel (0) target = $region24
          $region23: #{inception_stem_forward.69} parent=19 // pred_region
            // Predicated region
            $region25: #{inception_stem_forward.69} parent=23 // pred_check
              _
            $region26: #{inception_stem_forward.69} parent=23 // pred_check_branch
              %175 = sbr.rel (0) target = $region28
            $region27: #{inception_stem_forward.69} parent=23 // pred_region
              // Predicated region
              $region40: #{inception_stem_forward.69} parent=27 // pred_check
                _
              $region41: #{inception_stem_forward.69} parent=27 // pred_check_branch
                %193 = sbr.rel (0) target = $region43
              $region42: #{inception_stem_forward.69} parent=27 // pred_region
                loop: start=0, step=1, limit=1
                $region44: #{inception_stem_forward.69} parent=42 // loop_pre_header
                  _
                $region45: #{inception_stem_forward.69} parent=42 // loop_header
                  %s195 = sphi 0, %s199
                  %p196 = scmp.ge.s32.totalorder %s195, 1
                  %s200 = sphi %s171, %s171
                  %s201 = sphi %s165, %s165
                $region46: #{inception_stem_forward.69} parent=42 // loop_header_branch
                  %198 = sbr.rel (%p196) target = $region50
                $region47: #{inception_stem_forward.69} parent=42 // loop_body
                  %v202 = vld [vmem:[%s200] sm:$0xff]
                  %203 = vst [vmem:[%s201] sm:$0xff] %v202
                  %v204 = vld [vmem:[%s200 + $0x10] sm:$0xff]
                  %205 = vst [vmem:[%s201 + $0x8] sm:$0xff] %v204
                $region48: #{inception_stem_forward.69} parent=42 // loop_footer
                  %s199 = sadd.s32 1, %s195
                $region49: #{inception_stem_forward.69} parent=42 // loop_footer_branch
                  %194 = sbr.rel target = $region45
                $region50: #{inception_stem_forward.69} parent=42 // loop_exit
                  _
              $region43: #{inception_stem_forward.69} parent=27 // pred_fallthru
                _
              // Predicated region
              $region51: #{inception_stem_forward.69} parent=27 // pred_check
                _
              $region52: #{inception_stem_forward.69} parent=27 // pred_check_branch
                %207 = sbr.rel target = $region54
              $region53: #{inception_stem_forward.69} parent=27 // pred_region
                _
              $region54: #{inception_stem_forward.69} parent=27 // pred_fallthru
                _
            $region28: #{inception_stem_forward.69} parent=23 // pred_fallthru
              _
            // Predicated region
            $region29: #{inception_stem_forward.69} parent=23 // pred_check
              _
            $region30: #{inception_stem_forward.69} parent=23 // pred_check_branch
              %177 = sbr.rel target = $region32
            $region31: #{inception_stem_forward.69} parent=23 // pred_region
              %s179 = ssub.s32 256, 1
              loop: start=0, step=1, limit=1
              $region33: #{inception_stem_forward.69} parent=31 // loop_pre_header
                _
              $region34: #{inception_stem_forward.69} parent=31 // loop_header
                %s181 = sphi 0, %s185
                %p182 = scmp.ge.s32.totalorder %s181, 1
                %s186 = sphi %s171, %s171
                %s187 = sphi %s165, %s165
              $region35: #{inception_stem_forward.69} parent=31 // loop_header_branch
                %184 = sbr.rel (%p182) target = $region39
              $region36: #{inception_stem_forward.69} parent=31 // loop_body
                %v188 = vld [vmem:[%s186] sm:%s179]
                %189 = vst [vmem:[%s187] sm:%s179] %v188
                %v190 = vld [vmem:[%s186 + $0x10] sm:%s179]
                %191 = vst [vmem:[%s187 + $0x8] sm:%s179] %v190
              $region37: #{inception_stem_forward.69} parent=31 // loop_footer
                %s185 = sadd.s32 1, %s181
              $region38: #{inception_stem_forward.69} parent=31 // loop_footer_branch
                %180 = sbr.rel target = $region34
              $region39: #{inception_stem_forward.69} parent=31 // loop_exit
                _
            $region32: #{inception_stem_forward.69} parent=23 // pred_fallthru
              _
          $region24: #{inception_stem_forward.69} parent=19 // pred_fallthru
            _
          %208 = vnop
        $region20: #{inception_stem_forward.69} parent=15 // pred_fallthru
          _
        // Predicated region
        $region55: #{inception_stem_forward.69} parent=15 // pred_check
          %p209 = pneg %p78
        $region56: #{inception_stem_forward.69} parent=15 // pred_check_branch
          %211 = sbr.rel (%p209) target = $region58
        $region57: #{inception_stem_forward.69} parent=15 // pred_region
          %p212 = scmp.lt.s32.totalorder %s18, 1
          %s213 = scalar_select %p212, %s18, 1
          %s214 = scalar_lea.vmem %s1, %s213
        $region58: #{inception_stem_forward.69} parent=15 // pred_fallthru
          _
        // Predicated region
        $region59: #{inception_stem_forward.69} parent=15 // pred_check
          %p215 = pneg %p104
        $region60: #{inception_stem_forward.69} parent=15 // pred_check_branch
          %217 = sbr.rel (%p215) target = $region62
        $region61: #{inception_stem_forward.69} parent=15 // pred_region
          %p218 = scmp.lt.s32.totalorder %s18, 1
          %s219 = scalar_select %p218, %s18, 1
          %s220 = scalar_lea.vmem %s2, %s219
        $region62: #{inception_stem_forward.69} parent=15 // pred_fallthru
          _
      $region16: #{inception_stem_forward.69} parent=5 // pred_fallthru
        _
      %p221 = scmp.le.s32.totalorder 1, %s9
      %p222 = scmp.lt.s32.totalorder %s9, 57
      %p223 = pnand %p221, %p222
      %p224 = pneg %p223
      // Predicated region
      $region63: #{inception_stem_forward.69} parent=5 // pred_check
        _
      $region64: #{inception_stem_forward.69} parent=5 // pred_check_branch
        %226 = sbr.rel (%p223) target = $region66
      $region65: #{inception_stem_forward.69} parent=5 // pred_region
        %s227 = ssub.s32 %s9, 1
        %s228 = sand.u32 %s45, 1
        %s229 = sand.u32 %s45, 1
        %s230 = smul.addr %s229, 16
        %s231 = scalar_lea.vmem [#allocation2], %s230
        // Predicated region
        $region67: #{inception_stem_forward.69} parent=65 // pred_check
          %p232 = pneg %p58
        $region68: #{inception_stem_forward.69} parent=65 // pred_check_branch
          %234 = sbr.rel (%p232) target = $region70
        $region69: #{inception_stem_forward.69} parent=65 // pred_region
          _
        $region70: #{inception_stem_forward.69} parent=65 // pred_fallthru
          _
        %s235 = sand.u32 %s45, 1
        %s236 = sand.u32 %s45, 1
        %s237 = smul.addr %s236, 16
        %s238 = scalar_lea.vmem [#allocation2], %s237
        %p239 = pneg %p58
        %p240 = pneg %p55
        %p241 = scmp.lt.s32.totalorder %s21, 1
        %s242 = scalar_select %p241, %s21, 1
        %s243 = scalar_lea.vmem %s1, %s242
        %p244 = pneg %p84
        %p245 = pneg %p81
        %p246 = scmp.lt.s32.totalorder %s21, 1
        %s247 = scalar_select %p246, %s21, 1
        %s248 = scalar_lea.vmem %s2, %s247
        %p249 = pneg %p110
        %p250 = pneg %p107
        %p251 = pneg %p140
        %p252 = pneg %p137
        %s253 = sand.u32 %s127, 1
        %s254 = sand.u32 %s127, 1
        %s255 = smul.addr %s254, 8
        %s256 = scalar_lea.vmem [#allocation3], %s255
        %p257 = scmp.lt.s32.totalorder %s21, 1
        %s258 = scalar_select %p257, %s21, 1
        %s259 = scalar_lea.vmem %s1, %s258
        %p260 = scmp.lt.s32.totalorder %s21, 1
        %s261 = scalar_select %p260, %s21, 1
        %s262 = scalar_lea.vmem %s2, %s261
        %v263 = vld [vmem:[%s231] sm:$0xff]
        %v264 = vld [vmem:[%s231 + $0x8] sm:$0x3f]
        %v265 = vld [vmem:[%s259] sm:$0x1]
        %v267 = vlaneseq
        %v268 = vshrl.u32 %v267, 7
        %v269 = vsub.s32 0, %v268
        %v270 = vrot.slane %v265, %v269
        %v272 = vmul.f32 %v263, %v270
        %v273 = vmul.f32 %v264, %v270
        %v274 = vld [vmem:[%s262] sm:$0x1]
        %v276 = vlaneseq
        %v277 = vshrl.u32 %v276, 7
        %v278 = vsub.s32 0, %v277
        %v279 = vrot.slane %v274, %v278
        %v281 = vadd.f32 %v272, %v279
        %v282 = vadd.f32 %v273, %v279
        %v283 = vmax.f32 %v281, 0.0
        %v284 = vmax.f32 %v282, 0.0
        %v285 = vpack.c.bf16 %v284, %v283
        %v287 = vunpack.c.l.b16 %v285
        %v288 = vunpack.c.h.b16 %v285
        %v289 = vpack.c.b16 %v287, %v287
        %v290 = vpack.c.b16 %v288, %v288
        %293 = vst [vmem:[%s256] sm:$0xf] %v289
        %294 = vst [vmem:[%s256 + $0x4] sm:$0x7] %v290
        %s295 = sand.u32 %s127, 1
        %s296 = sand.u32 %s127, 1
        %s297 = smul.addr %s296, 8
        %s298 = scalar_lea.vmem [#allocation3], %s297
        // Predicated region
        $region71: #{inception_stem_forward.69} parent=65 // pred_check
          %p299 = pneg %p137
        $region72: #{inception_stem_forward.69} parent=65 // pred_check_branch
          %301 = sbr.rel (%p299) target = $region74
        $region73: #{inception_stem_forward.69} parent=65 // pred_region
          %s302 = smul.addr %s20, 4
          %s303 = sadd.s32 %s21, %s302
          %s304 = smul.addr %s19, 56
          %s305 = sadd.s32 %s303, %s304
          %s306 = smul.addr %s305, 4
          %s307 = scalar_lea.vmem %s3, %s306
          // Predicated region
          $region75: #{inception_stem_forward.69} parent=73 // pred_check
            _
          $region76: #{inception_stem_forward.69} parent=73 // pred_check_branch
            %309 = sbr.rel (0) target = $region78
          $region77: #{inception_stem_forward.69} parent=73 // pred_region
            // Predicated region
            $region79: #{inception_stem_forward.69} parent=77 // pred_check
              _
            $region80: #{inception_stem_forward.69} parent=77 // pred_check_branch
              %311 = sbr.rel target = $region82
            $region81: #{inception_stem_forward.69} parent=77 // pred_region
              // Predicated region
              $region94: #{inception_stem_forward.69} parent=81 // pred_check
                _
              $region95: #{inception_stem_forward.69} parent=81 // pred_check_branch
                %329 = sbr.rel (0) target = $region97
              $region96: #{inception_stem_forward.69} parent=81 // pred_region
                loop: start=0, step=1, limit=1
                $region98: #{inception_stem_forward.69} parent=96 // loop_pre_header
                  _
                $region99: #{inception_stem_forward.69} parent=96 // loop_header
                  %s331 = sphi 0, %s335
                  %p332 = scmp.ge.s32.totalorder %s331, 1
                  %s336 = sphi %s298, %s298
                  %s337 = sphi %s307, %s307
                $region100: #{inception_stem_forward.69} parent=96 // loop_header_branch
                  %334 = sbr.rel (%p332) target = $region104
                $region101: #{inception_stem_forward.69} parent=96 // loop_body
                  _
                $region102: #{inception_stem_forward.69} parent=96 // loop_footer
                  %s335 = sadd.s32 1, %s331
                $region103: #{inception_stem_forward.69} parent=96 // loop_footer_branch
                  %330 = sbr.rel target = $region99
                $region104: #{inception_stem_forward.69} parent=96 // loop_exit
                  _
                %s339 = ssub.s32 16, 1
                loop: start=0, step=1, limit=1
                $region105: #{inception_stem_forward.69} parent=96 // loop_pre_header
                  _
                $region106: #{inception_stem_forward.69} parent=96 // loop_header
                  %s341 = sphi 0, %s345
                  %p342 = scmp.ge.s32.totalorder %s341, 1
                  %s346 = sphi %s298, %s298
                  %s347 = sphi %s307, %s307
                $region107: #{inception_stem_forward.69} parent=96 // loop_header_branch
                  %344 = sbr.rel (%p342) target = $region111
                $region108: #{inception_stem_forward.69} parent=96 // loop_body
                  %v348 = vld [vmem:[%s346] sm:%s339]
                  %349 = vst [vmem:[%s347] sm:%s339] %v348
                  %v350 = vld [vmem:[%s346 + $0x4] sm:%s339]
                  %351 = vst [vmem:[%s347 + $0x8] sm:%s339] %v350
                $region109: #{inception_stem_forward.69} parent=96 // loop_footer
                  %s345 = sadd.s32 1, %s341
                $region110: #{inception_stem_forward.69} parent=96 // loop_footer_branch
                  %340 = sbr.rel target = $region106
                $region111: #{inception_stem_forward.69} parent=96 // loop_exit
                  _
              $region97: #{inception_stem_forward.69} parent=81 // pred_fallthru
                _
            $region82: #{inception_stem_forward.69} parent=77 // pred_fallthru
              _
            // Predicated region
            $region83: #{inception_stem_forward.69} parent=77 // pred_check
              _
            $region84: #{inception_stem_forward.69} parent=77 // pred_check_branch
              %313 = sbr.rel (0) target = $region86
            $region85: #{inception_stem_forward.69} parent=77 // pred_region
              %s315 = ssub.s32 16, 1
              loop: start=0, step=1, limit=1
              $region87: #{inception_stem_forward.69} parent=85 // loop_pre_header
                _
              $region88: #{inception_stem_forward.69} parent=85 // loop_header
                %s317 = sphi 0, %s321
                %p318 = scmp.ge.s32.totalorder %s317, 1
                %s322 = sphi %s298, %s298
                %s323 = sphi %s307, %s307
              $region89: #{inception_stem_forward.69} parent=85 // loop_header_branch
                %320 = sbr.rel (%p318) target = $region93
              $region90: #{inception_stem_forward.69} parent=85 // loop_body
                %v324 = vld [vmem:[%s322] sm:%s315]
                %325 = vst [vmem:[%s323] sm:%s315] %v324
                %v326 = vld [vmem:[%s322 + $0x4] sm:%s315]
                %327 = vst [vmem:[%s323 + $0x8] sm:%s315] %v326
              $region91: #{inception_stem_forward.69} parent=85 // loop_footer
                %s321 = sadd.s32 1, %s317
              $region92: #{inception_stem_forward.69} parent=85 // loop_footer_branch
                %316 = sbr.rel target = $region88
              $region93: #{inception_stem_forward.69} parent=85 // loop_exit
                _
            $region86: #{inception_stem_forward.69} parent=77 // pred_fallthru
              _
          $region78: #{inception_stem_forward.69} parent=73 // pred_fallthru
            _
          %352 = vnop
        $region74: #{inception_stem_forward.69} parent=65 // pred_fallthru
          _
      $region66: #{inception_stem_forward.69} parent=5 // pred_fallthru
        _
      %p353 = scmp.le.s32.totalorder 2, %s9
      // Predicated region
      $region112: #{inception_stem_forward.69} parent=5 // pred_check
        %p354 = pneg %p353
      $region113: #{inception_stem_forward.69} parent=5 // pred_check_branch
        %356 = sbr.rel (%p354) target = $region115
      $region114: #{inception_stem_forward.69} parent=5 // pred_region
        %s357 = ssub.s32 %s9, 2
        // Predicated region
        $region116: #{inception_stem_forward.69} parent=114 // pred_check
          %p358 = pneg %p143
        $region117: #{inception_stem_forward.69} parent=114 // pred_check_branch
          %360 = sbr.rel (%p358) target = $region119
        $region118: #{inception_stem_forward.69} parent=114 // pred_region
          %s361 = sand.u32 %s128, 1
          %s362 = sand.u32 %s128, 1
          %s363 = smul.addr %s362, 8
          %s364 = scalar_lea.vmem [#allocation3], %s363
        $region119: #{inception_stem_forward.69} parent=114 // pred_fallthru
          _
      $region115: #{inception_stem_forward.69} parent=5 // pred_fallthru
        _
    $region6: #{inception_stem_forward.69} parent=1 // loop_footer
      %s13 = sadd.s32 1, %s9
    $region7: #{inception_stem_forward.69} parent=1 // loop_footer_branch
      %8 = sbr.rel target = $region3
    $region8: #{inception_stem_forward.69} parent=1 // loop_exit
      _

// kernel: inception_stem_forward.67
$region0: #{inception_stem_forward.67}
  #allocation0 [shape = 'u32[]', space=smem, size = 0x4, offset = 0x4, fixed_abs, tag = 'smem constant byte address 0x4 - core index']
  #allocation1 [shape = 'u32[144,128]{1,0:T(1,128)}', space=vmem, size = 0x12000, scoped, tag = 'internal scratch']
  #allocation2 [shape = 'f32[14,128]{1,0:T(8,128)}', space=vmem, size = 0x2000, scoped, tag = 'scratch operand']
  %s0 = inlined_call_operand.vmem [shape: bf16[2,16,16,256], index: 0, kind: input, shape index: {}]
  %s1 = inlined_call_operand.vmem [shape: bf16[3,3,256,256], index: 1, kind: input, shape index: {}]
  %s2 = inlined_call_operand.vmem [shape: f32[2,14,14,256], index: 2, kind: output, shape index: {}]
  %s3 = sld [smem:[#allocation0]]
  $region124: #{inception_stem_forward.67} parent=0
    _
  %s5 = ssub.s32 1, %s3
  %s6 = scalar_select 0, %s5, %s3
  $region1: #{inception_stem_forward.67} parent=0
    #allocation3 [shape = 'u8[393216]{0}', space=vmem, size = 0x60000, scoped, tag = 'input window, operand 1']
    #allocation4 [shape = 'u8[16384]{0}', space=vmem, size = 0x4000, scoped, tag = 'output window, operand 0']
    loop: start=0, step=1, limit=170
    $region2: #{inception_stem_forward.67} parent=1 // loop_pre_header
      _
    $region3: #{inception_stem_forward.67} parent=1 // loop_header
      %s8 = sphi 0, %s12
      %p9 = scmp.ge.s32.totalorder %s8, 170
      %s15 = sphi 0, %s41
      %s16 = sphi 0, %s37
      %s17 = sphi 0, %s33
      %s18 = sphi 0, %s29
      %s19 = sphi 0, %s15
      %s20 = sphi 0, %s16
      %s21 = sphi 0, %s17
      %s22 = sphi 0, %s18
      %s23 = sphi 0, %s19
      %s24 = sphi 0, %s20
      %s25 = sphi 0, %s21
      %s26 = sphi 0, %s22
      %s48 = sphi 0, %s50
      %s51 = sphi 0, %s48
      %s52 = sphi 0, %s51
      %s68 = sphi 0, %s52
      %s76 = sphi 0, %s78
      %s79 = sphi 0, %s76
      %s80 = sphi 0, %s79
      %s96 = sphi 0, %s80
      %s106 = sphi 0, %s108
      %s109 = sphi 0, %s106
      %s110 = sphi 0, %s109
      %s126 = sphi 0, %s110
    $region4: #{inception_stem_forward.67} parent=1 // loop_header_branch
      %11 = sbr.rel (%p9) target = $region8
    $region5: #{inception_stem_forward.67} parent=1 // loop_body
      %s13 = ssub.s32 %s8, 1
      %s14 = ssub.s32 %s8, 2
      %s27 = sadd.s32 1, %s18
      %p28 = scmp.ge.s32.totalorder %s27, 3
      %s29 = scalar_select %p28, 0, %s27
      %s30 = sadd.s32 1, %s17
      %s31 = scalar_select %p28, %s30, %s17
      %p32 = scmp.ge.s32.totalorder %s31, 2
      %s33 = scalar_select %p32, 0, %s31
      %s34 = sadd.s32 1, %s16
      %s35 = scalar_select %p32, %s34, %s16
      %p36 = scmp.ge.s32.totalorder %s35, 14
      %s37 = scalar_select %p36, 0, %s35
      %s38 = sadd.s32 1, %s15
      %s39 = scalar_select %p36, %s38, %s15
      %p40 = scmp.ge.s32.totalorder %s39, 2
      %s41 = scalar_select %p40, 0, %s39
      %s42 = sadd.s32 %s16, %s18
      %s43 = sadd.s32 %s37, %s29
      %s44 = ssub.s32 %s15, %s41
      %s45 = ssub.s32 %s42, %s43
      %s46 = sor.u32 %s44, %s45
      %p47 = scmp.eq.s32.totalorder %s46, 0
      %s49 = sadd.s32 %s48, 1
      %s50 = scalar_select %p47, %s48, %s49
      %p53 = pneg %p47
      %p54 = scmp.eq.s32.totalorder %s8, 167
      %p55 = por %p53, %p54
      %p56 = scmp.ne.s32.totalorder %s48, %s51
      %p57 = scmp.eq.s32.totalorder %s8, 0
      %p58 = por %p56, %p57
      %p59 = scmp.ne.s32.totalorder %s48, %s51
      %p60 = scmp.eq.s32.totalorder %s13, 167
      %p61 = por %p59, %p60
      %p62 = scmp.ne.s32.totalorder %s51, %s52
      %p63 = scmp.eq.s32.totalorder %s13, 0
      %p64 = por %p62, %p63
      %p65 = scmp.ne.s32.totalorder %s51, %s52
      %p66 = scmp.eq.s32.totalorder %s14, 167
      %p67 = por %p65, %p66
      %p69 = scmp.ne.s32.totalorder %s52, %s68
      %p70 = scmp.eq.s32.totalorder %s14, 0
      %p71 = por %p69, %p70
      %s72 = ssub.s32 %s18, %s29
      %s73 = ssub.s32 %s17, %s33
      %s74 = sor.u32 %s72, %s73
      %p75 = scmp.eq.s32.totalorder %s74, 0
      %s77 = sadd.s32 %s76, 1
      %s78 = scalar_select %p75, %s76, %s77
      %p81 = pneg %p75
      %p82 = scmp.eq.s32.totalorder %s8, 167
      %p83 = por %p81, %p82
      %p84 = scmp.ne.s32.totalorder %s76, %s79
      %p85 = scmp.eq.s32.totalorder %s8, 0
      %p86 = por %p84, %p85
      %p87 = scmp.ne.s32.totalorder %s76, %s79
      %p88 = scmp.eq.s32.totalorder %s13, 167
      %p89 = por %p87, %p88
      %p90 = scmp.ne.s32.totalorder %s79, %s80
      %p91 = scmp.eq.s32.totalorder %s13, 0
      %p92 = por %p90, %p91
      %p93 = scmp.ne.s32.totalorder %s79, %s80
      %p94 = scmp.eq.s32.totalorder %s14, 167
      %p95 = por %p93, %p94
      %p97 = scmp.ne.s32.totalorder %s80, %s96
      %p98 = scmp.eq.s32.totalorder %s14, 0
      %p99 = por %p97, %p98
      %s100 = ssub.s32 %s15, %s41
      %s101 = ssub.s32 %s16, %s37
      %s102 = sor.u32 %s100, %s101
      %s103 = ssub.s32 %s17, %s33
      %s104 = sor.u32 %s102, %s103
      %p105 = scmp.eq.s32.totalorder %s104, 0
      %s107 = sadd.s32 %s106, 1
      %s108 = scalar_select %p105, %s106, %s107
      %p111 = pneg %p105
      %p112 = scmp.eq.s32.totalorder %s8, 167
      %p113 = por %p111, %p112
      %p114 = scmp.ne.s32.totalorder %s106, %s109
      %p115 = scmp.eq.s32.totalorder %s8, 0
      %p116 = por %p114, %p115
      %p117 = scmp.ne.s32.totalorder %s106, %s109
      %p118 = scmp.eq.s32.totalorder %s13, 167
      %p119 = por %p117, %p118
      %p120 = scmp.ne.s32.totalorder %s109, %s110
      %p121 = scmp.eq.s32.totalorder %s13, 0
      %p122 = por %p120, %p121
      %p123 = scmp.ne.s32.totalorder %s109, %s110
      %p124 = scmp.eq.s32.totalorder %s14, 167
      %p125 = por %p123, %p124
      %p127 = scmp.ne.s32.totalorder %s110, %s126
      %p128 = scmp.eq.s32.totalorder %s14, 0
      %p129 = por %p127, %p128
      %p130 = scmp.le.s32.totalorder 1, %s8
      %p131 = scmp.lt.s32.totalorder %s8, 169
      %p132 = pnand %p130, %p131
      %p133 = pneg %p132
      // Predicated region
      $region9: #{inception_stem_forward.67} parent=5 // pred_check
        _
      $region10: #{inception_stem_forward.67} parent=5 // pred_check_branch
        %135 = sbr.rel (%p132) target = $region12
      $region11: #{inception_stem_forward.67} parent=5 // pred_region
        %s136 = ssub.s32 %s8, 1
      $region12: #{inception_stem_forward.67} parent=5 // pred_fallthru
        _
      %p137 = scmp.lt.s32.totalorder %s8, 168
      // Predicated region
      $region13: #{inception_stem_forward.67} parent=5 // pred_check
        %p138 = pneg %p137
      $region14: #{inception_stem_forward.67} parent=5 // pred_check_branch
        %140 = sbr.rel (%p138) target = $region16
      $region15: #{inception_stem_forward.67} parent=5 // pred_region
        // Predicated region
        $region17: #{inception_stem_forward.67} parent=15 // pred_check
          %p141 = pneg %p58
        $region18: #{inception_stem_forward.67} parent=15 // pred_check_branch
          %143 = sbr.rel (%p141) target = $region20
        $region19: #{inception_stem_forward.67} parent=15 // pred_region
          %s144 = sadd.s32 %s16, %s18
          %p145 = scmp.lt.s32.totalorder %s15, 1
          %s146 = scalar_select %p145, %s15, 1
          %p147 = scmp.lt.s32.totalorder %s144, 15
          %s148 = scalar_select %p147, %s144, 15
          %s149 = smul.addr %s148, 4
          %s150 = smul.addr %s146, 64
          %s151 = sadd.s32 %s149, %s150
          %s152 = smul.addr %s151, 4
          %s153 = scalar_lea.vmem %s0, %s152
          %s154 = sadd.s32 %s16, %s18
        $region20: #{inception_stem_forward.67} parent=15 // pred_fallthru
          _
        // Predicated region
        $region21: #{inception_stem_forward.67} parent=15 // pred_check
          %p155 = pneg %p86
        $region22: #{inception_stem_forward.67} parent=15 // pred_check_branch
          %157 = sbr.rel (%p155) target = $region24
        $region23: #{inception_stem_forward.67} parent=15 // pred_region
          %s158 = sand.u32 %s76, 1
          %s159 = sand.u32 %s76, 1
          %s160 = smul.addr %s159, 384
          %s161 = scalar_lea.vmem [#allocation3], %s160
          %s162 = smul.addr %s18, 192
          %s163 = sadd.s32 %s17, %s162
          %s164 = smul.addr %s163, 4
          %s165 = scalar_lea.vmem %s1, %s164
          // Predicated region
          $region25: #{inception_stem_forward.67} parent=23 // pred_check
            _
          $region26: #{inception_stem_forward.67} parent=23 // pred_check_branch
            %167 = sbr.rel (0) target = $region28
          $region27: #{inception_stem_forward.67} parent=23 // pred_region
            // Predicated region
            $region29: #{inception_stem_forward.67} parent=27 // pred_check
              _
            $region30: #{inception_stem_forward.67} parent=27 // pred_check_branch
              %169 = sbr.rel target = $region32
            $region31: #{inception_stem_forward.67} parent=27 // pred_region
              // Predicated region
              $region44: #{inception_stem_forward.67} parent=31 // pred_check
                _
              $region45: #{inception_stem_forward.67} parent=31 // pred_check_branch
                %375 = sbr.rel (0) target = $region47
              $region46: #{inception_stem_forward.67} parent=31 // pred_region
                loop: start=0, step=1, limit=1
                $region48: #{inception_stem_forward.67} parent=46 // loop_pre_header
                  _
                $region49: #{inception_stem_forward.67} parent=46 // loop_header
                  %s377 = sphi 0, %s381
                  %p378 = scmp.ge.s32.totalorder %s377, 1
                  %s382 = sphi %s165, %s165
                  %s383 = sphi %s161, %s161
                $region50: #{inception_stem_forward.67} parent=46 // loop_header_branch
                  %380 = sbr.rel (%p378) target = $region54
                $region51: #{inception_stem_forward.67} parent=46 // loop_body
                  _
                $region52: #{inception_stem_forward.67} parent=46 // loop_footer
                  %s381 = sadd.s32 1, %s377
                $region53: #{inception_stem_forward.67} parent=46 // loop_footer_branch
                  %376 = sbr.rel target = $region49
                $region54: #{inception_stem_forward.67} parent=46 // loop_exit
                  _
                %s385 = ssub.s32 16, 1
                loop: start=0, step=1, limit=1
                $region55: #{inception_stem_forward.67} parent=46 // loop_pre_header
                  _
                $region56: #{inception_stem_forward.67} parent=46 // loop_header
                  %s387 = sphi 0, %s391
                  %p388 = scmp.ge.s32.totalorder %s387, 1
                  %s392 = sphi %s165, %s165
                  %s393 = sphi %s161, %s161
                $region57: #{inception_stem_forward.67} parent=46 // loop_header_branch
                  %390 = sbr.rel (%p388) target = $region61
                $region58: #{inception_stem_forward.67} parent=46 // loop_body
                  %v394 = vld [vmem:[%s392] sm:%s385]
                  %395 = vst [vmem:[%s393] sm:%s385] %v394
                  %v396 = vld [vmem:[%s392 + $0x8] sm:%s385]
                  %397 = vst [vmem:[%s393 + $0x4] sm:%s385] %v396
                  %v398 = vld [vmem:[%s392 + $0x10] sm:%s385]
                  %399 = vst [vmem:[%s393 + $0x8] sm:%s385] %v398
                  %v400 = vld [vmem:[%s392 + $0x18] sm:%s385]
                  %401 = vst [vmem:[%s393 + $0xc] sm:%s385] %v400
                  %v402 = vld [vmem:[%s392 + $0x20] sm:%s385]
                  %403 = vst [vmem:[%s393 + $0x10] sm:%s385] %v402
                  %v404 = vld [vmem:[%s392 + $0x28] sm:%s385]
                  %405 = vst [vmem:[%s393 + $0x14] sm:%s385] %v404
                  %v406 = vld [vmem:[%s392 + $0x30] sm:%s385]
                  %407 = vst [vmem:[%s393 + $0x18] sm:%s385] %v406
                  %v408 = vld [vmem:[%s392 + $0x38] sm:%s385]
                  %409 = vst [vmem:[%s393 + $0x1c] sm:%s385] %v408
                  %v410 = vld [vmem:[%s392 + $0x40] sm:%s385]
                  %411 = vst [vmem:[%s393 + $0x20] sm:%s385] %v410
                  %v412 = vld [vmem:[%s392 + $0x48] sm:%s385]
                  %413 = vst [vmem:[%s393 + $0x24] sm:%s385] %v412
                  %v414 = vld [vmem:[%s392 + $0x50] sm:%s385]
                  %415 = vst [vmem:[%s393 + $0x28] sm:%s385] %v414
                  %v416 = vld [vmem:[%s392 + $0x58] sm:%s385]
                  %417 = vst [vmem:[%s393 + $0x2c] sm:%s385] %v416
                  %v418 = vld [vmem:[%s392 + $0x60] sm:%s385]
                  %419 = vst [vmem:[%s393 + $0x30] sm:%s385] %v418
                  %v420 = vld [vmem:[%s392 + $0x68] sm:%s385]
                  %421 = vst [vmem:[%s393 + $0x34] sm:%s385] %v420
                  %v422 = vld [vmem:[%s392 + $0x70] sm:%s385]
                  %423 = vst [vmem:[%s393 + $0x38] sm:%s385] %v422
                  %v424 = vld [vmem:[%s392 + $0x78] sm:%s385]
                  %425 = vst [vmem:[%s393 + $0x3c] sm:%s385] %v424
                  %v426 = vld [vmem:[%s392 + $0x80] sm:%s385]
                  %427 = vst [vmem:[%s393 + $0x40] sm:%s385] %v426
                  %v428 = vld [vmem:[%s392 + $0x88] sm:%s385]
                  %429 = vst [vmem:[%s393 + $0x44] sm:%s385] %v428
                  %v430 = vld [vmem:[%s392 + $0x90] sm:%s385]
                  %431 = vst [vmem:[%s393 + $0x48] sm:%s385] %v430
                  %v432 = vld [vmem:[%s392 + $0x98] sm:%s385]
                  %433 = vst [vmem:[%s393 + $0x4c] sm:%s385] %v432
                  %v434 = vld [vmem:[%s392 + $0xa0] sm:%s385]
                  %435 = vst [vmem:[%s393 + $0x50] sm:%s385] %v434
                  %v436 = vld [vmem:[%s392 + $0xa8] sm:%s385]
                  %437 = vst [vmem:[%s393 + $0x54] sm:%s385] %v436
                  %v438 = vld [vmem:[%s392 + $0xb0] sm:%s385]
                  %439 = vst [vmem:[%s393 + $0x58] sm:%s385] %v438
                  %v440 = vld [vmem:[%s392 + $0xb8] sm:%s385]
                  %441 = vst [vmem:[%s393 + $0x5c] sm:%s385] %v440
                  %v442 = vld [vmem:[%s392 + $0xc0] sm:%s385]
                  %443 = vst [vmem:[%s393 + $0x60] sm:%s385] %v442
                  %v444 = vld [vmem:[%s392 + $0xc8] sm:%s385]
                  %445 = vst [vmem:[%s393 + $0x64] sm:%s385] %v444
                  %v446 = vld [vmem:[%s392 + $0xd0] sm:%s385]
                  %447 = vst [vmem:[%s393 + $0x68] sm:%s385] %v446
                  %v448 = vld [vmem:[%s392 + $0xd8] sm:%s385]
                  %449 = vst [vmem:[%s393 + $0x6c] sm:%s385] %v448
                  %v450 = vld [vmem:[%s392 + $0xe0] sm:%s385]
                  %451 = vst [vmem:[%s393 + $0x70] sm:%s385] %v450
                  %v452 = vld [vmem:[%s392 + $0xe8] sm:%s385]
                  %453 = vst [vmem:[%s393 + $0x74] sm:%s385] %v452
                  %v454 = vld [vmem:[%s392 + $0xf0] sm:%s385]
                  %455 = vst [vmem:[%s393 + $0x78] sm:%s385] %v454
                  %v456 = vld [vmem:[%s392 + $0xf8] sm:%s385]
                  %457 = vst [vmem:[%s393 + $0x7c] sm:%s385] %v456
                  %v458 = vld [vmem:[%s392 + $0x100] sm:%s385]
                  %459 = vst [vmem:[%s393 + $0x80] sm:%s385] %v458
                  %v460 = vld [vmem:[%s392 + $0x108] sm:%s385]
                  %461 = vst [vmem:[%s393 + $0x84] sm:%s385] %v460
                  %v462 = vld [vmem:[%s392 + $0x110] sm:%s385]
                  %463 = vst [vmem:[%s393 + $0x88] sm:%s385] %v462
                  %v464 = vld [vmem:[%s392 + $0x118] sm:%s385]
                  %465 = vst [vmem:[%s393 + $0x8c] sm:%s385] %v464
                  %v466 = vld [vmem:[%s392 + $0x120] sm:%s385]
                  %467 = vst [vmem:[%s393 + $0x90] sm:%s385] %v466
                  %v468 = vld [vmem:[%s392 + $0x128] sm:%s385]
                  %469 = vst [vmem:[%s393 + $0x94] sm:%s385] %v468
                  %v470 = vld [vmem:[%s392 + $0x130] sm:%s385]
                  %471 = vst [vmem:[%s393 + $0x98] sm:%s385] %v470
                  %v472 = vld [vmem:[%s392 + $0x138] sm:%s385]
                  %473 = vst [vmem:[%s393 + $0x9c] sm:%s385] %v472
                  %v474 = vld [vmem:[%s392 + $0x140] sm:%s385]
                  %475 = vst [vmem:[%s393 + $0xa0] sm:%s385] %v474
                  %v476 = vld [vmem:[%s392 + $0x148] sm:%s385]
                  %477 = vst [vmem:[%s393 + $0xa4] sm:%s385] %v476
                  %v478 = vld [vmem:[%s392 + $0x150] sm:%s385]
                  %479 = vst [vmem:[%s393 + $0xa8] sm:%s385] %v478
                  %v480 = vld [vmem:[%s392 + $0x158] sm:%s385]
                  %481 = vst [vmem:[%s393 + $0xac] sm:%s385] %v480
                  %v482 = vld [vmem:[%s392 + $0x160] sm:%s385]
                  %483 = vst [vmem:[%s393 + $0xb0] sm:%s385] %v482
                  %v484 = vld [vmem:[%s392 + $0x168] sm:%s385]
                  %485 = vst [vmem:[%s393 + $0xb4] sm:%s385] %v484
                  %v486 = vld [vmem:[%s392 + $0x170] sm:%s385]
                  %487 = vst [vmem:[%s393 + $0xb8] sm:%s385] %v486
                  %v488 = vld [vmem:[%s392 + $0x178] sm:%s385]
                  %489 = vst [vmem:[%s393 + $0xbc] sm:%s385] %v488
                  %v490 = vld [vmem:[%s392 + $0x180] sm:%s385]
                  %491 = vst [vmem:[%s393 + $0xc0] sm:%s385] %v490
                  %v492 = vld [vmem:[%s392 + $0x188] sm:%s385]
                  %493 = vst [vmem:[%s393 + $0xc4] sm:%s385] %v492
                  %v494 = vld [vmem:[%s392 + $0x190] sm:%s385]
                  %495 = vst [vmem:[%s393 + $0xc8] sm:%s385] %v494
                  %v496 = vld [vmem:[%s392 + $0x198] sm:%s385]
                  %497 = vst [vmem:[%s393 + $0xcc] sm:%s385] %v496
                  %v498 = vld [vmem:[%s392 + $0x1a0] sm:%s385]
                  %499 = vst [vmem:[%s393 + $0xd0] sm:%s385] %v498
                  %v500 = vld [vmem:[%s392 + $0x1a8] sm:%s385]
                  %501 = vst [vmem:[%s393 + $0xd4] sm:%s385] %v500
                  %v502 = vld [vmem:[%s392 + $0x1b0] sm:%s385]
                  %503 = vst [vmem:[%s393 + $0xd8] sm:%s385] %v502
                  %v504 = vld [vmem:[%s392 + $0x1b8] sm:%s385]
                  %505 = vst [vmem:[%s393 + $0xdc] sm:%s385] %v504
                  %v506 = vld [vmem:[%s392 + $0x1c0] sm:%s385]
                  %507 = vst [vmem:[%s393 + $0xe0] sm:%s385] %v506
                  %v508 = vld [vmem:[%s392 + $0x1c8] sm:%s385]
                  %509 = vst [vmem:[%s393 + $0xe4] sm:%s385] %v508
                  %v510 = vld [vmem:[%s392 + $0x1d0] sm:%s385]
                  %511 = vst [vmem:[%s393 + $0xe8] sm:%s385] %v510
                  %v512 = vld [vmem:[%s392 + $0x1d8] sm:%s385]
                  %513 = vst [vmem:[%s393 + $0xec] sm:%s385] %v512
                  %v514 = vld [vmem:[%s392 + $0x1e0] sm:%s385]
                  %515 = vst [vmem:[%s393 + $0xf0] sm:%s385] %v514
                  %v516 = vld [vmem:[%s392 + $0x1e8] sm:%s385]
                  %517 = vst [vmem:[%s393 + $0xf4] sm:%s385] %v516
                  %v518 = vld [vmem:[%s392 + $0x1f0] sm:%s385]
                  %519 = vst [vmem:[%s393 + $0xf8] sm:%s385] %v518
                  %v520 = vld [vmem:[%s392 + $0x1f8] sm:%s385]
                  %521 = vst [vmem:[%s393 + $0xfc] sm:%s385] %v520
                  %v522 = vld [vmem:[%s392 + $0x200] sm:%s385]
                  %523 = vst [vmem:[%s393 + $0x100] sm:%s385] %v522
                  %v524 = vld [vmem:[%s392 + $0x208] sm:%s385]
                  %525 = vst [vmem:[%s393 + $0x104] sm:%s385] %v524
                  %v526 = vld [vmem:[%s392 + $0x210] sm:%s385]
                  %527 = vst [vmem:[%s393 + $0x108] sm:%s385] %v526
                  %v528 = vld [vmem:[%s392 + $0x218] sm:%s385]
                  %529 = vst [vmem:[%s393 + $0x10c] sm:%s385] %v528
                  %v530 = vld [vmem:[%s392 + $0x220] sm:%s385]
                  %531 = vst [vmem:[%s393 + $0x110] sm:%s385] %v530
                  %v532 = vld [vmem:[%s392 + $0x228] sm:%s385]
                  %533 = vst [vmem:[%s393 + $0x114] sm:%s385] %v532
                  %v534 = vld [vmem:[%s392 + $0x230] sm:%s385]
                  %535 = vst [vmem:[%s393 + $0x118] sm:%s385] %v534
                  %v536 = vld [vmem:[%s392 + $0x238] sm:%s385]
                  %537 = vst [vmem:[%s393 + $0x11c] sm:%s385] %v536
                  %v538 = vld [vmem:[%s392 + $0x240] sm:%s385]
                  %539 = vst [vmem:[%s393 + $0x120] sm:%s385] %v538
                  %v540 = vld [vmem:[%s392 + $0x248] sm:%s385]
                  %541 = vst [vmem:[%s393 + $0x124] sm:%s385] %v540
                  %v542 = vld [vmem:[%s392 + $0x250] sm:%s385]
                  %543 = vst [vmem:[%s393 + $0x128] sm:%s385] %v542
                  %v544 = vld [vmem:[%s392 + $0x258] sm:%s385]
                  %545 = vst [vmem:[%s393 + $0x12c] sm:%s385] %v544
                  %v546 = vld [vmem:[%s392 + $0x260] sm:%s385]
                  %547 = vst [vmem:[%s393 + $0x130] sm:%s385] %v546
                  %v548 = vld [vmem:[%s392 + $0x268] sm:%s385]
                  %549 = vst [vmem:[%s393 + $0x134] sm:%s385] %v548
                  %v550 = vld [vmem:[%s392 + $0x270] sm:%s385]
                  %551 = vst [vmem:[%s393 + $0x138] sm:%s385] %v550
                  %v552 = vld [vmem:[%s392 + $0x278] sm:%s385]
                  %553 = vst [vmem:[%s393 + $0x13c] sm:%s385] %v552
                  %v554 = vld [vmem:[%s392 + $0x280] sm:%s385]
                  %555 = vst [vmem:[%s393 + $0x140] sm:%s385] %v554
                  %v556 = vld [vmem:[%s392 + $0x288] sm:%s385]
                  %557 = vst [vmem:[%s393 + $0x144] sm:%s385] %v556
                  %v558 = vld [vmem:[%s392 + $0x290] sm:%s385]
                  %559 = vst [vmem:[%s393 + $0x148] sm:%s385] %v558
                  %v560 = vld [vmem:[%s392 + $0x298] sm:%s385]
                  %561 = vst [vmem:[%s393 + $0x14c] sm:%s385] %v560
                  %v562 = vld [vmem:[%s392 + $0x2a0] sm:%s385]
                  %563 = vst [vmem:[%s393 + $0x150] sm:%s385] %v562
                  %v564 = vld [vmem:[%s392 + $0x2a8] sm:%s385]
                  %565 = vst [vmem:[%s393 + $0x154] sm:%s385] %v564
                  %v566 = vld [vmem:[%s392 + $0x2b0] sm:%s385]
                  %567 = vst [vmem:[%s393 + $0x158] sm:%s385] %v566
                  %v568 = vld [vmem:[%s392 + $0x2b8] sm:%s385]
                  %569 = vst [vmem:[%s393 + $0x15c] sm:%s385] %v568
                  %v570 = vld [vmem:[%s392 + $0x2c0] sm:%s385]
                  %571 = vst [vmem:[%s393 + $0x160] sm:%s385] %v570
                  %v572 = vld [vmem:[%s392 + $0x2c8] sm:%s385]
                  %573 = vst [vmem:[%s393 + $0x164] sm:%s385] %v572
                  %v574 = vld [vmem:[%s392 + $0x2d0] sm:%s385]
                  %575 = vst [vmem:[%s393 + $0x168] sm:%s385] %v574
                  %v576 = vld [vmem:[%s392 + $0x2d8] sm:%s385]
                  %577 = vst [vmem:[%s393 + $0x16c] sm:%s385] %v576
                  %v578 = vld [vmem:[%s392 + $0x2e0] sm:%s385]
                  %579 = vst [vmem:[%s393 + $0x170] sm:%s385] %v578
                  %v580 = vld [vmem:[%s392 + $0x2e8] sm:%s385]
                  %581 = vst [vmem:[%s393 + $0x174] sm:%s385] %v580
                  %v582 = vld [vmem:[%s392 + $0x2f0] sm:%s385]
                  %583 = vst [vmem:[%s393 + $0x178] sm:%s385] %v582
                  %v584 = vld [vmem:[%s392 + $0x2f8] sm:%s385]
                  %585 = vst [vmem:[%s393 + $0x17c] sm:%s385] %v584
                $region59: #{inception_stem_forward.67} parent=46 // loop_footer
                  %s391 = sadd.s32 1, %s387
                $region60: #{inception_stem_forward.67} parent=46 // loop_footer_branch
                  %386 = sbr.rel target = $region56
                $region61: #{inception_stem_forward.67} parent=46 // loop_exit
                  _
              $region47: #{inception_stem_forward.67} parent=31 // pred_fallthru
                _
            $region32: #{inception_stem_forward.67} parent=27 // pred_fallthru
              _
            // Predicated region
            $region33: #{inception_stem_forward.67} parent=27 // pred_check
              _
            $region34: #{inception_stem_forward.67} parent=27 // pred_check_branch
              %171 = sbr.rel (0) target = $region36
            $region35: #{inception_stem_forward.67} parent=27 // pred_region
              %s173 = ssub.s32 16, 1
              loop: start=0, step=1, limit=1
              $region37: #{inception_stem_forward.67} parent=35 // loop_pre_header
                _
              $region38: #{inception_stem_forward.67} parent=35 // loop_header
                %s175 = sphi 0, %s179
                %p176 = scmp.ge.s32.totalorder %s175, 1
                %s180 = sphi %s165, %s165
                %s181 = sphi %s161, %s161
              $region39: #{inception_stem_forward.67} parent=35 // loop_header_branch
                %178 = sbr.rel (%p176) target = $region43
              $region40: #{inception_stem_forward.67} parent=35 // loop_body
                %v182 = vld [vmem:[%s180] sm:%s173]
                %183 = vst [vmem:[%s181] sm:%s173] %v182
                %v184 = vld [vmem:[%s180 + $0x8] sm:%s173]
                %185 = vst [vmem:[%s181 + $0x4] sm:%s173] %v184
                %v186 = vld [vmem:[%s180 + $0x10] sm:%s173]
                %187 = vst [vmem:[%s181 + $0x8] sm:%s173] %v186
                %v188 = vld [vmem:[%s180 + $0x18] sm:%s173]
                %189 = vst [vmem:[%s181 + $0xc] sm:%s173] %v188
                %v190 = vld [vmem:[%s180 + $0x20] sm:%s173]
                %191 = vst [vmem:[%s181 + $0x10] sm:%s173] %v190
                %v192 = vld [vmem:[%s180 + $0x28] sm:%s173]
                %193 = vst [vmem:[%s181 + $0x14] sm:%s173] %v192
                %v194 = vld [vmem:[%s180 + $0x30] sm:%s173]
                %195 = vst [vmem:[%s181 + $0x18] sm:%s173] %v194
                %v196 = vld [vmem:[%s180 + $0x38] sm:%s173]
                %197 = vst [vmem:[%s181 + $0x1c] sm:%s173] %v196
                %v198 = vld [vmem:[%s180 + $0x40] sm:%s173]
                %199 = vst [vmem:[%s181 + $0x20] sm:%s173] %v198
                %v200 = vld [vmem:[%s180 + $0x48] sm:%s173]
                %201 = vst [vmem:[%s181 + $0x24] sm:%s173] %v200
                %v202 = vld [vmem:[%s180 + $0x50] sm:%s173]
                %203 = vst [vmem:[%s181 + $0x28] sm:%s173] %v202
                %v204 = vld [vmem:[%s180 + $0x58] sm:%s173]
                %205 = vst [vmem:[%s181 + $0x2c] sm:%s173] %v204
                %v206 = vld [vmem:[%s180 + $0x60] sm:%s173]
                %207 = vst [vmem:[%s181 + $0x30] sm:%s173] %v206
                %v208 = vld [vmem:[%s180 + $0x68] sm:%s173]
                %209 = vst [vmem:[%s181 + $0x34] sm:%s173] %v208
                %v210 = vld [vmem:[%s180 + $0x70] sm:%s173]
                %211 = vst [vmem:[%s181 + $0x38] sm:%s173] %v210
                %v212 = vld [vmem:[%s180 + $0x78] sm:%s173]
                %213 = vst [vmem:[%s181 + $0x3c] sm:%s173] %v212
                %v214 = vld [vmem:[%s180 + $0x80] sm:%s173]
                %215 = vst [vmem:[%s181 + $0x40] sm:%s173] %v214
                %v216 = vld [vmem:[%s180 + $0x88] sm:%s173]
                %217 = vst [vmem:[%s181 + $0x44] sm:%s173] %v216
                %v218 = vld [vmem:[%s180 + $0x90] sm:%s173]
                %219 = vst [vmem:[%s181 + $0x48] sm:%s173] %v218
                %v220 = vld [vmem:[%s180 + $0x98] sm:%s173]
                %221 = vst [vmem:[%s181 + $0x4c] sm:%s173] %v220
                %v222 = vld [vmem:[%s180 + $0xa0] sm:%s173]
                %223 = vst [vmem:[%s181 + $0x50] sm:%s173] %v222
                %v224 = vld [vmem:[%s180 + $0xa8] sm:%s173]
                %225 = vst [vmem:[%s181 + $0x54] sm:%s173] %v224
                %v226 = vld [vmem:[%s180 + $0xb0] sm:%s173]
                %227 = vst [vmem:[%s181 + $0x58] sm:%s173] %v226
                %v228 = vld [vmem:[%s180 + $0xb8] sm:%s173]
                %229 = vst [vmem:[%s181 + $0x5c] sm:%s173] %v228
                %v230 = vld [vmem:[%s180 + $0xc0] sm:%s173]
                %231 = vst [vmem:[%s181 + $0x60] sm:%s173] %v230
                %v232 = vld [vmem:[%s180 + $0xc8] sm:%s173]
                %233 = vst [vmem:[%s181 + $0x64] sm:%s173] %v232
                %v234 = vld [vmem:[%s180 + $0xd0] sm:%s173]
                %235 = vst [vmem:[%s181 + $0x68] sm:%s173] %v234
                %v236 = vld [vmem:[%s180 + $0xd8] sm:%s173]
                %237 = vst [vmem:[%s181 + $0x6c] sm:%s173] %v236
                %v238 = vld [vmem:[%s180 + $0xe0] sm:%s173]
                %239 = vst [vmem:[%s181 + $0x70] sm:%s173] %v238
                %v240 = vld [vmem:[%s180 + $0xe8] sm:%s173]
                %241 = vst [vmem:[%s181 + $0x74] sm:%s173] %v240
                %v242 = vld [vmem:[%s180 + $0xf0] sm:%s173]
                %243 = vst [vmem:[%s181 + $0x78] sm:%s173] %v242
                %v244 = vld [vmem:[%s180 + $0xf8] sm:%s173]
                %245 = vst [vmem:[%s181 + $0x7c] sm:%s173] %v244
                %v246 = vld [vmem:[%s180 + $0x100] sm:%s173]
                %247 = vst [vmem:[%s181 + $0x80] sm:%s173] %v246
                %v248 = vld [vmem:[%s180 + $0x108] sm:%s173]
                %249 = vst [vmem:[%s181 + $0x84] sm:%s173] %v248
                %v250 = vld [vmem:[%s180 + $0x110] sm:%s173]
                %251 = vst [vmem:[%s181 + $0x88] sm:%s173] %v250
                %v252 = vld [vmem:[%s180 + $0x118] sm:%s173]
                %253 = vst [vmem:[%s181 + $0x8c] sm:%s173] %v252
                %v254 = vld [vmem:[%s180 + $0x120] sm:%s173]
                %255 = vst [vmem:[%s181 + $0x90] sm:%s173] %v254
                %v256 = vld [vmem:[%s180 + $0x128] sm:%s173]
                %257 = vst [vmem:[%s181 + $0x94] sm:%s173] %v256
                %v258 = vld [vmem:[%s180 + $0x130] sm:%s173]
                %259 = vst [vmem:[%s181 + $0x98] sm:%s173] %v258
                %v260 = vld [vmem:[%s180 + $0x138] sm:%s173]
                %261 = vst [vmem:[%s181 + $0x9c] sm:%s173] %v260
                %v262 = vld [vmem:[%s180 + $0x140] sm:%s173]
                %263 = vst [vmem:[%s181 + $0xa0] sm:%s173] %v262
                %v264 = vld [vmem:[%s180 + $0x148] sm:%s173]
                %265 = vst [vmem:[%s181 + $0xa4] sm:%s173] %v264
                %v266 = vld [vmem:[%s180 + $0x150] sm:%s173]
                %267 = vst [vmem:[%s181 + $0xa8] sm:%s173] %v266
                %v268 = vld [vmem:[%s180 + $0x158] sm:%s173]
                %269 = vst [vmem:[%s181 + $0xac] sm:%s173] %v268
                %v270 = vld [vmem:[%s180 + $0x160] sm:%s173]
                %271 = vst [vmem:[%s181 + $0xb0] sm:%s173] %v270
                %v272 = vld [vmem:[%s180 + $0x168] sm:%s173]
                %273 = vst [vmem:[%s181 + $0xb4] sm:%s173] %v272
                %v274 = vld [vmem:[%s180 + $0x170] sm:%s173]
                %275 = vst [vmem:[%s181 + $0xb8] sm:%s173] %v274
                %v276 = vld [vmem:[%s180 + $0x178] sm:%s173]
                %277 = vst [vmem:[%s181 + $0xbc] sm:%s173] %v276
                %v278 = vld [vmem:[%s180 + $0x180] sm:%s173]
                %279 = vst [vmem:[%s181 + $0xc0] sm:%s173] %v278
                %v280 = vld [vmem:[%s180 + $0x188] sm:%s173]
                %281 = vst [vmem:[%s181 + $0xc4] sm:%s173] %v280
                %v282 = vld [vmem:[%s180 + $0x190] sm:%s173]
                %283 = vst [vmem:[%s181 + $0xc8] sm:%s173] %v282
                %v284 = vld [vmem:[%s180 + $0x198] sm:%s173]
                %285 = vst [vmem:[%s181 + $0xcc] sm:%s173] %v284
                %v286 = vld [vmem:[%s180 + $0x1a0] sm:%s173]
                %287 = vst [vmem:[%s181 + $0xd0] sm:%s173] %v286
                %v288 = vld [vmem:[%s180 + $0x1a8] sm:%s173]
                %289 = vst [vmem:[%s181 + $0xd4] sm:%s173] %v288
                %v290 = vld [vmem:[%s180 + $0x1b0] sm:%s173]
                %291 = vst [vmem:[%s181 + $0xd8] sm:%s173] %v290
                %v292 = vld [vmem:[%s180 + $0x1b8] sm:%s173]
                %293 = vst [vmem:[%s181 + $0xdc] sm:%s173] %v292
                %v294 = vld [vmem:[%s180 + $0x1c0] sm:%s173]
                %295 = vst [vmem:[%s181 + $0xe0] sm:%s173] %v294
                %v296 = vld [vmem:[%s180 + $0x1c8] sm:%s173]
                %297 = vst [vmem:[%s181 + $0xe4] sm:%s173] %v296
                %v298 = vld [vmem:[%s180 + $0x1d0] sm:%s173]
                %299 = vst [vmem:[%s181 + $0xe8] sm:%s173] %v298
                %v300 = vld [vmem:[%s180 + $0x1d8] sm:%s173]
                %301 = vst [vmem:[%s181 + $0xec] sm:%s173] %v300
                %v302 = vld [vmem:[%s180 + $0x1e0] sm:%s173]
                %303 = vst [vmem:[%s181 + $0xf0] sm:%s173] %v302
                %v304 = vld [vmem:[%s180 + $0x1e8] sm:%s173]
                %305 = vst [vmem:[%s181 + $0xf4] sm:%s173] %v304
                %v306 = vld [vmem:[%s180 + $0x1f0] sm:%s173]
                %307 = vst [vmem:[%s181 + $0xf8] sm:%s173] %v306
                %v308 = vld [vmem:[%s180 + $0x1f8] sm:%s173]
                %309 = vst [vmem:[%s181 + $0xfc] sm:%s173] %v308
                %v310 = vld [vmem:[%s180 + $0x200] sm:%s173]
                %311 = vst [vmem:[%s181 + $0x100] sm:%s173] %v310
                %v312 = vld [vmem:[%s180 + $0x208] sm:%s173]
                %313 = vst [vmem:[%s181 + $0x104] sm:%s173] %v312
                %v314 = vld [vmem:[%s180 + $0x210] sm:%s173]
                %315 = vst [vmem:[%s181 + $0x108] sm:%s173] %v314
                %v316 = vld [vmem:[%s180 + $0x218] sm:%s173]
                %317 = vst [vmem:[%s181 + $0x10c] sm:%s173] %v316
                %v318 = vld [vmem:[%s180 + $0x220] sm:%s173]
                %319 = vst [vmem:[%s181 + $0x110] sm:%s173] %v318
                %v320 = vld [vmem:[%s180 + $0x228] sm:%s173]
                %321 = vst [vmem:[%s181 + $0x114] sm:%s173] %v320
                %v322 = vld [vmem:[%s180 + $0x230] sm:%s173]
                %323 = vst [vmem:[%s181 + $0x118] sm:%s173] %v322
                %v324 = vld [vmem:[%s180 + $0x238] sm:%s173]
                %325 = vst [vmem:[%s181 + $0x11c] sm:%s173] %v324
                %v326 = vld [vmem:[%s180 + $0x240] sm:%s173]
                %327 = vst [vmem:[%s181 + $0x120] sm:%s173] %v326
                %v328 = vld [vmem:[%s180 + $0x248] sm:%s173]
                %329 = vst [vmem:[%s181 + $0x124] sm:%s173] %v328
                %v330 = vld [vmem:[%s180 + $0x250] sm:%s173]
                %331 = vst [vmem:[%s181 + $0x128] sm:%s173] %v330
                %v332 = vld [vmem:[%s180 + $0x258] sm:%s173]
                %333 = vst [vmem:[%s181 + $0x12c] sm:%s173] %v332
                %v334 = vld [vmem:[%s180 + $0x260] sm:%s173]
                %335 = vst [vmem:[%s181 + $0x130] sm:%s173] %v334
                %v336 = vld [vmem:[%s180 + $0x268] sm:%s173]
                %337 = vst [vmem:[%s181 + $0x134] sm:%s173] %v336
                %v338 = vld [vmem:[%s180 + $0x270] sm:%s173]
                %339 = vst [vmem:[%s181 + $0x138] sm:%s173] %v338
                %v340 = vld [vmem:[%s180 + $0x278] sm:%s173]
                %341 = vst [vmem:[%s181 + $0x13c] sm:%s173] %v340
                %v342 = vld [vmem:[%s180 + $0x280] sm:%s173]
                %343 = vst [vmem:[%s181 + $0x140] sm:%s173] %v342
                %v344 = vld [vmem:[%s180 + $0x288] sm:%s173]
                %345 = vst [vmem:[%s181 + $0x144] sm:%s173] %v344
                %v346 = vld [vmem:[%s180 + $0x290] sm:%s173]
                %347 = vst [vmem:[%s181 + $0x148] sm:%s173] %v346
                %v348 = vld [vmem:[%s180 + $0x298] sm:%s173]
                %349 = vst [vmem:[%s181 + $0x14c] sm:%s173] %v348
                %v350 = vld [vmem:[%s180 + $0x2a0] sm:%s173]
                %351 = vst [vmem:[%s181 + $0x150] sm:%s173] %v350
                %v352 = vld [vmem:[%s180 + $0x2a8] sm:%s173]
                %353 = vst [vmem:[%s181 + $0x154] sm:%s173] %v352
                %v354 = vld [vmem:[%s180 + $0x2b0] sm:%s173]
                %355 = vst [vmem:[%s181 + $0x158] sm:%s173] %v354
                %v356 = vld [vmem:[%s180 + $0x2b8] sm:%s173]
                %357 = vst [vmem:[%s181 + $0x15c] sm:%s173] %v356
                %v358 = vld [vmem:[%s180 + $0x2c0] sm:%s173]
                %359 = vst [vmem:[%s181 + $0x160] sm:%s173] %v358
                %v360 = vld [vmem:[%s180 + $0x2c8] sm:%s173]
                %361 = vst [vmem:[%s181 + $0x164] sm:%s173] %v360
                %v362 = vld [vmem:[%s180 + $0x2d0] sm:%s173]
                %363 = vst [vmem:[%s181 + $0x168] sm:%s173] %v362
                %v364 = vld [vmem:[%s180 + $0x2d8] sm:%s173]
                %365 = vst [vmem:[%s181 + $0x16c] sm:%s173] %v364
                %v366 = vld [vmem:[%s180 + $0x2e0] sm:%s173]
                %367 = vst [vmem:[%s181 + $0x170] sm:%s173] %v366
                %v368 = vld [vmem:[%s180 + $0x2e8] sm:%s173]
                %369 = vst [vmem:[%s181 + $0x174] sm:%s173] %v368
                %v370 = vld [vmem:[%s180 + $0x2f0] sm:%s173]
                %371 = vst [vmem:[%s181 + $0x178] sm:%s173] %v370
                %v372 = vld [vmem:[%s180 + $0x2f8] sm:%s173]
                %373 = vst [vmem:[%s181 + $0x17c] sm:%s173] %v372
              $region41: #{inception_stem_forward.67} parent=35 // loop_footer
                %s179 = sadd.s32 1, %s175
              $region42: #{inception_stem_forward.67} parent=35 // loop_footer_branch
                %174 = sbr.rel target = $region38
              $region43: #{inception_stem_forward.67} parent=35 // loop_exit
                _
            $region36: #{inception_stem_forward.67} parent=27 // pred_fallthru
              _
          $region28: #{inception_stem_forward.67} parent=23 // pred_fallthru
            _
          %586 = vnop
        $region24: #{inception_stem_forward.67} parent=15 // pred_fallthru
          _
      $region16: #{inception_stem_forward.67} parent=5 // pred_fallthru
        _
      %p587 = scmp.le.s32.totalorder 1, %s8
      %p588 = scmp.lt.s32.totalorder %s8, 169
      %p589 = pnand %p587, %p588
      %p590 = pneg %p589
      // Predicated region
      $region62: #{inception_stem_forward.67} parent=5 // pred_check
        _
      $region63: #{inception_stem_forward.67} parent=5 // pred_check_branch
        %592 = sbr.rel (%p589) target = $region65
      $region64: #{inception_stem_forward.67} parent=5 // pred_region
        %s593 = ssub.s32 %s8, 1
        %s594 = sand.u32 %s79, 1
        %s595 = sand.u32 %s79, 1
        %s596 = smul.addr %s595, 384
        %s597 = scalar_lea.vmem [#allocation3], %s596
        // Predicated region
        $region66: #{inception_stem_forward.67} parent=64 // pred_check
          %p598 = pneg %p92
        $region67: #{inception_stem_forward.67} parent=64 // pred_check_branch
          %600 = sbr.rel (%p598) target = $region69
        $region68: #{inception_stem_forward.67} parent=64 // pred_region
          _
        $region69: #{inception_stem_forward.67} parent=64 // pred_fallthru
          _
        %s601 = sadd.s32 %s20, %s22
        %p602 = scmp.lt.s32.totalorder %s19, 1
        %s603 = scalar_select %p602, %s19, 1
        %p604 = scmp.lt.s32.totalorder %s601, 15
        %s605 = scalar_select %p604, %s601, 15
        %s606 = smul.addr %s605, 4
        %s607 = smul.addr %s603, 64
        %s608 = sadd.s32 %s606, %s607
        %s609 = smul.addr %s608, 4
        %s610 = scalar_lea.vmem %s0, %s609
        %p611 = pneg %p64
        %p612 = pneg %p61
        %s613 = sand.u32 %s79, 1
        %s614 = sand.u32 %s79, 1
        %s615 = smul.addr %s614, 384
        %s616 = scalar_lea.vmem [#allocation3], %s615
        %p617 = pneg %p92
        %p618 = pneg %p89
        %p619 = pneg %p122
        %p620 = pneg %p119
        %s621 = sand.u32 %s109, 1
        %s622 = sand.u32 %s109, 1
        %s623 = smul.addr %s622, 16
        %s624 = scalar_lea.vmem [#allocation4], %s623
        %s625 = sadd.s32 %s20, %s22
        %p626 = scmp.lt.s32.totalorder %s19, 1
        %s627 = scalar_select %p626, %s19, 1
        %p628 = scmp.lt.s32.totalorder %s625, 15
        %s629 = scalar_select %p628, %s625, 15
        %s630 = smul.addr %s629, 4
        %s631 = smul.addr %s627, 64
        %s632 = sadd.s32 %s630, %s631
        %s633 = smul.addr %s632, 4
        %s634 = scalar_lea.vmem %s0, %s633
        %s635 = sadd.s32 %s20, %s22
        %p637 = scmp.eq.s32.totalorder %s22, 0
        // Predicated region
        $region70: #{inception_stem_forward.67} parent=64 // pred_check
          %p638 = pneg %p637
        $region71: #{inception_stem_forward.67} parent=64 // pred_check_branch
          %640 = sbr.rel (%p638) target = $region73
        $region72: #{inception_stem_forward.67} parent=64 // pred_region
          %641 = vst [vmem:[#allocation2] sm:$0xff] 0.0
          %642 = vst [vmem:[#allocation2 + $0x8] sm:$0x3f] 0.0
        $region73: #{inception_stem_forward.67} parent=64 // pred_fallthru
          _
        %v643 = vld [vmem:[%s634] sm:$0xff]
        %v644 = vld [vmem:[%s634 + $0x8] sm:$0xff]
        %v645 = vld [vmem:[#allocation2] sm:$0xff]
        %v646 = vld [vmem:[#allocation2 + $0x8] sm:$0x3f]
        %v647 = vld [vmem:[%s597] sm:$0xf]
        %v648 = vld [vmem:[%s597 + $0x4] sm:$0xf]
        %v649 = vld [vmem:[%s597 + $0x8] sm:$0xf]
        %v650 = vld [vmem:[%s597 + $0xc] sm:$0xf]
        %v651 = vld [vmem:[%s597 + $0x10] sm:$0xf]
        %v652 = vld [vmem:[%s597 + $0x14] sm:$0xf]
        %v653 = vld [vmem:[%s597 + $0x18] sm:$0xf]
        %v654 = vld [vmem:[%s597 + $0x1c] sm:$0xf]
        %v655 = vld [vmem:[%s597 + $0x20] sm:$0xf]
        %v656 = vld [vmem:[%s597 + $0x24] sm:$0xf]
        %v657 = vld [vmem:[%s597 + $0x28] sm:$0xf]
        %v658 = vld [vmem:[%s597 + $0x2c] sm:$0xf]
        %v659 = vld [vmem:[%s597 + $0x30] sm:$0xf]
        %v660 = vld [vmem:[%s597 + $0x34] sm:$0xf]
        %v661 = vld [vmem:[%s597 + $0x38] sm:$0xf]
        %v662 = vld [vmem:[%s597 + $0x3c] sm:$0xf]
        %v663 = vld [vmem:[%s597 + $0x40] sm:$0xf]
        %v664 = vld [vmem:[%s597 + $0x44] sm:$0xf]
        %v665 = vld [vmem:[%s597 + $0x48] sm:$0xf]
        %v666 = vld [vmem:[%s597 + $0x4c] sm:$0xf]
        %v667 = vld [vmem:[%s597 + $0x50] sm:$0xf]
        %v668 = vld [vmem:[%s597 + $0x54] sm:$0xf]
        %v669 = vld [vmem:[%s597 + $0x58] sm:$0xf]
        %v670 = vld [vmem:[%s597 + $0x5c] sm:$0xf]
        %v671 = vld [vmem:[%s597 + $0x60] sm:$0xf]
        %v672 = vld [vmem:[%s597 + $0x64] sm:$0xf]
        %v673 = vld [vmem:[%s597 + $0x68] sm:$0xf]
        %v674 = vld [vmem:[%s597 + $0x6c] sm:$0xf]
        %v675 = vld [vmem:[%s597 + $0x70] sm:$0xf]
        %v676 = vld [vmem:[%s597 + $0x74] sm:$0xf]
        %v677 = vld [vmem:[%s597 + $0x78] sm:$0xf]
        %v678 = vld [vmem:[%s597 + $0x7c] sm:$0xf]
        %v681 = vunpack.c.l.b16 %v643
        %v682 = vunpack.c.h.b16 %v643
        %v683 = vunpack.c.l.b16 %v644
        %v684 = vunpack.c.h.b16 %v644
        %v685 = vpack.c.b16 %v683, %v681
        %v686 = vpack.c.b16 %v684, %v682
        %v721 = vunpack.c.l.b16 %v647
        %v722 = vunpack.c.l.b16 %v648
        %v723 = vunpack.c.l.b16 %v649
        %v724 = vunpack.c.l.b16 %v650
        %v725 = vunpack.c.l.b16 %v651
        %v726 = vunpack.c.l.b16 %v652
        %v727 = vunpack.c.l.b16 %v653
        %v728 = vunpack.c.l.b16 %v654
        %v729 = vunpack.c.l.b16 %v655
        %v730 = vunpack.c.l.b16 %v656
        %v731 = vunpack.c.l.b16 %v657
        %v732 = vunpack.c.l.b16 %v658
        %v733 = vunpack.c.l.b16 %v659
        %v734 = vunpack.c.l.b16 %v660
        %v735 = vunpack.c.l.b16 %v661
        %v736 = vunpack.c.l.b16 %v662
        %v737 = vunpack.c.l.b16 %v663
        %v738 = vunpack.c.l.b16 %v664
        %v739 = vunpack.c.l.b16 %v665
        %v740 = vunpack.c.l.b16 %v666
        %v741 = vunpack.c.l.b16 %v667
        %v742 = vunpack.c.l.b16 %v668
        %v743 = vunpack.c.l.b16 %v669
        %v744 = vunpack.c.l.b16 %v670
        %v745 = vunpack.c.l.b16 %v671
        %v746 = vunpack.c.l.b16 %v672
        %v747 = vunpack.c.l.b16 %v673
        %v748 = vunpack.c.l.b16 %v674
        %v749 = vunpack.c.l.b16 %v675
        %v750 = vunpack.c.l.b16 %v676
        %v751 = vunpack.c.l.b16 %v677
        %v752 = vunpack.c.l.b16 %v678
        %v753 = vpack.c.b16 %v722, %v721
        %v754 = vpack.c.b16 %v724, %v723
        %v755 = vpack.c.b16 %v726, %v725
        %v756 = vpack.c.b16 %v728, %v727
        %v757 = vpack.c.b16 %v730, %v729
        %v758 = vpack.c.b16 %v732, %v731
        %v759 = vpack.c.b16 %v734, %v733
        %v760 = vpack.c.b16 %v736, %v735
        %v761 = vpack.c.b16 %v738, %v737
        %v762 = vpack.c.b16 %v740, %v739
        %v763 = vpack.c.b16 %v742, %v741
        %v764 = vpack.c.b16 %v744, %v743
        %v765 = vpack.c.b16 %v746, %v745
        %v766 = vpack.c.b16 %v748, %v747
        %v767 = vpack.c.b16 %v750, %v749
        %v768 = vpack.c.b16 %v752, %v751
        %785 = vmatprep.subr.bf16.mxu0 0
        %786 = vmatpush1.bf16.msra.mxu0 %v760
        %787 = vmatprep.subr.bf16.mxu0 0
        %788 = vmatpush1.bf16.msra.mxu0 %v759
        %789 = vmatprep.subr.bf16.mxu0 0
        %790 = vmatpush1.bf16.msra.mxu0 %v758
        %791 = vmatprep.subr.bf16.mxu0 0
        %792 = vmatpush1.bf16.msra.mxu0 %v757
        %793 = vmatprep.subr.bf16.mxu0 0
        %794 = vmatpush1.bf16.msra.mxu0 %v756
        %795 = vmatprep.subr.bf16.mxu0 0
        %796 = vmatpush1.bf16.msra.mxu0 %v755
        %797 = vmatprep.subr.bf16.mxu0 0
        %798 = vmatpush1.bf16.msra.mxu0 %v754
        %799 = vmatprep.subr.bf16.mxu0 0
        %800 = vmatpush1.bf16.msra.mxu0 %v753
        %801 = vmatprep.subr.bf16.mxu0 0
        %802 = vmatpush2.bf16.msra.mxu0 %v768
        %803 = vmatprep.subr.bf16.mxu0 0
        %804 = vmatpush2.bf16.msra.mxu0 %v767
        %805 = vmatprep.subr.bf16.mxu0 0
        %806 = vmatpush2.bf16.msra.mxu0 %v766
        %807 = vmatprep.subr.bf16.mxu0 0
        %808 = vmatpush2.bf16.msra.mxu0 %v765
        %809 = vmatprep.subr.bf16.mxu0 0
        %810 = vmatpush2.bf16.msra.mxu0 %v764
        %811 = vmatprep.subr.bf16.mxu0 0
        %812 = vmatpush2.bf16.msra.mxu0 %v763
        %813 = vmatprep.subr.bf16.mxu0 0
        %814 = vmatpush2.bf16.msra.mxu0 %v762
        %815 = vmatprep.subr.bf16.mxu0 0
        %816 = vmatpush2.bf16.msra.mxu0 %v761
        %817 = vmatprep.mubr.bf16.mxu0 %v686
        %818 = vmatmul.mubr.bf16.gmra.mxu0 %v685
        %v819 = vpop.f32.mrf.mxu0
        %v820 = vadd.f32 0.0, %v819
        %v821 = vpop.f32.mrf.mxu0
        %v822 = vpop.f32.mrf.mxu0
        %v823 = vadd.f32 0.0, %v822
        %v824 = vpop.f32.mrf.mxu0
        %825 = vdwg.mxu0
        %v826 = vadd.f32 %v645, %v820
        %v827 = vadd.f32 %v646, %v823
        %s828 = scalar_lea.vmem %s597, 128 [#allocation3]
        %v829 = vld [vmem:[%s828] sm:$0xf]
        %v830 = vld [vmem:[%s828 + $0x4] sm:$0xf]
        %v831 = vld [vmem:[%s828 + $0x8] sm:$0xf]
        %v832 = vld [vmem:[%s828 + $0xc] sm:$0xf]
        %v833 = vld [vmem:[%s828 + $0x10] sm:$0xf]
        %v834 = vld [vmem:[%s828 + $0x14] sm:$0xf]
        %v835 = vld [vmem:[%s828 + $0x18] sm:$0xf]
        %v836 = vld [vmem:[%s828 + $0x1c] sm:$0xf]
        %v837 = vld [vmem:[%s828 + $0x20] sm:$0xf]
        %v838 = vld [vmem:[%s828 + $0x24] sm:$0xf]
        %v839 = vld [vmem:[%s828 + $0x28] sm:$0xf]
        %v840 = vld [vmem:[%s828 + $0x2c] sm:$0xf]
        %v841 = vld [vmem:[%s828 + $0x30] sm:$0xf]
        %v842 = vld [vmem:[%s828 + $0x34] sm:$0xf]
        %v843 = vld [vmem:[%s828 + $0x38] sm:$0xf]
        %v844 = vld [vmem:[%s828 + $0x3c] sm:$0xf]
        %v845 = vld [vmem:[%s828 + $0x40] sm:$0xf]
        %v846 = vld [vmem:[%s828 + $0x44] sm:$0xf]
        %v847 = vld [vmem:[%s828 + $0x48] sm:$0xf]
        %v848 = vld [vmem:[%s828 + $0x4c] sm:$0xf]
        %v849 = vld [vmem:[%s828 + $0x50] sm:$0xf]
        %v850 = vld [vmem:[%s828 + $0x54] sm:$0xf]
        %v851 = vld [vmem:[%s828 + $0x58] sm:$0xf]
        %v852 = vld [vmem:[%s828 + $0x5c] sm:$0xf]
        %v853 = vld [vmem:[%s828 + $0x60] sm:$0xf]
        %v854 = vld [vmem:[%s828 + $0x64] sm:$0xf]
        %v855 = vld [vmem:[%s828 + $0x68] sm:$0xf]
        %v856 = vld [vmem:[%s828 + $0x6c] sm:$0xf]
        %v857 = vld [vmem:[%s828 + $0x70] sm:$0xf]
        %v858 = vld [vmem:[%s828 + $0x74] sm:$0xf]
        %v859 = vld [vmem:[%s828 + $0x78] sm:$0xf]
        %v860 = vld [vmem:[%s828 + $0x7c] sm:$0xf]
        %v862 = vshrl.u32 %v685, 16
        %v864 = vshll.u32 %v685, 16
        %v866 = vrot.slane %v864, 1
        %v867 = vor.u32 %v862, %v866
        %v869 = vshrl.u32 %v686, 16
        %v871 = vshll.u32 %v686, 16
        %v873 = vrot.slane %v871, 1
        %v874 = vor.u32 %v869, %v873
        %v909 = vunpack.c.l.b16 %v829
        %v910 = vunpack.c.l.b16 %v830
        %v911 = vunpack.c.l.b16 %v831
        %v912 = vunpack.c.l.b16 %v832
        %v913 = vunpack.c.l.b16 %v833
        %v914 = vunpack.c.l.b16 %v834
        %v915 = vunpack.c.l.b16 %v835
        %v916 = vunpack.c.l.b16 %v836
        %v917 = vunpack.c.l.b16 %v837
        %v918 = vunpack.c.l.b16 %v838
        %v919 = vunpack.c.l.b16 %v839
        %v920 = vunpack.c.l.b16 %v840
        %v921 = vunpack.c.l.b16 %v841
        %v922 = vunpack.c.l.b16 %v842
        %v923 = vunpack.c.l.b16 %v843
        %v924 = vunpack.c.l.b16 %v844
        %v925 = vunpack.c.l.b16 %v845
        %v926 = vunpack.c.l.b16 %v846
        %v927 = vunpack.c.l.b16 %v847
        %v928 = vunpack.c.l.b16 %v848
        %v929 = vunpack.c.l.b16 %v849
        %v930 = vunpack.c.l.b16 %v850
        %v931 = vunpack.c.l.b16 %v851
        %v932 = vunpack.c.l.b16 %v852
        %v933 = vunpack.c.l.b16 %v853
        %v934 = vunpack.c.l.b16 %v854
        %v935 = vunpack.c.l.b16 %v855
        %v936 = vunpack.c.l.b16 %v856
        %v937 = vunpack.c.l.b16 %v857
        %v938 = vunpack.c.l.b16 %v858
        %v939 = vunpack.c.l.b16 %v859
        %v940 = vunpack.c.l.b16 %v860
        %v941 = vpack.c.b16 %v910, %v909
        %v942 = vpack.c.b16 %v912, %v911
        %v943 = vpack.c.b16 %v914, %v913
        %v944 = vpack.c.b16 %v916, %v915
        %v945 = vpack.c.b16 %v918, %v917
        %v946 = vpack.c.b16 %v920, %v919
        %v947 = vpack.c.b16 %v922, %v921
        %v948 = vpack.c.b16 %v924, %v923
        %v949 = vpack.c.b16 %v926, %v925
        %v950 = vpack.c.b16 %v928, %v927
        %v951 = vpack.c.b16 %v930, %v929
        %v952 = vpack.c.b16 %v932, %v931
        %v953 = vpack.c.b16 %v934, %v933
        %v954 = vpack.c.b16 %v936, %v935
        %v955 = vpack.c.b16 %v938, %v937
        %v956 = vpack.c.b16 %v940, %v939
        %973 = vmatprep.subr.bf16.mxu0 0
        %974 = vmatpush1.bf16.msra.mxu0 %v948
        %975 = vmatprep.subr.bf16.mxu0 0
        %976 = vmatpush1.bf16.msra.mxu0 %v947
        %977 = vmatprep.subr.bf16.mxu0 0
        %978 = vmatpush1.bf16.msra.mxu0 %v946
        %979 = vmatprep.subr.bf16.mxu0 0
        %980 = vmatpush1.bf16.msra.mxu0 %v945
        %981 = vmatprep.subr.bf16.mxu0 0
        %982 = vmatpush1.bf16.msra.mxu0 %v944
        %983 = vmatprep.subr.bf16.mxu0 0
        %984 = vmatpush1.bf16.msra.mxu0 %v943
        %985 = vmatprep.subr.bf16.mxu0 0
        %986 = vmatpush1.bf16.msra.mxu0 %v942
        %987 = vmatprep.subr.bf16.mxu0 0
        %988 = vmatpush1.bf16.msra.mxu0 %v941
        %989 = vmatprep.subr.bf16.mxu0 0
        %990 = vmatpush2.bf16.msra.mxu0 %v956
        %991 = vmatprep.subr.bf16.mxu0 0
        %992 = vmatpush2.bf16.msra.mxu0 %v955
        %993 = vmatprep.subr.bf16.mxu0 0
        %994 = vmatpush2.bf16.msra.mxu0 %v954
        %995 = vmatprep.subr.bf16.mxu0 0
        %996 = vmatpush2.bf16.msra.mxu0 %v953
        %997 = vmatprep.subr.bf16.mxu0 0
        %998 = vmatpush2.bf16.msra.mxu0 %v952
        %999 = vmatprep.subr.bf16.mxu0 0
        %1000 = vmatpush2.bf16.msra.mxu0 %v951
        %1001 = vmatprep.subr.bf16.mxu0 0
        %1002 = vmatpush2.bf16.msra.mxu0 %v950
        %1003 = vmatprep.subr.bf16.mxu0 0
        %1004 = vmatpush2.bf16.msra.mxu0 %v949
        %1005 = vmatprep.mubr.bf16.mxu0 %v874
        %1006 = vmatmul.mubr.bf16.gmra.mxu0 %v867
        %v1007 = vpop.f32.mrf.mxu0
        %v1008 = vadd.f32 0.0, %v1007
        %v1009 = vpop.f32.mrf.mxu0
        %v1010 = vpop.f32.mrf.mxu0
        %v1011 = vadd.f32 0.0, %v1010
        %v1012 = vpop.f32.mrf.mxu0
        %1013 = vdwg.mxu0
        %v1014 = vadd.f32 %v826, %v1008
        %v1015 = vadd.f32 %v827, %v1011
        %s1016 = scalar_lea.vmem %s597, 256 [#allocation3]
        %v1017 = vld [vmem:[%s1016] sm:$0xf]
        %v1018 = vld [vmem:[%s1016 + $0x4] sm:$0xf]
        %v1019 = vld [vmem:[%s1016 + $0x8] sm:$0xf]
        %v1020 = vld [vmem:[%s1016 + $0xc] sm:$0xf]
        %v1021 = vld [vmem:[%s1016 + $0x10] sm:$0xf]
        %v1022 = vld [vmem:[%s1016 + $0x14] sm:$0xf]
        %v1023 = vld [vmem:[%s1016 + $0x18] sm:$0xf]
        %v1024 = vld [vmem:[%s1016 + $0x1c] sm:$0xf]
        %v1025 = vld [vmem:[%s1016 + $0x20] sm:$0xf]
        %v1026 = vld [vmem:[%s1016 + $0x24] sm:$0xf]
        %v1027 = vld [vmem:[%s1016 + $0x28] sm:$0xf]
        %v1028 = vld [vmem:[%s1016 + $0x2c] sm:$0xf]
        %v1029 = vld [vmem:[%s1016 + $0x30] sm:$0xf]
        %v1030 = vld [vmem:[%s1016 + $0x34] sm:$0xf]
        %v1031 = vld [vmem:[%s1016 + $0x38] sm:$0xf]
        %v1032 = vld [vmem:[%s1016 + $0x3c] sm:$0xf]
        %v1033 = vld [vmem:[%s1016 + $0x40] sm:$0xf]
        %v1034 = vld [vmem:[%s1016 + $0x44] sm:$0xf]
        %v1035 = vld [vmem:[%s1016 + $0x48] sm:$0xf]
        %v1036 = vld [vmem:[%s1016 + $0x4c] sm:$0xf]
        %v1037 = vld [vmem:[%s1016 + $0x50] sm:$0xf]
        %v1038 = vld [vmem:[%s1016 + $0x54] sm:$0xf]
        %v1039 = vld [vmem:[%s1016 + $0x58] sm:$0xf]
        %v1040 = vld [vmem:[%s1016 + $0x5c] sm:$0xf]
        %v1041 = vld [vmem:[%s1016 + $0x60] sm:$0xf]
        %v1042 = vld [vmem:[%s1016 + $0x64] sm:$0xf]
        %v1043 = vld [vmem:[%s1016 + $0x68] sm:$0xf]
        %v1044 = vld [vmem:[%s1016 + $0x6c] sm:$0xf]
        %v1045 = vld [vmem:[%s1016 + $0x70] sm:$0xf]
        %v1046 = vld [vmem:[%s1016 + $0x74] sm:$0xf]
        %v1047 = vld [vmem:[%s1016 + $0x78] sm:$0xf]
        %v1048 = vld [vmem:[%s1016 + $0x7c] sm:$0xf]
        %v1049 = vrot.slane %v685, 1
        %v1050 = vrot.slane %v686, 1
        %v1085 = vunpack.c.l.b16 %v1017
        %v1086 = vunpack.c.l.b16 %v1018
        %v1087 = vunpack.c.l.b16 %v1019
        %v1088 = vunpack.c.l.b16 %v1020
        %v1089 = vunpack.c.l.b16 %v1021
        %v1090 = vunpack.c.l.b16 %v1022
        %v1091 = vunpack.c.l.b16 %v1023
        %v1092 = vunpack.c.l.b16 %v1024
        %v1093 = vunpack.c.l.b16 %v1025
        %v1094 = vunpack.c.l.b16 %v1026
        %v1095 = vunpack.c.l.b16 %v1027
        %v1096 = vunpack.c.l.b16 %v1028
        %v1097 = vunpack.c.l.b16 %v1029
        %v1098 = vunpack.c.l.b16 %v1030
        %v1099 = vunpack.c.l.b16 %v1031
        %v1100 = vunpack.c.l.b16 %v1032
        %v1101 = vunpack.c.l.b16 %v1033
        %v1102 = vunpack.c.l.b16 %v1034
        %v1103 = vunpack.c.l.b16 %v1035
        %v1104 = vunpack.c.l.b16 %v1036
        %v1105 = vunpack.c.l.b16 %v1037
        %v1106 = vunpack.c.l.b16 %v1038
        %v1107 = vunpack.c.l.b16 %v1039
        %v1108 = vunpack.c.l.b16 %v1040
        %v1109 = vunpack.c.l.b16 %v1041
        %v1110 = vunpack.c.l.b16 %v1042
        %v1111 = vunpack.c.l.b16 %v1043
        %v1112 = vunpack.c.l.b16 %v1044
        %v1113 = vunpack.c.l.b16 %v1045
        %v1114 = vunpack.c.l.b16 %v1046
        %v1115 = vunpack.c.l.b16 %v1047
        %v1116 = vunpack.c.l.b16 %v1048
        %v1117 = vpack.c.b16 %v1086, %v1085
        %v1118 = vpack.c.b16 %v1088, %v1087
        %v1119 = vpack.c.b16 %v1090, %v1089
        %v1120 = vpack.c.b16 %v1092, %v1091
        %v1121 = vpack.c.b16 %v1094, %v1093
        %v1122 = vpack.c.b16 %v1096, %v1095
        %v1123 = vpack.c.b16 %v1098, %v1097
        %v1124 = vpack.c.b16 %v1100, %v1099
        %v1125 = vpack.c.b16 %v1102, %v1101
        %v1126 = vpack.c.b16 %v1104, %v1103
        %v1127 = vpack.c.b16 %v1106, %v1105
        %v1128 = vpack.c.b16 %v1108, %v1107
        %v1129 = vpack.c.b16 %v1110, %v1109
        %v1130 = vpack.c.b16 %v1112, %v1111
        %v1131 = vpack.c.b16 %v1114, %v1113
        %v1132 = vpack.c.b16 %v1116, %v1115
        %1149 = vmatprep.subr.bf16.mxu0 0
        %1150 = vmatpush1.bf16.msra.mxu0 %v1124
        %1151 = vmatprep.subr.bf16.mxu0 0
        %1152 = vmatpush1.bf16.msra.mxu0 %v1123
        %1153 = vmatprep.subr.bf16.mxu0 0
        %1154 = vmatpush1.bf16.msra.mxu0 %v1122
        %1155 = vmatprep.subr.bf16.mxu0 0
        %1156 = vmatpush1.bf16.msra.mxu0 %v1121
        %1157 = vmatprep.subr.bf16.mxu0 0
        %1158 = vmatpush1.bf16.msra.mxu0 %v1120
        %1159 = vmatprep.subr.bf16.mxu0 0
        %1160 = vmatpush1.bf16.msra.mxu0 %v1119
        %1161 = vmatprep.subr.bf16.mxu0 0
        %1162 = vmatpush1.bf16.msra.mxu0 %v1118
        %1163 = vmatprep.subr.bf16.mxu0 0
        %1164 = vmatpush1.bf16.msra.mxu0 %v1117
        %1165 = vmatprep.subr.bf16.mxu0 0
        %1166 = vmatpush2.bf16.msra.mxu0 %v1132
        %1167 = vmatprep.subr.bf16.mxu0 0
        %1168 = vmatpush2.bf16.msra.mxu0 %v1131
        %1169 = vmatprep.subr.bf16.mxu0 0
        %1170 = vmatpush2.bf16.msra.mxu0 %v1130
        %1171 = vmatprep.subr.bf16.mxu0 0
        %1172 = vmatpush2.bf16.msra.mxu0 %v1129
        %1173 = vmatprep.subr.bf16.mxu0 0
        %1174 = vmatpush2.bf16.msra.mxu0 %v1128
        %1175 = vmatprep.subr.bf16.mxu0 0
        %1176 = vmatpush2.bf16.msra.mxu0 %v1127
        %1177 = vmatprep.subr.bf16.mxu0 0
        %1178 = vmatpush2.bf16.msra.mxu0 %v1126
        %1179 = vmatprep.subr.bf16.mxu0 0
        %1180 = vmatpush2.bf16.msra.mxu0 %v1125
        %1181 = vmatprep.mubr.bf16.mxu0 %v1050
        %1182 = vmatmul.mubr.bf16.gmra.mxu0 %v1049
        %v1183 = vpop.f32.mrf.mxu0
        %v1184 = vadd.f32 0.0, %v1183
        %v1185 = vpop.f32.mrf.mxu0
        %v1186 = vpop.f32.mrf.mxu0
        %v1187 = vadd.f32 0.0, %v1186
        %v1188 = vpop.f32.mrf.mxu0
        %1189 = vdwg.mxu0
        %v1190 = vadd.f32 %v1014, %v1184
        %v1191 = vadd.f32 %v1015, %v1187
        %1192 = vst [vmem:[#allocation2] sm:$0xff] %v1190
        %1193 = vst [vmem:[#allocation2 + $0x8] sm:$0x3f] %v1191
        %p1194 = scmp.eq.s32.totalorder %s22, 2
        // Predicated region
        $region74: #{inception_stem_forward.67} parent=64 // pred_check
          %p1195 = pneg %p1194
        $region75: #{inception_stem_forward.67} parent=64 // pred_check_branch
          %1197 = sbr.rel (%p1195) target = $region77
        $region76: #{inception_stem_forward.67} parent=64 // pred_region
          %v1198 = vld [vmem:[#allocation2] sm:$0xff]
          %v1199 = vld [vmem:[#allocation2 + $0x8] sm:$0x3f]
          %1200 = vst [vmem:[%s624] sm:$0xff] %v1198
          %1201 = vst [vmem:[%s624 + $0x8] sm:$0x3f] %v1199
        $region77: #{inception_stem_forward.67} parent=64 // pred_fallthru
          _
        %s1202 = sand.u32 %s109, 1
        %s1203 = sand.u32 %s109, 1
        %s1204 = smul.addr %s1203, 16
        %s1205 = scalar_lea.vmem [#allocation4], %s1204
        // Predicated region
        $region78: #{inception_stem_forward.67} parent=64 // pred_check
          %p1206 = pneg %p119
        $region79: #{inception_stem_forward.67} parent=64 // pred_check_branch
          %1208 = sbr.rel (%p1206) target = $region81
        $region80: #{inception_stem_forward.67} parent=64 // pred_region
          %s1209 = smul.addr %s20, 4
          %s1210 = sadd.s32 %s21, %s1209
          %s1211 = smul.addr %s19, 56
          %s1212 = sadd.s32 %s1210, %s1211
          %s1213 = smul.addr %s1212, 8
          %s1214 = scalar_lea.vmem %s2, %s1213
          // Predicated region
          $region82: #{inception_stem_forward.67} parent=80 // pred_check
            _
          $region83: #{inception_stem_forward.67} parent=80 // pred_check_branch
            %1216 = sbr.rel (0) target = $region85
          $region84: #{inception_stem_forward.67} parent=80 // pred_region
            // Predicated region
            $region86: #{inception_stem_forward.67} parent=84 // pred_check
              _
            $region87: #{inception_stem_forward.67} parent=84 // pred_check_branch
              %1218 = sbr.rel (0) target = $region89
            $region88: #{inception_stem_forward.67} parent=84 // pred_region
              // Predicated region
              $region101: #{inception_stem_forward.67} parent=88 // pred_check
                _
              $region102: #{inception_stem_forward.67} parent=88 // pred_check_branch
                %1236 = sbr.rel (0) target = $region104
              $region103: #{inception_stem_forward.67} parent=88 // pred_region
                loop: start=0, step=1, limit=1
                $region105: #{inception_stem_forward.67} parent=103 // loop_pre_header
                  _
                $region106: #{inception_stem_forward.67} parent=103 // loop_header
                  %s1238 = sphi 0, %s1242
                  %p1239 = scmp.ge.s32.totalorder %s1238, 1
                  %s1243 = sphi %s1205, %s1205
                  %s1244 = sphi %s1214, %s1214
                $region107: #{inception_stem_forward.67} parent=103 // loop_header_branch
                  %1241 = sbr.rel (%p1239) target = $region111
                $region108: #{inception_stem_forward.67} parent=103 // loop_body
                  %v1245 = vld [vmem:[%s1243] sm:$0xff]
                  %1246 = vst [vmem:[%s1244] sm:$0xff] %v1245
                  %v1247 = vld [vmem:[%s1243 + $0x8] sm:$0xff]
                  %1248 = vst [vmem:[%s1244 + $0x10] sm:$0xff] %v1247
                $region109: #{inception_stem_forward.67} parent=103 // loop_footer
                  %s1242 = sadd.s32 1, %s1238
                $region110: #{inception_stem_forward.67} parent=103 // loop_footer_branch
                  %1237 = sbr.rel target = $region106
                $region111: #{inception_stem_forward.67} parent=103 // loop_exit
                  _
              $region104: #{inception_stem_forward.67} parent=88 // pred_fallthru
                _
              // Predicated region
              $region112: #{inception_stem_forward.67} parent=88 // pred_check
                _
              $region113: #{inception_stem_forward.67} parent=88 // pred_check_branch
                %1250 = sbr.rel target = $region115
              $region114: #{inception_stem_forward.67} parent=88 // pred_region
                _
              $region115: #{inception_stem_forward.67} parent=88 // pred_fallthru
                _
            $region89: #{inception_stem_forward.67} parent=84 // pred_fallthru
              _
            // Predicated region
            $region90: #{inception_stem_forward.67} parent=84 // pred_check
              _
            $region91: #{inception_stem_forward.67} parent=84 // pred_check_branch
              %1220 = sbr.rel target = $region93
            $region92: #{inception_stem_forward.67} parent=84 // pred_region
              %s1222 = ssub.s32 256, 1
              loop: start=0, step=1, limit=1
              $region94: #{inception_stem_forward.67} parent=92 // loop_pre_header
                _
              $region95: #{inception_stem_forward.67} parent=92 // loop_header
                %s1224 = sphi 0, %s1228
                %p1225 = scmp.ge.s32.totalorder %s1224, 1
                %s1229 = sphi %s1205, %s1205
                %s1230 = sphi %s1214, %s1214
              $region96: #{inception_stem_forward.67} parent=92 // loop_header_branch
                %1227 = sbr.rel (%p1225) target = $region100
              $region97: #{inception_stem_forward.67} parent=92 // loop_body
                %v1231 = vld [vmem:[%s1229] sm:%s1222]
                %1232 = vst [vmem:[%s1230] sm:%s1222] %v1231
                %v1233 = vld [vmem:[%s1229 + $0x8] sm:%s1222]
                %1234 = vst [vmem:[%s1230 + $0x10] sm:%s1222] %v1233
              $region98: #{inception_stem_forward.67} parent=92 // loop_footer
                %s1228 = sadd.s32 1, %s1224
              $region99: #{inception_stem_forward.67} parent=92 // loop_footer_branch
                %1223 = sbr.rel target = $region95
              $region100: #{inception_stem_forward.67} parent=92 // loop_exit
                _
            $region93: #{inception_stem_forward.67} parent=84 // pred_fallthru
              _
          $region85: #{inception_stem_forward.67} parent=80 // pred_fallthru
            _
          %1251 = vnop
        $region81: #{inception_stem_forward.67} parent=64 // pred_fallthru
          _
      $region65: #{inception_stem_forward.67} parent=5 // pred_fallthru
        _
      %p1252 = scmp.le.s32.totalorder 2, %s8
      // Predicated region
      $region116: #{inception_stem_forward.67} parent=5 // pred_check
        %p1253 = pneg %p1252
      $region117: #{inception_stem_forward.67} parent=5 // pred_check_branch
        %1255 = sbr.rel (%p1253) target = $region119
      $region118: #{inception_stem_forward.67} parent=5 // pred_region
        %s1256 = ssub.s32 %s8, 2
        // Predicated region
        $region120: #{inception_stem_forward.67} parent=118 // pred_check
          %p1257 = pneg %p125
        $region121: #{inception_stem_forward.67} parent=118 // pred_check_branch
          %1259 = sbr.rel (%p1257) target = $region123
        $region122: #{inception_stem_forward.67} parent=118 // pred_region
          %s1260 = sand.u32 %s110, 1
          %s1261 = sand.u32 %s110, 1
          %s1262 = smul.addr %s1261, 16
          %s1263 = scalar_lea.vmem [#allocation4], %s1262
        $region123: #{inception_stem_forward.67} parent=118 // pred_fallthru
          _
      $region119: #{inception_stem_forward.67} parent=5 // pred_fallthru
        _
    $region6: #{inception_stem_forward.67} parent=1 // loop_footer
      %s12 = sadd.s32 1, %s8
    $region7: #{inception_stem_forward.67} parent=1 // loop_footer_branch
      %7 = sbr.rel target = $region3
    $region8: #{inception_stem_forward.67} parent=1 // loop_exit
      _

// kernel: inception_stem_forward.68
$region0: #{inception_stem_forward.68}
  #allocation0 [shape = 'u32[]', space=smem, size = 0x4, offset = 0x4, fixed_abs, tag = 'smem constant byte address 0x4 - core index']
  #allocation1 [shape = 'u32[144,128]{1,0:T(1,128)}', space=vmem, size = 0x12000, scoped, tag = 'internal scratch']
  #allocation2 [shape = 'f32[1,128]{1,0:T(1,128)}', space=vmem, size = 0x200, scoped, tag = 'scratch operand']
  #allocation3 [shape = 'f32[1,128]{1,0:T(1,128)}', space=vmem, size = 0x200, scoped, tag = 'scratch operand']
  %s0 = inlined_call_operand.vmem [shape: f32[2,14,14,256], index: 0, kind: input, shape index: {}]
  %s1 = inlined_call_operand.vmem [shape: f32[1,256], index: 1, kind: input, shape index: {}]
  %s2 = inlined_call_operand.vmem [shape: f32[1,256], index: 2, kind: input, shape index: {}]
  %s3 = inlined_call_operand.vmem [shape: f32[1,256], index: 3, kind: output, shape index: {0}]
  %s4 = inlined_call_operand.vmem [shape: f32[1,256], index: 4, kind: output, shape index: {1}]
  %5 = xla_tuple %s3, %s4
  %s6 = sld [smem:[#allocation0]]
  $region99: #{inception_stem_forward.68} parent=0
    _
  %s8 = ssub.s32 1, %s6
  %s9 = scalar_select 0, %s8, %s6
  $region1: #{inception_stem_forward.68} parent=0
    #allocation4 [shape = 'u8[16384]{0}', space=vmem, size = 0x4000, scoped, tag = 'input window, operand 0']
    loop: start=0, step=1, limit=58
    $region2: #{inception_stem_forward.68} parent=1 // loop_pre_header
      _
    $region3: #{inception_stem_forward.68} parent=1 // loop_header
      %s11 = sphi 0, %s15
      %p12 = scmp.ge.s32.totalorder %s11, 58
      %s18 = sphi 0, %s37
      %s19 = sphi 0, %s33
      %s20 = sphi 0, %s29
      %s21 = sphi 0, %s18
      %s22 = sphi 0, %s19
      %s23 = sphi 0, %s20
      %s24 = sphi 0, %s21
      %s25 = sphi 0, %s22
      %s26 = sphi 0, %s23
      %s44 = sphi 0, %s46
      %s47 = sphi 0, %s44
      %s48 = sphi 0, %s47
      %s64 = sphi 0, %s48
      %s70 = sphi 0, %s72
      %s73 = sphi 0, %s70
      %s74 = sphi 0, %s73
      %s90 = sphi 0, %s74
      %s96 = sphi 0, %s98
      %s99 = sphi 0, %s96
      %s100 = sphi 0, %s99
      %s116 = sphi 0, %s100
      %s122 = sphi 0, %s124
      %s125 = sphi 0, %s122
      %s126 = sphi 0, %s125
      %s142 = sphi 0, %s126
      %s148 = sphi 0, %s150
      %s151 = sphi 0, %s148
      %s152 = sphi 0, %s151
      %s168 = sphi 0, %s152
    $region4: #{inception_stem_forward.68} parent=1 // loop_header_branch
      %14 = sbr.rel (%p12) target = $region8
    $region5: #{inception_stem_forward.68} parent=1 // loop_body
      %s16 = ssub.s32 %s11, 1
      %s17 = ssub.s32 %s11, 2
      %s27 = sadd.s32 1, %s20
      %p28 = scmp.ge.s32.totalorder %s27, 14
      %s29 = scalar_select %p28, 0, %s27
      %s30 = sadd.s32 1, %s19
      %s31 = scalar_select %p28, %s30, %s19
      %p32 = scmp.ge.s32.totalorder %s31, 2
      %s33 = scalar_select %p32, 0, %s31
      %s34 = sadd.s32 1, %s18
      %s35 = scalar_select %p32, %s34, %s18
      %p36 = scmp.ge.s32.totalorder %s35, 2
      %s37 = scalar_select %p36, 0, %s35
      %s38 = ssub.s32 %s19, %s33
      %s39 = ssub.s32 %s20, %s29
      %s40 = sor.u32 %s38, %s39
      %s41 = ssub.s32 %s18, %s37
      %s42 = sor.u32 %s40, %s41
      %p43 = scmp.eq.s32.totalorder %s42, 0
      %s45 = sadd.s32 %s44, 1
      %s46 = scalar_select %p43, %s44, %s45
      %p49 = pneg %p43
      %p50 = scmp.eq.s32.totalorder %s11, 55
      %p51 = por %p49, %p50
      %p52 = scmp.ne.s32.totalorder %s44, %s47
      %p53 = scmp.eq.s32.totalorder %s11, 0
      %p54 = por %p52, %p53
      %p55 = scmp.ne.s32.totalorder %s44, %s47
      %p56 = scmp.eq.s32.totalorder %s16, 55
      %p57 = por %p55, %p56
      %p58 = scmp.ne.s32.totalorder %s47, %s48
      %p59 = scmp.eq.s32.totalorder %s16, 0
      %p60 = por %p58, %p59
      %p61 = scmp.ne.s32.totalorder %s47, %s48
      %p62 = scmp.eq.s32.totalorder %s17, 55
      %p63 = por %p61, %p62
      %p65 = scmp.ne.s32.totalorder %s48, %s64
      %p66 = scmp.eq.s32.totalorder %s17, 0
      %p67 = por %p65, %p66
      %s68 = ssub.s32 %s18, %s37
      %p69 = scmp.eq.s32.totalorder %s68, 0
      %s71 = sadd.s32 %s70, 1
      %s72 = scalar_select %p69, %s70, %s71
      %p75 = pneg %p69
      %p76 = scmp.eq.s32.totalorder %s11, 55
      %p77 = por %p75, %p76
      %p78 = scmp.ne.s32.totalorder %s70, %s73
      %p79 = scmp.eq.s32.totalorder %s11, 0
      %p80 = por %p78, %p79
      %p81 = scmp.ne.s32.totalorder %s70, %s73
      %p82 = scmp.eq.s32.totalorder %s16, 55
      %p83 = por %p81, %p82
      %p84 = scmp.ne.s32.totalorder %s73, %s74
      %p85 = scmp.eq.s32.totalorder %s16, 0
      %p86 = por %p84, %p85
      %p87 = scmp.ne.s32.totalorder %s73, %s74
      %p88 = scmp.eq.s32.totalorder %s17, 55
      %p89 = por %p87, %p88
      %p91 = scmp.ne.s32.totalorder %s74, %s90
      %p92 = scmp.eq.s32.totalorder %s17, 0
      %p93 = por %p91, %p92
      %s94 = ssub.s32 %s18, %s37
      %p95 = scmp.eq.s32.totalorder %s94, 0
      %s97 = sadd.s32 %s96, 1
      %s98 = scalar_select %p95, %s96, %s97
      %p101 = pneg %p95
      %p102 = scmp.eq.s32.totalorder %s11, 55
      %p103 = por %p101, %p102
      %p104 = scmp.ne.s32.totalorder %s96, %s99
      %p105 = scmp.eq.s32.totalorder %s11, 0
      %p106 = por %p104, %p105
      %p107 = scmp.ne.s32.totalorder %s96, %s99
      %p108 = scmp.eq.s32.totalorder %s16, 55
      %p109 = por %p107, %p108
      %p110 = scmp.ne.s32.totalorder %s99, %s100
      %p111 = scmp.eq.s32.totalorder %s16, 0
      %p112 = por %p110, %p111
      %p113 = scmp.ne.s32.totalorder %s99, %s100
      %p114 = scmp.eq.s32.totalorder %s17, 55
      %p115 = por %p113, %p114
      %p117 = scmp.ne.s32.totalorder %s100, %s116
      %p118 = scmp.eq.s32.totalorder %s17, 0
      %p119 = por %p117, %p118
      %s120 = ssub.s32 %s18, %s37
      %p121 = scmp.eq.s32.totalorder %s120, 0
      %s123 = sadd.s32 %s122, 1
      %s124 = scalar_select %p121, %s122, %s123
      %p127 = pneg %p121
      %p128 = scmp.eq.s32.totalorder %s11, 55
      %p129 = por %p127, %p128
      %p130 = scmp.ne.s32.totalorder %s122, %s125
      %p131 = scmp.eq.s32.totalorder %s11, 0
      %p132 = por %p130, %p131
      %p133 = scmp.ne.s32.totalorder %s122, %s125
      %p134 = scmp.eq.s32.totalorder %s16, 55
      %p135 = por %p133, %p134
      %p136 = scmp.ne.s32.totalorder %s125, %s126
      %p137 = scmp.eq.s32.totalorder %s16, 0
      %p138 = por %p136, %p137
      %p139 = scmp.ne.s32.totalorder %s125, %s126
      %p140 = scmp.eq.s32.totalorder %s17, 55
      %p141 = por %p139, %p140
      %p143 = scmp.ne.s32.totalorder %s126, %s142
      %p144 = scmp.eq.s32.totalorder %s17, 0
      %p145 = por %p143, %p144
      %s146 = ssub.s32 %s18, %s37
      %p147 = scmp.eq.s32.totalorder %s146, 0
      %s149 = sadd.s32 %s148, 1
      %s150 = scalar_select %p147, %s148, %s149
      %p153 = pneg %p147
      %p154 = scmp.eq.s32.totalorder %s11, 55
      %p155 = por %p153, %p154
      %p156 = scmp.ne.s32.totalorder %s148, %s151
      %p157 = scmp.eq.s32.totalorder %s11, 0
      %p158 = por %p156, %p157
      %p159 = scmp.ne.s32.totalorder %s148, %s151
      %p160 = scmp.eq.s32.totalorder %s16, 55
      %p161 = por %p159, %p160
      %p162 = scmp.ne.s32.totalorder %s151, %s152
      %p163 = scmp.eq.s32.totalorder %s16, 0
      %p164 = por %p162, %p163
      %p165 = scmp.ne.s32.totalorder %s151, %s152
      %p166 = scmp.eq.s32.totalorder %s17, 55
      %p167 = por %p165, %p166
      %p169 = scmp.ne.s32.totalorder %s152, %s168
      %p170 = scmp.eq.s32.totalorder %s17, 0
      %p171 = por %p169, %p170
      %p172 = scmp.le.s32.totalorder 1, %s11
      %p173 = scmp.lt.s32.totalorder %s11, 57
      %p174 = pnand %p172, %p173
      %p175 = pneg %p174
      // Predicated region
      $region9: #{inception_stem_forward.68} parent=5 // pred_check
        _
      $region10: #{inception_stem_forward.68} parent=5 // pred_check_branch
        %177 = sbr.rel (%p174) target = $region12
      $region11: #{inception_stem_forward.68} parent=5 // pred_region
        %s178 = ssub.s32 %s11, 1
      $region12: #{inception_stem_forward.68} parent=5 // pred_fallthru
        _
      %p179 = scmp.lt.s32.totalorder %s11, 56
      // Predicated region
      $region13: #{inception_stem_forward.68} parent=5 // pred_check
        %p180 = pneg %p179
      $region14: #{inception_stem_forward.68} parent=5 // pred_check_branch
        %182 = sbr.rel (%p180) target = $region16
      $region15: #{inception_stem_forward.68} parent=5 // pred_region
        // Predicated region
        $region17: #{inception_stem_forward.68} parent=15 // pred_check
          %p183 = pneg %p54
        $region18: #{inception_stem_forward.68} parent=15 // pred_check_branch
          %185 = sbr.rel (%p183) target = $region20
        $region19: #{inception_stem_forward.68} parent=15 // pred_region
          %s186 = sand.u32 %s44, 1
          %s187 = sand.u32 %s44, 1
          %s188 = smul.addr %s187, 16
          %s189 = scalar_lea.vmem [#allocation4], %s188
          %s190 = smul.addr %s20, 4
          %s191 = sadd.s32 %s18, %s190
          %s192 = smul.addr %s19, 56
          %s193 = sadd.s32 %s191, %s192
          %s194 = smul.addr %s193, 8
          %s195 = scalar_lea.vmem %s0, %s194
          // Predicated region
          $region21: #{inception_stem_forward.68} parent=19 // pred_check
            _
          $region22: #{inception_stem_forward.68} parent=19 // pred_check_branch
            %197 = sbr.rel (0) target = $region24
          $region23: #{inception_stem_forward.68} parent=19 // pred_region
            // Predicated region
            $region25: #{inception_stem_forward.68} parent=23 // pred_check
              _
            $region26: #{inception_stem_forward.68} parent=23 // pred_check_branch
              %199 = sbr.rel (0) target = $region28
            $region27: #{inception_stem_forward.68} parent=23 // pred_region
              // Predicated region
              $region40: #{inception_stem_forward.68} parent=27 // pred_check
                _
              $region41: #{inception_stem_forward.68} parent=27 // pred_check_branch
                %217 = sbr.rel (0) target = $region43
              $region42: #{inception_stem_forward.68} parent=27 // pred_region
                loop: start=0, step=1, limit=1
                $region44: #{inception_stem_forward.68} parent=42 // loop_pre_header
                  _
                $region45: #{inception_stem_forward.68} parent=42 // loop_header
                  %s219 = sphi 0, %s223
                  %p220 = scmp.ge.s32.totalorder %s219, 1
                  %s224 = sphi %s195, %s195
                  %s225 = sphi %s189, %s189
                $region46: #{inception_stem_forward.68} parent=42 // loop_header_branch
                  %222 = sbr.rel (%p220) target = $region50
                $region47: #{inception_stem_forward.68} parent=42 // loop_body
                  %v226 = vld [vmem:[%s224] sm:$0xff]
                  %227 = vst [vmem:[%s225] sm:$0xff] %v226
                  %v228 = vld [vmem:[%s224 + $0x10] sm:$0xff]
                  %229 = vst [vmem:[%s225 + $0x8] sm:$0xff] %v228
                $region48: #{inception_stem_forward.68} parent=42 // loop_footer
                  %s223 = sadd.s32 1, %s219
                $region49: #{inception_stem_forward.68} parent=42 // loop_footer_branch
                  %218 = sbr.rel target = $region45
                $region50: #{inception_stem_forward.68} parent=42 // loop_exit
                  _
              $region43: #{inception_stem_forward.68} parent=27 // pred_fallthru
                _
              // Predicated region
              $region51: #{inception_stem_forward.68} parent=27 // pred_check
                _
              $region52: #{inception_stem_forward.68} parent=27 // pred_check_branch
                %231 = sbr.rel target = $region54
              $region53: #{inception_stem_forward.68} parent=27 // pred_region
                _
              $region54: #{inception_stem_forward.68} parent=27 // pred_fallthru
                _
            $region28: #{inception_stem_forward.68} parent=23 // pred_fallthru
              _
            // Predicated region
            $region29: #{inception_stem_forward.68} parent=23 // pred_check
              _
            $region30: #{inception_stem_forward.68} parent=23 // pred_check_branch
              %201 = sbr.rel target = $region32
            $region31: #{inception_stem_forward.68} parent=23 // pred_region
              %s203 = ssub.s32 256, 1
              loop: start=0, step=1, limit=1
              $region33: #{inception_stem_forward.68} parent=31 // loop_pre_header
                _
              $region34: #{inception_stem_forward.68} parent=31 // loop_header
                %s205 = sphi 0, %s209
                %p206 = scmp.ge.s32.totalorder %s205, 1
                %s210 = sphi %s195, %s195
                %s211 = sphi %s189, %s189
              $region35: #{inception_stem_forward.68} parent=31 // loop_header_branch
                %208 = sbr.rel (%p206) target = $region39
              $region36: #{inception_stem_forward.68} parent=31 // loop_body
                %v212 = vld [vmem:[%s210] sm:%s203]
                %213 = vst [vmem:[%s211] sm:%s203] %v212
                %v214 = vld [vmem:[%s210 + $0x10] sm:%s203]
                %215 = vst [vmem:[%s211 + $0x8] sm:%s203] %v214
              $region37: #{inception_stem_forward.68} parent=31 // loop_footer
                %s209 = sadd.s32 1, %s205
              $region38: #{inception_stem_forward.68} parent=31 // loop_footer_branch
                %204 = sbr.rel target = $region34
              $region39: #{inception_stem_forward.68} parent=31 // loop_exit
                _
            $region32: #{inception_stem_forward.68} parent=23 // pred_fallthru
              _
          $region24: #{inception_stem_forward.68} parent=19 // pred_fallthru
            _
          %232 = vnop
        $region20: #{inception_stem_forward.68} parent=15 // pred_fallthru
          _
        // Predicated region
        $region55: #{inception_stem_forward.68} parent=15 // pred_check
          %p233 = pneg %p80
        $region56: #{inception_stem_forward.68} parent=15 // pred_check_branch
          %235 = sbr.rel (%p233) target = $region58
        $region57: #{inception_stem_forward.68} parent=15 // pred_region
          %p236 = scmp.lt.s32.totalorder %s18, 1
          %s237 = scalar_select %p236, %s18, 1
          %s238 = scalar_lea.vmem %s1, %s237
        $region58: #{inception_stem_forward.68} parent=15 // pred_fallthru
          _
        // Predicated region
        $region59: #{inception_stem_forward.68} parent=15 // pred_check
          %p239 = pneg %p106
        $region60: #{inception_stem_forward.68} parent=15 // pred_check_branch
          %241 = sbr.rel (%p239) target = $region62
        $region61: #{inception_stem_forward.68} parent=15 // pred_region
          %p242 = scmp.lt.s32.totalorder %s18, 1
          %s243 = scalar_select %p242, %s18, 1
          %s244 = scalar_lea.vmem %s2, %s243
        $region62: #{inception_stem_forward.68} parent=15 // pred_fallthru
          _
      $region16: #{inception_stem_forward.68} parent=5 // pred_fallthru
        _
      %p245 = scmp.le.s32.totalorder 1, %s11
      %p246 = scmp.lt.s32.totalorder %s11, 57
      %p247 = pnand %p245, %p246
      %p248 = pneg %p247
      // Predicated region
      $region63: #{inception_stem_forward.68} parent=5 // pred_check
        _
      $region64: #{inception_stem_forward.68} parent=5 // pred_check_branch
        %250 = sbr.rel (%p247) target = $region66
      $region65: #{inception_stem_forward.68} parent=5 // pred_region
        %s251 = ssub.s32 %s11, 1
        %s252 = sand.u32 %s47, 1
        %s253 = sand.u32 %s47, 1
        %s254 = smul.addr %s253, 16
        %s255 = scalar_lea.vmem [#allocation4], %s254
        // Predicated region
        $region67: #{inception_stem_forward.68} parent=65 // pred_check
          %p256 = pneg %p60
        $region68: #{inception_stem_forward.68} parent=65 // pred_check_branch
          %258 = sbr.rel (%p256) target = $region70
        $region69: #{inception_stem_forward.68} parent=65 // pred_region
          _
        $region70: #{inception_stem_forward.68} parent=65 // pred_fallthru
          _
        %s259 = sand.u32 %s47, 1
        %s260 = sand.u32 %s47, 1
        %s261 = smul.addr %s260, 16
        %s262 = scalar_lea.vmem [#allocation4], %s261
        %p263 = pneg %p60
        %p264 = pneg %p57
        %p265 = scmp.lt.s32.totalorder %s21, 1
        %s266 = scalar_select %p265, %s21, 1
        %s267 = scalar_lea.vmem %s1, %s266
        %p268 = pneg %p86
        %p269 = pneg %p83
        %p270 = scmp.lt.s32.totalorder %s21, 1
        %s271 = scalar_select %p270, %s21, 1
        %s272 = scalar_lea.vmem %s2, %s271
        %p273 = pneg %p112
        %p274 = pneg %p109
        %p275 = pneg %p138
        %p276 = pneg %p135
        %p277 = scmp.lt.s32.totalorder %s21, 1
        %s278 = scalar_select %p277, %s21, 1
        %s279 = scalar_lea.vmem %s3, %s278
        %p280 = pneg %p164
        %p281 = pneg %p161
        %p282 = scmp.lt.s32.totalorder %s21, 1
        %s283 = scalar_select %p282, %s21, 1
        %s284 = scalar_lea.vmem %s4, %s283
        %p285 = scmp.lt.s32.totalorder %s21, 1
        %s286 = scalar_select %p285, %s21, 1
        %s287 = scalar_lea.vmem %s1, %s286
        %p288 = scmp.lt.s32.totalorder %s21, 1
        %s289 = scalar_select %p288, %s21, 1
        %s290 = scalar_lea.vmem %s2, %s289
        %p291 = scmp.lt.s32.totalorder %s21, 1
        %s292 = scalar_select %p291, %s21, 1
        %s293 = scalar_lea.vmem %s3, %s292
        %p294 = scmp.lt.s32.totalorder %s21, 1
        %s295 = scalar_select %p294, %s21, 1
        %s296 = scalar_lea.vmem %s4, %s295
        %p297 = scmp.eq.s32.totalorder %s22, 0
        %p298 = scmp.eq.s32.totalorder %s23, 0
        %p299 = pnand %p297, %p298
        %p300 = pneg %p299
        // Predicated region
        $region71: #{inception_stem_forward.68} parent=65 // pred_check
          _
        $region72: #{inception_stem_forward.68} parent=65 // pred_check_branch
          %302 = sbr.rel (%p299) target = $region74
        $region73: #{inception_stem_forward.68} parent=65 // pred_region
          %303 = vst [vmem:[#allocation2] sm:$0x1] 0.0
          %304 = vst [vmem:[#allocation3] sm:$0x1] 0.0
        $region74: #{inception_stem_forward.68} parent=65 // pred_fallthru
          _
        %v305 = vld [vmem:[%s255] sm:$0xff]
        %v306 = vld [vmem:[%s255 + $0x8] sm:$0x3f]
        %v307 = vld [vmem:[#allocation2] sm:$0x1]
        %vm308 = vcmask 1045504
        %v309 = vsel %vm308, %v306, 0.0
        %v310 = vadd.f32 %v305, %v309
        %v311 = vrot.slane %v310, 4
        %v312 = vadd.f32 %v310, %v311
        %v313 = vrot.slane %v312, 2
        %v314 = vadd.f32 %v312, %v313
        %v315 = vrot.slane %v314, 1
        %v316 = vadd.f32 %v314, %v315
        %v317 = vadd.f32 %v307, %v316
        %318 = vst [vmem:[#allocation2] sm:$0x1] %v317
        %v319 = vld [vmem:[#allocation3] sm:$0x1]
        %v320 = vmul.f32 %v305, %v305
        %v321 = vmul.f32 %v306, %v306
        %v322 = vsel %vm308, %v321, 0.0
        %v323 = vadd.f32 %v320, %v322
        %v324 = vrot.slane %v323, 4
        %v325 = vadd.f32 %v323, %v324
        %v326 = vrot.slane %v325, 2
        %v327 = vadd.f32 %v325, %v326
        %v328 = vrot.slane %v327, 1
        %v329 = vadd.f32 %v327, %v328
        %v330 = vadd.f32 %v319, %v329
        %331 = vst [vmem:[#allocation3] sm:$0x1] %v330
        %p332 = scmp.eq.s32.totalorder %s22, 1
        %p333 = scmp.eq.s32.totalorder %s23, 13
        %p334 = pnand %p332, %p333
        %p335 = pneg %p334
        // Predicated region
        $region75: #{inception_stem_forward.68} parent=65 // pred_check
          _
        $region76: #{inception_stem_forward.68} parent=65 // pred_check_branch
          %337 = sbr.rel (%p334) target = $region78
        $region77: #{inception_stem_forward.68} parent=65 // pred_region
          %v338 = vld [vmem:[#allocation2] sm:$0x1]
          %v339 = vmul.f32 %v338, 0.0025510204
          %v340 = vld [vmem:[#allocation3] sm:$0x1]
          %v341 = vmul.f32 %v340, 0.0025510204
          %v342 = vmul.f32 %v339, %v339
          %v343 = vsub.f32 %v341, %v342
          %v344 = vmax.f32 %v343, 0.0
          %v345 = vld [vmem:[%s287] sm:$0x1]
          %v346 = vadd.f32 %v344, 1e-05
          %v347 = vrsqrt.pop %v346
          %v348 = vmul.f32 %v345, %v347
          %349 = vst [vmem:[%s293] sm:$0x1] %v348
          %v350 = vld [vmem:[%s290] sm:$0x1]
          %v351 = vmul.f32 %v339, %v348
          %v352 = vsub.f32 %v350, %v351
          %353 = vst [vmem:[%s296] sm:$0x1] %v352
        $region78: #{inception_stem_forward.68} parent=65 // pred_fallthru
          _
        %p354 = scmp.lt.s32.totalorder %s21, 1
        %s355 = scalar_select %p354, %s21, 1
        %s356 = scalar_lea.vmem %s3, %s355
        %p357 = scmp.lt.s32.totalorder %s21, 1
        %s358 = scalar_select %p357, %s21, 1
        %s359 = scalar_lea.vmem %s4, %s358
        // Predicated region
        $region79: #{inception_stem_forward.68} parent=65 // pred_check
          %p360 = pneg %p135
        $region80: #{inception_stem_forward.68} parent=65 // pred_check_branch
          %362 = sbr.rel (%p360) target = $region82
        $region81: #{inception_stem_forward.68} parent=65 // pred_region
          _
        $region82: #{inception_stem_forward.68} parent=65 // pred_fallthru
          _
        // Predicated region
        $region83: #{inception_stem_forward.68} parent=65 // pred_check
          %p363 = pneg %p161
        $region84: #{inception_stem_forward.68} parent=65 // pred_check_branch
          %365 = sbr.rel (%p363) target = $region86
        $region85: #{inception_stem_forward.68} parent=65 // pred_region
          _
        $region86: #{inception_stem_forward.68} parent=65 // pred_fallthru
          _
      $region66: #{inception_stem_forward.68} parent=5 // pred_fallthru
        _
      %p366 = scmp.le.s32.totalorder 2, %s11
      // Predicated region
      $region87: #{inception_stem_forward.68} parent=5 // pred_check
        %p367 = pneg %p366
      $region88: #{inception_stem_forward.68} parent=5 // pred_check_branch
        %369 = sbr.rel (%p367) target = $region90
      $region89: #{inception_stem_forward.68} parent=5 // pred_region
        %s370 = ssub.s32 %s11, 2
        // Predicated region
        $region91: #{inception_stem_forward.68} parent=89 // pred_check
          %p371 = pneg %p141
        $region92: #{inception_stem_forward.68} parent=89 // pred_check_branch
          %373 = sbr.rel (%p371) target = $region94
        $region93: #{inception_stem_forward.68} parent=89 // pred_region
          %p374 = scmp.lt.s32.totalorder %s24, 1
          %s375 = scalar_select %p374, %s24, 1
          %s376 = scalar_lea.vmem %s3, %s375
        $region94: #{inception_stem_forward.68} parent=89 // pred_fallthru
          _
        // Predicated region
        $region95: #{inception_stem_forward.68} parent=89 // pred_check
          %p377 = pneg %p167
        $region96: #{inception_stem_forward.68} parent=89 // pred_check_branch
          %379 = sbr.rel (%p377) target = $region98
        $region97: #{inception_stem_forward.68} parent=89 // pred_region
          %p380 = scmp.lt.s32.totalorder %s24, 1
          %s381 = scalar_select %p380, %s24, 1
          %s382 = scalar_lea.vmem %s4, %s381
        $region98: #{inception_stem_forward.68} parent=89 // pred_fallthru
          _
      $region90: #{inception_stem_forward.68} parent=5 // pred_fallthru
        _
    $region6: #{inception_stem_forward.68} parent=1 // loop_footer
      %s15 = sadd.s32 1, %s11
    $region7: #{inception_stem_forward.68} parent=1 // loop_footer_branch
      %10 = sbr.rel target = $region3
    $region8: #{inception_stem_forward.68} parent=1 // loop_exit
      _

// kernel: inception_stem_forward.66
$region0: #{inception_stem_forward.66}
  #allocation0 [shape = 'u32[]', space=smem, size = 0x4, offset = 0x4, fixed_abs, tag = 'smem constant byte address 0x4 - core index']
  #allocation1 [shape = 'u32[144,128]{1,0:T(1,128)}', space=vmem, size = 0x12000, scoped, tag = 'internal scratch']
  #allocation2 [shape = 'bf16[14,256]{1,0:T(8,128)(2,1)}', space=vmem, size = 0x2000, scoped, tag = 'scratch operand']
  %s0 = inlined_call_operand.vmem [shape: bf16[2,16,16,256], index: 0, kind: input, shape index: {}]
  %s1 = inlined_call_operand.vmem [shape: bf16[2,14,14,256], index: 1, kind: output, shape index: {}]
  %s2 = sld [smem:[#allocation0]]
  $region45: #{inception_stem_forward.66} parent=0
    _
  %s4 = ssub.s32 1, %s2
  %s5 = scalar_select 0, %s4, %s2
  loop: start=0, step=1, limit=86
  $region2: #{inception_stem_forward.66} parent=0 // loop_pre_header
    _
  $region3: #{inception_stem_forward.66} parent=0 // loop_header
    %s7 = sphi 0, %s11
    %p8 = scmp.ge.s32.totalorder %s7, 86
    %s14 = sphi 0, %s33
    %s15 = sphi 0, %s29
    %s16 = sphi 0, %s25
    %s17 = sphi 0, %s14
    %s18 = sphi 0, %s15
    %s19 = sphi 0, %s16
    %s20 = sphi 0, %s17
    %s21 = sphi 0, %s18
    %s22 = sphi 0, %s19
    %s40 = sphi 0, %s42
    %s43 = sphi 0, %s40
    %s44 = sphi 0, %s43
    %s60 = sphi 0, %s44
    %s68 = sphi 0, %s70
    %s71 = sphi 0, %s68
    %s72 = sphi 0, %s71
    %s88 = sphi 0, %s72
  $region4: #{inception_stem_forward.66} parent=0 // loop_header_branch
    %10 = sbr.rel (%p8) target = $region8
  $region5: #{inception_stem_forward.66} parent=0 // loop_body
    %s12 = ssub.s32 %s7, 1
    %s13 = ssub.s32 %s7, 2
    %s23 = sadd.s32 1, %s16
    %p24 = scmp.ge.s32.totalorder %s23, 3
    %s25 = scalar_select %p24, 0, %s23
    %s26 = sadd.s32 1, %s15
    %s27 = scalar_select %p24, %s26, %s15
    %p28 = scmp.ge.s32.totalorder %s27, 14
    %s29 = scalar_select %p28, 0, %s27
    %s30 = sadd.s32 1, %s14
    %s31 = scalar_select %p28, %s30, %s14
    %p32 = scmp.ge.s32.totalorder %s31, 2
    %s33 = scalar_select %p32, 0, %s31
    %s34 = sadd.s32 %s15, %s16
    %s35 = sadd.s32 %s29, %s25
    %s36 = ssub.s32 %s14, %s33
    %s37 = ssub.s32 %s34, %s35
    %s38 = sor.u32 %s36, %s37
    %p39 = scmp.eq.s32.totalorder %s38, 0
    %s41 = sadd.s32 %s40, 1
    %s42 = scalar_select %p39, %s40, %s41
    %p45 = pneg %p39
    %p46 = scmp.eq.s32.totalorder %s7, 83
    %p47 = por %p45, %p46
    %p48 = scmp.ne.s32.totalorder %s40, %s43
    %p49 = scmp.eq.s32.totalorder %s7, 0
    %p50 = por %p48, %p49
    %p51 = scmp.ne.s32.totalorder %s40, %s43
    %p52 = scmp.eq.s32.totalorder %s12, 83
    %p53 = por %p51, %p52
    %p54 = scmp.ne.s32.totalorder %s43, %s44
    %p55 = scmp.eq.s32.totalorder %s12, 0
    %p56 = por %p54, %p55
    %p57 = scmp.ne.s32.totalorder %s43, %s44
    %p58 = scmp.eq.s32.totalorder %s13, 83
    %p59 = por %p57, %p58
    %p61 = scmp.ne.s32.totalorder %s44, %s60
    %p62 = scmp.eq.s32.totalorder %s13, 0
    %p63 = por %p61, %p62
    %s64 = ssub.s32 %s14, %s33
    %s65 = ssub.s32 %s15, %s29
    %s66 = sor.u32 %s64, %s65
    %p67 = scmp.eq.s32.totalorder %s66, 0
    %s69 = sadd.s32 %s68, 1
    %s70 = scalar_select %p67, %s68, %s69
    %p73 = pneg %p67
    %p74 = scmp.eq.s32.totalorder %s7, 83
    %p75 = por %p73, %p74
    %p76 = scmp.ne.s32.totalorder %s68, %s71
    %p77 = scmp.eq.s32.totalorder %s7, 0
    %p78 = por %p76, %p77
    %p79 = scmp.ne.s32.totalorder %s68, %s71
    %p80 = scmp.eq.s32.totalorder %s12, 83
    %p81 = por %p79, %p80
    %p82 = scmp.ne.s32.totalorder %s71, %s72
    %p83 = scmp.eq.s32.totalorder %s12, 0
    %p84 = por %p82, %p83
    %p85 = scmp.ne.s32.totalorder %s71, %s72
    %p86 = scmp.eq.s32.totalorder %s13, 83
    %p87 = por %p85, %p86
    %p89 = scmp.ne.s32.totalorder %s72, %s88
    %p90 = scmp.eq.s32.totalorder %s13, 0
    %p91 = por %p89, %p90
    %p92 = scmp.le.s32.totalorder 1, %s7
    %p93 = scmp.lt.s32.totalorder %s7, 85
    %p94 = pnand %p92, %p93
    %p95 = pneg %p94
    // Predicated region
    $region9: #{inception_stem_forward.66} parent=5 // pred_check
      _
    $region10: #{inception_stem_forward.66} parent=5 // pred_check_branch
      %97 = sbr.rel (%p94) target = $region12
    $region11: #{inception_stem_forward.66} parent=5 // pred_region
      %s98 = ssub.s32 %s7, 1
    $region12: #{inception_stem_forward.66} parent=5 // pred_fallthru
      _
    %p99 = scmp.lt.s32.totalorder %s7, 84
    // Predicated region
    $region13: #{inception_stem_forward.66} parent=5 // pred_check
      %p100 = pneg %p99
    $region14: #{inception_stem_forward.66} parent=5 // pred_check_branch
      %102 = sbr.rel (%p100) target = $region16
    $region15: #{inception_stem_forward.66} parent=5 // pred_region
      // Predicated region
      $region17: #{inception_stem_forward.66} parent=15 // pred_check
        %p103 = pneg %p50
      $region18: #{inception_stem_forward.66} parent=15 // pred_check_branch
        %105 = sbr.rel (%p103) target = $region20
      $region19: #{inception_stem_forward.66} parent=15 // pred_region
        %s106 = sadd.s32 %s15, %s16
        %p107 = scmp.lt.s32.totalorder %s14, 1
        %s108 = scalar_select %p107, %s14, 1
        %p109 = scmp.lt.s32.totalorder %s106, 15
        %s110 = scalar_select %p109, %s106, 15
        %s111 = smul.addr %s110, 4
        %s112 = smul.addr %s108, 64
        %s113 = sadd.s32 %s111, %s112
        %s114 = smul.addr %s113, 4
        %s115 = scalar_lea.vmem %s0, %s114
        %s116 = sadd.s32 %s15, %s16
      $region20: #{inception_stem_forward.66} parent=15 // pred_fallthru
        _
    $region16: #{inception_stem_forward.66} parent=5 // pred_fallthru
      _
    %p117 = scmp.le.s32.totalorder 1, %s7
    %p118 = scmp.lt.s32.totalorder %s7, 85
    %p119 = pnand %p117, %p118
    %p120 = pneg %p119
    // Predicated region
    $region21: #{inception_stem_forward.66} parent=5 // pred_check
      _
    $region22: #{inception_stem_forward.66} parent=5 // pred_check_branch
      %122 = sbr.rel (%p119) target = $region24
    $region23: #{inception_stem_forward.66} parent=5 // pred_region
      %s123 = ssub.s32 %s7, 1
      %s124 = sadd.s32 %s18, %s19
      %p125 = scmp.lt.s32.totalorder %s17, 1
      %s126 = scalar_select %p125, %s17, 1
      %p127 = scmp.lt.s32.totalorder %s124, 15
      %s128 = scalar_select %p127, %s124, 15
      %s129 = smul.addr %s128, 4
      %s130 = smul.addr %s126, 64
      %s131 = sadd.s32 %s129, %s130
      %s132 = smul.addr %s131, 4
      %s133 = scalar_lea.vmem %s0, %s132
      %p134 = pneg %p56
      %p135 = pneg %p53
      %p136 = pneg %p84
      %p137 = pneg %p81
      %p138 = scmp.lt.s32.totalorder %s17, 1
      %s139 = scalar_select %p138, %s17, 1
      %p140 = scmp.lt.s32.totalorder %s18, 13
      %s141 = scalar_select %p140, %s18, 13
      %s142 = smul.addr %s141, 4
      %s143 = smul.addr %s139, 56
      %s144 = sadd.s32 %s142, %s143
      %s145 = smul.addr %s144, 4
      %s146 = scalar_lea.vmem %s1, %s145
      %s147 = sadd.s32 %s18, %s19
      %p148 = scmp.lt.s32.totalorder %s17, 1
      %s149 = scalar_select %p148, %s17, 1
      %p150 = scmp.lt.s32.totalorder %s147, 15
      %s151 = scalar_select %p150, %s147, 15
      %s152 = smul.addr %s151, 4
      %s153 = smul.addr %s149, 64
      %s154 = sadd.s32 %s152, %s153
      %s155 = smul.addr %s154, 4
      %s156 = scalar_lea.vmem %s0, %s155
      %s157 = sadd.s32 %s18, %s19
      %p158 = scmp.lt.s32.totalorder %s17, 1
      %s159 = scalar_select %p158, %s17, 1
      %p160 = scmp.lt.s32.totalorder %s18, 13
      %s161 = scalar_select %p160, %s18, 13
      %s162 = smul.addr %s161, 4
      %s163 = smul.addr %s159, 56
      %s164 = sadd.s32 %s162, %s163
      %s165 = smul.addr %s164, 4
      %s166 = scalar_lea.vmem %s1, %s165
      %p168 = scmp.eq.s32.totalorder %s19, 0
      // Predicated region
      $region25: #{inception_stem_forward.66} parent=23 // pred_check
        %p169 = pneg %p168
      $region26: #{inception_stem_forward.66} parent=23 // pred_check_branch
        %171 = sbr.rel (%p169) target = $region28
      $region27: #{inception_stem_forward.66} parent=23 // pred_region
        %172 = vst [vmem:[#allocation2] sm:$0xff] 4286644096
        %173 = vst [vmem:[#allocation2 + $0x8] sm:$0x77] 4286644096
      $region28: #{inception_stem_forward.66} parent=23 // pred_fallthru
        _
      %v174 = vld [vmem:[%s156] sm:$0xff]
      %v175 = vld [vmem:[%s156 + $0x8] sm:$0xff]
      %vm176 = vsmask.f32 3328
      %vm177 = vsmask.f32 7440
      %vm178 = vmor %vm176, %vm177
      %v180 = vshrl.u32 %v174, 16
      %v182 = vrot.slane %v180, 4
      %v183 = vshll.u32 %v174, 16
      %v185 = vrot.slane %v183, 5
      %v186 = vor.u32 %v182, %v185
      %v187 = vrot.slane %v186, 4
      %v189 = vshll.u32 %v175, 16
      %v191 = vrot.slane %v189, 5
      %v192 = vsel %vm178, %v187, %v191
      %v193 = vshrl.u32 %v175, 16
      %v195 = vrot.slane %v193, 4
      %v196 = vor.u32 %v195, %v191
      %v197 = vrot.slane %v196, 4
      %v200 = vmax.bf16 %v174, %v192
      %v201 = vmax.bf16 %v175, %v197
      %vm204 = vcmask 1042432
      %vm205 = vcmask 1046532
      %vm206 = vmor %vm204, %vm205
      %v207 = vrot.slane %v174, 5
      %v208 = vrot.slane %v207, 4
      %v209 = vrot.slane %v175, 5
      %v210 = vsel %vm206, %v208, %v209
      %v211 = vrot.slane %v209, 4
      %v214 = vmax.bf16 %v200, %v210
      %v215 = vmax.bf16 %v201, %v211
      %v216 = vld [vmem:[#allocation2] sm:$0xff]
      %v217 = vld [vmem:[#allocation2 + $0x8] sm:$0x77]
      %v218 = vmax.bf16 %v216, %v214
      %v219 = vmax.bf16 %v217, %v215
      %220 = vst [vmem:[#allocation2] sm:$0xff] %v218
      %221 = vst [vmem:[#allocation2 + $0x8] sm:$0x77] %v219
      %p222 = scmp.eq.s32.totalorder %s19, 2
      // Predicated region
      $region29: #{inception_stem_forward.66} parent=23 // pred_check
        %p223 = pneg %p222
      $region30: #{inception_stem_forward.66} parent=23 // pred_check_branch
        %225 = sbr.rel (%p223) target = $region32
      $region31: #{inception_stem_forward.66} parent=23 // pred_region
        %v226 = vld [vmem:[#allocation2] sm:$0xff]
        %v227 = vld [vmem:[#allocation2 + $0x8] sm:$0x77]
        %228 = vst [vmem:[%s166] sm:$0xff] %v226
        %229 = vst [vmem:[%s166 + $0x8] sm:$0x77] %v227
      $region32: #{inception_stem_forward.66} parent=23 // pred_fallthru
        _
      %p230 = scmp.lt.s32.totalorder %s17, 1
      %s231 = scalar_select %p230, %s17, 1
      %p232 = scmp.lt.s32.totalorder %s18, 13
      %s233 = scalar_select %p232, %s18, 13
      %s234 = smul.addr %s233, 4
      %s235 = smul.addr %s231, 56
      %s236 = sadd.s32 %s234, %s235
      %s237 = smul.addr %s236, 4
      %s238 = scalar_lea.vmem %s1, %s237
      // Predicated region
      $region33: #{inception_stem_forward.66} parent=23 // pred_check
        %p239 = pneg %p81
      $region34: #{inception_stem_forward.66} parent=23 // pred_check_branch
        %241 = sbr.rel (%p239) target = $region36
      $region35: #{inception_stem_forward.66} parent=23 // pred_region
        _
      $region36: #{inception_stem_forward.66} parent=23 // pred_fallthru
        _
    $region24: #{inception_stem_forward.66} parent=5 // pred_fallthru
      _
    %p242 = scmp.le.s32.totalorder 2, %s7
    // Predicated region
    $region37: #{inception_stem_forward.66} parent=5 // pred_check
      %p243 = pneg %p242
    $region38: #{inception_stem_forward.66} parent=5 // pred_check_branch
      %245 = sbr.rel (%p243) target = $region40
    $region39: #{inception_stem_forward.66} parent=5 // pred_region
      %s246 = ssub.s32 %s7, 2
      // Predicated region
      $region41: #{inception_stem_forward.66} parent=39 // pred_check
        %p247 = pneg %p87
      $region42: #{inception_stem_forward.66} parent=39 // pred_check_branch
        %249 = sbr.rel (%p247) target = $region44
      $region43: #{inception_stem_forward.66} parent=39 // pred_region
        %p250 = scmp.lt.s32.totalorder %s20, 1
        %s251 = scalar_select %p250, %s20, 1
        %p252 = scmp.lt.s32.totalorder %s21, 13
        %s253 = scalar_select %p252, %s21, 13
        %s254 = smul.addr %s253, 4
        %s255 = smul.addr %s251, 56
        %s256 = sadd.s32 %s254, %s255
        %s257 = smul.addr %s256, 4
        %s258 = scalar_lea.vmem %s1, %s257
      $region44: #{inception_stem_forward.66} parent=39 // pred_fallthru
        _
    $region40: #{inception_stem_forward.66} parent=5 // pred_fallthru
      _
  $region6: #{inception_stem_forward.66} parent=0 // loop_footer
    %s11 = sadd.s32 1, %s7
  $region7: #{inception_stem_forward.66} parent=0 // loop_footer_branch
    %6 = sbr.rel target = $region3
  $region8: #{inception_stem_forward.66} parent=0 // loop_exit
    _

</llo_original>
